<compile_context>
chip_gen: v7x
topology: tpu7x:2x2x1
jax: 0.10.0
libtpu: 0.0.40
codegen_flags: <defaults>
</compile_context>

<pallas_src>
import jax
import jax.numpy as jnp
from jax.experimental import pallas as pl
from jax.experimental.pallas import tpu as pltpu

# ----------------------------- model hyper-params ---------------------------
B = 2            # batch
T_NUM = 8        # number of tasks (rows)
M_NUM = 4        # number of machines (cols)
NT = 6           # task feature dim
NM = 5           # machine feature dim
EMB = 32         # embedding_dim
HEADS = 4        # head_num
QKV = 8          # qkv_dim
HD = HEADS * QKV # 32
MS_HID = 16      # ms_hidden_dim
FF_HID = 64      # ff_hidden_dim
LAYERS = 2       # encoder_layer_num
SQRT_EMB = float(EMB) ** 0.5
SQRT_QKV = float(QKV) ** 0.5
INV_SQRT_EMB = 1.0 / SQRT_EMB
INV_SQRT_QKV = 1.0 / SQRT_QKV
LOGIT_CLIP = 10.0
IN_EPS = 1e-5    # nn.InstanceNorm1d default eps


# --------------------------- kernel-internal helpers ------------------------
def _add_instance_norm(x1, x2, g, b):
    """Add + InstanceNorm1d over the sequence axis (per channel), affine."""
    x = x1 + x2                                            # (N, E)
    mean = jnp.mean(x, axis=0, keepdims=True)              # (1, E)
    cx = x - mean
    var = jnp.mean(cx * cx, axis=0, keepdims=True)
    return cx * jax.lax.rsqrt(var + IN_EPS) * g + b


def _block_softmax(s, cst):
    """Per-head softmax over lane-blocks of size Nc.  s: (R, H*Nc)."""
    n = s.shape[-1]
    blk = n // HEADS
    ind = cst['ind']                       # (H, n) 0/1 block indicators
    m = jnp.zeros_like(s)
    for h in range(HEADS):                 # cheap lane-slice max; matmuls stay batched
        mh = jnp.max(s[:, h * blk:(h + 1) * blk], axis=-1, keepdims=True)   # (R, 1)
        m = m + mh * ind[h:h + 1, :]                                        # (R, n)
    e = jnp.exp(s - m)
    # per-block sums broadcast back to every lane of the block via one matmul
    denom = jnp.dot(e, cst['seg'], preferred_element_type=jnp.float32)
    return e * pl.reciprocal(denom, approx=True)


def _encoding_block(bp, cst, l, row, col, cost):
    """MatNet EncodingBlock with MixedScore MHA (head-batched, lane-blocked).

    bp: dict of refs stacked over the layer axis (static int l).
    cst: dict of loaded constant matrices for this side (Nc = col count).
    row: (Nr, E), col: (Nc, E), cost: (Nr, Nc)  ->  (Nr, E)
    """
    q = jnp.dot(row, bp['Wq'][l], preferred_element_type=jnp.float32)        # (Nr, HD)
    kv = jnp.dot(col, bp['Wkv'][l], preferred_element_type=jnp.float32)      # (Nc, 2*HD)
    kT = kv[:, :HD].T                                                        # (HD, Nc)

    # block-diagonal K:  K_bd[i, h*Nc+c] = k[c, i]/sqrt(d) iff i belongs to head h
    k_bd = jnp.dot(kT, cst['repK'], preferred_element_type=jnp.float32) * cst['kmask']
    dot_all = jnp.dot(q, k_bd, preferred_element_type=jnp.float32)           # (Nr, H*Nc), scaled

    # mixed-score MLP over all heads at once (block-diag expanded weights)
    ms1 = jnp.maximum(
        jnp.dot(dot_all, bp['Wd'][l], preferred_element_type=jnp.float32)
        + jnp.dot(cost, bp['Wc'][l], preferred_element_type=jnp.float32)
        + bp['b1'][l], 0.0)                                                  # (Nr, H*Nc*ms)
    mixed = jnp.dot(ms1, bp['W2'][l], preferred_element_type=jnp.float32) + bp['b2'][l]  # (Nr, H*Nc)

    w = _block_softmax(mixed, cst)                                           # (Nr, H*Nc)

    # block-diagonal V:  V_bd[h*Nc+c, j] = v[c, j] iff j belongs to head h
    v_bd = jnp.dot(cst['repV'], kv[:, HD:], preferred_element_type=jnp.float32) * cst['vmask']
    out_concat = jnp.dot(w, v_bd, preferred_element_type=jnp.float32)        # (Nr, HD)
    mh = jnp.dot(out_concat, bp['comb_W'][l],
                 preferred_element_type=jnp.float32) + bp['comb_b'][l]       # (Nr, E)

    out1 = _add_instance_norm(row, mh, bp['n1_g'][l], bp['n1_b'][l])
    hid = jnp.maximum(
        jnp.dot(out1, bp['ff_W1'][l], preferred_element_type=jnp.float32)
        + bp['ff_b1'][l], 0.0)
    out2 = jnp.dot(hid, bp['ff_W2'][l], preferred_element_type=jnp.float32) + bp['ff_b2'][l]
    return _add_instance_norm(out1, out2, bp['n2_g'][l], bp['n2_b'][l])


def _decoder(dp, cst, machines, jobs, mask):
    """MMatrix_Decoder: MHA (machines attend jobs) + pointer score + flat softmax.

    machines: (M, E), jobs: (T, E), mask: (M, T)  ->  probs (M, T)
    (softmax over the flattened M*T scores, matching the PyTorch reshape.)
    """
    kv = jnp.dot(jobs, dp['Wkv'], preferred_element_type=jnp.float32)        # (T, 2*HD)
    q = jnp.dot(machines, dp['Wq3'], preferred_element_type=jnp.float32)     # (M, HD)
    kT = kv[:, :HD].T                                                        # (HD, T)

    k_bd = jnp.dot(kT, cst['repK'], preferred_element_type=jnp.float32) * cst['kmask']
    s = jnp.dot(q, k_bd, preferred_element_type=jnp.float32)                 # (M, H*T), scaled
    w = _block_softmax(s, cst)
    v_bd = jnp.dot(cst['repV'], kv[:, HD:], preferred_element_type=jnp.float32) * cst['vmask']
    out_concat = jnp.dot(w, v_bd, preferred_element_type=jnp.float32)        # (M, HD)
    mh = jnp.dot(out_concat, dp['comb_W'],
                 preferred_element_type=jnp.float32) + dp['comb_b']          # (M, E)

    score = jnp.dot(mh, jobs.T, preferred_element_type=jnp.float32) * INV_SQRT_EMB  # (M, T)
    score = LOGIT_CLIP * jnp.tanh(score) + mask
    # flattened softmax over all (M*T) entries of this batch element
    e = jnp.exp(score - jnp.max(score))
    return e / jnp.sum(e)


# --------------------------------- fused call --------------------------------
def _param_spec(a):
    nd = a.ndim
    return pl.BlockSpec(a.shape, lambda i, _nd=nd: (0,) * _nd)


@jax.jit
def cloud_matrix_model_forward(proc, machine_state, task_state, D_TM, ninf_mask):
    """proc: preprocessed params (see preprocess_params). Returns (task_selected, logpa, probs)."""
    flat, treedef = jax.tree_util.tree_flatten(proc)
    Bn = machine_state.shape[0]
    D_MT = jnp.transpose(D_TM, (0, 2, 1))   # hoisted once; shared by every col block

    def kernel(ts_ref, msr_ref, ctm_ref, cmt_ref, mask_ref, *rest):
        p_refs, o_ref = rest[:-1], rest[-1]
        p = jax.tree_util.tree_unflatten(treedef, list(p_refs))

        load = lambda d: {k: v[...] for k, v in d.items()}
        cM, cT, dec = load(p['cM']), load(p['cT']), load(p['dec'])

        tasks = ts_ref[0]        # (T, nT)
        machines = msr_ref[0]    # (M, nM)
        cost = ctm_ref[0]        # (T, M)
        cost_t = cmt_ref[0]      # (M, T)
        mask = mask_ref[0]       # (M, T)

        row = jnp.dot(tasks, p['T_W'][...],
                      preferred_element_type=jnp.float32) + p['T_b'][...]      # (T, E)
        col = jnp.dot(machines, p['M_W'][...],
                      preferred_element_type=jnp.float32) + p['M_b'][...]      # (M, E)

        for l in range(LAYERS):
            row_new = _encoding_block(p['row'], cM, l, row, col, cost)
            col_new = _encoding_block(p['col'], cT, l, col, row, cost_t)
            row, col = row_new, col_new

        o_ref[0] = _decoder(dec, cT, col, row, mask)                           # (M, T)

    data_specs = [
        pl.BlockSpec((1, T_NUM, NT), lambda i: (i, 0, 0)),
        pl.BlockSpec((1, M_NUM, NM), lambda i: (i, 0, 0)),
        pl.BlockSpec((1, T_NUM, M_NUM), lambda i: (i, 0, 0)),
        pl.BlockSpec((1, M_NUM, T_NUM), lambda i: (i, 0, 0)),
        pl.BlockSpec((1, M_NUM, T_NUM), lambda i: (i, 0, 0)),
    ]
    probs_mt = pl.pallas_call(
        kernel,
        out_shape=jax.ShapeDtypeStruct((Bn, M_NUM, T_NUM), jnp.float32),
        grid=(Bn,),
        in_specs=data_specs + [_param_spec(a) for a in flat],
        out_specs=pl.BlockSpec((1, M_NUM, T_NUM), lambda i: (i, 0, 0)),
        compiler_params=pltpu.CompilerParams(dimension_semantics=("parallel",)),
    )(task_state, machine_state, D_TM, D_MT, ninf_mask, *flat)

    probs = probs_mt.reshape(Bn, M_NUM * T_NUM)
    # eval_type='argmax' path of the PyTorch module (deterministic)
    # TODO(synk): Categorical sampling path (training / eval_type=='softmax') not implemented.
    task_selected = jnp.argmax(probs, axis=1)
    logpa = None
    return task_selected, logpa, probs


# ------------------------------- parameter init -----------------------------
def _linear_params(key, din, dout, bias=True):
    k1, k2 = jax.random.split(key)
    bound = 1.0 / float(din) ** 0.5
    W = jax.random.uniform(k1, (din, dout), jnp.float32, -bound, bound)
    if bias:
        b = jax.random.uniform(k2, (dout,), jnp.float32, -bound, bound)
    else:
        b = jnp.zeros((dout,), jnp.float32)
    return W, b


def _encoding_block_params(key):
    ks = jax.random.split(key, 10)
    Wq, _ = _linear_params(ks[0], EMB, HD, bias=False)
    Wk, _ = _linear_params(ks[1], EMB, HD, bias=False)
    Wv, _ = _linear_params(ks[2], EMB, HD, bias=False)
    mix1_init = (0.5) ** 0.5
    mix2_init = (1.0 / 16.0) ** 0.5
    m1w = jax.random.uniform(ks[3], (HEADS, 2, MS_HID), jnp.float32, -mix1_init, mix1_init)
    m1b = jax.random.uniform(ks[4], (HEADS, MS_HID), jnp.float32, -mix1_init, mix1_init)
    m2w = jax.random.uniform(ks[5], (HEADS, MS_HID), jnp.float32, -mix2_init, mix2_init)
    m2b = jax.random.uniform(ks[6], (HEADS, 1), jnp.float32, -mix2_init, mix2_init)
    cW, cb = _linear_params(ks[7], HD, EMB, bias=True)
    fW1, fb1 = _linear_params(ks[8], EMB, FF_HID, bias=True)
    fW2, fb2 = _linear_params(ks[9], FF_HID, EMB, bias=True)
    return dict(
        Wq=Wq, Wk=Wk, Wv=Wv,
        m1w=m1w, m1b=m1b, m2w=m2w, m2b=m2b,
        comb_W=cW, comb_b=cb,
        n1_g=jnp.ones((EMB,), jnp.float32), n1_b=jnp.zeros((EMB,), jnp.float32),
        ff_W1=fW1, ff_b1=fb1, ff_W2=fW2, ff_b2=fb2,
        n2_g=jnp.ones((EMB,), jnp.float32), n2_b=jnp.zeros((EMB,), jnp.float32),
    )


def init_params(key):
    keys = jax.random.split(key, 3 + 2 * LAYERS + 6)
    T_W, T_b = _linear_params(keys[0], NT, EMB)
    M_W, M_b = _linear_params(keys[1], NM, EMB)
    encoder = []
    for l in range(LAYERS):
        encoder.append(dict(
            row=_encoding_block_params(keys[2 + 2 * l]),
            col=_encoding_block_params(keys[3 + 2 * l]),
        ))
    dk = keys[2 + 2 * LAYERS:]
    Wq1, _ = _linear_params(dk[0], EMB, HD, bias=False)   # unused in forward (as in PyTorch)
    Wq2, _ = _linear_params(dk[1], EMB, HD, bias=False)   # unused in forward
    Wq3, _ = _linear_params(dk[2], EMB, HD, bias=False)
    Wk, _ = _linear_params(dk[3], EMB, HD, bias=False)
    Wv, _ = _linear_params(dk[4], EMB, HD, bias=False)
    cW, cb = _linear_params(dk[5], HD, EMB, bias=True)
    decoder = dict(Wq_1=Wq1, Wq_2=Wq2, Wq_3=Wq3, Wk=Wk, Wv=Wv, comb_W=cW, comb_b=cb)
    return dict(T_emb_W=T_W, T_emb_b=T_b, M_emb_W=M_W, M_emb_b=M_b,
                encoder=encoder, decoder=decoder)


# ------------------------ parameter / constant preprocessing ------------------
def _block_diag(mats):
    H = len(mats)
    a, b = mats[0].shape
    out = jnp.zeros((H * a, H * b), jnp.float32)
    for h, m in enumerate(mats):
        out = out.at[h * a:(h + 1) * a, h * b:(h + 1) * b].set(m)
    return out


def _expand_mixed_score(p, nc):
    """Block-diag expand the per-head mixed-score MLP so it becomes plain 2-D matmuls."""
    eye = jnp.eye(nc, dtype=jnp.float32)
    w_dot = p['m1w'][:, 0, :]          # (H, ms)
    w_cst = p['m1w'][:, 1, :]          # (H, ms)
    # ms1[r, h*nc*ms + c*ms + m] = dot[r,h*nc+c]*w_dot[h,m] + cost[r,c]*w_cst[h,m] + m1b[h,m]
    Wd_big = _block_diag([jnp.kron(eye, w_dot[h][None, :]) for h in range(HEADS)])   # (H*nc, H*nc*ms)
    Wc_fold = jnp.concatenate([jnp.kron(eye, w_cst[h][None, :])
                               for h in range(HEADS)], axis=1)                       # (nc, H*nc*ms)
    W2_big = _block_diag([jnp.kron(eye, p['m2w'][h][:, None]) for h in range(HEADS)])  # (H*nc*ms, H*nc)
    b1_big = jnp.concatenate([jnp.tile(p['m1b'][h], nc) for h in range(HEADS)])[None, :]
    b2_big = jnp.repeat(p['m2b'][:, 0], nc)[None, :]                                  # (1, H*nc)
    return Wd_big, Wc_fold, b1_big, W2_big, b2_big


def _side_consts(nc):
    """Constant replication / head-mask / segment matrices for column count nc."""
    n = HEADS * nc
    i_head = jnp.arange(HD)[:, None] // QKV            # (HD, 1)
    j_head = jnp.arange(n)[None, :] // nc               # (1, n)
    kmask = (i_head == j_head).astype(jnp.float32) * INV_SQRT_QKV           # (HD, n)
    vmask = ((jnp.arange(n)[:, None] // nc) ==
             (jnp.arange(HD)[None, :] // QKV)).astype(jnp.float32)          # (n, HD)
    repK = jnp.tile(jnp.eye(nc, dtype=jnp.float32), (1, HEADS))             # (nc, n)
    repV = jnp.tile(jnp.eye(nc, dtype=jnp.float32), (HEADS, 1))             # (n, nc)
    seg = ((jnp.arange(n)[:, None] // nc) ==
           (jnp.arange(n)[None, :] // nc)).astype(jnp.float32)              # (n, n)
    ind = (jnp.arange(HEADS)[:, None] ==
           (jnp.arange(n)[None, :] // nc)).astype(jnp.float32)              # (H, n)
    return dict(repK=repK, kmask=kmask, repV=repV, vmask=vmask, seg=seg, ind=ind)


def preprocess_params(params):
    """Reshape / fuse / block-diag-expand raw params for the fused kernel (done once)."""
    def expand_block(p, nc):
        Wd, Wc, b1, W2, b2 = _expand_mixed_score(p, nc)
        return dict(
            Wq=p['Wq'],
            Wkv=jnp.concatenate([p['Wk'], p['Wv']], axis=1),          # fused K|V projection
            Wd=Wd, Wc=Wc, b1=b1, W2=W2, b2=b2,
            comb_W=p['comb_W'], comb_b=p['comb_b'][None, :],
            n1_g=p['n1_g'][None, :], n1_b=p['n1_b'][None, :],
            ff_W1=p['ff_W1'], ff_b1=p['ff_b1'][None, :],
            ff_W2=p['ff_W2'], ff_b2=p['ff_b2'][None, :],
            n2_g=p['n2_g'][None, :], n2_b=p['n2_b'][None, :],
        )

    row_blocks = [expand_block(layer['row'], M_NUM) for layer in params['encoder']]
    col_blocks = [expand_block(layer['col'], T_NUM) for layer in params['encoder']]
    stack = lambda *xs: jnp.stack(xs, axis=0)            # stack over the layer axis
    dec = params['decoder']
    return dict(
        T_W=params['T_emb_W'], T_b=params['T_emb_b'][None, :],
        M_W=params['M_emb_W'], M_b=params['M_emb_b'][None, :],
        row=jax.tree_util.tree_map(stack, *row_blocks),
        col=jax.tree_util.tree_map(stack, *col_blocks),
        dec=dict(Wq3=dec['Wq_3'],
                 Wkv=jnp.concatenate([dec['Wk'], dec['Wv']], axis=1),
                 comb_W=dec['comb_W'], comb_b=dec['comb_b'][None, :]),
        cM=_side_consts(M_NUM),   # row blocks attend machines (Nc = M_NUM)
        cT=_side_consts(T_NUM),   # col blocks + decoder attend tasks (Nc = T_NUM)
    )


# ----------------------------------- main ------------------------------------
if __name__ == "__main__":
    key = jax.random.PRNGKey(0)
    kp, k1, k2, k3, k4 = jax.random.split(key, 5)
    raw_params = init_params(kp)
    proc = preprocess_params(raw_params)

    machine_state = jax.random.normal(k1, (B, M_NUM, NM), jnp.float32)
    task_state = jax.random.normal(k2, (B, T_NUM, NT), jnp.float32)
    D_TM = jax.random.uniform(k3, (B, T_NUM, M_NUM), jnp.float32)
    mask_bits = jax.random.uniform(k4, (B, M_NUM, T_NUM), jnp.float32)
    ninf_mask = jnp.where(mask_bits < 0.2, jnp.float32(-1e9), jnp.float32(0.0))

    task_selected, logpa, probs = cloud_matrix_model_forward(
        proc, machine_state, task_state, D_TM, ninf_mask)
    task_selected = jax.block_until_ready(task_selected)
    probs = jax.block_until_ready(probs)

    assert task_selected.shape == (B,)
    assert probs.shape == (B, M_NUM * T_NUM)
    assert bool(jnp.all(jnp.isfinite(probs)))
    assert bool(jnp.allclose(jnp.sum(probs, axis=1), 1.0, atol=1e-4))
    print("KERNEL_OK")
</pallas_src>

<mosaic_0001>
module attributes {stable_mosaic.version = 11 : i64} {
  func.func @kernel(%arg0: i32, %arg1: memref<1x8x6xf32, #tpu.memory_space<vmem>>, %arg2: memref<1x4x5xf32, #tpu.memory_space<vmem>>, %arg3: memref<1x8x4xf32, #tpu.memory_space<vmem>>, %arg4: memref<1x4x8xf32, #tpu.memory_space<vmem>>, %arg5: memref<1x4x8xf32, #tpu.memory_space<vmem>>, %arg6: memref<5x32xf32, #tpu.memory_space<vmem>>, %arg7: memref<1x32xf32, #tpu.memory_space<vmem>>, %arg8: memref<6x32xf32, #tpu.memory_space<vmem>>, %arg9: memref<1x32xf32, #tpu.memory_space<vmem>>, %arg10: memref<4x16xf32, #tpu.memory_space<vmem>>, %arg11: memref<32x16xf32, #tpu.memory_space<vmem>>, %arg12: memref<4x16xf32, #tpu.memory_space<vmem>>, %arg13: memref<16x4xf32, #tpu.memory_space<vmem>>, %arg14: memref<16x16xf32, #tpu.memory_space<vmem>>, %arg15: memref<16x32xf32, #tpu.memory_space<vmem>>, %arg16: memref<4x32xf32, #tpu.memory_space<vmem>>, %arg17: memref<32x32xf32, #tpu.memory_space<vmem>>, %arg18: memref<8x32xf32, #tpu.memory_space<vmem>>, %arg19: memref<32x8xf32, #tpu.memory_space<vmem>>, %arg20: memref<32x32xf32, #tpu.memory_space<vmem>>, %arg21: memref<32x32xf32, #tpu.memory_space<vmem>>, %arg22: memref<2x512x32xf32, #tpu.memory_space<vmem>>, %arg23: memref<2x8x512xf32, #tpu.memory_space<vmem>>, %arg24: memref<2x32x512xf32, #tpu.memory_space<vmem>>, %arg25: memref<2x32x64xf32, #tpu.memory_space<vmem>>, %arg26: memref<2x32x32xf32, #tpu.memory_space<vmem>>, %arg27: memref<2x1x512xf32, #tpu.memory_space<vmem>>, %arg28: memref<2x1x32xf32, #tpu.memory_space<vmem>>, %arg29: memref<2x32x32xf32, #tpu.memory_space<vmem>>, %arg30: memref<2x1x32xf32, #tpu.memory_space<vmem>>, %arg31: memref<2x32x64xf32, #tpu.memory_space<vmem>>, %arg32: memref<2x64x32xf32, #tpu.memory_space<vmem>>, %arg33: memref<2x1x64xf32, #tpu.memory_space<vmem>>, %arg34: memref<2x1x32xf32, #tpu.memory_space<vmem>>, %arg35: memref<2x1x32xf32, #tpu.memory_space<vmem>>, %arg36: memref<2x1x32xf32, #tpu.memory_space<vmem>>, %arg37: memref<2x1x32xf32, #tpu.memory_space<vmem>>, %arg38: memref<2x1x32xf32, #tpu.memory_space<vmem>>, %arg39: memref<32x64xf32, #tpu.memory_space<vmem>>, %arg40: memref<32x32xf32, #tpu.memory_space<vmem>>, %arg41: memref<32x32xf32, #tpu.memory_space<vmem>>, %arg42: memref<1x32xf32, #tpu.memory_space<vmem>>, %arg43: memref<2x256x16xf32, #tpu.memory_space<vmem>>, %arg44: memref<2x4x256xf32, #tpu.memory_space<vmem>>, %arg45: memref<2x16x256xf32, #tpu.memory_space<vmem>>, %arg46: memref<2x32x64xf32, #tpu.memory_space<vmem>>, %arg47: memref<2x32x32xf32, #tpu.memory_space<vmem>>, %arg48: memref<2x1x256xf32, #tpu.memory_space<vmem>>, %arg49: memref<2x1x16xf32, #tpu.memory_space<vmem>>, %arg50: memref<2x32x32xf32, #tpu.memory_space<vmem>>, %arg51: memref<2x1x32xf32, #tpu.memory_space<vmem>>, %arg52: memref<2x32x64xf32, #tpu.memory_space<vmem>>, %arg53: memref<2x64x32xf32, #tpu.memory_space<vmem>>, %arg54: memref<2x1x64xf32, #tpu.memory_space<vmem>>, %arg55: memref<2x1x32xf32, #tpu.memory_space<vmem>>, %arg56: memref<2x1x32xf32, #tpu.memory_space<vmem>>, %arg57: memref<2x1x32xf32, #tpu.memory_space<vmem>>, %arg58: memref<2x1x32xf32, #tpu.memory_space<vmem>>, %arg59: memref<2x1x32xf32, #tpu.memory_space<vmem>>, %arg60: memref<1x4x8xf32, #tpu.memory_space<vmem>>) attributes {dimension_semantics = [#tpu.dimension_semantics<parallel>], iteration_bounds = array<i64: 2>, scalar_prefetch = 0 : i64, scratch_operands = 0 : i64, tpu.core_type = #tpu.core_type<tc>, window_params = [{transform_indices = @transform_0, window_bounds = array<i64: 1, 8, 6>}, {transform_indices = @transform_1, window_bounds = array<i64: 1, 4, 5>}, {transform_indices = @transform_2, window_bounds = array<i64: 1, 8, 4>}, {transform_indices = @transform_3, window_bounds = array<i64: 1, 4, 8>}, {transform_indices = @transform_4, window_bounds = array<i64: 1, 4, 8>}, {pipeline_mode = #tpu.pipeline_mode<synchronous>, transform_indices = @transform_5, window_bounds = array<i64: 5, 32>}, {pipeline_mode = #tpu.pipeline_mode<synchronous>, transform_indices = @transform_6, window_bounds = array<i64: 1, 32>}, {pipeline_mode = #tpu.pipeline_mode<synchronous>, transform_indices = @transform_7, window_bounds = array<i64: 6, 32>}, {pipeline_mode = #tpu.pipeline_mode<synchronous>, transform_indices = @transform_8, window_bounds = array<i64: 1, 32>}, {pipeline_mode = #tpu.pipeline_mode<synchronous>, transform_indices = @transform_9, window_bounds = array<i64: 4, 16>}, {pipeline_mode = #tpu.pipeline_mode<synchronous>, transform_indices = @transform_10, window_bounds = array<i64: 32, 16>}, {pipeline_mode = #tpu.pipeline_mode<synchronous>, transform_indices = @transform_11, window_bounds = array<i64: 4, 16>}, {pipeline_mode = #tpu.pipeline_mode<synchronous>, transform_indices = @transform_12, window_bounds = array<i64: 16, 4>}, {pipeline_mode = #tpu.pipeline_mode<synchronous>, transform_indices = @transform_13, window_bounds = array<i64: 16, 16>}, {pipeline_mode = #tpu.pipeline_mode<synchronous>, transform_indices = @transform_14, window_bounds = array<i64: 16, 32>}, {pipeline_mode = #tpu.pipeline_mode<synchronous>, transform_indices = @transform_15, window_bounds = array<i64: 4, 32>}, {pipeline_mode = #tpu.pipeline_mode<synchronous>, transform_indices = @transform_16, window_bounds = array<i64: 32, 32>}, {pipeline_mode = #tpu.pipeline_mode<synchronous>, transform_indices = @transform_17, window_bounds = array<i64: 8, 32>}, {pipeline_mode = #tpu.pipeline_mode<synchronous>, transform_indices = @transform_18, window_bounds = array<i64: 32, 8>}, {pipeline_mode = #tpu.pipeline_mode<synchronous>, transform_indices = @transform_19, window_bounds = array<i64: 32, 32>}, {pipeline_mode = #tpu.pipeline_mode<synchronous>, transform_indices = @transform_20, window_bounds = array<i64: 32, 32>}, {pipeline_mode = #tpu.pipeline_mode<synchronous>, transform_indices = @transform_21, window_bounds = array<i64: 2, 512, 32>}, {pipeline_mode = #tpu.pipeline_mode<synchronous>, transform_indices = @transform_22, window_bounds = array<i64: 2, 8, 512>}, {pipeline_mode = #tpu.pipeline_mode<synchronous>, transform_indices = @transform_23, window_bounds = array<i64: 2, 32, 512>}, {pipeline_mode = #tpu.pipeline_mode<synchronous>, transform_indices = @transform_24, window_bounds = array<i64: 2, 32, 64>}, {pipeline_mode = #tpu.pipeline_mode<synchronous>, transform_indices = @transform_25, window_bounds = array<i64: 2, 32, 32>}, {pipeline_mode = #tpu.pipeline_mode<synchronous>, transform_indices = @transform_26, window_bounds = array<i64: 2, 1, 512>}, {pipeline_mode = #tpu.pipeline_mode<synchronous>, transform_indices = @transform_27, window_bounds = array<i64: 2, 1, 32>}, {pipeline_mode = #tpu.pipeline_mode<synchronous>, transform_indices = @transform_28, window_bounds = array<i64: 2, 32, 32>}, {pipeline_mode = #tpu.pipeline_mode<synchronous>, transform_indices = @transform_29, window_bounds = array<i64: 2, 1, 32>}, {pipeline_mode = #tpu.pipeline_mode<synchronous>, transform_indices = @transform_30, window_bounds = array<i64: 2, 32, 64>}, {pipeline_mode = #tpu.pipeline_mode<synchronous>, transform_indices = @transform_31, window_bounds = array<i64: 2, 64, 32>}, {pipeline_mode = #tpu.pipeline_mode<synchronous>, transform_indices = @transform_32, window_bounds = array<i64: 2, 1, 64>}, {pipeline_mode = #tpu.pipeline_mode<synchronous>, transform_indices = @transform_33, window_bounds = array<i64: 2, 1, 32>}, {pipeline_mode = #tpu.pipeline_mode<synchronous>, transform_indices = @transform_34, window_bounds = array<i64: 2, 1, 32>}, {pipeline_mode = #tpu.pipeline_mode<synchronous>, transform_indices = @transform_35, window_bounds = array<i64: 2, 1, 32>}, {pipeline_mode = #tpu.pipeline_mode<synchronous>, transform_indices = @transform_36, window_bounds = array<i64: 2, 1, 32>}, {pipeline_mode = #tpu.pipeline_mode<synchronous>, transform_indices = @transform_37, window_bounds = array<i64: 2, 1, 32>}, {pipeline_mode = #tpu.pipeline_mode<synchronous>, transform_indices = @transform_38, window_bounds = array<i64: 32, 64>}, {pipeline_mode = #tpu.pipeline_mode<synchronous>, transform_indices = @transform_39, window_bounds = array<i64: 32, 32>}, {pipeline_mode = #tpu.pipeline_mode<synchronous>, transform_indices = @transform_40, window_bounds = array<i64: 32, 32>}, {pipeline_mode = #tpu.pipeline_mode<synchronous>, transform_indices = @transform_41, window_bounds = array<i64: 1, 32>}, {pipeline_mode = #tpu.pipeline_mode<synchronous>, transform_indices = @transform_42, window_bounds = array<i64: 2, 256, 16>}, {pipeline_mode = #tpu.pipeline_mode<synchronous>, transform_indices = @transform_43, window_bounds = array<i64: 2, 4, 256>}, {pipeline_mode = #tpu.pipeline_mode<synchronous>, transform_indices = @transform_44, window_bounds = array<i64: 2, 16, 256>}, {pipeline_mode = #tpu.pipeline_mode<synchronous>, transform_indices = @transform_45, window_bounds = array<i64: 2, 32, 64>}, {pipeline_mode = #tpu.pipeline_mode<synchronous>, transform_indices = @transform_46, window_bounds = array<i64: 2, 32, 32>}, {pipeline_mode = #tpu.pipeline_mode<synchronous>, transform_indices = @transform_47, window_bounds = array<i64: 2, 1, 256>}, {pipeline_mode = #tpu.pipeline_mode<synchronous>, transform_indices = @transform_48, window_bounds = array<i64: 2, 1, 16>}, {pipeline_mode = #tpu.pipeline_mode<synchronous>, transform_indices = @transform_49, window_bounds = array<i64: 2, 32, 32>}, {pipeline_mode = #tpu.pipeline_mode<synchronous>, transform_indices = @transform_50, window_bounds = array<i64: 2, 1, 32>}, {pipeline_mode = #tpu.pipeline_mode<synchronous>, transform_indices = @transform_51, window_bounds = array<i64: 2, 32, 64>}, {pipeline_mode = #tpu.pipeline_mode<synchronous>, transform_indices = @transform_52, window_bounds = array<i64: 2, 64, 32>}, {pipeline_mode = #tpu.pipeline_mode<synchronous>, transform_indices = @transform_53, window_bounds = array<i64: 2, 1, 64>}, {pipeline_mode = #tpu.pipeline_mode<synchronous>, transform_indices = @transform_54, window_bounds = array<i64: 2, 1, 32>}, {pipeline_mode = #tpu.pipeline_mode<synchronous>, transform_indices = @transform_55, window_bounds = array<i64: 2, 1, 32>}, {pipeline_mode = #tpu.pipeline_mode<synchronous>, transform_indices = @transform_56, window_bounds = array<i64: 2, 1, 32>}, {pipeline_mode = #tpu.pipeline_mode<synchronous>, transform_indices = @transform_57, window_bounds = array<i64: 2, 1, 32>}, {pipeline_mode = #tpu.pipeline_mode<synchronous>, transform_indices = @transform_58, window_bounds = array<i64: 2, 1, 32>}, {transform_indices = @transform_59, window_bounds = array<i64: 1, 4, 8>}]} {
    %c0 = arith.constant 0 : index
    %c0_0 = arith.constant 0 : index
    %0 = vector.load %arg10[%c0, %c0_0] : memref<4x16xf32, #tpu.memory_space<vmem>>, vector<4x16xf32>
    %c0_1 = arith.constant 0 : index
    %c0_2 = arith.constant 0 : index
    %1 = vector.load %arg11[%c0_1, %c0_2] : memref<32x16xf32, #tpu.memory_space<vmem>>, vector<32x16xf32>
    %c0_3 = arith.constant 0 : index
    %c0_4 = arith.constant 0 : index
    %2 = vector.load %arg12[%c0_3, %c0_4] : memref<4x16xf32, #tpu.memory_space<vmem>>, vector<4x16xf32>
    %c0_5 = arith.constant 0 : index
    %c0_6 = arith.constant 0 : index
    %3 = vector.load %arg13[%c0_5, %c0_6] : memref<16x4xf32, #tpu.memory_space<vmem>>, vector<16x4xf32>
    %c0_7 = arith.constant 0 : index
    %c0_8 = arith.constant 0 : index
    %4 = vector.load %arg14[%c0_7, %c0_8] : memref<16x16xf32, #tpu.memory_space<vmem>>, vector<16x16xf32>
    %c0_9 = arith.constant 0 : index
    %c0_10 = arith.constant 0 : index
    %5 = vector.load %arg15[%c0_9, %c0_10] : memref<16x32xf32, #tpu.memory_space<vmem>>, vector<16x32xf32>
    %c0_11 = arith.constant 0 : index
    %c0_12 = arith.constant 0 : index
    %6 = vector.load %arg16[%c0_11, %c0_12] : memref<4x32xf32, #tpu.memory_space<vmem>>, vector<4x32xf32>
    %c0_13 = arith.constant 0 : index
    %c0_14 = arith.constant 0 : index
    %7 = vector.load %arg17[%c0_13, %c0_14] : memref<32x32xf32, #tpu.memory_space<vmem>>, vector<32x32xf32>
    %c0_15 = arith.constant 0 : index
    %c0_16 = arith.constant 0 : index
    %8 = vector.load %arg18[%c0_15, %c0_16] : memref<8x32xf32, #tpu.memory_space<vmem>>, vector<8x32xf32>
    %c0_17 = arith.constant 0 : index
    %c0_18 = arith.constant 0 : index
    %9 = vector.load %arg19[%c0_17, %c0_18] : memref<32x8xf32, #tpu.memory_space<vmem>>, vector<32x8xf32>
    %c0_19 = arith.constant 0 : index
    %c0_20 = arith.constant 0 : index
    %10 = vector.load %arg20[%c0_19, %c0_20] : memref<32x32xf32, #tpu.memory_space<vmem>>, vector<32x32xf32>
    %c0_21 = arith.constant 0 : index
    %c0_22 = arith.constant 0 : index
    %11 = vector.load %arg21[%c0_21, %c0_22] : memref<32x32xf32, #tpu.memory_space<vmem>>, vector<32x32xf32>
    %c0_23 = arith.constant 0 : index
    %c0_24 = arith.constant 0 : index
    %12 = vector.load %arg39[%c0_23, %c0_24] : memref<32x64xf32, #tpu.memory_space<vmem>>, vector<32x64xf32>
    %c0_25 = arith.constant 0 : index
    %c0_26 = arith.constant 0 : index
    %13 = vector.load %arg40[%c0_25, %c0_26] : memref<32x32xf32, #tpu.memory_space<vmem>>, vector<32x32xf32>
    %c0_27 = arith.constant 0 : index
    %c0_28 = arith.constant 0 : index
    %14 = vector.load %arg41[%c0_27, %c0_28] : memref<32x32xf32, #tpu.memory_space<vmem>>, vector<32x32xf32>
    %c0_29 = arith.constant 0 : index
    %c0_30 = arith.constant 0 : index
    %15 = vector.load %arg42[%c0_29, %c0_30] : memref<1x32xf32, #tpu.memory_space<vmem>>, vector<1x32xf32>
    %c0_31 = arith.constant 0 : index
    %c0_32 = arith.constant 0 : index
    %c0_33 = arith.constant 0 : index
    %16 = vector.load %arg1[%c0_31, %c0_32, %c0_33] : memref<1x8x6xf32, #tpu.memory_space<vmem>>, vector<1x8x6xf32>
    %17 = vector.shape_cast %16 : vector<1x8x6xf32> to vector<8x6xf32>
    %c0_34 = arith.constant 0 : index
    %c0_35 = arith.constant 0 : index
    %c0_36 = arith.constant 0 : index
    %18 = vector.load %arg2[%c0_34, %c0_35, %c0_36] : memref<1x4x5xf32, #tpu.memory_space<vmem>>, vector<1x4x5xf32>
    %19 = vector.shape_cast %18 : vector<1x4x5xf32> to vector<4x5xf32>
    %c0_37 = arith.constant 0 : index
    %c0_38 = arith.constant 0 : index
    %c0_39 = arith.constant 0 : index
    %20 = vector.load %arg3[%c0_37, %c0_38, %c0_39] : memref<1x8x4xf32, #tpu.memory_space<vmem>>, vector<1x8x4xf32>
    %21 = vector.shape_cast %20 : vector<1x8x4xf32> to vector<8x4xf32>
    %c0_40 = arith.constant 0 : index
    %c0_41 = arith.constant 0 : index
    %c0_42 = arith.constant 0 : index
    %22 = vector.load %arg4[%c0_40, %c0_41, %c0_42] : memref<1x4x8xf32, #tpu.memory_space<vmem>>, vector<1x4x8xf32>
    %23 = vector.shape_cast %22 : vector<1x4x8xf32> to vector<4x8xf32>
    %c0_43 = arith.constant 0 : index
    %c0_44 = arith.constant 0 : index
    %c0_45 = arith.constant 0 : index
    %24 = vector.load %arg5[%c0_43, %c0_44, %c0_45] : memref<1x4x8xf32, #tpu.memory_space<vmem>>, vector<1x4x8xf32>
    %25 = vector.shape_cast %24 : vector<1x4x8xf32> to vector<4x8xf32>
    %c0_46 = arith.constant 0 : index
    %c0_47 = arith.constant 0 : index
    %26 = vector.load %arg8[%c0_46, %c0_47] : memref<6x32xf32, #tpu.memory_space<vmem>>, vector<6x32xf32>
    %cst = arith.constant dense<0.000000e+00> : vector<8x32xf32>
    %27 = tpu.matmul %17, %26, %cst {dimension_numbers = #tpu.dot_dimension_numbers<[1], [0], [0], [1], [0, 0, 1, 1], [], []>} : vector<8x6xf32>, vector<6x32xf32>, vector<8x32xf32> -> vector<8x32xf32>
    %c0_48 = arith.constant 0 : index
    %c0_49 = arith.constant 0 : index
    %28 = vector.load %arg9[%c0_48, %c0_49] : memref<1x32xf32, #tpu.memory_space<vmem>>, vector<1x32xf32>
    %29 = vector.broadcast %28 : vector<1x32xf32> to vector<8x32xf32>
    %30 = arith.addf %27, %29 : vector<8x32xf32>
    %c0_50 = arith.constant 0 : index
    %c0_51 = arith.constant 0 : index
    %31 = vector.load %arg6[%c0_50, %c0_51] : memref<5x32xf32, #tpu.memory_space<vmem>>, vector<5x32xf32>
    %cst_52 = arith.constant dense<0.000000e+00> : vector<4x32xf32>
    %32 = tpu.matmul %19, %31, %cst_52 {dimension_numbers = #tpu.dot_dimension_numbers<[1], [0], [0], [1], [0, 0, 1, 1], [], []>} : vector<4x5xf32>, vector<5x32xf32>, vector<4x32xf32> -> vector<4x32xf32>
    %c0_53 = arith.constant 0 : index
    %c0_54 = arith.constant 0 : index
    %33 = vector.load %arg7[%c0_53, %c0_54] : memref<1x32xf32, #tpu.memory_space<vmem>>, vector<1x32xf32>
    %34 = vector.broadcast %33 : vector<1x32xf32> to vector<4x32xf32>
    %35 = arith.addf %32, %34 : vector<4x32xf32>
    %c0_55 = arith.constant 0 : index
    %c0_56 = arith.constant 0 : index
    %c0_57 = arith.constant 0 : index
    %36 = vector.load %arg47[%c0_55, %c0_56, %c0_57] : memref<2x32x32xf32, #tpu.memory_space<vmem>>, vector<1x32x32xf32>
    %37 = vector.shape_cast %36 : vector<1x32x32xf32> to vector<32x32xf32>
    %cst_58 = arith.constant dense<0.000000e+00> : vector<8x32xf32>
    %38 = tpu.matmul %30, %37, %cst_58 {dimension_numbers = #tpu.dot_dimension_numbers<[1], [0], [0], [1], [0, 0, 1, 1], [], []>} : vector<8x32xf32>, vector<32x32xf32>, vector<8x32xf32> -> vector<8x32xf32>
    %c0_59 = arith.constant 0 : index
    %c0_60 = arith.constant 0 : index
    %c0_61 = arith.constant 0 : index
    %39 = vector.load %arg46[%c0_59, %c0_60, %c0_61] : memref<2x32x64xf32, #tpu.memory_space<vmem>>, vector<1x32x64xf32>
    %40 = vector.shape_cast %39 : vector<1x32x64xf32> to vector<32x64xf32>
    %cst_62 = arith.constant dense<0.000000e+00> : vector<4x64xf32>
    %41 = tpu.matmul %35, %40, %cst_62 {dimension_numbers = #tpu.dot_dimension_numbers<[1], [0], [0], [1], [0, 0, 1, 1], [], []>} : vector<4x32xf32>, vector<32x64xf32>, vector<4x64xf32> -> vector<4x64xf32>
    %42 = vector.extract_strided_slice %41 {offsets = [0, 0], sizes = [4, 32], strides = [1, 1]} : vector<4x64xf32> to vector<4x32xf32>
    %43 = tpu.transpose %42, [1, 0] : vector<4x32xf32> -> vector<32x4xf32>
    %cst_63 = arith.constant dense<0.000000e+00> : vector<32x16xf32>
    %44 = tpu.matmul %43, %2, %cst_63 {dimension_numbers = #tpu.dot_dimension_numbers<[1], [0], [0], [1], [0, 0, 1, 1], [], []>} : vector<32x4xf32>, vector<4x16xf32>, vector<32x16xf32> -> vector<32x16xf32>
    %45 = arith.mulf %44, %1 : vector<32x16xf32>
    %cst_64 = arith.constant dense<0.000000e+00> : vector<8x16xf32>
    %46 = tpu.matmul %38, %45, %cst_64 {dimension_numbers = #tpu.dot_dimension_numbers<[1], [0], [0], [1], [0, 0, 1, 1], [], []>} : vector<8x32xf32>, vector<32x16xf32>, vector<8x16xf32> -> vector<8x16xf32>
    %c0_65 = arith.constant 0 : index
    %c0_66 = arith.constant 0 : index
    %c0_67 = arith.constant 0 : index
    %47 = vector.load %arg45[%c0_65, %c0_66, %c0_67] : memref<2x16x256xf32, #tpu.memory_space<vmem>>, vector<1x16x256xf32>
    %48 = vector.shape_cast %47 : vector<1x16x256xf32> to vector<16x256xf32>
    %cst_68 = arith.constant dense<0.000000e+00> : vector<8x256xf32>
    %49 = tpu.matmul %46, %48, %cst_68 {dimension_numbers = #tpu.dot_dimension_numbers<[1], [0], [0], [1], [0, 0, 1, 1], [], []>} : vector<8x16xf32>, vector<16x256xf32>, vector<8x256xf32> -> vector<8x256xf32>
    %c0_69 = arith.constant 0 : index
    %c0_70 = arith.constant 0 : index
    %c0_71 = arith.constant 0 : index
    %50 = vector.load %arg44[%c0_69, %c0_70, %c0_71] : memref<2x4x256xf32, #tpu.memory_space<vmem>>, vector<1x4x256xf32>
    %51 = vector.shape_cast %50 : vector<1x4x256xf32> to vector<4x256xf32>
    %cst_72 = arith.constant dense<0.000000e+00> : vector<8x256xf32>
    %52 = tpu.matmul %21, %51, %cst_72 {dimension_numbers = #tpu.dot_dimension_numbers<[1], [0], [0], [1], [0, 0, 1, 1], [], []>} : vector<8x4xf32>, vector<4x256xf32>, vector<8x256xf32> -> vector<8x256xf32>
    %53 = arith.addf %49, %52 : vector<8x256xf32>
    %c0_73 = arith.constant 0 : index
    %c0_74 = arith.constant 0 : index
    %c0_75 = arith.constant 0 : index
    %54 = vector.load %arg48[%c0_73, %c0_74, %c0_75] : memref<2x1x256xf32, #tpu.memory_space<vmem>>, vector<1x1x256xf32>
    %55 = vector.shape_cast %54 : vector<1x1x256xf32> to vector<1x256xf32>
    %56 = vector.broadcast %55 : vector<1x256xf32> to vector<8x256xf32>
    %57 = arith.addf %53, %56 : vector<8x256xf32>
    %cst_76 = arith.constant 0.000000e+00 : f32
    %58 = vector.broadcast %cst_76 : f32 to vector<8x256xf32>
    %59 = arith.maximumf %57, %58 : vector<8x256xf32>
    %c0_77 = arith.constant 0 : index
    %c0_78 = arith.constant 0 : index
    %c0_79 = arith.constant 0 : index
    %60 = vector.load %arg43[%c0_77, %c0_78, %c0_79] : memref<2x256x16xf32, #tpu.memory_space<vmem>>, vector<1x256x16xf32>
    %61 = vector.shape_cast %60 : vector<1x256x16xf32> to vector<256x16xf32>
    %cst_80 = arith.constant dense<0.000000e+00> : vector<8x16xf32>
    %62 = tpu.matmul %59, %61, %cst_80 {dimension_numbers = #tpu.dot_dimension_numbers<[1], [0], [0], [1], [0, 0, 1, 1], [], []>} : vector<8x256xf32>, vector<256x16xf32>, vector<8x16xf32> -> vector<8x16xf32>
    %c0_81 = arith.constant 0 : index
    %c0_82 = arith.constant 0 : index
    %c0_83 = arith.constant 0 : index
    %63 = vector.load %arg49[%c0_81, %c0_82, %c0_83] : memref<2x1x16xf32, #tpu.memory_space<vmem>>, vector<1x1x16xf32>
    %64 = vector.shape_cast %63 : vector<1x1x16xf32> to vector<1x16xf32>
    %65 = vector.broadcast %64 : vector<1x16xf32> to vector<8x16xf32>
    %66 = arith.addf %62, %65 : vector<8x16xf32>
    %cst_84 = arith.constant 0.000000e+00 : f32
    %67 = vector.broadcast %cst_84 : f32 to vector<8x16xf32>
    %68 = vector.extract_strided_slice %66 {offsets = [0, 0], sizes = [8, 4], strides = [1, 1]} : vector<8x16xf32> to vector<8x4xf32>
    %cst_85 = arith.constant dense<0xFF800000> : vector<8xf32>
    %69 = vector.multi_reduction <maximumf>, %68, %cst_85 [1] : vector<8x4xf32> to vector<8xf32>
    %70 = vector.shape_cast %69 : vector<8xf32> to vector<8x1xf32>
    %71 = vector.extract_strided_slice %0 {offsets = [0, 0], sizes = [1, 16], strides = [1, 1]} : vector<4x16xf32> to vector<1x16xf32>
    %72 = vector.broadcast %70 : vector<8x1xf32> to vector<8x16xf32>
    %73 = vector.broadcast %71 : vector<1x16xf32> to vector<8x16xf32>
    %74 = arith.mulf %72, %73 : vector<8x16xf32>
    %75 = arith.addf %67, %74 : vector<8x16xf32>
    %76 = vector.extract_strided_slice %66 {offsets = [0, 4], sizes = [8, 4], strides = [1, 1]} : vector<8x16xf32> to vector<8x4xf32>
    %cst_86 = arith.constant dense<0xFF800000> : vector<8xf32>
    %77 = vector.multi_reduction <maximumf>, %76, %cst_86 [1] : vector<8x4xf32> to vector<8xf32>
    %78 = vector.shape_cast %77 : vector<8xf32> to vector<8x1xf32>
    %79 = vector.extract_strided_slice %0 {offsets = [1, 0], sizes = [1, 16], strides = [1, 1]} : vector<4x16xf32> to vector<1x16xf32>
    %80 = vector.broadcast %78 : vector<8x1xf32> to vector<8x16xf32>
    %81 = vector.broadcast %79 : vector<1x16xf32> to vector<8x16xf32>
    %82 = arith.mulf %80, %81 : vector<8x16xf32>
    %83 = arith.addf %75, %82 : vector<8x16xf32>
    %84 = vector.extract_strided_slice %66 {offsets = [0, 8], sizes = [8, 4], strides = [1, 1]} : vector<8x16xf32> to vector<8x4xf32>
    %cst_87 = arith.constant dense<0xFF800000> : vector<8xf32>
    %85 = vector.multi_reduction <maximumf>, %84, %cst_87 [1] : vector<8x4xf32> to vector<8xf32>
    %86 = vector.shape_cast %85 : vector<8xf32> to vector<8x1xf32>
    %87 = vector.extract_strided_slice %0 {offsets = [2, 0], sizes = [1, 16], strides = [1, 1]} : vector<4x16xf32> to vector<1x16xf32>
    %88 = vector.broadcast %86 : vector<8x1xf32> to vector<8x16xf32>
    %89 = vector.broadcast %87 : vector<1x16xf32> to vector<8x16xf32>
    %90 = arith.mulf %88, %89 : vector<8x16xf32>
    %91 = arith.addf %83, %90 : vector<8x16xf32>
    %92 = vector.extract_strided_slice %66 {offsets = [0, 12], sizes = [8, 4], strides = [1, 1]} : vector<8x16xf32> to vector<8x4xf32>
    %cst_88 = arith.constant dense<0xFF800000> : vector<8xf32>
    %93 = vector.multi_reduction <maximumf>, %92, %cst_88 [1] : vector<8x4xf32> to vector<8xf32>
    %94 = vector.shape_cast %93 : vector<8xf32> to vector<8x1xf32>
    %95 = vector.extract_strided_slice %0 {offsets = [3, 0], sizes = [1, 16], strides = [1, 1]} : vector<4x16xf32> to vector<1x16xf32>
    %96 = vector.broadcast %94 : vector<8x1xf32> to vector<8x16xf32>
    %97 = vector.broadcast %95 : vector<1x16xf32> to vector<8x16xf32>
    %98 = arith.mulf %96, %97 : vector<8x16xf32>
    %99 = arith.addf %91, %98 : vector<8x16xf32>
    %100 = arith.subf %66, %99 : vector<8x16xf32>
    %101 = math.exp %100 : vector<8x16xf32>
    %cst_89 = arith.constant dense<0.000000e+00> : vector<8x16xf32>
    %102 = tpu.matmul %101, %4, %cst_89 {dimension_numbers = #tpu.dot_dimension_numbers<[1], [0], [0], [1], [0, 0, 1, 1], [], []>} : vector<8x16xf32>, vector<16x16xf32>, vector<8x16xf32> -> vector<8x16xf32>
    %103 = tpu.reciprocal %102 {approx = true} : vector<8x16xf32> -> vector<8x16xf32>
    %104 = arith.mulf %101, %103 : vector<8x16xf32>
    %105 = vector.extract_strided_slice %41 {offsets = [0, 32], sizes = [4, 32], strides = [1, 1]} : vector<4x64xf32> to vector<4x32xf32>
    %cst_90 = arith.constant dense<0.000000e+00> : vector<16x32xf32>
    %106 = tpu.matmul %3, %105, %cst_90 {dimension_numbers = #tpu.dot_dimension_numbers<[1], [0], [0], [1], [0, 0, 1, 1], [], []>} : vector<16x4xf32>, vector<4x32xf32>, vector<16x32xf32> -> vector<16x32xf32>
    %107 = arith.mulf %106, %5 : vector<16x32xf32>
    %cst_91 = arith.constant dense<0.000000e+00> : vector<8x32xf32>
    %108 = tpu.matmul %104, %107, %cst_91 {dimension_numbers = #tpu.dot_dimension_numbers<[1], [0], [0], [1], [0, 0, 1, 1], [], []>} : vector<8x16xf32>, vector<16x32xf32>, vector<8x32xf32> -> vector<8x32xf32>
    %c0_92 = arith.constant 0 : index
    %c0_93 = arith.constant 0 : index
    %c0_94 = arith.constant 0 : index
    %109 = vector.load %arg50[%c0_92, %c0_93, %c0_94] : memref<2x32x32xf32, #tpu.memory_space<vmem>>, vector<1x32x32xf32>
    %110 = vector.shape_cast %109 : vector<1x32x32xf32> to vector<32x32xf32>
    %cst_95 = arith.constant dense<0.000000e+00> : vector<8x32xf32>
    %111 = tpu.matmul %108, %110, %cst_95 {dimension_numbers = #tpu.dot_dimension_numbers<[1], [0], [0], [1], [0, 0, 1, 1], [], []>} : vector<8x32xf32>, vector<32x32xf32>, vector<8x32xf32> -> vector<8x32xf32>
    %c0_96 = arith.constant 0 : index
    %c0_97 = arith.constant 0 : index
    %c0_98 = arith.constant 0 : index
    %112 = vector.load %arg51[%c0_96, %c0_97, %c0_98] : memref<2x1x32xf32, #tpu.memory_space<vmem>>, vector<1x1x32xf32>
    %113 = vector.shape_cast %112 : vector<1x1x32xf32> to vector<1x32xf32>
    %114 = vector.broadcast %113 : vector<1x32xf32> to vector<8x32xf32>
    %115 = arith.addf %111, %114 : vector<8x32xf32>
    %c0_99 = arith.constant 0 : index
    %c0_100 = arith.constant 0 : index
    %c0_101 = arith.constant 0 : index
    %116 = vector.load %arg57[%c0_99, %c0_100, %c0_101] : memref<2x1x32xf32, #tpu.memory_space<vmem>>, vector<1x1x32xf32>
    %117 = vector.shape_cast %116 : vector<1x1x32xf32> to vector<1x32xf32>
    %c0_102 = arith.constant 0 : index
    %c0_103 = arith.constant 0 : index
    %c0_104 = arith.constant 0 : index
    %118 = vector.load %arg56[%c0_102, %c0_103, %c0_104] : memref<2x1x32xf32, #tpu.memory_space<vmem>>, vector<1x1x32xf32>
    %119 = vector.shape_cast %118 : vector<1x1x32xf32> to vector<1x32xf32>
    %120 = arith.addf %30, %115 : vector<8x32xf32>
    %cst_105 = arith.constant dense<0.000000e+00> : vector<32xf32>
    %121 = vector.multi_reduction <add>, %120, %cst_105 [0] : vector<8x32xf32> to vector<32xf32>
    %122 = vector.shape_cast %121 : vector<32xf32> to vector<1x32xf32>
    %cst_106 = arith.constant 8.000000e+00 : f32
    %123 = vector.broadcast %cst_106 : f32 to vector<1x32xf32>
    %124 = arith.divf %122, %123 : vector<1x32xf32>
    %125 = vector.broadcast %124 : vector<1x32xf32> to vector<8x32xf32>
    %126 = arith.subf %120, %125 : vector<8x32xf32>
    %127 = arith.mulf %126, %126 : vector<8x32xf32>
    %cst_107 = arith.constant dense<0.000000e+00> : vector<32xf32>
    %128 = vector.multi_reduction <add>, %127, %cst_107 [0] : vector<8x32xf32> to vector<32xf32>
    %129 = vector.shape_cast %128 : vector<32xf32> to vector<1x32xf32>
    %cst_108 = arith.constant 8.000000e+00 : f32
    %130 = vector.broadcast %cst_108 : f32 to vector<1x32xf32>
    %131 = arith.divf %129, %130 : vector<1x32xf32>
    %cst_109 = arith.constant 9.99999974E-6 : f32
    %132 = vector.broadcast %cst_109 : f32 to vector<1x32xf32>
    %133 = arith.addf %131, %132 : vector<1x32xf32>
    %134 = math.rsqrt %133 : vector<1x32xf32>
    %135 = vector.broadcast %134 : vector<1x32xf32> to vector<8x32xf32>
    %136 = arith.mulf %126, %135 : vector<8x32xf32>
    %137 = vector.broadcast %117 : vector<1x32xf32> to vector<8x32xf32>
    %138 = arith.mulf %136, %137 : vector<8x32xf32>
    %139 = vector.broadcast %119 : vector<1x32xf32> to vector<8x32xf32>
    %140 = arith.addf %138, %139 : vector<8x32xf32>
    %c0_110 = arith.constant 0 : index
    %c0_111 = arith.constant 0 : index
    %c0_112 = arith.constant 0 : index
    %141 = vector.load %arg52[%c0_110, %c0_111, %c0_112] : memref<2x32x64xf32, #tpu.memory_space<vmem>>, vector<1x32x64xf32>
    %142 = vector.shape_cast %141 : vector<1x32x64xf32> to vector<32x64xf32>
    %cst_113 = arith.constant dense<0.000000e+00> : vector<8x64xf32>
    %143 = tpu.matmul %140, %142, %cst_113 {dimension_numbers = #tpu.dot_dimension_numbers<[1], [0], [0], [1], [0, 0, 1, 1], [], []>} : vector<8x32xf32>, vector<32x64xf32>, vector<8x64xf32> -> vector<8x64xf32>
    %c0_114 = arith.constant 0 : index
    %c0_115 = arith.constant 0 : index
    %c0_116 = arith.constant 0 : index
    %144 = vector.load %arg54[%c0_114, %c0_115, %c0_116] : memref<2x1x64xf32, #tpu.memory_space<vmem>>, vector<1x1x64xf32>
    %145 = vector.shape_cast %144 : vector<1x1x64xf32> to vector<1x64xf32>
    %146 = vector.broadcast %145 : vector<1x64xf32> to vector<8x64xf32>
    %147 = arith.addf %143, %146 : vector<8x64xf32>
    %cst_117 = arith.constant 0.000000e+00 : f32
    %148 = vector.broadcast %cst_117 : f32 to vector<8x64xf32>
    %149 = arith.maximumf %147, %148 : vector<8x64xf32>
    %c0_118 = arith.constant 0 : index
    %c0_119 = arith.constant 0 : index
    %c0_120 = arith.constant 0 : index
    %150 = vector.load %arg53[%c0_118, %c0_119, %c0_120] : memref<2x64x32xf32, #tpu.memory_space<vmem>>, vector<1x64x32xf32>
    %151 = vector.shape_cast %150 : vector<1x64x32xf32> to vector<64x32xf32>
    %cst_121 = arith.constant dense<0.000000e+00> : vector<8x32xf32>
    %152 = tpu.matmul %149, %151, %cst_121 {dimension_numbers = #tpu.dot_dimension_numbers<[1], [0], [0], [1], [0, 0, 1, 1], [], []>} : vector<8x64xf32>, vector<64x32xf32>, vector<8x32xf32> -> vector<8x32xf32>
    %c0_122 = arith.constant 0 : index
    %c0_123 = arith.constant 0 : index
    %c0_124 = arith.constant 0 : index
    %153 = vector.load %arg55[%c0_122, %c0_123, %c0_124] : memref<2x1x32xf32, #tpu.memory_space<vmem>>, vector<1x1x32xf32>
    %154 = vector.shape_cast %153 : vector<1x1x32xf32> to vector<1x32xf32>
    %155 = vector.broadcast %154 : vector<1x32xf32> to vector<8x32xf32>
    %156 = arith.addf %152, %155 : vector<8x32xf32>
    %c0_125 = arith.constant 0 : index
    %c0_126 = arith.constant 0 : index
    %c0_127 = arith.constant 0 : index
    %157 = vector.load %arg59[%c0_125, %c0_126, %c0_127] : memref<2x1x32xf32, #tpu.memory_space<vmem>>, vector<1x1x32xf32>
    %158 = vector.shape_cast %157 : vector<1x1x32xf32> to vector<1x32xf32>
    %c0_128 = arith.constant 0 : index
    %c0_129 = arith.constant 0 : index
    %c0_130 = arith.constant 0 : index
    %159 = vector.load %arg58[%c0_128, %c0_129, %c0_130] : memref<2x1x32xf32, #tpu.memory_space<vmem>>, vector<1x1x32xf32>
    %160 = vector.shape_cast %159 : vector<1x1x32xf32> to vector<1x32xf32>
    %161 = arith.addf %140, %156 : vector<8x32xf32>
    %cst_131 = arith.constant dense<0.000000e+00> : vector<32xf32>
    %162 = vector.multi_reduction <add>, %161, %cst_131 [0] : vector<8x32xf32> to vector<32xf32>
    %163 = vector.shape_cast %162 : vector<32xf32> to vector<1x32xf32>
    %cst_132 = arith.constant 8.000000e+00 : f32
    %164 = vector.broadcast %cst_132 : f32 to vector<1x32xf32>
    %165 = arith.divf %163, %164 : vector<1x32xf32>
    %166 = vector.broadcast %165 : vector<1x32xf32> to vector<8x32xf32>
    %167 = arith.subf %161, %166 : vector<8x32xf32>
    %168 = arith.mulf %167, %167 : vector<8x32xf32>
    %cst_133 = arith.constant dense<0.000000e+00> : vector<32xf32>
    %169 = vector.multi_reduction <add>, %168, %cst_133 [0] : vector<8x32xf32> to vector<32xf32>
    %170 = vector.shape_cast %169 : vector<32xf32> to vector<1x32xf32>
    %cst_134 = arith.constant 8.000000e+00 : f32
    %171 = vector.broadcast %cst_134 : f32 to vector<1x32xf32>
    %172 = arith.divf %170, %171 : vector<1x32xf32>
    %cst_135 = arith.constant 9.99999974E-6 : f32
    %173 = vector.broadcast %cst_135 : f32 to vector<1x32xf32>
    %174 = arith.addf %172, %173 : vector<1x32xf32>
    %175 = math.rsqrt %174 : vector<1x32xf32>
    %176 = vector.broadcast %175 : vector<1x32xf32> to vector<8x32xf32>
    %177 = arith.mulf %167, %176 : vector<8x32xf32>
    %178 = vector.broadcast %158 : vector<1x32xf32> to vector<8x32xf32>
    %179 = arith.mulf %177, %178 : vector<8x32xf32>
    %180 = vector.broadcast %160 : vector<1x32xf32> to vector<8x32xf32>
    %181 = arith.addf %179, %180 : vector<8x32xf32>
    %c0_136 = arith.constant 0 : index
    %c0_137 = arith.constant 0 : index
    %c0_138 = arith.constant 0 : index
    %182 = vector.load %arg26[%c0_136, %c0_137, %c0_138] : memref<2x32x32xf32, #tpu.memory_space<vmem>>, vector<1x32x32xf32>
    %183 = vector.shape_cast %182 : vector<1x32x32xf32> to vector<32x32xf32>
    %cst_139 = arith.constant dense<0.000000e+00> : vector<4x32xf32>
    %184 = tpu.matmul %35, %183, %cst_139 {dimension_numbers = #tpu.dot_dimension_numbers<[1], [0], [0], [1], [0, 0, 1, 1], [], []>} : vector<4x32xf32>, vector<32x32xf32>, vector<4x32xf32> -> vector<4x32xf32>
    %c0_140 = arith.constant 0 : index
    %c0_141 = arith.constant 0 : index
    %c0_142 = arith.constant 0 : index
    %185 = vector.load %arg25[%c0_140, %c0_141, %c0_142] : memref<2x32x64xf32, #tpu.memory_space<vmem>>, vector<1x32x64xf32>
    %186 = vector.shape_cast %185 : vector<1x32x64xf32> to vector<32x64xf32>
    %cst_143 = arith.constant dense<0.000000e+00> : vector<8x64xf32>
    %187 = tpu.matmul %30, %186, %cst_143 {dimension_numbers = #tpu.dot_dimension_numbers<[1], [0], [0], [1], [0, 0, 1, 1], [], []>} : vector<8x32xf32>, vector<32x64xf32>, vector<8x64xf32> -> vector<8x64xf32>
    %188 = vector.extract_strided_slice %187 {offsets = [0, 0], sizes = [8, 32], strides = [1, 1]} : vector<8x64xf32> to vector<8x32xf32>
    %189 = tpu.transpose %188, [1, 0] : vector<8x32xf32> -> vector<32x8xf32>
    %cst_144 = arith.constant dense<0.000000e+00> : vector<32x32xf32>
    %190 = tpu.matmul %189, %8, %cst_144 {dimension_numbers = #tpu.dot_dimension_numbers<[1], [0], [0], [1], [0, 0, 1, 1], [], []>} : vector<32x8xf32>, vector<8x32xf32>, vector<32x32xf32> -> vector<32x32xf32>
    %191 = arith.mulf %190, %7 : vector<32x32xf32>
    %cst_145 = arith.constant dense<0.000000e+00> : vector<4x32xf32>
    %192 = tpu.matmul %184, %191, %cst_145 {dimension_numbers = #tpu.dot_dimension_numbers<[1], [0], [0], [1], [0, 0, 1, 1], [], []>} : vector<4x32xf32>, vector<32x32xf32>, vector<4x32xf32> -> vector<4x32xf32>
    %c0_146 = arith.constant 0 : index
    %c0_147 = arith.constant 0 : index
    %c0_148 = arith.constant 0 : index
    %193 = vector.load %arg24[%c0_146, %c0_147, %c0_148] : memref<2x32x512xf32, #tpu.memory_space<vmem>>, vector<1x32x512xf32>
    %194 = vector.shape_cast %193 : vector<1x32x512xf32> to vector<32x512xf32>
    %cst_149 = arith.constant dense<0.000000e+00> : vector<4x512xf32>
    %195 = tpu.matmul %192, %194, %cst_149 {dimension_numbers = #tpu.dot_dimension_numbers<[1], [0], [0], [1], [0, 0, 1, 1], [], []>} : vector<4x32xf32>, vector<32x512xf32>, vector<4x512xf32> -> vector<4x512xf32>
    %c0_150 = arith.constant 0 : index
    %c0_151 = arith.constant 0 : index
    %c0_152 = arith.constant 0 : index
    %196 = vector.load %arg23[%c0_150, %c0_151, %c0_152] : memref<2x8x512xf32, #tpu.memory_space<vmem>>, vector<1x8x512xf32>
    %197 = vector.shape_cast %196 : vector<1x8x512xf32> to vector<8x512xf32>
    %cst_153 = arith.constant dense<0.000000e+00> : vector<4x512xf32>
    %198 = tpu.matmul %23, %197, %cst_153 {dimension_numbers = #tpu.dot_dimension_numbers<[1], [0], [0], [1], [0, 0, 1, 1], [], []>} : vector<4x8xf32>, vector<8x512xf32>, vector<4x512xf32> -> vector<4x512xf32>
    %199 = arith.addf %195, %198 : vector<4x512xf32>
    %c0_154 = arith.constant 0 : index
    %c0_155 = arith.constant 0 : index
    %c0_156 = arith.constant 0 : index
    %200 = vector.load %arg27[%c0_154, %c0_155, %c0_156] : memref<2x1x512xf32, #tpu.memory_space<vmem>>, vector<1x1x512xf32>
    %201 = vector.shape_cast %200 : vector<1x1x512xf32> to vector<1x512xf32>
    %202 = vector.broadcast %201 : vector<1x512xf32> to vector<4x512xf32>
    %203 = arith.addf %199, %202 : vector<4x512xf32>
    %cst_157 = arith.constant 0.000000e+00 : f32
    %204 = vector.broadcast %cst_157 : f32 to vector<4x512xf32>
    %205 = arith.maximumf %203, %204 : vector<4x512xf32>
    %c0_158 = arith.constant 0 : index
    %c0_159 = arith.constant 0 : index
    %c0_160 = arith.constant 0 : index
    %206 = vector.load %arg22[%c0_158, %c0_159, %c0_160] : memref<2x512x32xf32, #tpu.memory_space<vmem>>, vector<1x512x32xf32>
    %207 = vector.shape_cast %206 : vector<1x512x32xf32> to vector<512x32xf32>
    %cst_161 = arith.constant dense<0.000000e+00> : vector<4x32xf32>
    %208 = tpu.matmul %205, %207, %cst_161 {dimension_numbers = #tpu.dot_dimension_numbers<[1], [0], [0], [1], [0, 0, 1, 1], [], []>} : vector<4x512xf32>, vector<512x32xf32>, vector<4x32xf32> -> vector<4x32xf32>
    %c0_162 = arith.constant 0 : index
    %c0_163 = arith.constant 0 : index
    %c0_164 = arith.constant 0 : index
    %209 = vector.load %arg28[%c0_162, %c0_163, %c0_164] : memref<2x1x32xf32, #tpu.memory_space<vmem>>, vector<1x1x32xf32>
    %210 = vector.shape_cast %209 : vector<1x1x32xf32> to vector<1x32xf32>
    %211 = vector.broadcast %210 : vector<1x32xf32> to vector<4x32xf32>
    %212 = arith.addf %208, %211 : vector<4x32xf32>
    %cst_165 = arith.constant 0.000000e+00 : f32
    %213 = vector.broadcast %cst_165 : f32 to vector<4x32xf32>
    %214 = vector.extract_strided_slice %212 {offsets = [0, 0], sizes = [4, 8], strides = [1, 1]} : vector<4x32xf32> to vector<4x8xf32>
    %cst_166 = arith.constant dense<0xFF800000> : vector<4xf32>
    %215 = vector.multi_reduction <maximumf>, %214, %cst_166 [1] : vector<4x8xf32> to vector<4xf32>
    %216 = vector.shape_cast %215 : vector<4xf32> to vector<4x1xf32>
    %217 = vector.extract_strided_slice %6 {offsets = [0, 0], sizes = [1, 32], strides = [1, 1]} : vector<4x32xf32> to vector<1x32xf32>
    %218 = vector.broadcast %216 : vector<4x1xf32> to vector<4x32xf32>
    %219 = vector.broadcast %217 : vector<1x32xf32> to vector<4x32xf32>
    %220 = arith.mulf %218, %219 : vector<4x32xf32>
    %221 = arith.addf %213, %220 : vector<4x32xf32>
    %222 = vector.extract_strided_slice %212 {offsets = [0, 8], sizes = [4, 8], strides = [1, 1]} : vector<4x32xf32> to vector<4x8xf32>
    %cst_167 = arith.constant dense<0xFF800000> : vector<4xf32>
    %223 = vector.multi_reduction <maximumf>, %222, %cst_167 [1] : vector<4x8xf32> to vector<4xf32>
    %224 = vector.shape_cast %223 : vector<4xf32> to vector<4x1xf32>
    %225 = vector.extract_strided_slice %6 {offsets = [1, 0], sizes = [1, 32], strides = [1, 1]} : vector<4x32xf32> to vector<1x32xf32>
    %226 = vector.broadcast %224 : vector<4x1xf32> to vector<4x32xf32>
    %227 = vector.broadcast %225 : vector<1x32xf32> to vector<4x32xf32>
    %228 = arith.mulf %226, %227 : vector<4x32xf32>
    %229 = arith.addf %221, %228 : vector<4x32xf32>
    %230 = vector.extract_strided_slice %212 {offsets = [0, 16], sizes = [4, 8], strides = [1, 1]} : vector<4x32xf32> to vector<4x8xf32>
    %cst_168 = arith.constant dense<0xFF800000> : vector<4xf32>
    %231 = vector.multi_reduction <maximumf>, %230, %cst_168 [1] : vector<4x8xf32> to vector<4xf32>
    %232 = vector.shape_cast %231 : vector<4xf32> to vector<4x1xf32>
    %233 = vector.extract_strided_slice %6 {offsets = [2, 0], sizes = [1, 32], strides = [1, 1]} : vector<4x32xf32> to vector<1x32xf32>
    %234 = vector.broadcast %232 : vector<4x1xf32> to vector<4x32xf32>
    %235 = vector.broadcast %233 : vector<1x32xf32> to vector<4x32xf32>
    %236 = arith.mulf %234, %235 : vector<4x32xf32>
    %237 = arith.addf %229, %236 : vector<4x32xf32>
    %238 = vector.extract_strided_slice %212 {offsets = [0, 24], sizes = [4, 8], strides = [1, 1]} : vector<4x32xf32> to vector<4x8xf32>
    %cst_169 = arith.constant dense<0xFF800000> : vector<4xf32>
    %239 = vector.multi_reduction <maximumf>, %238, %cst_169 [1] : vector<4x8xf32> to vector<4xf32>
    %240 = vector.shape_cast %239 : vector<4xf32> to vector<4x1xf32>
    %241 = vector.extract_strided_slice %6 {offsets = [3, 0], sizes = [1, 32], strides = [1, 1]} : vector<4x32xf32> to vector<1x32xf32>
    %242 = vector.broadcast %240 : vector<4x1xf32> to vector<4x32xf32>
    %243 = vector.broadcast %241 : vector<1x32xf32> to vector<4x32xf32>
    %244 = arith.mulf %242, %243 : vector<4x32xf32>
    %245 = arith.addf %237, %244 : vector<4x32xf32>
    %246 = arith.subf %212, %245 : vector<4x32xf32>
    %247 = math.exp %246 : vector<4x32xf32>
    %cst_170 = arith.constant dense<0.000000e+00> : vector<4x32xf32>
    %248 = tpu.matmul %247, %10, %cst_170 {dimension_numbers = #tpu.dot_dimension_numbers<[1], [0], [0], [1], [0, 0, 1, 1], [], []>} : vector<4x32xf32>, vector<32x32xf32>, vector<4x32xf32> -> vector<4x32xf32>
    %249 = tpu.reciprocal %248 {approx = true} : vector<4x32xf32> -> vector<4x32xf32>
    %250 = arith.mulf %247, %249 : vector<4x32xf32>
    %251 = vector.extract_strided_slice %187 {offsets = [0, 32], sizes = [8, 32], strides = [1, 1]} : vector<8x64xf32> to vector<8x32xf32>
    %cst_171 = arith.constant dense<0.000000e+00> : vector<32x32xf32>
    %252 = tpu.matmul %9, %251, %cst_171 {dimension_numbers = #tpu.dot_dimension_numbers<[1], [0], [0], [1], [0, 0, 1, 1], [], []>} : vector<32x8xf32>, vector<8x32xf32>, vector<32x32xf32> -> vector<32x32xf32>
    %253 = arith.mulf %252, %11 : vector<32x32xf32>
    %cst_172 = arith.constant dense<0.000000e+00> : vector<4x32xf32>
    %254 = tpu.matmul %250, %253, %cst_172 {dimension_numbers = #tpu.dot_dimension_numbers<[1], [0], [0], [1], [0, 0, 1, 1], [], []>} : vector<4x32xf32>, vector<32x32xf32>, vector<4x32xf32> -> vector<4x32xf32>
    %c0_173 = arith.constant 0 : index
    %c0_174 = arith.constant 0 : index
    %c0_175 = arith.constant 0 : index
    %255 = vector.load %arg29[%c0_173, %c0_174, %c0_175] : memref<2x32x32xf32, #tpu.memory_space<vmem>>, vector<1x32x32xf32>
    %256 = vector.shape_cast %255 : vector<1x32x32xf32> to vector<32x32xf32>
    %cst_176 = arith.constant dense<0.000000e+00> : vector<4x32xf32>
    %257 = tpu.matmul %254, %256, %cst_176 {dimension_numbers = #tpu.dot_dimension_numbers<[1], [0], [0], [1], [0, 0, 1, 1], [], []>} : vector<4x32xf32>, vector<32x32xf32>, vector<4x32xf32> -> vector<4x32xf32>
    %c0_177 = arith.constant 0 : index
    %c0_178 = arith.constant 0 : index
    %c0_179 = arith.constant 0 : index
    %258 = vector.load %arg30[%c0_177, %c0_178, %c0_179] : memref<2x1x32xf32, #tpu.memory_space<vmem>>, vector<1x1x32xf32>
    %259 = vector.shape_cast %258 : vector<1x1x32xf32> to vector<1x32xf32>
    %260 = vector.broadcast %259 : vector<1x32xf32> to vector<4x32xf32>
    %261 = arith.addf %257, %260 : vector<4x32xf32>
    %c0_180 = arith.constant 0 : index
    %c0_181 = arith.constant 0 : index
    %c0_182 = arith.constant 0 : index
    %262 = vector.load %arg36[%c0_180, %c0_181, %c0_182] : memref<2x1x32xf32, #tpu.memory_space<vmem>>, vector<1x1x32xf32>
    %263 = vector.shape_cast %262 : vector<1x1x32xf32> to vector<1x32xf32>
    %c0_183 = arith.constant 0 : index
    %c0_184 = arith.constant 0 : index
    %c0_185 = arith.constant 0 : index
    %264 = vector.load %arg35[%c0_183, %c0_184, %c0_185] : memref<2x1x32xf32, #tpu.memory_space<vmem>>, vector<1x1x32xf32>
    %265 = vector.shape_cast %264 : vector<1x1x32xf32> to vector<1x32xf32>
    %266 = arith.addf %35, %261 : vector<4x32xf32>
    %cst_186 = arith.constant dense<0.000000e+00> : vector<32xf32>
    %267 = vector.multi_reduction <add>, %266, %cst_186 [0] : vector<4x32xf32> to vector<32xf32>
    %268 = vector.shape_cast %267 : vector<32xf32> to vector<1x32xf32>
    %cst_187 = arith.constant 4.000000e+00 : f32
    %269 = vector.broadcast %cst_187 : f32 to vector<1x32xf32>
    %270 = arith.divf %268, %269 : vector<1x32xf32>
    %271 = vector.broadcast %270 : vector<1x32xf32> to vector<4x32xf32>
    %272 = arith.subf %266, %271 : vector<4x32xf32>
    %273 = arith.mulf %272, %272 : vector<4x32xf32>
    %cst_188 = arith.constant dense<0.000000e+00> : vector<32xf32>
    %274 = vector.multi_reduction <add>, %273, %cst_188 [0] : vector<4x32xf32> to vector<32xf32>
    %275 = vector.shape_cast %274 : vector<32xf32> to vector<1x32xf32>
    %cst_189 = arith.constant 4.000000e+00 : f32
    %276 = vector.broadcast %cst_189 : f32 to vector<1x32xf32>
    %277 = arith.divf %275, %276 : vector<1x32xf32>
    %cst_190 = arith.constant 9.99999974E-6 : f32
    %278 = vector.broadcast %cst_190 : f32 to vector<1x32xf32>
    %279 = arith.addf %277, %278 : vector<1x32xf32>
    %280 = math.rsqrt %279 : vector<1x32xf32>
    %281 = vector.broadcast %280 : vector<1x32xf32> to vector<4x32xf32>
    %282 = arith.mulf %272, %281 : vector<4x32xf32>
    %283 = vector.broadcast %263 : vector<1x32xf32> to vector<4x32xf32>
    %284 = arith.mulf %282, %283 : vector<4x32xf32>
    %285 = vector.broadcast %265 : vector<1x32xf32> to vector<4x32xf32>
    %286 = arith.addf %284, %285 : vector<4x32xf32>
    %c0_191 = arith.constant 0 : index
    %c0_192 = arith.constant 0 : index
    %c0_193 = arith.constant 0 : index
    %287 = vector.load %arg31[%c0_191, %c0_192, %c0_193] : memref<2x32x64xf32, #tpu.memory_space<vmem>>, vector<1x32x64xf32>
    %288 = vector.shape_cast %287 : vector<1x32x64xf32> to vector<32x64xf32>
    %cst_194 = arith.constant dense<0.000000e+00> : vector<4x64xf32>
    %289 = tpu.matmul %286, %288, %cst_194 {dimension_numbers = #tpu.dot_dimension_numbers<[1], [0], [0], [1], [0, 0, 1, 1], [], []>} : vector<4x32xf32>, vector<32x64xf32>, vector<4x64xf32> -> vector<4x64xf32>
    %c0_195 = arith.constant 0 : index
    %c0_196 = arith.constant 0 : index
    %c0_197 = arith.constant 0 : index
    %290 = vector.load %arg33[%c0_195, %c0_196, %c0_197] : memref<2x1x64xf32, #tpu.memory_space<vmem>>, vector<1x1x64xf32>
    %291 = vector.shape_cast %290 : vector<1x1x64xf32> to vector<1x64xf32>
    %292 = vector.broadcast %291 : vector<1x64xf32> to vector<4x64xf32>
    %293 = arith.addf %289, %292 : vector<4x64xf32>
    %cst_198 = arith.constant 0.000000e+00 : f32
    %294 = vector.broadcast %cst_198 : f32 to vector<4x64xf32>
    %295 = arith.maximumf %293, %294 : vector<4x64xf32>
    %c0_199 = arith.constant 0 : index
    %c0_200 = arith.constant 0 : index
    %c0_201 = arith.constant 0 : index
    %296 = vector.load %arg32[%c0_199, %c0_200, %c0_201] : memref<2x64x32xf32, #tpu.memory_space<vmem>>, vector<1x64x32xf32>
    %297 = vector.shape_cast %296 : vector<1x64x32xf32> to vector<64x32xf32>
    %cst_202 = arith.constant dense<0.000000e+00> : vector<4x32xf32>
    %298 = tpu.matmul %295, %297, %cst_202 {dimension_numbers = #tpu.dot_dimension_numbers<[1], [0], [0], [1], [0, 0, 1, 1], [], []>} : vector<4x64xf32>, vector<64x32xf32>, vector<4x32xf32> -> vector<4x32xf32>
    %c0_203 = arith.constant 0 : index
    %c0_204 = arith.constant 0 : index
    %c0_205 = arith.constant 0 : index
    %299 = vector.load %arg34[%c0_203, %c0_204, %c0_205] : memref<2x1x32xf32, #tpu.memory_space<vmem>>, vector<1x1x32xf32>
    %300 = vector.shape_cast %299 : vector<1x1x32xf32> to vector<1x32xf32>
    %301 = vector.broadcast %300 : vector<1x32xf32> to vector<4x32xf32>
    %302 = arith.addf %298, %301 : vector<4x32xf32>
    %c0_206 = arith.constant 0 : index
    %c0_207 = arith.constant 0 : index
    %c0_208 = arith.constant 0 : index
    %303 = vector.load %arg38[%c0_206, %c0_207, %c0_208] : memref<2x1x32xf32, #tpu.memory_space<vmem>>, vector<1x1x32xf32>
    %304 = vector.shape_cast %303 : vector<1x1x32xf32> to vector<1x32xf32>
    %c0_209 = arith.constant 0 : index
    %c0_210 = arith.constant 0 : index
    %c0_211 = arith.constant 0 : index
    %305 = vector.load %arg37[%c0_209, %c0_210, %c0_211] : memref<2x1x32xf32, #tpu.memory_space<vmem>>, vector<1x1x32xf32>
    %306 = vector.shape_cast %305 : vector<1x1x32xf32> to vector<1x32xf32>
    %307 = arith.addf %286, %302 : vector<4x32xf32>
    %cst_212 = arith.constant dense<0.000000e+00> : vector<32xf32>
    %308 = vector.multi_reduction <add>, %307, %cst_212 [0] : vector<4x32xf32> to vector<32xf32>
    %309 = vector.shape_cast %308 : vector<32xf32> to vector<1x32xf32>
    %cst_213 = arith.constant 4.000000e+00 : f32
    %310 = vector.broadcast %cst_213 : f32 to vector<1x32xf32>
    %311 = arith.divf %309, %310 : vector<1x32xf32>
    %312 = vector.broadcast %311 : vector<1x32xf32> to vector<4x32xf32>
    %313 = arith.subf %307, %312 : vector<4x32xf32>
    %314 = arith.mulf %313, %313 : vector<4x32xf32>
    %cst_214 = arith.constant dense<0.000000e+00> : vector<32xf32>
    %315 = vector.multi_reduction <add>, %314, %cst_214 [0] : vector<4x32xf32> to vector<32xf32>
    %316 = vector.shape_cast %315 : vector<32xf32> to vector<1x32xf32>
    %cst_215 = arith.constant 4.000000e+00 : f32
    %317 = vector.broadcast %cst_215 : f32 to vector<1x32xf32>
    %318 = arith.divf %316, %317 : vector<1x32xf32>
    %cst_216 = arith.constant 9.99999974E-6 : f32
    %319 = vector.broadcast %cst_216 : f32 to vector<1x32xf32>
    %320 = arith.addf %318, %319 : vector<1x32xf32>
    %321 = math.rsqrt %320 : vector<1x32xf32>
    %322 = vector.broadcast %321 : vector<1x32xf32> to vector<4x32xf32>
    %323 = arith.mulf %313, %322 : vector<4x32xf32>
    %324 = vector.broadcast %304 : vector<1x32xf32> to vector<4x32xf32>
    %325 = arith.mulf %323, %324 : vector<4x32xf32>
    %326 = vector.broadcast %306 : vector<1x32xf32> to vector<4x32xf32>
    %327 = arith.addf %325, %326 : vector<4x32xf32>
    %c1 = arith.constant 1 : index
    %c0_217 = arith.constant 0 : index
    %c0_218 = arith.constant 0 : index
    %328 = vector.load %arg47[%c1, %c0_217, %c0_218] : memref<2x32x32xf32, #tpu.memory_space<vmem>>, vector<1x32x32xf32>
    %329 = vector.shape_cast %328 : vector<1x32x32xf32> to vector<32x32xf32>
    %cst_219 = arith.constant dense<0.000000e+00> : vector<8x32xf32>
    %330 = tpu.matmul %181, %329, %cst_219 {dimension_numbers = #tpu.dot_dimension_numbers<[1], [0], [0], [1], [0, 0, 1, 1], [], []>} : vector<8x32xf32>, vector<32x32xf32>, vector<8x32xf32> -> vector<8x32xf32>
    %c1_220 = arith.constant 1 : index
    %c0_221 = arith.constant 0 : index
    %c0_222 = arith.constant 0 : index
    %331 = vector.load %arg46[%c1_220, %c0_221, %c0_222] : memref<2x32x64xf32, #tpu.memory_space<vmem>>, vector<1x32x64xf32>
    %332 = vector.shape_cast %331 : vector<1x32x64xf32> to vector<32x64xf32>
    %cst_223 = arith.constant dense<0.000000e+00> : vector<4x64xf32>
    %333 = tpu.matmul %327, %332, %cst_223 {dimension_numbers = #tpu.dot_dimension_numbers<[1], [0], [0], [1], [0, 0, 1, 1], [], []>} : vector<4x32xf32>, vector<32x64xf32>, vector<4x64xf32> -> vector<4x64xf32>
    %334 = vector.extract_strided_slice %333 {offsets = [0, 0], sizes = [4, 32], strides = [1, 1]} : vector<4x64xf32> to vector<4x32xf32>
    %335 = tpu.transpose %334, [1, 0] : vector<4x32xf32> -> vector<32x4xf32>
    %cst_224 = arith.constant dense<0.000000e+00> : vector<32x16xf32>
    %336 = tpu.matmul %335, %2, %cst_224 {dimension_numbers = #tpu.dot_dimension_numbers<[1], [0], [0], [1], [0, 0, 1, 1], [], []>} : vector<32x4xf32>, vector<4x16xf32>, vector<32x16xf32> -> vector<32x16xf32>
    %337 = arith.mulf %336, %1 : vector<32x16xf32>
    %cst_225 = arith.constant dense<0.000000e+00> : vector<8x16xf32>
    %338 = tpu.matmul %330, %337, %cst_225 {dimension_numbers = #tpu.dot_dimension_numbers<[1], [0], [0], [1], [0, 0, 1, 1], [], []>} : vector<8x32xf32>, vector<32x16xf32>, vector<8x16xf32> -> vector<8x16xf32>
    %c1_226 = arith.constant 1 : index
    %c0_227 = arith.constant 0 : index
    %c0_228 = arith.constant 0 : index
    %339 = vector.load %arg45[%c1_226, %c0_227, %c0_228] : memref<2x16x256xf32, #tpu.memory_space<vmem>>, vector<1x16x256xf32>
    %340 = vector.shape_cast %339 : vector<1x16x256xf32> to vector<16x256xf32>
    %cst_229 = arith.constant dense<0.000000e+00> : vector<8x256xf32>
    %341 = tpu.matmul %338, %340, %cst_229 {dimension_numbers = #tpu.dot_dimension_numbers<[1], [0], [0], [1], [0, 0, 1, 1], [], []>} : vector<8x16xf32>, vector<16x256xf32>, vector<8x256xf32> -> vector<8x256xf32>
    %c1_230 = arith.constant 1 : index
    %c0_231 = arith.constant 0 : index
    %c0_232 = arith.constant 0 : index
    %342 = vector.load %arg44[%c1_230, %c0_231, %c0_232] : memref<2x4x256xf32, #tpu.memory_space<vmem>>, vector<1x4x256xf32>
    %343 = vector.shape_cast %342 : vector<1x4x256xf32> to vector<4x256xf32>
    %cst_233 = arith.constant dense<0.000000e+00> : vector<8x256xf32>
    %344 = tpu.matmul %21, %343, %cst_233 {dimension_numbers = #tpu.dot_dimension_numbers<[1], [0], [0], [1], [0, 0, 1, 1], [], []>} : vector<8x4xf32>, vector<4x256xf32>, vector<8x256xf32> -> vector<8x256xf32>
    %345 = arith.addf %341, %344 : vector<8x256xf32>
    %c1_234 = arith.constant 1 : index
    %c0_235 = arith.constant 0 : index
    %c0_236 = arith.constant 0 : index
    %346 = vector.load %arg48[%c1_234, %c0_235, %c0_236] : memref<2x1x256xf32, #tpu.memory_space<vmem>>, vector<1x1x256xf32>
    %347 = vector.shape_cast %346 : vector<1x1x256xf32> to vector<1x256xf32>
    %348 = vector.broadcast %347 : vector<1x256xf32> to vector<8x256xf32>
    %349 = arith.addf %345, %348 : vector<8x256xf32>
    %cst_237 = arith.constant 0.000000e+00 : f32
    %350 = vector.broadcast %cst_237 : f32 to vector<8x256xf32>
    %351 = arith.maximumf %349, %350 : vector<8x256xf32>
    %c1_238 = arith.constant 1 : index
    %c0_239 = arith.constant 0 : index
    %c0_240 = arith.constant 0 : index
    %352 = vector.load %arg43[%c1_238, %c0_239, %c0_240] : memref<2x256x16xf32, #tpu.memory_space<vmem>>, vector<1x256x16xf32>
    %353 = vector.shape_cast %352 : vector<1x256x16xf32> to vector<256x16xf32>
    %cst_241 = arith.constant dense<0.000000e+00> : vector<8x16xf32>
    %354 = tpu.matmul %351, %353, %cst_241 {dimension_numbers = #tpu.dot_dimension_numbers<[1], [0], [0], [1], [0, 0, 1, 1], [], []>} : vector<8x256xf32>, vector<256x16xf32>, vector<8x16xf32> -> vector<8x16xf32>
    %c1_242 = arith.constant 1 : index
    %c0_243 = arith.constant 0 : index
    %c0_244 = arith.constant 0 : index
    %355 = vector.load %arg49[%c1_242, %c0_243, %c0_244] : memref<2x1x16xf32, #tpu.memory_space<vmem>>, vector<1x1x16xf32>
    %356 = vector.shape_cast %355 : vector<1x1x16xf32> to vector<1x16xf32>
    %357 = vector.broadcast %356 : vector<1x16xf32> to vector<8x16xf32>
    %358 = arith.addf %354, %357 : vector<8x16xf32>
    %cst_245 = arith.constant 0.000000e+00 : f32
    %359 = vector.broadcast %cst_245 : f32 to vector<8x16xf32>
    %360 = vector.extract_strided_slice %358 {offsets = [0, 0], sizes = [8, 4], strides = [1, 1]} : vector<8x16xf32> to vector<8x4xf32>
    %cst_246 = arith.constant dense<0xFF800000> : vector<8xf32>
    %361 = vector.multi_reduction <maximumf>, %360, %cst_246 [1] : vector<8x4xf32> to vector<8xf32>
    %362 = vector.shape_cast %361 : vector<8xf32> to vector<8x1xf32>
    %363 = vector.extract_strided_slice %0 {offsets = [0, 0], sizes = [1, 16], strides = [1, 1]} : vector<4x16xf32> to vector<1x16xf32>
    %364 = vector.broadcast %362 : vector<8x1xf32> to vector<8x16xf32>
    %365 = vector.broadcast %363 : vector<1x16xf32> to vector<8x16xf32>
    %366 = arith.mulf %364, %365 : vector<8x16xf32>
    %367 = arith.addf %359, %366 : vector<8x16xf32>
    %368 = vector.extract_strided_slice %358 {offsets = [0, 4], sizes = [8, 4], strides = [1, 1]} : vector<8x16xf32> to vector<8x4xf32>
    %cst_247 = arith.constant dense<0xFF800000> : vector<8xf32>
    %369 = vector.multi_reduction <maximumf>, %368, %cst_247 [1] : vector<8x4xf32> to vector<8xf32>
    %370 = vector.shape_cast %369 : vector<8xf32> to vector<8x1xf32>
    %371 = vector.extract_strided_slice %0 {offsets = [1, 0], sizes = [1, 16], strides = [1, 1]} : vector<4x16xf32> to vector<1x16xf32>
    %372 = vector.broadcast %370 : vector<8x1xf32> to vector<8x16xf32>
    %373 = vector.broadcast %371 : vector<1x16xf32> to vector<8x16xf32>
    %374 = arith.mulf %372, %373 : vector<8x16xf32>
    %375 = arith.addf %367, %374 : vector<8x16xf32>
    %376 = vector.extract_strided_slice %358 {offsets = [0, 8], sizes = [8, 4], strides = [1, 1]} : vector<8x16xf32> to vector<8x4xf32>
    %cst_248 = arith.constant dense<0xFF800000> : vector<8xf32>
    %377 = vector.multi_reduction <maximumf>, %376, %cst_248 [1] : vector<8x4xf32> to vector<8xf32>
    %378 = vector.shape_cast %377 : vector<8xf32> to vector<8x1xf32>
    %379 = vector.extract_strided_slice %0 {offsets = [2, 0], sizes = [1, 16], strides = [1, 1]} : vector<4x16xf32> to vector<1x16xf32>
    %380 = vector.broadcast %378 : vector<8x1xf32> to vector<8x16xf32>
    %381 = vector.broadcast %379 : vector<1x16xf32> to vector<8x16xf32>
    %382 = arith.mulf %380, %381 : vector<8x16xf32>
    %383 = arith.addf %375, %382 : vector<8x16xf32>
    %384 = vector.extract_strided_slice %358 {offsets = [0, 12], sizes = [8, 4], strides = [1, 1]} : vector<8x16xf32> to vector<8x4xf32>
    %cst_249 = arith.constant dense<0xFF800000> : vector<8xf32>
    %385 = vector.multi_reduction <maximumf>, %384, %cst_249 [1] : vector<8x4xf32> to vector<8xf32>
    %386 = vector.shape_cast %385 : vector<8xf32> to vector<8x1xf32>
    %387 = vector.extract_strided_slice %0 {offsets = [3, 0], sizes = [1, 16], strides = [1, 1]} : vector<4x16xf32> to vector<1x16xf32>
    %388 = vector.broadcast %386 : vector<8x1xf32> to vector<8x16xf32>
    %389 = vector.broadcast %387 : vector<1x16xf32> to vector<8x16xf32>
    %390 = arith.mulf %388, %389 : vector<8x16xf32>
    %391 = arith.addf %383, %390 : vector<8x16xf32>
    %392 = arith.subf %358, %391 : vector<8x16xf32>
    %393 = math.exp %392 : vector<8x16xf32>
    %cst_250 = arith.constant dense<0.000000e+00> : vector<8x16xf32>
    %394 = tpu.matmul %393, %4, %cst_250 {dimension_numbers = #tpu.dot_dimension_numbers<[1], [0], [0], [1], [0, 0, 1, 1], [], []>} : vector<8x16xf32>, vector<16x16xf32>, vector<8x16xf32> -> vector<8x16xf32>
    %395 = tpu.reciprocal %394 {approx = true} : vector<8x16xf32> -> vector<8x16xf32>
    %396 = arith.mulf %393, %395 : vector<8x16xf32>
    %397 = vector.extract_strided_slice %333 {offsets = [0, 32], sizes = [4, 32], strides = [1, 1]} : vector<4x64xf32> to vector<4x32xf32>
    %cst_251 = arith.constant dense<0.000000e+00> : vector<16x32xf32>
    %398 = tpu.matmul %3, %397, %cst_251 {dimension_numbers = #tpu.dot_dimension_numbers<[1], [0], [0], [1], [0, 0, 1, 1], [], []>} : vector<16x4xf32>, vector<4x32xf32>, vector<16x32xf32> -> vector<16x32xf32>
    %399 = arith.mulf %398, %5 : vector<16x32xf32>
    %cst_252 = arith.constant dense<0.000000e+00> : vector<8x32xf32>
    %400 = tpu.matmul %396, %399, %cst_252 {dimension_numbers = #tpu.dot_dimension_numbers<[1], [0], [0], [1], [0, 0, 1, 1], [], []>} : vector<8x16xf32>, vector<16x32xf32>, vector<8x32xf32> -> vector<8x32xf32>
    %c1_253 = arith.constant 1 : index
    %c0_254 = arith.constant 0 : index
    %c0_255 = arith.constant 0 : index
    %401 = vector.load %arg50[%c1_253, %c0_254, %c0_255] : memref<2x32x32xf32, #tpu.memory_space<vmem>>, vector<1x32x32xf32>
    %402 = vector.shape_cast %401 : vector<1x32x32xf32> to vector<32x32xf32>
    %cst_256 = arith.constant dense<0.000000e+00> : vector<8x32xf32>
    %403 = tpu.matmul %400, %402, %cst_256 {dimension_numbers = #tpu.dot_dimension_numbers<[1], [0], [0], [1], [0, 0, 1, 1], [], []>} : vector<8x32xf32>, vector<32x32xf32>, vector<8x32xf32> -> vector<8x32xf32>
    %c1_257 = arith.constant 1 : index
    %c0_258 = arith.constant 0 : index
    %c0_259 = arith.constant 0 : index
    %404 = vector.load %arg51[%c1_257, %c0_258, %c0_259] : memref<2x1x32xf32, #tpu.memory_space<vmem>>, vector<1x1x32xf32>
    %405 = vector.shape_cast %404 : vector<1x1x32xf32> to vector<1x32xf32>
    %406 = vector.broadcast %405 : vector<1x32xf32> to vector<8x32xf32>
    %407 = arith.addf %403, %406 : vector<8x32xf32>
    %c1_260 = arith.constant 1 : index
    %c0_261 = arith.constant 0 : index
    %c0_262 = arith.constant 0 : index
    %408 = vector.load %arg57[%c1_260, %c0_261, %c0_262] : memref<2x1x32xf32, #tpu.memory_space<vmem>>, vector<1x1x32xf32>
    %409 = vector.shape_cast %408 : vector<1x1x32xf32> to vector<1x32xf32>
    %c1_263 = arith.constant 1 : index
    %c0_264 = arith.constant 0 : index
    %c0_265 = arith.constant 0 : index
    %410 = vector.load %arg56[%c1_263, %c0_264, %c0_265] : memref<2x1x32xf32, #tpu.memory_space<vmem>>, vector<1x1x32xf32>
    %411 = vector.shape_cast %410 : vector<1x1x32xf32> to vector<1x32xf32>
    %412 = arith.addf %181, %407 : vector<8x32xf32>
    %cst_266 = arith.constant dense<0.000000e+00> : vector<32xf32>
    %413 = vector.multi_reduction <add>, %412, %cst_266 [0] : vector<8x32xf32> to vector<32xf32>
    %414 = vector.shape_cast %413 : vector<32xf32> to vector<1x32xf32>
    %cst_267 = arith.constant 8.000000e+00 : f32
    %415 = vector.broadcast %cst_267 : f32 to vector<1x32xf32>
    %416 = arith.divf %414, %415 : vector<1x32xf32>
    %417 = vector.broadcast %416 : vector<1x32xf32> to vector<8x32xf32>
    %418 = arith.subf %412, %417 : vector<8x32xf32>
    %419 = arith.mulf %418, %418 : vector<8x32xf32>
    %cst_268 = arith.constant dense<0.000000e+00> : vector<32xf32>
    %420 = vector.multi_reduction <add>, %419, %cst_268 [0] : vector<8x32xf32> to vector<32xf32>
    %421 = vector.shape_cast %420 : vector<32xf32> to vector<1x32xf32>
    %cst_269 = arith.constant 8.000000e+00 : f32
    %422 = vector.broadcast %cst_269 : f32 to vector<1x32xf32>
    %423 = arith.divf %421, %422 : vector<1x32xf32>
    %cst_270 = arith.constant 9.99999974E-6 : f32
    %424 = vector.broadcast %cst_270 : f32 to vector<1x32xf32>
    %425 = arith.addf %423, %424 : vector<1x32xf32>
    %426 = math.rsqrt %425 : vector<1x32xf32>
    %427 = vector.broadcast %426 : vector<1x32xf32> to vector<8x32xf32>
    %428 = arith.mulf %418, %427 : vector<8x32xf32>
    %429 = vector.broadcast %409 : vector<1x32xf32> to vector<8x32xf32>
    %430 = arith.mulf %428, %429 : vector<8x32xf32>
    %431 = vector.broadcast %411 : vector<1x32xf32> to vector<8x32xf32>
    %432 = arith.addf %430, %431 : vector<8x32xf32>
    %c1_271 = arith.constant 1 : index
    %c0_272 = arith.constant 0 : index
    %c0_273 = arith.constant 0 : index
    %433 = vector.load %arg52[%c1_271, %c0_272, %c0_273] : memref<2x32x64xf32, #tpu.memory_space<vmem>>, vector<1x32x64xf32>
    %434 = vector.shape_cast %433 : vector<1x32x64xf32> to vector<32x64xf32>
    %cst_274 = arith.constant dense<0.000000e+00> : vector<8x64xf32>
    %435 = tpu.matmul %432, %434, %cst_274 {dimension_numbers = #tpu.dot_dimension_numbers<[1], [0], [0], [1], [0, 0, 1, 1], [], []>} : vector<8x32xf32>, vector<32x64xf32>, vector<8x64xf32> -> vector<8x64xf32>
    %c1_275 = arith.constant 1 : index
    %c0_276 = arith.constant 0 : index
    %c0_277 = arith.constant 0 : index
    %436 = vector.load %arg54[%c1_275, %c0_276, %c0_277] : memref<2x1x64xf32, #tpu.memory_space<vmem>>, vector<1x1x64xf32>
    %437 = vector.shape_cast %436 : vector<1x1x64xf32> to vector<1x64xf32>
    %438 = vector.broadcast %437 : vector<1x64xf32> to vector<8x64xf32>
    %439 = arith.addf %435, %438 : vector<8x64xf32>
    %cst_278 = arith.constant 0.000000e+00 : f32
    %440 = vector.broadcast %cst_278 : f32 to vector<8x64xf32>
    %441 = arith.maximumf %439, %440 : vector<8x64xf32>
    %c1_279 = arith.constant 1 : index
    %c0_280 = arith.constant 0 : index
    %c0_281 = arith.constant 0 : index
    %442 = vector.load %arg53[%c1_279, %c0_280, %c0_281] : memref<2x64x32xf32, #tpu.memory_space<vmem>>, vector<1x64x32xf32>
    %443 = vector.shape_cast %442 : vector<1x64x32xf32> to vector<64x32xf32>
    %cst_282 = arith.constant dense<0.000000e+00> : vector<8x32xf32>
    %444 = tpu.matmul %441, %443, %cst_282 {dimension_numbers = #tpu.dot_dimension_numbers<[1], [0], [0], [1], [0, 0, 1, 1], [], []>} : vector<8x64xf32>, vector<64x32xf32>, vector<8x32xf32> -> vector<8x32xf32>
    %c1_283 = arith.constant 1 : index
    %c0_284 = arith.constant 0 : index
    %c0_285 = arith.constant 0 : index
    %445 = vector.load %arg55[%c1_283, %c0_284, %c0_285] : memref<2x1x32xf32, #tpu.memory_space<vmem>>, vector<1x1x32xf32>
    %446 = vector.shape_cast %445 : vector<1x1x32xf32> to vector<1x32xf32>
    %447 = vector.broadcast %446 : vector<1x32xf32> to vector<8x32xf32>
    %448 = arith.addf %444, %447 : vector<8x32xf32>
    %c1_286 = arith.constant 1 : index
    %c0_287 = arith.constant 0 : index
    %c0_288 = arith.constant 0 : index
    %449 = vector.load %arg59[%c1_286, %c0_287, %c0_288] : memref<2x1x32xf32, #tpu.memory_space<vmem>>, vector<1x1x32xf32>
    %450 = vector.shape_cast %449 : vector<1x1x32xf32> to vector<1x32xf32>
    %c1_289 = arith.constant 1 : index
    %c0_290 = arith.constant 0 : index
    %c0_291 = arith.constant 0 : index
    %451 = vector.load %arg58[%c1_289, %c0_290, %c0_291] : memref<2x1x32xf32, #tpu.memory_space<vmem>>, vector<1x1x32xf32>
    %452 = vector.shape_cast %451 : vector<1x1x32xf32> to vector<1x32xf32>
    %453 = arith.addf %432, %448 : vector<8x32xf32>
    %cst_292 = arith.constant dense<0.000000e+00> : vector<32xf32>
    %454 = vector.multi_reduction <add>, %453, %cst_292 [0] : vector<8x32xf32> to vector<32xf32>
    %455 = vector.shape_cast %454 : vector<32xf32> to vector<1x32xf32>
    %cst_293 = arith.constant 8.000000e+00 : f32
    %456 = vector.broadcast %cst_293 : f32 to vector<1x32xf32>
    %457 = arith.divf %455, %456 : vector<1x32xf32>
    %458 = vector.broadcast %457 : vector<1x32xf32> to vector<8x32xf32>
    %459 = arith.subf %453, %458 : vector<8x32xf32>
    %460 = arith.mulf %459, %459 : vector<8x32xf32>
    %cst_294 = arith.constant dense<0.000000e+00> : vector<32xf32>
    %461 = vector.multi_reduction <add>, %460, %cst_294 [0] : vector<8x32xf32> to vector<32xf32>
    %462 = vector.shape_cast %461 : vector<32xf32> to vector<1x32xf32>
    %cst_295 = arith.constant 8.000000e+00 : f32
    %463 = vector.broadcast %cst_295 : f32 to vector<1x32xf32>
    %464 = arith.divf %462, %463 : vector<1x32xf32>
    %cst_296 = arith.constant 9.99999974E-6 : f32
    %465 = vector.broadcast %cst_296 : f32 to vector<1x32xf32>
    %466 = arith.addf %464, %465 : vector<1x32xf32>
    %467 = math.rsqrt %466 : vector<1x32xf32>
    %468 = vector.broadcast %467 : vector<1x32xf32> to vector<8x32xf32>
    %469 = arith.mulf %459, %468 : vector<8x32xf32>
    %470 = vector.broadcast %450 : vector<1x32xf32> to vector<8x32xf32>
    %471 = arith.mulf %469, %470 : vector<8x32xf32>
    %472 = vector.broadcast %452 : vector<1x32xf32> to vector<8x32xf32>
    %473 = arith.addf %471, %472 : vector<8x32xf32>
    %c1_297 = arith.constant 1 : index
    %c0_298 = arith.constant 0 : index
    %c0_299 = arith.constant 0 : index
    %474 = vector.load %arg26[%c1_297, %c0_298, %c0_299] : memref<2x32x32xf32, #tpu.memory_space<vmem>>, vector<1x32x32xf32>
    %475 = vector.shape_cast %474 : vector<1x32x32xf32> to vector<32x32xf32>
    %cst_300 = arith.constant dense<0.000000e+00> : vector<4x32xf32>
    %476 = tpu.matmul %327, %475, %cst_300 {dimension_numbers = #tpu.dot_dimension_numbers<[1], [0], [0], [1], [0, 0, 1, 1], [], []>} : vector<4x32xf32>, vector<32x32xf32>, vector<4x32xf32> -> vector<4x32xf32>
    %c1_301 = arith.constant 1 : index
    %c0_302 = arith.constant 0 : index
    %c0_303 = arith.constant 0 : index
    %477 = vector.load %arg25[%c1_301, %c0_302, %c0_303] : memref<2x32x64xf32, #tpu.memory_space<vmem>>, vector<1x32x64xf32>
    %478 = vector.shape_cast %477 : vector<1x32x64xf32> to vector<32x64xf32>
    %cst_304 = arith.constant dense<0.000000e+00> : vector<8x64xf32>
    %479 = tpu.matmul %181, %478, %cst_304 {dimension_numbers = #tpu.dot_dimension_numbers<[1], [0], [0], [1], [0, 0, 1, 1], [], []>} : vector<8x32xf32>, vector<32x64xf32>, vector<8x64xf32> -> vector<8x64xf32>
    %480 = vector.extract_strided_slice %479 {offsets = [0, 0], sizes = [8, 32], strides = [1, 1]} : vector<8x64xf32> to vector<8x32xf32>
    %481 = tpu.transpose %480, [1, 0] : vector<8x32xf32> -> vector<32x8xf32>
    %cst_305 = arith.constant dense<0.000000e+00> : vector<32x32xf32>
    %482 = tpu.matmul %481, %8, %cst_305 {dimension_numbers = #tpu.dot_dimension_numbers<[1], [0], [0], [1], [0, 0, 1, 1], [], []>} : vector<32x8xf32>, vector<8x32xf32>, vector<32x32xf32> -> vector<32x32xf32>
    %483 = arith.mulf %482, %7 : vector<32x32xf32>
    %cst_306 = arith.constant dense<0.000000e+00> : vector<4x32xf32>
    %484 = tpu.matmul %476, %483, %cst_306 {dimension_numbers = #tpu.dot_dimension_numbers<[1], [0], [0], [1], [0, 0, 1, 1], [], []>} : vector<4x32xf32>, vector<32x32xf32>, vector<4x32xf32> -> vector<4x32xf32>
    %c1_307 = arith.constant 1 : index
    %c0_308 = arith.constant 0 : index
    %c0_309 = arith.constant 0 : index
    %485 = vector.load %arg24[%c1_307, %c0_308, %c0_309] : memref<2x32x512xf32, #tpu.memory_space<vmem>>, vector<1x32x512xf32>
    %486 = vector.shape_cast %485 : vector<1x32x512xf32> to vector<32x512xf32>
    %cst_310 = arith.constant dense<0.000000e+00> : vector<4x512xf32>
    %487 = tpu.matmul %484, %486, %cst_310 {dimension_numbers = #tpu.dot_dimension_numbers<[1], [0], [0], [1], [0, 0, 1, 1], [], []>} : vector<4x32xf32>, vector<32x512xf32>, vector<4x512xf32> -> vector<4x512xf32>
    %c1_311 = arith.constant 1 : index
    %c0_312 = arith.constant 0 : index
    %c0_313 = arith.constant 0 : index
    %488 = vector.load %arg23[%c1_311, %c0_312, %c0_313] : memref<2x8x512xf32, #tpu.memory_space<vmem>>, vector<1x8x512xf32>
    %489 = vector.shape_cast %488 : vector<1x8x512xf32> to vector<8x512xf32>
    %cst_314 = arith.constant dense<0.000000e+00> : vector<4x512xf32>
    %490 = tpu.matmul %23, %489, %cst_314 {dimension_numbers = #tpu.dot_dimension_numbers<[1], [0], [0], [1], [0, 0, 1, 1], [], []>} : vector<4x8xf32>, vector<8x512xf32>, vector<4x512xf32> -> vector<4x512xf32>
    %491 = arith.addf %487, %490 : vector<4x512xf32>
    %c1_315 = arith.constant 1 : index
    %c0_316 = arith.constant 0 : index
    %c0_317 = arith.constant 0 : index
    %492 = vector.load %arg27[%c1_315, %c0_316, %c0_317] : memref<2x1x512xf32, #tpu.memory_space<vmem>>, vector<1x1x512xf32>
    %493 = vector.shape_cast %492 : vector<1x1x512xf32> to vector<1x512xf32>
    %494 = vector.broadcast %493 : vector<1x512xf32> to vector<4x512xf32>
    %495 = arith.addf %491, %494 : vector<4x512xf32>
    %cst_318 = arith.constant 0.000000e+00 : f32
    %496 = vector.broadcast %cst_318 : f32 to vector<4x512xf32>
    %497 = arith.maximumf %495, %496 : vector<4x512xf32>
    %c1_319 = arith.constant 1 : index
    %c0_320 = arith.constant 0 : index
    %c0_321 = arith.constant 0 : index
    %498 = vector.load %arg22[%c1_319, %c0_320, %c0_321] : memref<2x512x32xf32, #tpu.memory_space<vmem>>, vector<1x512x32xf32>
    %499 = vector.shape_cast %498 : vector<1x512x32xf32> to vector<512x32xf32>
    %cst_322 = arith.constant dense<0.000000e+00> : vector<4x32xf32>
    %500 = tpu.matmul %497, %499, %cst_322 {dimension_numbers = #tpu.dot_dimension_numbers<[1], [0], [0], [1], [0, 0, 1, 1], [], []>} : vector<4x512xf32>, vector<512x32xf32>, vector<4x32xf32> -> vector<4x32xf32>
    %c1_323 = arith.constant 1 : index
    %c0_324 = arith.constant 0 : index
    %c0_325 = arith.constant 0 : index
    %501 = vector.load %arg28[%c1_323, %c0_324, %c0_325] : memref<2x1x32xf32, #tpu.memory_space<vmem>>, vector<1x1x32xf32>
    %502 = vector.shape_cast %501 : vector<1x1x32xf32> to vector<1x32xf32>
    %503 = vector.broadcast %502 : vector<1x32xf32> to vector<4x32xf32>
    %504 = arith.addf %500, %503 : vector<4x32xf32>
    %cst_326 = arith.constant 0.000000e+00 : f32
    %505 = vector.broadcast %cst_326 : f32 to vector<4x32xf32>
    %506 = vector.extract_strided_slice %504 {offsets = [0, 0], sizes = [4, 8], strides = [1, 1]} : vector<4x32xf32> to vector<4x8xf32>
    %cst_327 = arith.constant dense<0xFF800000> : vector<4xf32>
    %507 = vector.multi_reduction <maximumf>, %506, %cst_327 [1] : vector<4x8xf32> to vector<4xf32>
    %508 = vector.shape_cast %507 : vector<4xf32> to vector<4x1xf32>
    %509 = vector.extract_strided_slice %6 {offsets = [0, 0], sizes = [1, 32], strides = [1, 1]} : vector<4x32xf32> to vector<1x32xf32>
    %510 = vector.broadcast %508 : vector<4x1xf32> to vector<4x32xf32>
    %511 = vector.broadcast %509 : vector<1x32xf32> to vector<4x32xf32>
    %512 = arith.mulf %510, %511 : vector<4x32xf32>
    %513 = arith.addf %505, %512 : vector<4x32xf32>
    %514 = vector.extract_strided_slice %504 {offsets = [0, 8], sizes = [4, 8], strides = [1, 1]} : vector<4x32xf32> to vector<4x8xf32>
    %cst_328 = arith.constant dense<0xFF800000> : vector<4xf32>
    %515 = vector.multi_reduction <maximumf>, %514, %cst_328 [1] : vector<4x8xf32> to vector<4xf32>
    %516 = vector.shape_cast %515 : vector<4xf32> to vector<4x1xf32>
    %517 = vector.extract_strided_slice %6 {offsets = [1, 0], sizes = [1, 32], strides = [1, 1]} : vector<4x32xf32> to vector<1x32xf32>
    %518 = vector.broadcast %516 : vector<4x1xf32> to vector<4x32xf32>
    %519 = vector.broadcast %517 : vector<1x32xf32> to vector<4x32xf32>
    %520 = arith.mulf %518, %519 : vector<4x32xf32>
    %521 = arith.addf %513, %520 : vector<4x32xf32>
    %522 = vector.extract_strided_slice %504 {offsets = [0, 16], sizes = [4, 8], strides = [1, 1]} : vector<4x32xf32> to vector<4x8xf32>
    %cst_329 = arith.constant dense<0xFF800000> : vector<4xf32>
    %523 = vector.multi_reduction <maximumf>, %522, %cst_329 [1] : vector<4x8xf32> to vector<4xf32>
    %524 = vector.shape_cast %523 : vector<4xf32> to vector<4x1xf32>
    %525 = vector.extract_strided_slice %6 {offsets = [2, 0], sizes = [1, 32], strides = [1, 1]} : vector<4x32xf32> to vector<1x32xf32>
    %526 = vector.broadcast %524 : vector<4x1xf32> to vector<4x32xf32>
    %527 = vector.broadcast %525 : vector<1x32xf32> to vector<4x32xf32>
    %528 = arith.mulf %526, %527 : vector<4x32xf32>
    %529 = arith.addf %521, %528 : vector<4x32xf32>
    %530 = vector.extract_strided_slice %504 {offsets = [0, 24], sizes = [4, 8], strides = [1, 1]} : vector<4x32xf32> to vector<4x8xf32>
    %cst_330 = arith.constant dense<0xFF800000> : vector<4xf32>
    %531 = vector.multi_reduction <maximumf>, %530, %cst_330 [1] : vector<4x8xf32> to vector<4xf32>
    %532 = vector.shape_cast %531 : vector<4xf32> to vector<4x1xf32>
    %533 = vector.extract_strided_slice %6 {offsets = [3, 0], sizes = [1, 32], strides = [1, 1]} : vector<4x32xf32> to vector<1x32xf32>
    %534 = vector.broadcast %532 : vector<4x1xf32> to vector<4x32xf32>
    %535 = vector.broadcast %533 : vector<1x32xf32> to vector<4x32xf32>
    %536 = arith.mulf %534, %535 : vector<4x32xf32>
    %537 = arith.addf %529, %536 : vector<4x32xf32>
    %538 = arith.subf %504, %537 : vector<4x32xf32>
    %539 = math.exp %538 : vector<4x32xf32>
    %cst_331 = arith.constant dense<0.000000e+00> : vector<4x32xf32>
    %540 = tpu.matmul %539, %10, %cst_331 {dimension_numbers = #tpu.dot_dimension_numbers<[1], [0], [0], [1], [0, 0, 1, 1], [], []>} : vector<4x32xf32>, vector<32x32xf32>, vector<4x32xf32> -> vector<4x32xf32>
    %541 = tpu.reciprocal %540 {approx = true} : vector<4x32xf32> -> vector<4x32xf32>
    %542 = arith.mulf %539, %541 : vector<4x32xf32>
    %543 = vector.extract_strided_slice %479 {offsets = [0, 32], sizes = [8, 32], strides = [1, 1]} : vector<8x64xf32> to vector<8x32xf32>
    %cst_332 = arith.constant dense<0.000000e+00> : vector<32x32xf32>
    %544 = tpu.matmul %9, %543, %cst_332 {dimension_numbers = #tpu.dot_dimension_numbers<[1], [0], [0], [1], [0, 0, 1, 1], [], []>} : vector<32x8xf32>, vector<8x32xf32>, vector<32x32xf32> -> vector<32x32xf32>
    %545 = arith.mulf %544, %11 : vector<32x32xf32>
    %cst_333 = arith.constant dense<0.000000e+00> : vector<4x32xf32>
    %546 = tpu.matmul %542, %545, %cst_333 {dimension_numbers = #tpu.dot_dimension_numbers<[1], [0], [0], [1], [0, 0, 1, 1], [], []>} : vector<4x32xf32>, vector<32x32xf32>, vector<4x32xf32> -> vector<4x32xf32>
    %c1_334 = arith.constant 1 : index
    %c0_335 = arith.constant 0 : index
    %c0_336 = arith.constant 0 : index
    %547 = vector.load %arg29[%c1_334, %c0_335, %c0_336] : memref<2x32x32xf32, #tpu.memory_space<vmem>>, vector<1x32x32xf32>
    %548 = vector.shape_cast %547 : vector<1x32x32xf32> to vector<32x32xf32>
    %cst_337 = arith.constant dense<0.000000e+00> : vector<4x32xf32>
    %549 = tpu.matmul %546, %548, %cst_337 {dimension_numbers = #tpu.dot_dimension_numbers<[1], [0], [0], [1], [0, 0, 1, 1], [], []>} : vector<4x32xf32>, vector<32x32xf32>, vector<4x32xf32> -> vector<4x32xf32>
    %c1_338 = arith.constant 1 : index
    %c0_339 = arith.constant 0 : index
    %c0_340 = arith.constant 0 : index
    %550 = vector.load %arg30[%c1_338, %c0_339, %c0_340] : memref<2x1x32xf32, #tpu.memory_space<vmem>>, vector<1x1x32xf32>
    %551 = vector.shape_cast %550 : vector<1x1x32xf32> to vector<1x32xf32>
    %552 = vector.broadcast %551 : vector<1x32xf32> to vector<4x32xf32>
    %553 = arith.addf %549, %552 : vector<4x32xf32>
    %c1_341 = arith.constant 1 : index
    %c0_342 = arith.constant 0 : index
    %c0_343 = arith.constant 0 : index
    %554 = vector.load %arg36[%c1_341, %c0_342, %c0_343] : memref<2x1x32xf32, #tpu.memory_space<vmem>>, vector<1x1x32xf32>
    %555 = vector.shape_cast %554 : vector<1x1x32xf32> to vector<1x32xf32>
    %c1_344 = arith.constant 1 : index
    %c0_345 = arith.constant 0 : index
    %c0_346 = arith.constant 0 : index
    %556 = vector.load %arg35[%c1_344, %c0_345, %c0_346] : memref<2x1x32xf32, #tpu.memory_space<vmem>>, vector<1x1x32xf32>
    %557 = vector.shape_cast %556 : vector<1x1x32xf32> to vector<1x32xf32>
    %558 = arith.addf %327, %553 : vector<4x32xf32>
    %cst_347 = arith.constant dense<0.000000e+00> : vector<32xf32>
    %559 = vector.multi_reduction <add>, %558, %cst_347 [0] : vector<4x32xf32> to vector<32xf32>
    %560 = vector.shape_cast %559 : vector<32xf32> to vector<1x32xf32>
    %cst_348 = arith.constant 4.000000e+00 : f32
    %561 = vector.broadcast %cst_348 : f32 to vector<1x32xf32>
    %562 = arith.divf %560, %561 : vector<1x32xf32>
    %563 = vector.broadcast %562 : vector<1x32xf32> to vector<4x32xf32>
    %564 = arith.subf %558, %563 : vector<4x32xf32>
    %565 = arith.mulf %564, %564 : vector<4x32xf32>
    %cst_349 = arith.constant dense<0.000000e+00> : vector<32xf32>
    %566 = vector.multi_reduction <add>, %565, %cst_349 [0] : vector<4x32xf32> to vector<32xf32>
    %567 = vector.shape_cast %566 : vector<32xf32> to vector<1x32xf32>
    %cst_350 = arith.constant 4.000000e+00 : f32
    %568 = vector.broadcast %cst_350 : f32 to vector<1x32xf32>
    %569 = arith.divf %567, %568 : vector<1x32xf32>
    %cst_351 = arith.constant 9.99999974E-6 : f32
    %570 = vector.broadcast %cst_351 : f32 to vector<1x32xf32>
    %571 = arith.addf %569, %570 : vector<1x32xf32>
    %572 = math.rsqrt %571 : vector<1x32xf32>
    %573 = vector.broadcast %572 : vector<1x32xf32> to vector<4x32xf32>
    %574 = arith.mulf %564, %573 : vector<4x32xf32>
    %575 = vector.broadcast %555 : vector<1x32xf32> to vector<4x32xf32>
    %576 = arith.mulf %574, %575 : vector<4x32xf32>
    %577 = vector.broadcast %557 : vector<1x32xf32> to vector<4x32xf32>
    %578 = arith.addf %576, %577 : vector<4x32xf32>
    %c1_352 = arith.constant 1 : index
    %c0_353 = arith.constant 0 : index
    %c0_354 = arith.constant 0 : index
    %579 = vector.load %arg31[%c1_352, %c0_353, %c0_354] : memref<2x32x64xf32, #tpu.memory_space<vmem>>, vector<1x32x64xf32>
    %580 = vector.shape_cast %579 : vector<1x32x64xf32> to vector<32x64xf32>
    %cst_355 = arith.constant dense<0.000000e+00> : vector<4x64xf32>
    %581 = tpu.matmul %578, %580, %cst_355 {dimension_numbers = #tpu.dot_dimension_numbers<[1], [0], [0], [1], [0, 0, 1, 1], [], []>} : vector<4x32xf32>, vector<32x64xf32>, vector<4x64xf32> -> vector<4x64xf32>
    %c1_356 = arith.constant 1 : index
    %c0_357 = arith.constant 0 : index
    %c0_358 = arith.constant 0 : index
    %582 = vector.load %arg33[%c1_356, %c0_357, %c0_358] : memref<2x1x64xf32, #tpu.memory_space<vmem>>, vector<1x1x64xf32>
    %583 = vector.shape_cast %582 : vector<1x1x64xf32> to vector<1x64xf32>
    %584 = vector.broadcast %583 : vector<1x64xf32> to vector<4x64xf32>
    %585 = arith.addf %581, %584 : vector<4x64xf32>
    %cst_359 = arith.constant 0.000000e+00 : f32
    %586 = vector.broadcast %cst_359 : f32 to vector<4x64xf32>
    %587 = arith.maximumf %585, %586 : vector<4x64xf32>
    %c1_360 = arith.constant 1 : index
    %c0_361 = arith.constant 0 : index
    %c0_362 = arith.constant 0 : index
    %588 = vector.load %arg32[%c1_360, %c0_361, %c0_362] : memref<2x64x32xf32, #tpu.memory_space<vmem>>, vector<1x64x32xf32>
    %589 = vector.shape_cast %588 : vector<1x64x32xf32> to vector<64x32xf32>
    %cst_363 = arith.constant dense<0.000000e+00> : vector<4x32xf32>
    %590 = tpu.matmul %587, %589, %cst_363 {dimension_numbers = #tpu.dot_dimension_numbers<[1], [0], [0], [1], [0, 0, 1, 1], [], []>} : vector<4x64xf32>, vector<64x32xf32>, vector<4x32xf32> -> vector<4x32xf32>
    %c1_364 = arith.constant 1 : index
    %c0_365 = arith.constant 0 : index
    %c0_366 = arith.constant 0 : index
    %591 = vector.load %arg34[%c1_364, %c0_365, %c0_366] : memref<2x1x32xf32, #tpu.memory_space<vmem>>, vector<1x1x32xf32>
    %592 = vector.shape_cast %591 : vector<1x1x32xf32> to vector<1x32xf32>
    %593 = vector.broadcast %592 : vector<1x32xf32> to vector<4x32xf32>
    %594 = arith.addf %590, %593 : vector<4x32xf32>
    %c1_367 = arith.constant 1 : index
    %c0_368 = arith.constant 0 : index
    %c0_369 = arith.constant 0 : index
    %595 = vector.load %arg38[%c1_367, %c0_368, %c0_369] : memref<2x1x32xf32, #tpu.memory_space<vmem>>, vector<1x1x32xf32>
    %596 = vector.shape_cast %595 : vector<1x1x32xf32> to vector<1x32xf32>
    %c1_370 = arith.constant 1 : index
    %c0_371 = arith.constant 0 : index
    %c0_372 = arith.constant 0 : index
    %597 = vector.load %arg37[%c1_370, %c0_371, %c0_372] : memref<2x1x32xf32, #tpu.memory_space<vmem>>, vector<1x1x32xf32>
    %598 = vector.shape_cast %597 : vector<1x1x32xf32> to vector<1x32xf32>
    %599 = arith.addf %578, %594 : vector<4x32xf32>
    %cst_373 = arith.constant dense<0.000000e+00> : vector<32xf32>
    %600 = vector.multi_reduction <add>, %599, %cst_373 [0] : vector<4x32xf32> to vector<32xf32>
    %601 = vector.shape_cast %600 : vector<32xf32> to vector<1x32xf32>
    %cst_374 = arith.constant 4.000000e+00 : f32
    %602 = vector.broadcast %cst_374 : f32 to vector<1x32xf32>
    %603 = arith.divf %601, %602 : vector<1x32xf32>
    %604 = vector.broadcast %603 : vector<1x32xf32> to vector<4x32xf32>
    %605 = arith.subf %599, %604 : vector<4x32xf32>
    %606 = arith.mulf %605, %605 : vector<4x32xf32>
    %cst_375 = arith.constant dense<0.000000e+00> : vector<32xf32>
    %607 = vector.multi_reduction <add>, %606, %cst_375 [0] : vector<4x32xf32> to vector<32xf32>
    %608 = vector.shape_cast %607 : vector<32xf32> to vector<1x32xf32>
    %cst_376 = arith.constant 4.000000e+00 : f32
    %609 = vector.broadcast %cst_376 : f32 to vector<1x32xf32>
    %610 = arith.divf %608, %609 : vector<1x32xf32>
    %cst_377 = arith.constant 9.99999974E-6 : f32
    %611 = vector.broadcast %cst_377 : f32 to vector<1x32xf32>
    %612 = arith.addf %610, %611 : vector<1x32xf32>
    %613 = math.rsqrt %612 : vector<1x32xf32>
    %614 = vector.broadcast %613 : vector<1x32xf32> to vector<4x32xf32>
    %615 = arith.mulf %605, %614 : vector<4x32xf32>
    %616 = vector.broadcast %596 : vector<1x32xf32> to vector<4x32xf32>
    %617 = arith.mulf %615, %616 : vector<4x32xf32>
    %618 = vector.broadcast %598 : vector<1x32xf32> to vector<4x32xf32>
    %619 = arith.addf %617, %618 : vector<4x32xf32>
    %cst_378 = arith.constant dense<0.000000e+00> : vector<8x64xf32>
    %620 = tpu.matmul %473, %12, %cst_378 {dimension_numbers = #tpu.dot_dimension_numbers<[1], [0], [0], [1], [0, 0, 1, 1], [], []>} : vector<8x32xf32>, vector<32x64xf32>, vector<8x64xf32> -> vector<8x64xf32>
    %cst_379 = arith.constant dense<0.000000e+00> : vector<4x32xf32>
    %621 = tpu.matmul %619, %13, %cst_379 {dimension_numbers = #tpu.dot_dimension_numbers<[1], [0], [0], [1], [0, 0, 1, 1], [], []>} : vector<4x32xf32>, vector<32x32xf32>, vector<4x32xf32> -> vector<4x32xf32>
    %622 = vector.extract_strided_slice %620 {offsets = [0, 0], sizes = [8, 32], strides = [1, 1]} : vector<8x64xf32> to vector<8x32xf32>
    %623 = tpu.transpose %622, [1, 0] : vector<8x32xf32> -> vector<32x8xf32>
    %cst_380 = arith.constant dense<0.000000e+00> : vector<32x32xf32>
    %624 = tpu.matmul %623, %8, %cst_380 {dimension_numbers = #tpu.dot_dimension_numbers<[1], [0], [0], [1], [0, 0, 1, 1], [], []>} : vector<32x8xf32>, vector<8x32xf32>, vector<32x32xf32> -> vector<32x32xf32>
    %625 = arith.mulf %624, %7 : vector<32x32xf32>
    %cst_381 = arith.constant dense<0.000000e+00> : vector<4x32xf32>
    %626 = tpu.matmul %621, %625, %cst_381 {dimension_numbers = #tpu.dot_dimension_numbers<[1], [0], [0], [1], [0, 0, 1, 1], [], []>} : vector<4x32xf32>, vector<32x32xf32>, vector<4x32xf32> -> vector<4x32xf32>
    %cst_382 = arith.constant 0.000000e+00 : f32
    %627 = vector.broadcast %cst_382 : f32 to vector<4x32xf32>
    %628 = vector.extract_strided_slice %626 {offsets = [0, 0], sizes = [4, 8], strides = [1, 1]} : vector<4x32xf32> to vector<4x8xf32>
    %cst_383 = arith.constant dense<0xFF800000> : vector<4xf32>
    %629 = vector.multi_reduction <maximumf>, %628, %cst_383 [1] : vector<4x8xf32> to vector<4xf32>
    %630 = vector.shape_cast %629 : vector<4xf32> to vector<4x1xf32>
    %631 = vector.extract_strided_slice %6 {offsets = [0, 0], sizes = [1, 32], strides = [1, 1]} : vector<4x32xf32> to vector<1x32xf32>
    %632 = vector.broadcast %630 : vector<4x1xf32> to vector<4x32xf32>
    %633 = vector.broadcast %631 : vector<1x32xf32> to vector<4x32xf32>
    %634 = arith.mulf %632, %633 : vector<4x32xf32>
    %635 = arith.addf %627, %634 : vector<4x32xf32>
    %636 = vector.extract_strided_slice %626 {offsets = [0, 8], sizes = [4, 8], strides = [1, 1]} : vector<4x32xf32> to vector<4x8xf32>
    %cst_384 = arith.constant dense<0xFF800000> : vector<4xf32>
    %637 = vector.multi_reduction <maximumf>, %636, %cst_384 [1] : vector<4x8xf32> to vector<4xf32>
    %638 = vector.shape_cast %637 : vector<4xf32> to vector<4x1xf32>
    %639 = vector.extract_strided_slice %6 {offsets = [1, 0], sizes = [1, 32], strides = [1, 1]} : vector<4x32xf32> to vector<1x32xf32>
    %640 = vector.broadcast %638 : vector<4x1xf32> to vector<4x32xf32>
    %641 = vector.broadcast %639 : vector<1x32xf32> to vector<4x32xf32>
    %642 = arith.mulf %640, %641 : vector<4x32xf32>
    %643 = arith.addf %635, %642 : vector<4x32xf32>
    %644 = vector.extract_strided_slice %626 {offsets = [0, 16], sizes = [4, 8], strides = [1, 1]} : vector<4x32xf32> to vector<4x8xf32>
    %cst_385 = arith.constant dense<0xFF800000> : vector<4xf32>
    %645 = vector.multi_reduction <maximumf>, %644, %cst_385 [1] : vector<4x8xf32> to vector<4xf32>
    %646 = vector.shape_cast %645 : vector<4xf32> to vector<4x1xf32>
    %647 = vector.extract_strided_slice %6 {offsets = [2, 0], sizes = [1, 32], strides = [1, 1]} : vector<4x32xf32> to vector<1x32xf32>
    %648 = vector.broadcast %646 : vector<4x1xf32> to vector<4x32xf32>
    %649 = vector.broadcast %647 : vector<1x32xf32> to vector<4x32xf32>
    %650 = arith.mulf %648, %649 : vector<4x32xf32>
    %651 = arith.addf %643, %650 : vector<4x32xf32>
    %652 = vector.extract_strided_slice %626 {offsets = [0, 24], sizes = [4, 8], strides = [1, 1]} : vector<4x32xf32> to vector<4x8xf32>
    %cst_386 = arith.constant dense<0xFF800000> : vector<4xf32>
    %653 = vector.multi_reduction <maximumf>, %652, %cst_386 [1] : vector<4x8xf32> to vector<4xf32>
    %654 = vector.shape_cast %653 : vector<4xf32> to vector<4x1xf32>
    %655 = vector.extract_strided_slice %6 {offsets = [3, 0], sizes = [1, 32], strides = [1, 1]} : vector<4x32xf32> to vector<1x32xf32>
    %656 = vector.broadcast %654 : vector<4x1xf32> to vector<4x32xf32>
    %657 = vector.broadcast %655 : vector<1x32xf32> to vector<4x32xf32>
    %658 = arith.mulf %656, %657 : vector<4x32xf32>
    %659 = arith.addf %651, %658 : vector<4x32xf32>
    %660 = arith.subf %626, %659 : vector<4x32xf32>
    %661 = math.exp %660 : vector<4x32xf32>
    %cst_387 = arith.constant dense<0.000000e+00> : vector<4x32xf32>
    %662 = tpu.matmul %661, %10, %cst_387 {dimension_numbers = #tpu.dot_dimension_numbers<[1], [0], [0], [1], [0, 0, 1, 1], [], []>} : vector<4x32xf32>, vector<32x32xf32>, vector<4x32xf32> -> vector<4x32xf32>
    %663 = tpu.reciprocal %662 {approx = true} : vector<4x32xf32> -> vector<4x32xf32>
    %664 = arith.mulf %661, %663 : vector<4x32xf32>
    %665 = vector.extract_strided_slice %620 {offsets = [0, 32], sizes = [8, 32], strides = [1, 1]} : vector<8x64xf32> to vector<8x32xf32>
    %cst_388 = arith.constant dense<0.000000e+00> : vector<32x32xf32>
    %666 = tpu.matmul %9, %665, %cst_388 {dimension_numbers = #tpu.dot_dimension_numbers<[1], [0], [0], [1], [0, 0, 1, 1], [], []>} : vector<32x8xf32>, vector<8x32xf32>, vector<32x32xf32> -> vector<32x32xf32>
    %667 = arith.mulf %666, %11 : vector<32x32xf32>
    %cst_389 = arith.constant dense<0.000000e+00> : vector<4x32xf32>
    %668 = tpu.matmul %664, %667, %cst_389 {dimension_numbers = #tpu.dot_dimension_numbers<[1], [0], [0], [1], [0, 0, 1, 1], [], []>} : vector<4x32xf32>, vector<32x32xf32>, vector<4x32xf32> -> vector<4x32xf32>
    %cst_390 = arith.constant dense<0.000000e+00> : vector<4x32xf32>
    %669 = tpu.matmul %668, %14, %cst_390 {dimension_numbers = #tpu.dot_dimension_numbers<[1], [0], [0], [1], [0, 0, 1, 1], [], []>} : vector<4x32xf32>, vector<32x32xf32>, vector<4x32xf32> -> vector<4x32xf32>
    %670 = vector.broadcast %15 : vector<1x32xf32> to vector<4x32xf32>
    %671 = arith.addf %669, %670 : vector<4x32xf32>
    %672 = tpu.transpose %473, [1, 0] : vector<8x32xf32> -> vector<32x8xf32>
    %cst_391 = arith.constant dense<0.000000e+00> : vector<4x8xf32>
    %673 = tpu.matmul %671, %672, %cst_391 {dimension_numbers = #tpu.dot_dimension_numbers<[1], [0], [0], [1], [0, 0, 1, 1], [], []>} : vector<4x32xf32>, vector<32x8xf32>, vector<4x8xf32> -> vector<4x8xf32>
    %cst_392 = arith.constant 0.176776692 : f32
    %674 = vector.broadcast %cst_392 : f32 to vector<4x8xf32>
    %675 = arith.mulf %673, %674 : vector<4x8xf32>
    %676 = math.tanh %675 : vector<4x8xf32>
    %cst_393 = arith.constant 1.000000e+01 : f32
    %677 = vector.broadcast %cst_393 : f32 to vector<4x8xf32>
    %678 = arith.mulf %677, %676 : vector<4x8xf32>
    %679 = arith.addf %678, %25 : vector<4x8xf32>
    %680 = vector.shape_cast %679 : vector<4x8xf32> to vector<1x4x8xf32>
    %cst_394 = arith.constant dense<0xFF800000> : vector<1xf32>
    %681 = vector.multi_reduction <maximumf>, %680, %cst_394 [1, 2] : vector<1x4x8xf32> to vector<1xf32>
    %682 = vector.shape_cast %681 : vector<1xf32> to vector<1x1x1xf32>
    %683 = vector.extract %682[0, 0, 0] : f32 from vector<1x1x1xf32>
    %684 = vector.broadcast %683 : f32 to vector<4x8xf32>
    %685 = arith.subf %679, %684 : vector<4x8xf32>
    %686 = math.exp %685 : vector<4x8xf32>
    %687 = vector.shape_cast %686 : vector<4x8xf32> to vector<1x4x8xf32>
    %cst_395 = arith.constant dense<0.000000e+00> : vector<1xf32>
    %688 = vector.multi_reduction <add>, %687, %cst_395 [1, 2] : vector<1x4x8xf32> to vector<1xf32>
    %689 = vector.shape_cast %688 : vector<1xf32> to vector<1x1x1xf32>
    %690 = vector.extract %689[0, 0, 0] : f32 from vector<1x1x1xf32>
    %691 = vector.broadcast %690 : f32 to vector<4x8xf32>
    %692 = arith.divf %686, %691 : vector<4x8xf32>
    %c0_396 = arith.constant 0 : index
    %c0_397 = arith.constant 0 : index
    %c0_398 = arith.constant 0 : index
    %693 = vector.load %arg60[%c0_396, %c0_397, %c0_398] : memref<1x4x8xf32, #tpu.memory_space<vmem>>, vector<1x4x8xf32>
    %694 = vector.shape_cast %693 : vector<1x4x8xf32> to vector<4x8xf32>
    %695 = vector.shape_cast %692 : vector<4x8xf32> to vector<1x4x8xf32>
    tpu.vector_store %arg60[%c0_396, %c0_397, %c0_398], %695 {strides = array<i32>} : memref<1x4x8xf32, #tpu.memory_space<vmem>>, vector<1x4x8xf32>,
    return
  }
  func.func @transform_0(%arg0: i32) -> (i32, i32, i32) {
    %c0_i32 = arith.constant 0 : i32
    %c0_i32_0 = arith.constant 0 : i32
    %c0_i32_1 = arith.constant 0 : i32
    return %arg0, %c0_i32, %c0_i32_0 : i32, i32, i32
  }
  func.func @transform_1(%arg0: i32) -> (i32, i32, i32) {
    %c0_i32 = arith.constant 0 : i32
    %c0_i32_0 = arith.constant 0 : i32
    %c0_i32_1 = arith.constant 0 : i32
    return %arg0, %c0_i32, %c0_i32_0 : i32, i32, i32
  }
  func.func @transform_2(%arg0: i32) -> (i32, i32, i32) {
    %c0_i32 = arith.constant 0 : i32
    %c0_i32_0 = arith.constant 0 : i32
    %c0_i32_1 = arith.constant 0 : i32
    return %arg0, %c0_i32, %c0_i32_0 : i32, i32, i32
  }
  func.func @transform_3(%arg0: i32) -> (i32, i32, i32) {
    %c0_i32 = arith.constant 0 : i32
    %c0_i32_0 = arith.constant 0 : i32
    %c0_i32_1 = arith.constant 0 : i32
    return %arg0, %c0_i32, %c0_i32_0 : i32, i32, i32
  }
  func.func @transform_4(%arg0: i32) -> (i32, i32, i32) {
    %c0_i32 = arith.constant 0 : i32
    %c0_i32_0 = arith.constant 0 : i32
    %c0_i32_1 = arith.constant 0 : i32
    return %arg0, %c0_i32, %c0_i32_0 : i32, i32, i32
  }
  func.func @transform_5(%arg0: i32) -> (i32, i32) {
    %c0_i32 = arith.constant 0 : i32
    %c0_i32_0 = arith.constant 0 : i32
    %c0_i32_1 = arith.constant 0 : i32
    return %c0_i32, %c0_i32_0 : i32, i32
  }
  func.func @transform_6(%arg0: i32) -> (i32, i32) {
    %c0_i32 = arith.constant 0 : i32
    %c0_i32_0 = arith.constant 0 : i32
    %c0_i32_1 = arith.constant 0 : i32
    return %c0_i32, %c0_i32_0 : i32, i32
  }
  func.func @transform_7(%arg0: i32) -> (i32, i32) {
    %c0_i32 = arith.constant 0 : i32
    %c0_i32_0 = arith.constant 0 : i32
    %c0_i32_1 = arith.constant 0 : i32
    return %c0_i32, %c0_i32_0 : i32, i32
  }
  func.func @transform_8(%arg0: i32) -> (i32, i32) {
    %c0_i32 = arith.constant 0 : i32
    %c0_i32_0 = arith.constant 0 : i32
    %c0_i32_1 = arith.constant 0 : i32
    return %c0_i32, %c0_i32_0 : i32, i32
  }
  func.func @transform_9(%arg0: i32) -> (i32, i32) {
    %c0_i32 = arith.constant 0 : i32
    %c0_i32_0 = arith.constant 0 : i32
    %c0_i32_1 = arith.constant 0 : i32
    return %c0_i32, %c0_i32_0 : i32, i32
  }
  func.func @transform_10(%arg0: i32) -> (i32, i32) {
    %c0_i32 = arith.constant 0 : i32
    %c0_i32_0 = arith.constant 0 : i32
    %c0_i32_1 = arith.constant 0 : i32
    return %c0_i32, %c0_i32_0 : i32, i32
  }
  func.func @transform_11(%arg0: i32) -> (i32, i32) {
    %c0_i32 = arith.constant 0 : i32
    %c0_i32_0 = arith.constant 0 : i32
    %c0_i32_1 = arith.constant 0 : i32
    return %c0_i32, %c0_i32_0 : i32, i32
  }
  func.func @transform_12(%arg0: i32) -> (i32, i32) {
    %c0_i32 = arith.constant 0 : i32
    %c0_i32_0 = arith.constant 0 : i32
    %c0_i32_1 = arith.constant 0 : i32
    return %c0_i32, %c0_i32_0 : i32, i32
  }
  func.func @transform_13(%arg0: i32) -> (i32, i32) {
    %c0_i32 = arith.constant 0 : i32
    %c0_i32_0 = arith.constant 0 : i32
    %c0_i32_1 = arith.constant 0 : i32
    return %c0_i32, %c0_i32_0 : i32, i32
  }
  func.func @transform_14(%arg0: i32) -> (i32, i32) {
    %c0_i32 = arith.constant 0 : i32
    %c0_i32_0 = arith.constant 0 : i32
    %c0_i32_1 = arith.constant 0 : i32
    return %c0_i32, %c0_i32_0 : i32, i32
  }
  func.func @transform_15(%arg0: i32) -> (i32, i32) {
    %c0_i32 = arith.constant 0 : i32
    %c0_i32_0 = arith.constant 0 : i32
    %c0_i32_1 = arith.constant 0 : i32
    return %c0_i32, %c0_i32_0 : i32, i32
  }
  func.func @transform_16(%arg0: i32) -> (i32, i32) {
    %c0_i32 = arith.constant 0 : i32
    %c0_i32_0 = arith.constant 0 : i32
    %c0_i32_1 = arith.constant 0 : i32
    return %c0_i32, %c0_i32_0 : i32, i32
  }
  func.func @transform_17(%arg0: i32) -> (i32, i32) {
    %c0_i32 = arith.constant 0 : i32
    %c0_i32_0 = arith.constant 0 : i32
    %c0_i32_1 = arith.constant 0 : i32
    return %c0_i32, %c0_i32_0 : i32, i32
  }
  func.func @transform_18(%arg0: i32) -> (i32, i32) {
    %c0_i32 = arith.constant 0 : i32
    %c0_i32_0 = arith.constant 0 : i32
    %c0_i32_1 = arith.constant 0 : i32
    return %c0_i32, %c0_i32_0 : i32, i32
  }
  func.func @transform_19(%arg0: i32) -> (i32, i32) {
    %c0_i32 = arith.constant 0 : i32
    %c0_i32_0 = arith.constant 0 : i32
    %c0_i32_1 = arith.constant 0 : i32
    return %c0_i32, %c0_i32_0 : i32, i32
  }
  func.func @transform_20(%arg0: i32) -> (i32, i32) {
    %c0_i32 = arith.constant 0 : i32
    %c0_i32_0 = arith.constant 0 : i32
    %c0_i32_1 = arith.constant 0 : i32
    return %c0_i32, %c0_i32_0 : i32, i32
  }
  func.func @transform_21(%arg0: i32) -> (i32, i32, i32) {
    %c0_i32 = arith.constant 0 : i32
    %c0_i32_0 = arith.constant 0 : i32
    %c0_i32_1 = arith.constant 0 : i32
    %c0_i32_2 = arith.constant 0 : i32
    return %c0_i32, %c0_i32_0, %c0_i32_1 : i32, i32, i32
  }
  func.func @transform_22(%arg0: i32) -> (i32, i32, i32) {
    %c0_i32 = arith.constant 0 : i32
    %c0_i32_0 = arith.constant 0 : i32
    %c0_i32_1 = arith.constant 0 : i32
    %c0_i32_2 = arith.constant 0 : i32
    return %c0_i32, %c0_i32_0, %c0_i32_1 : i32, i32, i32
  }
  func.func @transform_23(%arg0: i32) -> (i32, i32, i32) {
    %c0_i32 = arith.constant 0 : i32
    %c0_i32_0 = arith.constant 0 : i32
    %c0_i32_1 = arith.constant 0 : i32
    %c0_i32_2 = arith.constant 0 : i32
    return %c0_i32, %c0_i32_0, %c0_i32_1 : i32, i32, i32
  }
  func.func @transform_24(%arg0: i32) -> (i32, i32, i32) {
    %c0_i32 = arith.constant 0 : i32
    %c0_i32_0 = arith.constant 0 : i32
    %c0_i32_1 = arith.constant 0 : i32
    %c0_i32_2 = arith.constant 0 : i32
    return %c0_i32, %c0_i32_0, %c0_i32_1 : i32, i32, i32
  }
  func.func @transform_25(%arg0: i32) -> (i32, i32, i32) {
    %c0_i32 = arith.constant 0 : i32
    %c0_i32_0 = arith.constant 0 : i32
    %c0_i32_1 = arith.constant 0 : i32
    %c0_i32_2 = arith.constant 0 : i32
    return %c0_i32, %c0_i32_0, %c0_i32_1 : i32, i32, i32
  }
  func.func @transform_26(%arg0: i32) -> (i32, i32, i32) {
    %c0_i32 = arith.constant 0 : i32
    %c0_i32_0 = arith.constant 0 : i32
    %c0_i32_1 = arith.constant 0 : i32
    %c0_i32_2 = arith.constant 0 : i32
    return %c0_i32, %c0_i32_0, %c0_i32_1 : i32, i32, i32
  }
  func.func @transform_27(%arg0: i32) -> (i32, i32, i32) {
    %c0_i32 = arith.constant 0 : i32
    %c0_i32_0 = arith.constant 0 : i32
    %c0_i32_1 = arith.constant 0 : i32
    %c0_i32_2 = arith.constant 0 : i32
    return %c0_i32, %c0_i32_0, %c0_i32_1 : i32, i32, i32
  }
  func.func @transform_28(%arg0: i32) -> (i32, i32, i32) {
    %c0_i32 = arith.constant 0 : i32
    %c0_i32_0 = arith.constant 0 : i32
    %c0_i32_1 = arith.constant 0 : i32
    %c0_i32_2 = arith.constant 0 : i32
    return %c0_i32, %c0_i32_0, %c0_i32_1 : i32, i32, i32
  }
  func.func @transform_29(%arg0: i32) -> (i32, i32, i32) {
    %c0_i32 = arith.constant 0 : i32
    %c0_i32_0 = arith.constant 0 : i32
    %c0_i32_1 = arith.constant 0 : i32
    %c0_i32_2 = arith.constant 0 : i32
    return %c0_i32, %c0_i32_0, %c0_i32_1 : i32, i32, i32
  }
  func.func @transform_30(%arg0: i32) -> (i32, i32, i32) {
    %c0_i32 = arith.constant 0 : i32
    %c0_i32_0 = arith.constant 0 : i32
    %c0_i32_1 = arith.constant 0 : i32
    %c0_i32_2 = arith.constant 0 : i32
    return %c0_i32, %c0_i32_0, %c0_i32_1 : i32, i32, i32
  }
  func.func @transform_31(%arg0: i32) -> (i32, i32, i32) {
    %c0_i32 = arith.constant 0 : i32
    %c0_i32_0 = arith.constant 0 : i32
    %c0_i32_1 = arith.constant 0 : i32
    %c0_i32_2 = arith.constant 0 : i32
    return %c0_i32, %c0_i32_0, %c0_i32_1 : i32, i32, i32
  }
  func.func @transform_32(%arg0: i32) -> (i32, i32, i32) {
    %c0_i32 = arith.constant 0 : i32
    %c0_i32_0 = arith.constant 0 : i32
    %c0_i32_1 = arith.constant 0 : i32
    %c0_i32_2 = arith.constant 0 : i32
    return %c0_i32, %c0_i32_0, %c0_i32_1 : i32, i32, i32
  }
  func.func @transform_33(%arg0: i32) -> (i32, i32, i32) {
    %c0_i32 = arith.constant 0 : i32
    %c0_i32_0 = arith.constant 0 : i32
    %c0_i32_1 = arith.constant 0 : i32
    %c0_i32_2 = arith.constant 0 : i32
    return %c0_i32, %c0_i32_0, %c0_i32_1 : i32, i32, i32
  }
  func.func @transform_34(%arg0: i32) -> (i32, i32, i32) {
    %c0_i32 = arith.constant 0 : i32
    %c0_i32_0 = arith.constant 0 : i32
    %c0_i32_1 = arith.constant 0 : i32
    %c0_i32_2 = arith.constant 0 : i32
    return %c0_i32, %c0_i32_0, %c0_i32_1 : i32, i32, i32
  }
  func.func @transform_35(%arg0: i32) -> (i32, i32, i32) {
    %c0_i32 = arith.constant 0 : i32
    %c0_i32_0 = arith.constant 0 : i32
    %c0_i32_1 = arith.constant 0 : i32
    %c0_i32_2 = arith.constant 0 : i32
    return %c0_i32, %c0_i32_0, %c0_i32_1 : i32, i32, i32
  }
  func.func @transform_36(%arg0: i32) -> (i32, i32, i32) {
    %c0_i32 = arith.constant 0 : i32
    %c0_i32_0 = arith.constant 0 : i32
    %c0_i32_1 = arith.constant 0 : i32
    %c0_i32_2 = arith.constant 0 : i32
    return %c0_i32, %c0_i32_0, %c0_i32_1 : i32, i32, i32
  }
  func.func @transform_37(%arg0: i32) -> (i32, i32, i32) {
    %c0_i32 = arith.constant 0 : i32
    %c0_i32_0 = arith.constant 0 : i32
    %c0_i32_1 = arith.constant 0 : i32
    %c0_i32_2 = arith.constant 0 : i32
    return %c0_i32, %c0_i32_0, %c0_i32_1 : i32, i32, i32
  }
  func.func @transform_38(%arg0: i32) -> (i32, i32) {
    %c0_i32 = arith.constant 0 : i32
    %c0_i32_0 = arith.constant 0 : i32
    %c0_i32_1 = arith.constant 0 : i32
    return %c0_i32, %c0_i32_0 : i32, i32
  }
  func.func @transform_39(%arg0: i32) -> (i32, i32) {
    %c0_i32 = arith.constant 0 : i32
    %c0_i32_0 = arith.constant 0 : i32
    %c0_i32_1 = arith.constant 0 : i32
    return %c0_i32, %c0_i32_0 : i32, i32
  }
  func.func @transform_40(%arg0: i32) -> (i32, i32) {
    %c0_i32 = arith.constant 0 : i32
    %c0_i32_0 = arith.constant 0 : i32
    %c0_i32_1 = arith.constant 0 : i32
    return %c0_i32, %c0_i32_0 : i32, i32
  }
  func.func @transform_41(%arg0: i32) -> (i32, i32) {
    %c0_i32 = arith.constant 0 : i32
    %c0_i32_0 = arith.constant 0 : i32
    %c0_i32_1 = arith.constant 0 : i32
    return %c0_i32, %c0_i32_0 : i32, i32
  }
  func.func @transform_42(%arg0: i32) -> (i32, i32, i32) {
    %c0_i32 = arith.constant 0 : i32
    %c0_i32_0 = arith.constant 0 : i32
    %c0_i32_1 = arith.constant 0 : i32
    %c0_i32_2 = arith.constant 0 : i32
    return %c0_i32, %c0_i32_0, %c0_i32_1 : i32, i32, i32
  }
  func.func @transform_43(%arg0: i32) -> (i32, i32, i32) {
    %c0_i32 = arith.constant 0 : i32
    %c0_i32_0 = arith.constant 0 : i32
    %c0_i32_1 = arith.constant 0 : i32
    %c0_i32_2 = arith.constant 0 : i32
    return %c0_i32, %c0_i32_0, %c0_i32_1 : i32, i32, i32
  }
  func.func @transform_44(%arg0: i32) -> (i32, i32, i32) {
    %c0_i32 = arith.constant 0 : i32
    %c0_i32_0 = arith.constant 0 : i32
    %c0_i32_1 = arith.constant 0 : i32
    %c0_i32_2 = arith.constant 0 : i32
    return %c0_i32, %c0_i32_0, %c0_i32_1 : i32, i32, i32
  }
  func.func @transform_45(%arg0: i32) -> (i32, i32, i32) {
    %c0_i32 = arith.constant 0 : i32
    %c0_i32_0 = arith.constant 0 : i32
    %c0_i32_1 = arith.constant 0 : i32
    %c0_i32_2 = arith.constant 0 : i32
    return %c0_i32, %c0_i32_0, %c0_i32_1 : i32, i32, i32
  }
  func.func @transform_46(%arg0: i32) -> (i32, i32, i32) {
    %c0_i32 = arith.constant 0 : i32
    %c0_i32_0 = arith.constant 0 : i32
    %c0_i32_1 = arith.constant 0 : i32
    %c0_i32_2 = arith.constant 0 : i32
    return %c0_i32, %c0_i32_0, %c0_i32_1 : i32, i32, i32
  }
  func.func @transform_47(%arg0: i32) -> (i32, i32, i32) {
    %c0_i32 = arith.constant 0 : i32
    %c0_i32_0 = arith.constant 0 : i32
    %c0_i32_1 = arith.constant 0 : i32
    %c0_i32_2 = arith.constant 0 : i32
    return %c0_i32, %c0_i32_0, %c0_i32_1 : i32, i32, i32
  }
  func.func @transform_48(%arg0: i32) -> (i32, i32, i32) {
    %c0_i32 = arith.constant 0 : i32
    %c0_i32_0 = arith.constant 0 : i32
    %c0_i32_1 = arith.constant 0 : i32
    %c0_i32_2 = arith.constant 0 : i32
    return %c0_i32, %c0_i32_0, %c0_i32_1 : i32, i32, i32
  }
  func.func @transform_49(%arg0: i32) -> (i32, i32, i32) {
    %c0_i32 = arith.constant 0 : i32
    %c0_i32_0 = arith.constant 0 : i32
    %c0_i32_1 = arith.constant 0 : i32
    %c0_i32_2 = arith.constant 0 : i32
    return %c0_i32, %c0_i32_0, %c0_i32_1 : i32, i32, i32
  }
  func.func @transform_50(%arg0: i32) -> (i32, i32, i32) {
    %c0_i32 = arith.constant 0 : i32
    %c0_i32_0 = arith.constant 0 : i32
    %c0_i32_1 = arith.constant 0 : i32
    %c0_i32_2 = arith.constant 0 : i32
    return %c0_i32, %c0_i32_0, %c0_i32_1 : i32, i32, i32
  }
  func.func @transform_51(%arg0: i32) -> (i32, i32, i32) {
    %c0_i32 = arith.constant 0 : i32
    %c0_i32_0 = arith.constant 0 : i32
    %c0_i32_1 = arith.constant 0 : i32
    %c0_i32_2 = arith.constant 0 : i32
    return %c0_i32, %c0_i32_0, %c0_i32_1 : i32, i32, i32
  }
  func.func @transform_52(%arg0: i32) -> (i32, i32, i32) {
    %c0_i32 = arith.constant 0 : i32
    %c0_i32_0 = arith.constant 0 : i32
    %c0_i32_1 = arith.constant 0 : i32
    %c0_i32_2 = arith.constant 0 : i32
    return %c0_i32, %c0_i32_0, %c0_i32_1 : i32, i32, i32
  }
  func.func @transform_53(%arg0: i32) -> (i32, i32, i32) {
    %c0_i32 = arith.constant 0 : i32
    %c0_i32_0 = arith.constant 0 : i32
    %c0_i32_1 = arith.constant 0 : i32
    %c0_i32_2 = arith.constant 0 : i32
    return %c0_i32, %c0_i32_0, %c0_i32_1 : i32, i32, i32
  }
  func.func @transform_54(%arg0: i32) -> (i32, i32, i32) {
    %c0_i32 = arith.constant 0 : i32
    %c0_i32_0 = arith.constant 0 : i32
    %c0_i32_1 = arith.constant 0 : i32
    %c0_i32_2 = arith.constant 0 : i32
    return %c0_i32, %c0_i32_0, %c0_i32_1 : i32, i32, i32
  }
  func.func @transform_55(%arg0: i32) -> (i32, i32, i32) {
    %c0_i32 = arith.constant 0 : i32
    %c0_i32_0 = arith.constant 0 : i32
    %c0_i32_1 = arith.constant 0 : i32
    %c0_i32_2 = arith.constant 0 : i32
    return %c0_i32, %c0_i32_0, %c0_i32_1 : i32, i32, i32
  }
  func.func @transform_56(%arg0: i32) -> (i32, i32, i32) {
    %c0_i32 = arith.constant 0 : i32
    %c0_i32_0 = arith.constant 0 : i32
    %c0_i32_1 = arith.constant 0 : i32
    %c0_i32_2 = arith.constant 0 : i32
    return %c0_i32, %c0_i32_0, %c0_i32_1 : i32, i32, i32
  }
  func.func @transform_57(%arg0: i32) -> (i32, i32, i32) {
    %c0_i32 = arith.constant 0 : i32
    %c0_i32_0 = arith.constant 0 : i32
    %c0_i32_1 = arith.constant 0 : i32
    %c0_i32_2 = arith.constant 0 : i32
    return %c0_i32, %c0_i32_0, %c0_i32_1 : i32, i32, i32
  }
  func.func @transform_58(%arg0: i32) -> (i32, i32, i32) {
    %c0_i32 = arith.constant 0 : i32
    %c0_i32_0 = arith.constant 0 : i32
    %c0_i32_1 = arith.constant 0 : i32
    %c0_i32_2 = arith.constant 0 : i32
    return %c0_i32, %c0_i32_0, %c0_i32_1 : i32, i32, i32
  }
  func.func @transform_59(%arg0: i32) -> (i32, i32, i32) {
    %c0_i32 = arith.constant 0 : i32
    %c0_i32_0 = arith.constant 0 : i32
    %c0_i32_1 = arith.constant 0 : i32
    return %arg0, %c0_i32, %c0_i32_0 : i32, i32, i32
  }
}

</mosaic_0001>

<llo_original>
// kernel: cloud_matrix_model_forward.1
$region0: #{cloud_matrix_model_forward.1}
  #allocation0 [shape = 'u32[]', space=smem, size = 0x4, offset = 0x4, fixed_abs, tag = 'smem constant byte address 0x4 - core index']
  #allocation1 [shape = 'u32[144,128]{1,0:T(1,128)}', space=vmem, size = 0x12000, scoped, tag = 'internal scratch']
  %s0 = inlined_call_operand.smem [shape: u32[60], index: -1, kind: input, shape index: {}]
  %s1 = sld [smem:[%s0]]
  %s2 = scalar_lea.smem %s0, 1
  %s3 = sld [smem:[%s2]]
  %s4 = scalar_lea.smem %s0, 2
  %s5 = sld [smem:[%s4]]
  %s6 = scalar_lea.smem %s0, 3
  %s7 = sld [smem:[%s6]]
  %s8 = scalar_lea.smem %s0, 4
  %s9 = sld [smem:[%s8]]
  %s10 = scalar_lea.smem %s0, 5
  %s11 = sld [smem:[%s10]]
  %s12 = scalar_lea.smem %s0, 6
  %s13 = sld [smem:[%s12]]
  %s14 = scalar_lea.smem %s0, 7
  %s15 = sld [smem:[%s14]]
  %s16 = scalar_lea.smem %s0, 8
  %s17 = sld [smem:[%s16]]
  %s18 = scalar_lea.smem %s0, 9
  %s19 = sld [smem:[%s18]]
  %s20 = scalar_lea.smem %s0, 10
  %s21 = sld [smem:[%s20]]
  %s22 = scalar_lea.smem %s0, 11
  %s23 = sld [smem:[%s22]]
  %s24 = scalar_lea.smem %s0, 12
  %s25 = sld [smem:[%s24]]
  %s26 = scalar_lea.smem %s0, 13
  %s27 = sld [smem:[%s26]]
  %s28 = scalar_lea.smem %s0, 14
  %s29 = sld [smem:[%s28]]
  %s30 = scalar_lea.smem %s0, 15
  %s31 = sld [smem:[%s30]]
  %s32 = scalar_lea.smem %s0, 16
  %s33 = sld [smem:[%s32]]
  %s34 = scalar_lea.smem %s0, 17
  %s35 = sld [smem:[%s34]]
  %s36 = scalar_lea.smem %s0, 18
  %s37 = sld [smem:[%s36]]
  %s38 = scalar_lea.smem %s0, 19
  %s39 = sld [smem:[%s38]]
  %s40 = scalar_lea.smem %s0, 20
  %s41 = sld [smem:[%s40]]
  %s42 = scalar_lea.smem %s0, 21
  %s43 = sld [smem:[%s42]]
  %s44 = scalar_lea.smem %s0, 22
  %s45 = sld [smem:[%s44]]
  %s46 = scalar_lea.smem %s0, 23
  %s47 = sld [smem:[%s46]]
  %s48 = scalar_lea.smem %s0, 24
  %s49 = sld [smem:[%s48]]
  %s50 = scalar_lea.smem %s0, 25
  %s51 = sld [smem:[%s50]]
  %s52 = scalar_lea.smem %s0, 26
  %s53 = sld [smem:[%s52]]
  %s54 = scalar_lea.smem %s0, 27
  %s55 = sld [smem:[%s54]]
  %s56 = scalar_lea.smem %s0, 28
  %s57 = sld [smem:[%s56]]
  %s58 = scalar_lea.smem %s0, 29
  %s59 = sld [smem:[%s58]]
  %s60 = scalar_lea.smem %s0, 30
  %s61 = sld [smem:[%s60]]
  %s62 = scalar_lea.smem %s0, 31
  %s63 = sld [smem:[%s62]]
  %s64 = scalar_lea.smem %s0, 32
  %s65 = sld [smem:[%s64]]
  %s66 = scalar_lea.smem %s0, 33
  %s67 = sld [smem:[%s66]]
  %s68 = scalar_lea.smem %s0, 34
  %s69 = sld [smem:[%s68]]
  %s70 = scalar_lea.smem %s0, 35
  %s71 = sld [smem:[%s70]]
  %s72 = scalar_lea.smem %s0, 36
  %s73 = sld [smem:[%s72]]
  %s74 = scalar_lea.smem %s0, 37
  %s75 = sld [smem:[%s74]]
  %s76 = scalar_lea.smem %s0, 38
  %s77 = sld [smem:[%s76]]
  %s78 = scalar_lea.smem %s0, 39
  %s79 = sld [smem:[%s78]]
  %s80 = scalar_lea.smem %s0, 40
  %s81 = sld [smem:[%s80]]
  %s82 = scalar_lea.smem %s0, 41
  %s83 = sld [smem:[%s82]]
  %s84 = scalar_lea.smem %s0, 42
  %s85 = sld [smem:[%s84]]
  %s86 = scalar_lea.smem %s0, 43
  %s87 = sld [smem:[%s86]]
  %s88 = scalar_lea.smem %s0, 44
  %s89 = sld [smem:[%s88]]
  %s90 = scalar_lea.smem %s0, 45
  %s91 = sld [smem:[%s90]]
  %s92 = scalar_lea.smem %s0, 46
  %s93 = sld [smem:[%s92]]
  %s94 = scalar_lea.smem %s0, 47
  %s95 = sld [smem:[%s94]]
  %s96 = scalar_lea.smem %s0, 48
  %s97 = sld [smem:[%s96]]
  %s98 = scalar_lea.smem %s0, 49
  %s99 = sld [smem:[%s98]]
  %s100 = scalar_lea.smem %s0, 50
  %s101 = sld [smem:[%s100]]
  %s102 = scalar_lea.smem %s0, 51
  %s103 = sld [smem:[%s102]]
  %s104 = scalar_lea.smem %s0, 52
  %s105 = sld [smem:[%s104]]
  %s106 = scalar_lea.smem %s0, 53
  %s107 = sld [smem:[%s106]]
  %s108 = scalar_lea.smem %s0, 54
  %s109 = sld [smem:[%s108]]
  %s110 = scalar_lea.smem %s0, 55
  %s111 = sld [smem:[%s110]]
  %s112 = scalar_lea.smem %s0, 56
  %s113 = sld [smem:[%s112]]
  %s114 = scalar_lea.smem %s0, 57
  %s115 = sld [smem:[%s114]]
  %s116 = scalar_lea.smem %s0, 58
  %s117 = sld [smem:[%s116]]
  %s118 = scalar_lea.smem %s0, 59
  %s119 = sld [smem:[%s118]]
  %s120 = sld [smem:[#allocation0]]
  $region313: #{cloud_matrix_model_forward.1} parent=0
    _
  %s122 = ssub.s32 1, %s120
  %s123 = scalar_select 0, %s122, %s120
  $region1: #{cloud_matrix_model_forward.1} parent=0
    #allocation2 [shape = 'u8[512]{0}', space=vmem, size = 0x400, scoped, tag = 'input window, operand 6, single buffered']
    #allocation3 [shape = 's32[2]{0}', space=sflag, size = 0x8, scoped, tag = 'scoped memory for cloud_matrix_model_forward.1']
    #allocation4 [shape = 'u8[512]{0}', space=vmem, size = 0x400, scoped, tag = 'input window, operand 8, single buffered']
    #allocation5 [shape = 's32[1]{0}', space=sflag, size = 0x4, scoped, tag = 'scoped memory for cloud_matrix_model_forward.1']
    #allocation6 [shape = 'u8[512]{0}', space=vmem, size = 0x400, scoped, tag = 'input window, operand 41, single buffered']
    #allocation7 [shape = 'u8[1024]{0}', space=vmem, size = 0x400, scoped, tag = 'input window, operand 48, single buffered']
    #allocation8 [shape = 's32[1]{0}', space=sflag, size = 0x4, scoped, tag = 'scoped memory for cloud_matrix_model_forward.1']
    #allocation9 [shape = 'u8[1024]{0}', space=vmem, size = 0x400, scoped, tag = 'input window, operand 50, single buffered']
    #allocation10 [shape = 'u8[1024]{0}', space=vmem, size = 0x400, scoped, tag = 'input window, operand 53, single buffered']
    #allocation11 [shape = 's32[1]{0}', space=sflag, size = 0x4, scoped, tag = 'scoped memory for cloud_matrix_model_forward.1']
    #allocation12 [shape = 'u8[1024]{0}', space=vmem, size = 0x400, scoped, tag = 'input window, operand 54, single buffered']
    #allocation13 [shape = 'u8[1024]{0}', space=vmem, size = 0x400, scoped, tag = 'input window, operand 55, single buffered']
    #allocation14 [shape = 's32[1]{0}', space=sflag, size = 0x4, scoped, tag = 'scoped memory for cloud_matrix_model_forward.1']
    #allocation15 [shape = 'u8[1024]{0}', space=vmem, size = 0x400, scoped, tag = 'input window, operand 56, single buffered']
    #allocation16 [shape = 'u8[1024]{0}', space=vmem, size = 0x400, scoped, tag = 'input window, operand 57, single buffered']
    #allocation17 [shape = 's32[1]{0}', space=sflag, size = 0x4, scoped, tag = 'scoped memory for cloud_matrix_model_forward.1']
    #allocation18 [shape = 'u8[1024]{0}', space=vmem, size = 0x400, scoped, tag = 'input window, operand 58, single buffered']
    %124 = vsyncpa [#allocation3], 0
    %125 = vsyncpa [#allocation5], 0
    %126 = vsyncpa [#allocation8], 0
    %127 = vsyncpa [#allocation11], 0
    %128 = vsyncpa [#allocation14], 0
    %129 = vsyncpa [#allocation17], 0
    loop: start=0, step=1, limit=4
    $region2: #{cloud_matrix_model_forward.1} parent=1 // loop_pre_header
      _
    $region3: #{cloud_matrix_model_forward.1} parent=1 // loop_header
      %s131 = sphi 0, %s135
      %p132 = scmp.ge.s32.totalorder %s131, 4
      %s141 = sphi 0, %s143
      %s144 = sphi 0, %s141
      %s145 = sphi 0, %s144
      %s161 = sphi 0, %s145
      %s167 = sphi 0, %s169
      %s170 = sphi 0, %s167
      %s171 = sphi 0, %s170
      %s187 = sphi 0, %s171
      %s193 = sphi 0, %s195
      %s196 = sphi 0, %s193
      %s197 = sphi 0, %s196
      %s213 = sphi 0, %s197
      %s219 = sphi 0, %s221
      %s222 = sphi 0, %s219
      %s223 = sphi 0, %s222
      %s239 = sphi 0, %s223
      %s245 = sphi 0, %s247
      %s248 = sphi 0, %s245
      %s249 = sphi 0, %s248
      %s265 = sphi 0, %s249
      %s269 = sphi 0, %s269
      %s271 = sphi 0, %s269
      %s272 = sphi 0, %s271
      %s286 = sphi 0, %s272
      %s290 = sphi 0, %s290
      %s292 = sphi 0, %s290
      %s293 = sphi 0, %s292
      %s307 = sphi 0, %s293
      %s311 = sphi 0, %s311
      %s313 = sphi 0, %s311
      %s314 = sphi 0, %s313
      %s328 = sphi 0, %s314
      %s332 = sphi 0, %s332
      %s334 = sphi 0, %s332
      %s335 = sphi 0, %s334
      %s349 = sphi 0, %s335
      %s353 = sphi 0, %s353
      %s355 = sphi 0, %s353
      %s356 = sphi 0, %s355
      %s370 = sphi 0, %s356
      %s374 = sphi 0, %s374
      %s376 = sphi 0, %s374
      %s377 = sphi 0, %s376
      %s391 = sphi 0, %s377
      %s395 = sphi 0, %s395
      %s397 = sphi 0, %s395
      %s398 = sphi 0, %s397
      %s412 = sphi 0, %s398
      %s416 = sphi 0, %s416
      %s418 = sphi 0, %s416
      %s419 = sphi 0, %s418
      %s433 = sphi 0, %s419
      %s437 = sphi 0, %s437
      %s439 = sphi 0, %s437
      %s440 = sphi 0, %s439
      %s454 = sphi 0, %s440
      %s458 = sphi 0, %s458
      %s460 = sphi 0, %s458
      %s461 = sphi 0, %s460
      %s475 = sphi 0, %s461
      %s479 = sphi 0, %s479
      %s481 = sphi 0, %s479
      %s482 = sphi 0, %s481
      %s496 = sphi 0, %s482
      %s500 = sphi 0, %s500
      %s502 = sphi 0, %s500
      %s503 = sphi 0, %s502
      %s517 = sphi 0, %s503
      %s521 = sphi 0, %s521
      %s523 = sphi 0, %s521
      %s524 = sphi 0, %s523
      %s538 = sphi 0, %s524
      %s542 = sphi 0, %s542
      %s544 = sphi 0, %s542
      %s545 = sphi 0, %s544
      %s559 = sphi 0, %s545
      %s563 = sphi 0, %s563
      %s565 = sphi 0, %s563
      %s566 = sphi 0, %s565
      %s580 = sphi 0, %s566
      %s584 = sphi 0, %s584
      %s586 = sphi 0, %s584
      %s587 = sphi 0, %s586
      %s601 = sphi 0, %s587
      %s605 = sphi 0, %s605
      %s607 = sphi 0, %s605
      %s608 = sphi 0, %s607
      %s622 = sphi 0, %s608
      %s626 = sphi 0, %s626
      %s628 = sphi 0, %s626
      %s629 = sphi 0, %s628
      %s643 = sphi 0, %s629
      %s647 = sphi 0, %s647
      %s649 = sphi 0, %s647
      %s650 = sphi 0, %s649
      %s664 = sphi 0, %s650
      %s668 = sphi 0, %s668
      %s670 = sphi 0, %s668
      %s671 = sphi 0, %s670
      %s685 = sphi 0, %s671
      %s689 = sphi 0, %s689
      %s691 = sphi 0, %s689
      %s692 = sphi 0, %s691
      %s706 = sphi 0, %s692
      %s710 = sphi 0, %s710
      %s712 = sphi 0, %s710
      %s713 = sphi 0, %s712
      %s727 = sphi 0, %s713
      %s731 = sphi 0, %s731
      %s733 = sphi 0, %s731
      %s734 = sphi 0, %s733
      %s748 = sphi 0, %s734
      %s752 = sphi 0, %s752
      %s754 = sphi 0, %s752
      %s755 = sphi 0, %s754
      %s769 = sphi 0, %s755
      %s773 = sphi 0, %s773
      %s775 = sphi 0, %s773
      %s776 = sphi 0, %s775
      %s790 = sphi 0, %s776
      %s794 = sphi 0, %s794
      %s796 = sphi 0, %s794
      %s797 = sphi 0, %s796
      %s811 = sphi 0, %s797
      %s815 = sphi 0, %s815
      %s817 = sphi 0, %s815
      %s818 = sphi 0, %s817
      %s832 = sphi 0, %s818
      %s836 = sphi 0, %s836
      %s838 = sphi 0, %s836
      %s839 = sphi 0, %s838
      %s853 = sphi 0, %s839
      %s857 = sphi 0, %s857
      %s859 = sphi 0, %s857
      %s860 = sphi 0, %s859
      %s874 = sphi 0, %s860
      %s878 = sphi 0, %s878
      %s880 = sphi 0, %s878
      %s881 = sphi 0, %s880
      %s895 = sphi 0, %s881
      %s899 = sphi 0, %s899
      %s901 = sphi 0, %s899
      %s902 = sphi 0, %s901
      %s916 = sphi 0, %s902
      %s920 = sphi 0, %s920
      %s922 = sphi 0, %s920
      %s923 = sphi 0, %s922
      %s937 = sphi 0, %s923
      %s941 = sphi 0, %s941
      %s943 = sphi 0, %s941
      %s944 = sphi 0, %s943
      %s958 = sphi 0, %s944
      %s962 = sphi 0, %s962
      %s964 = sphi 0, %s962
      %s965 = sphi 0, %s964
      %s979 = sphi 0, %s965
      %s983 = sphi 0, %s983
      %s985 = sphi 0, %s983
      %s986 = sphi 0, %s985
      %s1000 = sphi 0, %s986
      %s1004 = sphi 0, %s1004
      %s1006 = sphi 0, %s1004
      %s1007 = sphi 0, %s1006
      %s1021 = sphi 0, %s1007
      %s1025 = sphi 0, %s1025
      %s1027 = sphi 0, %s1025
      %s1028 = sphi 0, %s1027
      %s1042 = sphi 0, %s1028
      %s1046 = sphi 0, %s1046
      %s1048 = sphi 0, %s1046
      %s1049 = sphi 0, %s1048
      %s1063 = sphi 0, %s1049
      %s1067 = sphi 0, %s1067
      %s1069 = sphi 0, %s1067
      %s1070 = sphi 0, %s1069
      %s1084 = sphi 0, %s1070
      %s1088 = sphi 0, %s1088
      %s1090 = sphi 0, %s1088
      %s1091 = sphi 0, %s1090
      %s1105 = sphi 0, %s1091
      %s1109 = sphi 0, %s1109
      %s1111 = sphi 0, %s1109
      %s1112 = sphi 0, %s1111
      %s1126 = sphi 0, %s1112
      %s1130 = sphi 0, %s1130
      %s1132 = sphi 0, %s1130
      %s1133 = sphi 0, %s1132
      %s1147 = sphi 0, %s1133
      %s1151 = sphi 0, %s1151
      %s1153 = sphi 0, %s1151
      %s1154 = sphi 0, %s1153
      %s1168 = sphi 0, %s1154
      %s1172 = sphi 0, %s1172
      %s1174 = sphi 0, %s1172
      %s1175 = sphi 0, %s1174
      %s1189 = sphi 0, %s1175
      %s1193 = sphi 0, %s1193
      %s1195 = sphi 0, %s1193
      %s1196 = sphi 0, %s1195
      %s1210 = sphi 0, %s1196
      %s1214 = sphi 0, %s1214
      %s1216 = sphi 0, %s1214
      %s1217 = sphi 0, %s1216
      %s1231 = sphi 0, %s1217
      %s1235 = sphi 0, %s1235
      %s1237 = sphi 0, %s1235
      %s1238 = sphi 0, %s1237
      %s1252 = sphi 0, %s1238
      %s1256 = sphi 0, %s1256
      %s1258 = sphi 0, %s1256
      %s1259 = sphi 0, %s1258
      %s1273 = sphi 0, %s1259
      %s1277 = sphi 0, %s1277
      %s1279 = sphi 0, %s1277
      %s1280 = sphi 0, %s1279
      %s1294 = sphi 0, %s1280
      %s1298 = sphi 0, %s1298
      %s1300 = sphi 0, %s1298
      %s1301 = sphi 0, %s1300
      %s1315 = sphi 0, %s1301
      %s1319 = sphi 0, %s1319
      %s1321 = sphi 0, %s1319
      %s1322 = sphi 0, %s1321
      %s1336 = sphi 0, %s1322
      %s1340 = sphi 0, %s1340
      %s1342 = sphi 0, %s1340
      %s1343 = sphi 0, %s1342
      %s1357 = sphi 0, %s1343
      %s1361 = sphi 0, %s1361
      %s1363 = sphi 0, %s1361
      %s1364 = sphi 0, %s1363
      %s1378 = sphi 0, %s1364
      %s1382 = sphi 0, %s1382
      %s1384 = sphi 0, %s1382
      %s1385 = sphi 0, %s1384
      %s1399 = sphi 0, %s1385
      %s1405 = sphi 0, %s1407
      %s1408 = sphi 0, %s1405
      %s1409 = sphi 0, %s1408
      %s1425 = sphi 0, %s1409
    $region4: #{cloud_matrix_model_forward.1} parent=1 // loop_header_branch
      %134 = sbr.rel (%p132) target = $region8
    $region5: #{cloud_matrix_model_forward.1} parent=1 // loop_body
      %s136 = ssub.s32 %s131, 1
      %s137 = ssub.s32 %s131, 2
      %s138 = sadd.s32 %s131, 1
      %s139 = ssub.s32 %s131, %s138
      %p140 = scmp.eq.s32.totalorder %s139, 0
      %s142 = sadd.s32 %s141, 1
      %s143 = scalar_select %p140, %s141, %s142
      %p146 = pneg %p140
      %p147 = scmp.eq.s32.totalorder %s131, 1
      %p148 = por %p146, %p147
      %p149 = scmp.ne.s32.totalorder %s141, %s144
      %p150 = scmp.eq.s32.totalorder %s131, 0
      %p151 = por %p149, %p150
      %p152 = scmp.ne.s32.totalorder %s141, %s144
      %p153 = scmp.eq.s32.totalorder %s136, 1
      %p154 = por %p152, %p153
      %p155 = scmp.ne.s32.totalorder %s144, %s145
      %p156 = scmp.eq.s32.totalorder %s136, 0
      %p157 = por %p155, %p156
      %p158 = scmp.ne.s32.totalorder %s144, %s145
      %p159 = scmp.eq.s32.totalorder %s137, 1
      %p160 = por %p158, %p159
      %p162 = scmp.ne.s32.totalorder %s145, %s161
      %p163 = scmp.eq.s32.totalorder %s137, 0
      %p164 = por %p162, %p163
      %s165 = ssub.s32 %s131, %s138
      %p166 = scmp.eq.s32.totalorder %s165, 0
      %s168 = sadd.s32 %s167, 1
      %s169 = scalar_select %p166, %s167, %s168
      %p172 = pneg %p166
      %p173 = scmp.eq.s32.totalorder %s131, 1
      %p174 = por %p172, %p173
      %p175 = scmp.ne.s32.totalorder %s167, %s170
      %p176 = scmp.eq.s32.totalorder %s131, 0
      %p177 = por %p175, %p176
      %p178 = scmp.ne.s32.totalorder %s167, %s170
      %p179 = scmp.eq.s32.totalorder %s136, 1
      %p180 = por %p178, %p179
      %p181 = scmp.ne.s32.totalorder %s170, %s171
      %p182 = scmp.eq.s32.totalorder %s136, 0
      %p183 = por %p181, %p182
      %p184 = scmp.ne.s32.totalorder %s170, %s171
      %p185 = scmp.eq.s32.totalorder %s137, 1
      %p186 = por %p184, %p185
      %p188 = scmp.ne.s32.totalorder %s171, %s187
      %p189 = scmp.eq.s32.totalorder %s137, 0
      %p190 = por %p188, %p189
      %s191 = ssub.s32 %s131, %s138
      %p192 = scmp.eq.s32.totalorder %s191, 0
      %s194 = sadd.s32 %s193, 1
      %s195 = scalar_select %p192, %s193, %s194
      %p198 = pneg %p192
      %p199 = scmp.eq.s32.totalorder %s131, 1
      %p200 = por %p198, %p199
      %p201 = scmp.ne.s32.totalorder %s193, %s196
      %p202 = scmp.eq.s32.totalorder %s131, 0
      %p203 = por %p201, %p202
      %p204 = scmp.ne.s32.totalorder %s193, %s196
      %p205 = scmp.eq.s32.totalorder %s136, 1
      %p206 = por %p204, %p205
      %p207 = scmp.ne.s32.totalorder %s196, %s197
      %p208 = scmp.eq.s32.totalorder %s136, 0
      %p209 = por %p207, %p208
      %p210 = scmp.ne.s32.totalorder %s196, %s197
      %p211 = scmp.eq.s32.totalorder %s137, 1
      %p212 = por %p210, %p211
      %p214 = scmp.ne.s32.totalorder %s197, %s213
      %p215 = scmp.eq.s32.totalorder %s137, 0
      %p216 = por %p214, %p215
      %s217 = ssub.s32 %s131, %s138
      %p218 = scmp.eq.s32.totalorder %s217, 0
      %s220 = sadd.s32 %s219, 1
      %s221 = scalar_select %p218, %s219, %s220
      %p224 = pneg %p218
      %p225 = scmp.eq.s32.totalorder %s131, 1
      %p226 = por %p224, %p225
      %p227 = scmp.ne.s32.totalorder %s219, %s222
      %p228 = scmp.eq.s32.totalorder %s131, 0
      %p229 = por %p227, %p228
      %p230 = scmp.ne.s32.totalorder %s219, %s222
      %p231 = scmp.eq.s32.totalorder %s136, 1
      %p232 = por %p230, %p231
      %p233 = scmp.ne.s32.totalorder %s222, %s223
      %p234 = scmp.eq.s32.totalorder %s136, 0
      %p235 = por %p233, %p234
      %p236 = scmp.ne.s32.totalorder %s222, %s223
      %p237 = scmp.eq.s32.totalorder %s137, 1
      %p238 = por %p236, %p237
      %p240 = scmp.ne.s32.totalorder %s223, %s239
      %p241 = scmp.eq.s32.totalorder %s137, 0
      %p242 = por %p240, %p241
      %s243 = ssub.s32 %s131, %s138
      %p244 = scmp.eq.s32.totalorder %s243, 0
      %s246 = sadd.s32 %s245, 1
      %s247 = scalar_select %p244, %s245, %s246
      %p250 = pneg %p244
      %p251 = scmp.eq.s32.totalorder %s131, 1
      %p252 = por %p250, %p251
      %p253 = scmp.ne.s32.totalorder %s245, %s248
      %p254 = scmp.eq.s32.totalorder %s131, 0
      %p255 = por %p253, %p254
      %p256 = scmp.ne.s32.totalorder %s245, %s248
      %p257 = scmp.eq.s32.totalorder %s136, 1
      %p258 = por %p256, %p257
      %p259 = scmp.ne.s32.totalorder %s248, %s249
      %p260 = scmp.eq.s32.totalorder %s136, 0
      %p261 = por %p259, %p260
      %p262 = scmp.ne.s32.totalorder %s248, %s249
      %p263 = scmp.eq.s32.totalorder %s137, 1
      %p264 = por %p262, %p263
      %p266 = scmp.ne.s32.totalorder %s249, %s265
      %p267 = scmp.eq.s32.totalorder %s137, 0
      %p268 = por %p266, %p267
      %s270 = sadd.s32 %s269, 1
      %p273 = scmp.eq.s32.totalorder %s131, 1
      %p274 = scmp.ne.s32.totalorder %s269, %s271
      %p275 = scmp.eq.s32.totalorder %s131, 0
      %p276 = por %p274, %p275
      %p277 = scmp.ne.s32.totalorder %s269, %s271
      %p278 = scmp.eq.s32.totalorder %s136, 1
      %p279 = por %p277, %p278
      %p280 = scmp.ne.s32.totalorder %s271, %s272
      %p281 = scmp.eq.s32.totalorder %s136, 0
      %p282 = por %p280, %p281
      %p283 = scmp.ne.s32.totalorder %s271, %s272
      %p284 = scmp.eq.s32.totalorder %s137, 1
      %p285 = por %p283, %p284
      %p287 = scmp.ne.s32.totalorder %s272, %s286
      %p288 = scmp.eq.s32.totalorder %s137, 0
      %p289 = por %p287, %p288
      %s291 = sadd.s32 %s290, 1
      %p294 = scmp.eq.s32.totalorder %s131, 1
      %p295 = scmp.ne.s32.totalorder %s290, %s292
      %p296 = scmp.eq.s32.totalorder %s131, 0
      %p297 = por %p295, %p296
      %p298 = scmp.ne.s32.totalorder %s290, %s292
      %p299 = scmp.eq.s32.totalorder %s136, 1
      %p300 = por %p298, %p299
      %p301 = scmp.ne.s32.totalorder %s292, %s293
      %p302 = scmp.eq.s32.totalorder %s136, 0
      %p303 = por %p301, %p302
      %p304 = scmp.ne.s32.totalorder %s292, %s293
      %p305 = scmp.eq.s32.totalorder %s137, 1
      %p306 = por %p304, %p305
      %p308 = scmp.ne.s32.totalorder %s293, %s307
      %p309 = scmp.eq.s32.totalorder %s137, 0
      %p310 = por %p308, %p309
      %s312 = sadd.s32 %s311, 1
      %p315 = scmp.eq.s32.totalorder %s131, 1
      %p316 = scmp.ne.s32.totalorder %s311, %s313
      %p317 = scmp.eq.s32.totalorder %s131, 0
      %p318 = por %p316, %p317
      %p319 = scmp.ne.s32.totalorder %s311, %s313
      %p320 = scmp.eq.s32.totalorder %s136, 1
      %p321 = por %p319, %p320
      %p322 = scmp.ne.s32.totalorder %s313, %s314
      %p323 = scmp.eq.s32.totalorder %s136, 0
      %p324 = por %p322, %p323
      %p325 = scmp.ne.s32.totalorder %s313, %s314
      %p326 = scmp.eq.s32.totalorder %s137, 1
      %p327 = por %p325, %p326
      %p329 = scmp.ne.s32.totalorder %s314, %s328
      %p330 = scmp.eq.s32.totalorder %s137, 0
      %p331 = por %p329, %p330
      %s333 = sadd.s32 %s332, 1
      %p336 = scmp.eq.s32.totalorder %s131, 1
      %p337 = scmp.ne.s32.totalorder %s332, %s334
      %p338 = scmp.eq.s32.totalorder %s131, 0
      %p339 = por %p337, %p338
      %p340 = scmp.ne.s32.totalorder %s332, %s334
      %p341 = scmp.eq.s32.totalorder %s136, 1
      %p342 = por %p340, %p341
      %p343 = scmp.ne.s32.totalorder %s334, %s335
      %p344 = scmp.eq.s32.totalorder %s136, 0
      %p345 = por %p343, %p344
      %p346 = scmp.ne.s32.totalorder %s334, %s335
      %p347 = scmp.eq.s32.totalorder %s137, 1
      %p348 = por %p346, %p347
      %p350 = scmp.ne.s32.totalorder %s335, %s349
      %p351 = scmp.eq.s32.totalorder %s137, 0
      %p352 = por %p350, %p351
      %s354 = sadd.s32 %s353, 1
      %p357 = scmp.eq.s32.totalorder %s131, 1
      %p358 = scmp.ne.s32.totalorder %s353, %s355
      %p359 = scmp.eq.s32.totalorder %s131, 0
      %p360 = por %p358, %p359
      %p361 = scmp.ne.s32.totalorder %s353, %s355
      %p362 = scmp.eq.s32.totalorder %s136, 1
      %p363 = por %p361, %p362
      %p364 = scmp.ne.s32.totalorder %s355, %s356
      %p365 = scmp.eq.s32.totalorder %s136, 0
      %p366 = por %p364, %p365
      %p367 = scmp.ne.s32.totalorder %s355, %s356
      %p368 = scmp.eq.s32.totalorder %s137, 1
      %p369 = por %p367, %p368
      %p371 = scmp.ne.s32.totalorder %s356, %s370
      %p372 = scmp.eq.s32.totalorder %s137, 0
      %p373 = por %p371, %p372
      %s375 = sadd.s32 %s374, 1
      %p378 = scmp.eq.s32.totalorder %s131, 1
      %p379 = scmp.ne.s32.totalorder %s374, %s376
      %p380 = scmp.eq.s32.totalorder %s131, 0
      %p381 = por %p379, %p380
      %p382 = scmp.ne.s32.totalorder %s374, %s376
      %p383 = scmp.eq.s32.totalorder %s136, 1
      %p384 = por %p382, %p383
      %p385 = scmp.ne.s32.totalorder %s376, %s377
      %p386 = scmp.eq.s32.totalorder %s136, 0
      %p387 = por %p385, %p386
      %p388 = scmp.ne.s32.totalorder %s376, %s377
      %p389 = scmp.eq.s32.totalorder %s137, 1
      %p390 = por %p388, %p389
      %p392 = scmp.ne.s32.totalorder %s377, %s391
      %p393 = scmp.eq.s32.totalorder %s137, 0
      %p394 = por %p392, %p393
      %s396 = sadd.s32 %s395, 1
      %p399 = scmp.eq.s32.totalorder %s131, 1
      %p400 = scmp.ne.s32.totalorder %s395, %s397
      %p401 = scmp.eq.s32.totalorder %s131, 0
      %p402 = por %p400, %p401
      %p403 = scmp.ne.s32.totalorder %s395, %s397
      %p404 = scmp.eq.s32.totalorder %s136, 1
      %p405 = por %p403, %p404
      %p406 = scmp.ne.s32.totalorder %s397, %s398
      %p407 = scmp.eq.s32.totalorder %s136, 0
      %p408 = por %p406, %p407
      %p409 = scmp.ne.s32.totalorder %s397, %s398
      %p410 = scmp.eq.s32.totalorder %s137, 1
      %p411 = por %p409, %p410
      %p413 = scmp.ne.s32.totalorder %s398, %s412
      %p414 = scmp.eq.s32.totalorder %s137, 0
      %p415 = por %p413, %p414
      %s417 = sadd.s32 %s416, 1
      %p420 = scmp.eq.s32.totalorder %s131, 1
      %p421 = scmp.ne.s32.totalorder %s416, %s418
      %p422 = scmp.eq.s32.totalorder %s131, 0
      %p423 = por %p421, %p422
      %p424 = scmp.ne.s32.totalorder %s416, %s418
      %p425 = scmp.eq.s32.totalorder %s136, 1
      %p426 = por %p424, %p425
      %p427 = scmp.ne.s32.totalorder %s418, %s419
      %p428 = scmp.eq.s32.totalorder %s136, 0
      %p429 = por %p427, %p428
      %p430 = scmp.ne.s32.totalorder %s418, %s419
      %p431 = scmp.eq.s32.totalorder %s137, 1
      %p432 = por %p430, %p431
      %p434 = scmp.ne.s32.totalorder %s419, %s433
      %p435 = scmp.eq.s32.totalorder %s137, 0
      %p436 = por %p434, %p435
      %s438 = sadd.s32 %s437, 1
      %p441 = scmp.eq.s32.totalorder %s131, 1
      %p442 = scmp.ne.s32.totalorder %s437, %s439
      %p443 = scmp.eq.s32.totalorder %s131, 0
      %p444 = por %p442, %p443
      %p445 = scmp.ne.s32.totalorder %s437, %s439
      %p446 = scmp.eq.s32.totalorder %s136, 1
      %p447 = por %p445, %p446
      %p448 = scmp.ne.s32.totalorder %s439, %s440
      %p449 = scmp.eq.s32.totalorder %s136, 0
      %p450 = por %p448, %p449
      %p451 = scmp.ne.s32.totalorder %s439, %s440
      %p452 = scmp.eq.s32.totalorder %s137, 1
      %p453 = por %p451, %p452
      %p455 = scmp.ne.s32.totalorder %s440, %s454
      %p456 = scmp.eq.s32.totalorder %s137, 0
      %p457 = por %p455, %p456
      %s459 = sadd.s32 %s458, 1
      %p462 = scmp.eq.s32.totalorder %s131, 1
      %p463 = scmp.ne.s32.totalorder %s458, %s460
      %p464 = scmp.eq.s32.totalorder %s131, 0
      %p465 = por %p463, %p464
      %p466 = scmp.ne.s32.totalorder %s458, %s460
      %p467 = scmp.eq.s32.totalorder %s136, 1
      %p468 = por %p466, %p467
      %p469 = scmp.ne.s32.totalorder %s460, %s461
      %p470 = scmp.eq.s32.totalorder %s136, 0
      %p471 = por %p469, %p470
      %p472 = scmp.ne.s32.totalorder %s460, %s461
      %p473 = scmp.eq.s32.totalorder %s137, 1
      %p474 = por %p472, %p473
      %p476 = scmp.ne.s32.totalorder %s461, %s475
      %p477 = scmp.eq.s32.totalorder %s137, 0
      %p478 = por %p476, %p477
      %s480 = sadd.s32 %s479, 1
      %p483 = scmp.eq.s32.totalorder %s131, 1
      %p484 = scmp.ne.s32.totalorder %s479, %s481
      %p485 = scmp.eq.s32.totalorder %s131, 0
      %p486 = por %p484, %p485
      %p487 = scmp.ne.s32.totalorder %s479, %s481
      %p488 = scmp.eq.s32.totalorder %s136, 1
      %p489 = por %p487, %p488
      %p490 = scmp.ne.s32.totalorder %s481, %s482
      %p491 = scmp.eq.s32.totalorder %s136, 0
      %p492 = por %p490, %p491
      %p493 = scmp.ne.s32.totalorder %s481, %s482
      %p494 = scmp.eq.s32.totalorder %s137, 1
      %p495 = por %p493, %p494
      %p497 = scmp.ne.s32.totalorder %s482, %s496
      %p498 = scmp.eq.s32.totalorder %s137, 0
      %p499 = por %p497, %p498
      %s501 = sadd.s32 %s500, 1
      %p504 = scmp.eq.s32.totalorder %s131, 1
      %p505 = scmp.ne.s32.totalorder %s500, %s502
      %p506 = scmp.eq.s32.totalorder %s131, 0
      %p507 = por %p505, %p506
      %p508 = scmp.ne.s32.totalorder %s500, %s502
      %p509 = scmp.eq.s32.totalorder %s136, 1
      %p510 = por %p508, %p509
      %p511 = scmp.ne.s32.totalorder %s502, %s503
      %p512 = scmp.eq.s32.totalorder %s136, 0
      %p513 = por %p511, %p512
      %p514 = scmp.ne.s32.totalorder %s502, %s503
      %p515 = scmp.eq.s32.totalorder %s137, 1
      %p516 = por %p514, %p515
      %p518 = scmp.ne.s32.totalorder %s503, %s517
      %p519 = scmp.eq.s32.totalorder %s137, 0
      %p520 = por %p518, %p519
      %s522 = sadd.s32 %s521, 1
      %p525 = scmp.eq.s32.totalorder %s131, 1
      %p526 = scmp.ne.s32.totalorder %s521, %s523
      %p527 = scmp.eq.s32.totalorder %s131, 0
      %p528 = por %p526, %p527
      %p529 = scmp.ne.s32.totalorder %s521, %s523
      %p530 = scmp.eq.s32.totalorder %s136, 1
      %p531 = por %p529, %p530
      %p532 = scmp.ne.s32.totalorder %s523, %s524
      %p533 = scmp.eq.s32.totalorder %s136, 0
      %p534 = por %p532, %p533
      %p535 = scmp.ne.s32.totalorder %s523, %s524
      %p536 = scmp.eq.s32.totalorder %s137, 1
      %p537 = por %p535, %p536
      %p539 = scmp.ne.s32.totalorder %s524, %s538
      %p540 = scmp.eq.s32.totalorder %s137, 0
      %p541 = por %p539, %p540
      %s543 = sadd.s32 %s542, 1
      %p546 = scmp.eq.s32.totalorder %s131, 1
      %p547 = scmp.ne.s32.totalorder %s542, %s544
      %p548 = scmp.eq.s32.totalorder %s131, 0
      %p549 = por %p547, %p548
      %p550 = scmp.ne.s32.totalorder %s542, %s544
      %p551 = scmp.eq.s32.totalorder %s136, 1
      %p552 = por %p550, %p551
      %p553 = scmp.ne.s32.totalorder %s544, %s545
      %p554 = scmp.eq.s32.totalorder %s136, 0
      %p555 = por %p553, %p554
      %p556 = scmp.ne.s32.totalorder %s544, %s545
      %p557 = scmp.eq.s32.totalorder %s137, 1
      %p558 = por %p556, %p557
      %p560 = scmp.ne.s32.totalorder %s545, %s559
      %p561 = scmp.eq.s32.totalorder %s137, 0
      %p562 = por %p560, %p561
      %s564 = sadd.s32 %s563, 1
      %p567 = scmp.eq.s32.totalorder %s131, 1
      %p568 = scmp.ne.s32.totalorder %s563, %s565
      %p569 = scmp.eq.s32.totalorder %s131, 0
      %p570 = por %p568, %p569
      %p571 = scmp.ne.s32.totalorder %s563, %s565
      %p572 = scmp.eq.s32.totalorder %s136, 1
      %p573 = por %p571, %p572
      %p574 = scmp.ne.s32.totalorder %s565, %s566
      %p575 = scmp.eq.s32.totalorder %s136, 0
      %p576 = por %p574, %p575
      %p577 = scmp.ne.s32.totalorder %s565, %s566
      %p578 = scmp.eq.s32.totalorder %s137, 1
      %p579 = por %p577, %p578
      %p581 = scmp.ne.s32.totalorder %s566, %s580
      %p582 = scmp.eq.s32.totalorder %s137, 0
      %p583 = por %p581, %p582
      %s585 = sadd.s32 %s584, 1
      %p588 = scmp.eq.s32.totalorder %s131, 1
      %p589 = scmp.ne.s32.totalorder %s584, %s586
      %p590 = scmp.eq.s32.totalorder %s131, 0
      %p591 = por %p589, %p590
      %p592 = scmp.ne.s32.totalorder %s584, %s586
      %p593 = scmp.eq.s32.totalorder %s136, 1
      %p594 = por %p592, %p593
      %p595 = scmp.ne.s32.totalorder %s586, %s587
      %p596 = scmp.eq.s32.totalorder %s136, 0
      %p597 = por %p595, %p596
      %p598 = scmp.ne.s32.totalorder %s586, %s587
      %p599 = scmp.eq.s32.totalorder %s137, 1
      %p600 = por %p598, %p599
      %p602 = scmp.ne.s32.totalorder %s587, %s601
      %p603 = scmp.eq.s32.totalorder %s137, 0
      %p604 = por %p602, %p603
      %s606 = sadd.s32 %s605, 1
      %p609 = scmp.eq.s32.totalorder %s131, 1
      %p610 = scmp.ne.s32.totalorder %s605, %s607
      %p611 = scmp.eq.s32.totalorder %s131, 0
      %p612 = por %p610, %p611
      %p613 = scmp.ne.s32.totalorder %s605, %s607
      %p614 = scmp.eq.s32.totalorder %s136, 1
      %p615 = por %p613, %p614
      %p616 = scmp.ne.s32.totalorder %s607, %s608
      %p617 = scmp.eq.s32.totalorder %s136, 0
      %p618 = por %p616, %p617
      %p619 = scmp.ne.s32.totalorder %s607, %s608
      %p620 = scmp.eq.s32.totalorder %s137, 1
      %p621 = por %p619, %p620
      %p623 = scmp.ne.s32.totalorder %s608, %s622
      %p624 = scmp.eq.s32.totalorder %s137, 0
      %p625 = por %p623, %p624
      %s627 = sadd.s32 %s626, 1
      %p630 = scmp.eq.s32.totalorder %s131, 1
      %p631 = scmp.ne.s32.totalorder %s626, %s628
      %p632 = scmp.eq.s32.totalorder %s131, 0
      %p633 = por %p631, %p632
      %p634 = scmp.ne.s32.totalorder %s626, %s628
      %p635 = scmp.eq.s32.totalorder %s136, 1
      %p636 = por %p634, %p635
      %p637 = scmp.ne.s32.totalorder %s628, %s629
      %p638 = scmp.eq.s32.totalorder %s136, 0
      %p639 = por %p637, %p638
      %p640 = scmp.ne.s32.totalorder %s628, %s629
      %p641 = scmp.eq.s32.totalorder %s137, 1
      %p642 = por %p640, %p641
      %p644 = scmp.ne.s32.totalorder %s629, %s643
      %p645 = scmp.eq.s32.totalorder %s137, 0
      %p646 = por %p644, %p645
      %s648 = sadd.s32 %s647, 1
      %p651 = scmp.eq.s32.totalorder %s131, 1
      %p652 = scmp.ne.s32.totalorder %s647, %s649
      %p653 = scmp.eq.s32.totalorder %s131, 0
      %p654 = por %p652, %p653
      %p655 = scmp.ne.s32.totalorder %s647, %s649
      %p656 = scmp.eq.s32.totalorder %s136, 1
      %p657 = por %p655, %p656
      %p658 = scmp.ne.s32.totalorder %s649, %s650
      %p659 = scmp.eq.s32.totalorder %s136, 0
      %p660 = por %p658, %p659
      %p661 = scmp.ne.s32.totalorder %s649, %s650
      %p662 = scmp.eq.s32.totalorder %s137, 1
      %p663 = por %p661, %p662
      %p665 = scmp.ne.s32.totalorder %s650, %s664
      %p666 = scmp.eq.s32.totalorder %s137, 0
      %p667 = por %p665, %p666
      %s669 = sadd.s32 %s668, 1
      %p672 = scmp.eq.s32.totalorder %s131, 1
      %p673 = scmp.ne.s32.totalorder %s668, %s670
      %p674 = scmp.eq.s32.totalorder %s131, 0
      %p675 = por %p673, %p674
      %p676 = scmp.ne.s32.totalorder %s668, %s670
      %p677 = scmp.eq.s32.totalorder %s136, 1
      %p678 = por %p676, %p677
      %p679 = scmp.ne.s32.totalorder %s670, %s671
      %p680 = scmp.eq.s32.totalorder %s136, 0
      %p681 = por %p679, %p680
      %p682 = scmp.ne.s32.totalorder %s670, %s671
      %p683 = scmp.eq.s32.totalorder %s137, 1
      %p684 = por %p682, %p683
      %p686 = scmp.ne.s32.totalorder %s671, %s685
      %p687 = scmp.eq.s32.totalorder %s137, 0
      %p688 = por %p686, %p687
      %s690 = sadd.s32 %s689, 1
      %p693 = scmp.eq.s32.totalorder %s131, 1
      %p694 = scmp.ne.s32.totalorder %s689, %s691
      %p695 = scmp.eq.s32.totalorder %s131, 0
      %p696 = por %p694, %p695
      %p697 = scmp.ne.s32.totalorder %s689, %s691
      %p698 = scmp.eq.s32.totalorder %s136, 1
      %p699 = por %p697, %p698
      %p700 = scmp.ne.s32.totalorder %s691, %s692
      %p701 = scmp.eq.s32.totalorder %s136, 0
      %p702 = por %p700, %p701
      %p703 = scmp.ne.s32.totalorder %s691, %s692
      %p704 = scmp.eq.s32.totalorder %s137, 1
      %p705 = por %p703, %p704
      %p707 = scmp.ne.s32.totalorder %s692, %s706
      %p708 = scmp.eq.s32.totalorder %s137, 0
      %p709 = por %p707, %p708
      %s711 = sadd.s32 %s710, 1
      %p714 = scmp.eq.s32.totalorder %s131, 1
      %p715 = scmp.ne.s32.totalorder %s710, %s712
      %p716 = scmp.eq.s32.totalorder %s131, 0
      %p717 = por %p715, %p716
      %p718 = scmp.ne.s32.totalorder %s710, %s712
      %p719 = scmp.eq.s32.totalorder %s136, 1
      %p720 = por %p718, %p719
      %p721 = scmp.ne.s32.totalorder %s712, %s713
      %p722 = scmp.eq.s32.totalorder %s136, 0
      %p723 = por %p721, %p722
      %p724 = scmp.ne.s32.totalorder %s712, %s713
      %p725 = scmp.eq.s32.totalorder %s137, 1
      %p726 = por %p724, %p725
      %p728 = scmp.ne.s32.totalorder %s713, %s727
      %p729 = scmp.eq.s32.totalorder %s137, 0
      %p730 = por %p728, %p729
      %s732 = sadd.s32 %s731, 1
      %p735 = scmp.eq.s32.totalorder %s131, 1
      %p736 = scmp.ne.s32.totalorder %s731, %s733
      %p737 = scmp.eq.s32.totalorder %s131, 0
      %p738 = por %p736, %p737
      %p739 = scmp.ne.s32.totalorder %s731, %s733
      %p740 = scmp.eq.s32.totalorder %s136, 1
      %p741 = por %p739, %p740
      %p742 = scmp.ne.s32.totalorder %s733, %s734
      %p743 = scmp.eq.s32.totalorder %s136, 0
      %p744 = por %p742, %p743
      %p745 = scmp.ne.s32.totalorder %s733, %s734
      %p746 = scmp.eq.s32.totalorder %s137, 1
      %p747 = por %p745, %p746
      %p749 = scmp.ne.s32.totalorder %s734, %s748
      %p750 = scmp.eq.s32.totalorder %s137, 0
      %p751 = por %p749, %p750
      %s753 = sadd.s32 %s752, 1
      %p756 = scmp.eq.s32.totalorder %s131, 1
      %p757 = scmp.ne.s32.totalorder %s752, %s754
      %p758 = scmp.eq.s32.totalorder %s131, 0
      %p759 = por %p757, %p758
      %p760 = scmp.ne.s32.totalorder %s752, %s754
      %p761 = scmp.eq.s32.totalorder %s136, 1
      %p762 = por %p760, %p761
      %p763 = scmp.ne.s32.totalorder %s754, %s755
      %p764 = scmp.eq.s32.totalorder %s136, 0
      %p765 = por %p763, %p764
      %p766 = scmp.ne.s32.totalorder %s754, %s755
      %p767 = scmp.eq.s32.totalorder %s137, 1
      %p768 = por %p766, %p767
      %p770 = scmp.ne.s32.totalorder %s755, %s769
      %p771 = scmp.eq.s32.totalorder %s137, 0
      %p772 = por %p770, %p771
      %s774 = sadd.s32 %s773, 1
      %p777 = scmp.eq.s32.totalorder %s131, 1
      %p778 = scmp.ne.s32.totalorder %s773, %s775
      %p779 = scmp.eq.s32.totalorder %s131, 0
      %p780 = por %p778, %p779
      %p781 = scmp.ne.s32.totalorder %s773, %s775
      %p782 = scmp.eq.s32.totalorder %s136, 1
      %p783 = por %p781, %p782
      %p784 = scmp.ne.s32.totalorder %s775, %s776
      %p785 = scmp.eq.s32.totalorder %s136, 0
      %p786 = por %p784, %p785
      %p787 = scmp.ne.s32.totalorder %s775, %s776
      %p788 = scmp.eq.s32.totalorder %s137, 1
      %p789 = por %p787, %p788
      %p791 = scmp.ne.s32.totalorder %s776, %s790
      %p792 = scmp.eq.s32.totalorder %s137, 0
      %p793 = por %p791, %p792
      %s795 = sadd.s32 %s794, 1
      %p798 = scmp.eq.s32.totalorder %s131, 1
      %p799 = scmp.ne.s32.totalorder %s794, %s796
      %p800 = scmp.eq.s32.totalorder %s131, 0
      %p801 = por %p799, %p800
      %p802 = scmp.ne.s32.totalorder %s794, %s796
      %p803 = scmp.eq.s32.totalorder %s136, 1
      %p804 = por %p802, %p803
      %p805 = scmp.ne.s32.totalorder %s796, %s797
      %p806 = scmp.eq.s32.totalorder %s136, 0
      %p807 = por %p805, %p806
      %p808 = scmp.ne.s32.totalorder %s796, %s797
      %p809 = scmp.eq.s32.totalorder %s137, 1
      %p810 = por %p808, %p809
      %p812 = scmp.ne.s32.totalorder %s797, %s811
      %p813 = scmp.eq.s32.totalorder %s137, 0
      %p814 = por %p812, %p813
      %s816 = sadd.s32 %s815, 1
      %p819 = scmp.eq.s32.totalorder %s131, 1
      %p820 = scmp.ne.s32.totalorder %s815, %s817
      %p821 = scmp.eq.s32.totalorder %s131, 0
      %p822 = por %p820, %p821
      %p823 = scmp.ne.s32.totalorder %s815, %s817
      %p824 = scmp.eq.s32.totalorder %s136, 1
      %p825 = por %p823, %p824
      %p826 = scmp.ne.s32.totalorder %s817, %s818
      %p827 = scmp.eq.s32.totalorder %s136, 0
      %p828 = por %p826, %p827
      %p829 = scmp.ne.s32.totalorder %s817, %s818
      %p830 = scmp.eq.s32.totalorder %s137, 1
      %p831 = por %p829, %p830
      %p833 = scmp.ne.s32.totalorder %s818, %s832
      %p834 = scmp.eq.s32.totalorder %s137, 0
      %p835 = por %p833, %p834
      %s837 = sadd.s32 %s836, 1
      %p840 = scmp.eq.s32.totalorder %s131, 1
      %p841 = scmp.ne.s32.totalorder %s836, %s838
      %p842 = scmp.eq.s32.totalorder %s131, 0
      %p843 = por %p841, %p842
      %p844 = scmp.ne.s32.totalorder %s836, %s838
      %p845 = scmp.eq.s32.totalorder %s136, 1
      %p846 = por %p844, %p845
      %p847 = scmp.ne.s32.totalorder %s838, %s839
      %p848 = scmp.eq.s32.totalorder %s136, 0
      %p849 = por %p847, %p848
      %p850 = scmp.ne.s32.totalorder %s838, %s839
      %p851 = scmp.eq.s32.totalorder %s137, 1
      %p852 = por %p850, %p851
      %p854 = scmp.ne.s32.totalorder %s839, %s853
      %p855 = scmp.eq.s32.totalorder %s137, 0
      %p856 = por %p854, %p855
      %s858 = sadd.s32 %s857, 1
      %p861 = scmp.eq.s32.totalorder %s131, 1
      %p862 = scmp.ne.s32.totalorder %s857, %s859
      %p863 = scmp.eq.s32.totalorder %s131, 0
      %p864 = por %p862, %p863
      %p865 = scmp.ne.s32.totalorder %s857, %s859
      %p866 = scmp.eq.s32.totalorder %s136, 1
      %p867 = por %p865, %p866
      %p868 = scmp.ne.s32.totalorder %s859, %s860
      %p869 = scmp.eq.s32.totalorder %s136, 0
      %p870 = por %p868, %p869
      %p871 = scmp.ne.s32.totalorder %s859, %s860
      %p872 = scmp.eq.s32.totalorder %s137, 1
      %p873 = por %p871, %p872
      %p875 = scmp.ne.s32.totalorder %s860, %s874
      %p876 = scmp.eq.s32.totalorder %s137, 0
      %p877 = por %p875, %p876
      %s879 = sadd.s32 %s878, 1
      %p882 = scmp.eq.s32.totalorder %s131, 1
      %p883 = scmp.ne.s32.totalorder %s878, %s880
      %p884 = scmp.eq.s32.totalorder %s131, 0
      %p885 = por %p883, %p884
      %p886 = scmp.ne.s32.totalorder %s878, %s880
      %p887 = scmp.eq.s32.totalorder %s136, 1
      %p888 = por %p886, %p887
      %p889 = scmp.ne.s32.totalorder %s880, %s881
      %p890 = scmp.eq.s32.totalorder %s136, 0
      %p891 = por %p889, %p890
      %p892 = scmp.ne.s32.totalorder %s880, %s881
      %p893 = scmp.eq.s32.totalorder %s137, 1
      %p894 = por %p892, %p893
      %p896 = scmp.ne.s32.totalorder %s881, %s895
      %p897 = scmp.eq.s32.totalorder %s137, 0
      %p898 = por %p896, %p897
      %s900 = sadd.s32 %s899, 1
      %p903 = scmp.eq.s32.totalorder %s131, 1
      %p904 = scmp.ne.s32.totalorder %s899, %s901
      %p905 = scmp.eq.s32.totalorder %s131, 0
      %p906 = por %p904, %p905
      %p907 = scmp.ne.s32.totalorder %s899, %s901
      %p908 = scmp.eq.s32.totalorder %s136, 1
      %p909 = por %p907, %p908
      %p910 = scmp.ne.s32.totalorder %s901, %s902
      %p911 = scmp.eq.s32.totalorder %s136, 0
      %p912 = por %p910, %p911
      %p913 = scmp.ne.s32.totalorder %s901, %s902
      %p914 = scmp.eq.s32.totalorder %s137, 1
      %p915 = por %p913, %p914
      %p917 = scmp.ne.s32.totalorder %s902, %s916
      %p918 = scmp.eq.s32.totalorder %s137, 0
      %p919 = por %p917, %p918
      %s921 = sadd.s32 %s920, 1
      %p924 = scmp.eq.s32.totalorder %s131, 1
      %p925 = scmp.ne.s32.totalorder %s920, %s922
      %p926 = scmp.eq.s32.totalorder %s131, 0
      %p927 = por %p925, %p926
      %p928 = scmp.ne.s32.totalorder %s920, %s922
      %p929 = scmp.eq.s32.totalorder %s136, 1
      %p930 = por %p928, %p929
      %p931 = scmp.ne.s32.totalorder %s922, %s923
      %p932 = scmp.eq.s32.totalorder %s136, 0
      %p933 = por %p931, %p932
      %p934 = scmp.ne.s32.totalorder %s922, %s923
      %p935 = scmp.eq.s32.totalorder %s137, 1
      %p936 = por %p934, %p935
      %p938 = scmp.ne.s32.totalorder %s923, %s937
      %p939 = scmp.eq.s32.totalorder %s137, 0
      %p940 = por %p938, %p939
      %s942 = sadd.s32 %s941, 1
      %p945 = scmp.eq.s32.totalorder %s131, 1
      %p946 = scmp.ne.s32.totalorder %s941, %s943
      %p947 = scmp.eq.s32.totalorder %s131, 0
      %p948 = por %p946, %p947
      %p949 = scmp.ne.s32.totalorder %s941, %s943
      %p950 = scmp.eq.s32.totalorder %s136, 1
      %p951 = por %p949, %p950
      %p952 = scmp.ne.s32.totalorder %s943, %s944
      %p953 = scmp.eq.s32.totalorder %s136, 0
      %p954 = por %p952, %p953
      %p955 = scmp.ne.s32.totalorder %s943, %s944
      %p956 = scmp.eq.s32.totalorder %s137, 1
      %p957 = por %p955, %p956
      %p959 = scmp.ne.s32.totalorder %s944, %s958
      %p960 = scmp.eq.s32.totalorder %s137, 0
      %p961 = por %p959, %p960
      %s963 = sadd.s32 %s962, 1
      %p966 = scmp.eq.s32.totalorder %s131, 1
      %p967 = scmp.ne.s32.totalorder %s962, %s964
      %p968 = scmp.eq.s32.totalorder %s131, 0
      %p969 = por %p967, %p968
      %p970 = scmp.ne.s32.totalorder %s962, %s964
      %p971 = scmp.eq.s32.totalorder %s136, 1
      %p972 = por %p970, %p971
      %p973 = scmp.ne.s32.totalorder %s964, %s965
      %p974 = scmp.eq.s32.totalorder %s136, 0
      %p975 = por %p973, %p974
      %p976 = scmp.ne.s32.totalorder %s964, %s965
      %p977 = scmp.eq.s32.totalorder %s137, 1
      %p978 = por %p976, %p977
      %p980 = scmp.ne.s32.totalorder %s965, %s979
      %p981 = scmp.eq.s32.totalorder %s137, 0
      %p982 = por %p980, %p981
      %s984 = sadd.s32 %s983, 1
      %p987 = scmp.eq.s32.totalorder %s131, 1
      %p988 = scmp.ne.s32.totalorder %s983, %s985
      %p989 = scmp.eq.s32.totalorder %s131, 0
      %p990 = por %p988, %p989
      %p991 = scmp.ne.s32.totalorder %s983, %s985
      %p992 = scmp.eq.s32.totalorder %s136, 1
      %p993 = por %p991, %p992
      %p994 = scmp.ne.s32.totalorder %s985, %s986
      %p995 = scmp.eq.s32.totalorder %s136, 0
      %p996 = por %p994, %p995
      %p997 = scmp.ne.s32.totalorder %s985, %s986
      %p998 = scmp.eq.s32.totalorder %s137, 1
      %p999 = por %p997, %p998
      %p1001 = scmp.ne.s32.totalorder %s986, %s1000
      %p1002 = scmp.eq.s32.totalorder %s137, 0
      %p1003 = por %p1001, %p1002
      %s1005 = sadd.s32 %s1004, 1
      %p1008 = scmp.eq.s32.totalorder %s131, 1
      %p1009 = scmp.ne.s32.totalorder %s1004, %s1006
      %p1010 = scmp.eq.s32.totalorder %s131, 0
      %p1011 = por %p1009, %p1010
      %p1012 = scmp.ne.s32.totalorder %s1004, %s1006
      %p1013 = scmp.eq.s32.totalorder %s136, 1
      %p1014 = por %p1012, %p1013
      %p1015 = scmp.ne.s32.totalorder %s1006, %s1007
      %p1016 = scmp.eq.s32.totalorder %s136, 0
      %p1017 = por %p1015, %p1016
      %p1018 = scmp.ne.s32.totalorder %s1006, %s1007
      %p1019 = scmp.eq.s32.totalorder %s137, 1
      %p1020 = por %p1018, %p1019
      %p1022 = scmp.ne.s32.totalorder %s1007, %s1021
      %p1023 = scmp.eq.s32.totalorder %s137, 0
      %p1024 = por %p1022, %p1023
      %s1026 = sadd.s32 %s1025, 1
      %p1029 = scmp.eq.s32.totalorder %s131, 1
      %p1030 = scmp.ne.s32.totalorder %s1025, %s1027
      %p1031 = scmp.eq.s32.totalorder %s131, 0
      %p1032 = por %p1030, %p1031
      %p1033 = scmp.ne.s32.totalorder %s1025, %s1027
      %p1034 = scmp.eq.s32.totalorder %s136, 1
      %p1035 = por %p1033, %p1034
      %p1036 = scmp.ne.s32.totalorder %s1027, %s1028
      %p1037 = scmp.eq.s32.totalorder %s136, 0
      %p1038 = por %p1036, %p1037
      %p1039 = scmp.ne.s32.totalorder %s1027, %s1028
      %p1040 = scmp.eq.s32.totalorder %s137, 1
      %p1041 = por %p1039, %p1040
      %p1043 = scmp.ne.s32.totalorder %s1028, %s1042
      %p1044 = scmp.eq.s32.totalorder %s137, 0
      %p1045 = por %p1043, %p1044
      %s1047 = sadd.s32 %s1046, 1
      %p1050 = scmp.eq.s32.totalorder %s131, 1
      %p1051 = scmp.ne.s32.totalorder %s1046, %s1048
      %p1052 = scmp.eq.s32.totalorder %s131, 0
      %p1053 = por %p1051, %p1052
      %p1054 = scmp.ne.s32.totalorder %s1046, %s1048
      %p1055 = scmp.eq.s32.totalorder %s136, 1
      %p1056 = por %p1054, %p1055
      %p1057 = scmp.ne.s32.totalorder %s1048, %s1049
      %p1058 = scmp.eq.s32.totalorder %s136, 0
      %p1059 = por %p1057, %p1058
      %p1060 = scmp.ne.s32.totalorder %s1048, %s1049
      %p1061 = scmp.eq.s32.totalorder %s137, 1
      %p1062 = por %p1060, %p1061
      %p1064 = scmp.ne.s32.totalorder %s1049, %s1063
      %p1065 = scmp.eq.s32.totalorder %s137, 0
      %p1066 = por %p1064, %p1065
      %s1068 = sadd.s32 %s1067, 1
      %p1071 = scmp.eq.s32.totalorder %s131, 1
      %p1072 = scmp.ne.s32.totalorder %s1067, %s1069
      %p1073 = scmp.eq.s32.totalorder %s131, 0
      %p1074 = por %p1072, %p1073
      %p1075 = scmp.ne.s32.totalorder %s1067, %s1069
      %p1076 = scmp.eq.s32.totalorder %s136, 1
      %p1077 = por %p1075, %p1076
      %p1078 = scmp.ne.s32.totalorder %s1069, %s1070
      %p1079 = scmp.eq.s32.totalorder %s136, 0
      %p1080 = por %p1078, %p1079
      %p1081 = scmp.ne.s32.totalorder %s1069, %s1070
      %p1082 = scmp.eq.s32.totalorder %s137, 1
      %p1083 = por %p1081, %p1082
      %p1085 = scmp.ne.s32.totalorder %s1070, %s1084
      %p1086 = scmp.eq.s32.totalorder %s137, 0
      %p1087 = por %p1085, %p1086
      %s1089 = sadd.s32 %s1088, 1
      %p1092 = scmp.eq.s32.totalorder %s131, 1
      %p1093 = scmp.ne.s32.totalorder %s1088, %s1090
      %p1094 = scmp.eq.s32.totalorder %s131, 0
      %p1095 = por %p1093, %p1094
      %p1096 = scmp.ne.s32.totalorder %s1088, %s1090
      %p1097 = scmp.eq.s32.totalorder %s136, 1
      %p1098 = por %p1096, %p1097
      %p1099 = scmp.ne.s32.totalorder %s1090, %s1091
      %p1100 = scmp.eq.s32.totalorder %s136, 0
      %p1101 = por %p1099, %p1100
      %p1102 = scmp.ne.s32.totalorder %s1090, %s1091
      %p1103 = scmp.eq.s32.totalorder %s137, 1
      %p1104 = por %p1102, %p1103
      %p1106 = scmp.ne.s32.totalorder %s1091, %s1105
      %p1107 = scmp.eq.s32.totalorder %s137, 0
      %p1108 = por %p1106, %p1107
      %s1110 = sadd.s32 %s1109, 1
      %p1113 = scmp.eq.s32.totalorder %s131, 1
      %p1114 = scmp.ne.s32.totalorder %s1109, %s1111
      %p1115 = scmp.eq.s32.totalorder %s131, 0
      %p1116 = por %p1114, %p1115
      %p1117 = scmp.ne.s32.totalorder %s1109, %s1111
      %p1118 = scmp.eq.s32.totalorder %s136, 1
      %p1119 = por %p1117, %p1118
      %p1120 = scmp.ne.s32.totalorder %s1111, %s1112
      %p1121 = scmp.eq.s32.totalorder %s136, 0
      %p1122 = por %p1120, %p1121
      %p1123 = scmp.ne.s32.totalorder %s1111, %s1112
      %p1124 = scmp.eq.s32.totalorder %s137, 1
      %p1125 = por %p1123, %p1124
      %p1127 = scmp.ne.s32.totalorder %s1112, %s1126
      %p1128 = scmp.eq.s32.totalorder %s137, 0
      %p1129 = por %p1127, %p1128
      %s1131 = sadd.s32 %s1130, 1
      %p1134 = scmp.eq.s32.totalorder %s131, 1
      %p1135 = scmp.ne.s32.totalorder %s1130, %s1132
      %p1136 = scmp.eq.s32.totalorder %s131, 0
      %p1137 = por %p1135, %p1136
      %p1138 = scmp.ne.s32.totalorder %s1130, %s1132
      %p1139 = scmp.eq.s32.totalorder %s136, 1
      %p1140 = por %p1138, %p1139
      %p1141 = scmp.ne.s32.totalorder %s1132, %s1133
      %p1142 = scmp.eq.s32.totalorder %s136, 0
      %p1143 = por %p1141, %p1142
      %p1144 = scmp.ne.s32.totalorder %s1132, %s1133
      %p1145 = scmp.eq.s32.totalorder %s137, 1
      %p1146 = por %p1144, %p1145
      %p1148 = scmp.ne.s32.totalorder %s1133, %s1147
      %p1149 = scmp.eq.s32.totalorder %s137, 0
      %p1150 = por %p1148, %p1149
      %s1152 = sadd.s32 %s1151, 1
      %p1155 = scmp.eq.s32.totalorder %s131, 1
      %p1156 = scmp.ne.s32.totalorder %s1151, %s1153
      %p1157 = scmp.eq.s32.totalorder %s131, 0
      %p1158 = por %p1156, %p1157
      %p1159 = scmp.ne.s32.totalorder %s1151, %s1153
      %p1160 = scmp.eq.s32.totalorder %s136, 1
      %p1161 = por %p1159, %p1160
      %p1162 = scmp.ne.s32.totalorder %s1153, %s1154
      %p1163 = scmp.eq.s32.totalorder %s136, 0
      %p1164 = por %p1162, %p1163
      %p1165 = scmp.ne.s32.totalorder %s1153, %s1154
      %p1166 = scmp.eq.s32.totalorder %s137, 1
      %p1167 = por %p1165, %p1166
      %p1169 = scmp.ne.s32.totalorder %s1154, %s1168
      %p1170 = scmp.eq.s32.totalorder %s137, 0
      %p1171 = por %p1169, %p1170
      %s1173 = sadd.s32 %s1172, 1
      %p1176 = scmp.eq.s32.totalorder %s131, 1
      %p1177 = scmp.ne.s32.totalorder %s1172, %s1174
      %p1178 = scmp.eq.s32.totalorder %s131, 0
      %p1179 = por %p1177, %p1178
      %p1180 = scmp.ne.s32.totalorder %s1172, %s1174
      %p1181 = scmp.eq.s32.totalorder %s136, 1
      %p1182 = por %p1180, %p1181
      %p1183 = scmp.ne.s32.totalorder %s1174, %s1175
      %p1184 = scmp.eq.s32.totalorder %s136, 0
      %p1185 = por %p1183, %p1184
      %p1186 = scmp.ne.s32.totalorder %s1174, %s1175
      %p1187 = scmp.eq.s32.totalorder %s137, 1
      %p1188 = por %p1186, %p1187
      %p1190 = scmp.ne.s32.totalorder %s1175, %s1189
      %p1191 = scmp.eq.s32.totalorder %s137, 0
      %p1192 = por %p1190, %p1191
      %s1194 = sadd.s32 %s1193, 1
      %p1197 = scmp.eq.s32.totalorder %s131, 1
      %p1198 = scmp.ne.s32.totalorder %s1193, %s1195
      %p1199 = scmp.eq.s32.totalorder %s131, 0
      %p1200 = por %p1198, %p1199
      %p1201 = scmp.ne.s32.totalorder %s1193, %s1195
      %p1202 = scmp.eq.s32.totalorder %s136, 1
      %p1203 = por %p1201, %p1202
      %p1204 = scmp.ne.s32.totalorder %s1195, %s1196
      %p1205 = scmp.eq.s32.totalorder %s136, 0
      %p1206 = por %p1204, %p1205
      %p1207 = scmp.ne.s32.totalorder %s1195, %s1196
      %p1208 = scmp.eq.s32.totalorder %s137, 1
      %p1209 = por %p1207, %p1208
      %p1211 = scmp.ne.s32.totalorder %s1196, %s1210
      %p1212 = scmp.eq.s32.totalorder %s137, 0
      %p1213 = por %p1211, %p1212
      %s1215 = sadd.s32 %s1214, 1
      %p1218 = scmp.eq.s32.totalorder %s131, 1
      %p1219 = scmp.ne.s32.totalorder %s1214, %s1216
      %p1220 = scmp.eq.s32.totalorder %s131, 0
      %p1221 = por %p1219, %p1220
      %p1222 = scmp.ne.s32.totalorder %s1214, %s1216
      %p1223 = scmp.eq.s32.totalorder %s136, 1
      %p1224 = por %p1222, %p1223
      %p1225 = scmp.ne.s32.totalorder %s1216, %s1217
      %p1226 = scmp.eq.s32.totalorder %s136, 0
      %p1227 = por %p1225, %p1226
      %p1228 = scmp.ne.s32.totalorder %s1216, %s1217
      %p1229 = scmp.eq.s32.totalorder %s137, 1
      %p1230 = por %p1228, %p1229
      %p1232 = scmp.ne.s32.totalorder %s1217, %s1231
      %p1233 = scmp.eq.s32.totalorder %s137, 0
      %p1234 = por %p1232, %p1233
      %s1236 = sadd.s32 %s1235, 1
      %p1239 = scmp.eq.s32.totalorder %s131, 1
      %p1240 = scmp.ne.s32.totalorder %s1235, %s1237
      %p1241 = scmp.eq.s32.totalorder %s131, 0
      %p1242 = por %p1240, %p1241
      %p1243 = scmp.ne.s32.totalorder %s1235, %s1237
      %p1244 = scmp.eq.s32.totalorder %s136, 1
      %p1245 = por %p1243, %p1244
      %p1246 = scmp.ne.s32.totalorder %s1237, %s1238
      %p1247 = scmp.eq.s32.totalorder %s136, 0
      %p1248 = por %p1246, %p1247
      %p1249 = scmp.ne.s32.totalorder %s1237, %s1238
      %p1250 = scmp.eq.s32.totalorder %s137, 1
      %p1251 = por %p1249, %p1250
      %p1253 = scmp.ne.s32.totalorder %s1238, %s1252
      %p1254 = scmp.eq.s32.totalorder %s137, 0
      %p1255 = por %p1253, %p1254
      %s1257 = sadd.s32 %s1256, 1
      %p1260 = scmp.eq.s32.totalorder %s131, 1
      %p1261 = scmp.ne.s32.totalorder %s1256, %s1258
      %p1262 = scmp.eq.s32.totalorder %s131, 0
      %p1263 = por %p1261, %p1262
      %p1264 = scmp.ne.s32.totalorder %s1256, %s1258
      %p1265 = scmp.eq.s32.totalorder %s136, 1
      %p1266 = por %p1264, %p1265
      %p1267 = scmp.ne.s32.totalorder %s1258, %s1259
      %p1268 = scmp.eq.s32.totalorder %s136, 0
      %p1269 = por %p1267, %p1268
      %p1270 = scmp.ne.s32.totalorder %s1258, %s1259
      %p1271 = scmp.eq.s32.totalorder %s137, 1
      %p1272 = por %p1270, %p1271
      %p1274 = scmp.ne.s32.totalorder %s1259, %s1273
      %p1275 = scmp.eq.s32.totalorder %s137, 0
      %p1276 = por %p1274, %p1275
      %s1278 = sadd.s32 %s1277, 1
      %p1281 = scmp.eq.s32.totalorder %s131, 1
      %p1282 = scmp.ne.s32.totalorder %s1277, %s1279
      %p1283 = scmp.eq.s32.totalorder %s131, 0
      %p1284 = por %p1282, %p1283
      %p1285 = scmp.ne.s32.totalorder %s1277, %s1279
      %p1286 = scmp.eq.s32.totalorder %s136, 1
      %p1287 = por %p1285, %p1286
      %p1288 = scmp.ne.s32.totalorder %s1279, %s1280
      %p1289 = scmp.eq.s32.totalorder %s136, 0
      %p1290 = por %p1288, %p1289
      %p1291 = scmp.ne.s32.totalorder %s1279, %s1280
      %p1292 = scmp.eq.s32.totalorder %s137, 1
      %p1293 = por %p1291, %p1292
      %p1295 = scmp.ne.s32.totalorder %s1280, %s1294
      %p1296 = scmp.eq.s32.totalorder %s137, 0
      %p1297 = por %p1295, %p1296
      %s1299 = sadd.s32 %s1298, 1
      %p1302 = scmp.eq.s32.totalorder %s131, 1
      %p1303 = scmp.ne.s32.totalorder %s1298, %s1300
      %p1304 = scmp.eq.s32.totalorder %s131, 0
      %p1305 = por %p1303, %p1304
      %p1306 = scmp.ne.s32.totalorder %s1298, %s1300
      %p1307 = scmp.eq.s32.totalorder %s136, 1
      %p1308 = por %p1306, %p1307
      %p1309 = scmp.ne.s32.totalorder %s1300, %s1301
      %p1310 = scmp.eq.s32.totalorder %s136, 0
      %p1311 = por %p1309, %p1310
      %p1312 = scmp.ne.s32.totalorder %s1300, %s1301
      %p1313 = scmp.eq.s32.totalorder %s137, 1
      %p1314 = por %p1312, %p1313
      %p1316 = scmp.ne.s32.totalorder %s1301, %s1315
      %p1317 = scmp.eq.s32.totalorder %s137, 0
      %p1318 = por %p1316, %p1317
      %s1320 = sadd.s32 %s1319, 1
      %p1323 = scmp.eq.s32.totalorder %s131, 1
      %p1324 = scmp.ne.s32.totalorder %s1319, %s1321
      %p1325 = scmp.eq.s32.totalorder %s131, 0
      %p1326 = por %p1324, %p1325
      %p1327 = scmp.ne.s32.totalorder %s1319, %s1321
      %p1328 = scmp.eq.s32.totalorder %s136, 1
      %p1329 = por %p1327, %p1328
      %p1330 = scmp.ne.s32.totalorder %s1321, %s1322
      %p1331 = scmp.eq.s32.totalorder %s136, 0
      %p1332 = por %p1330, %p1331
      %p1333 = scmp.ne.s32.totalorder %s1321, %s1322
      %p1334 = scmp.eq.s32.totalorder %s137, 1
      %p1335 = por %p1333, %p1334
      %p1337 = scmp.ne.s32.totalorder %s1322, %s1336
      %p1338 = scmp.eq.s32.totalorder %s137, 0
      %p1339 = por %p1337, %p1338
      %s1341 = sadd.s32 %s1340, 1
      %p1344 = scmp.eq.s32.totalorder %s131, 1
      %p1345 = scmp.ne.s32.totalorder %s1340, %s1342
      %p1346 = scmp.eq.s32.totalorder %s131, 0
      %p1347 = por %p1345, %p1346
      %p1348 = scmp.ne.s32.totalorder %s1340, %s1342
      %p1349 = scmp.eq.s32.totalorder %s136, 1
      %p1350 = por %p1348, %p1349
      %p1351 = scmp.ne.s32.totalorder %s1342, %s1343
      %p1352 = scmp.eq.s32.totalorder %s136, 0
      %p1353 = por %p1351, %p1352
      %p1354 = scmp.ne.s32.totalorder %s1342, %s1343
      %p1355 = scmp.eq.s32.totalorder %s137, 1
      %p1356 = por %p1354, %p1355
      %p1358 = scmp.ne.s32.totalorder %s1343, %s1357
      %p1359 = scmp.eq.s32.totalorder %s137, 0
      %p1360 = por %p1358, %p1359
      %s1362 = sadd.s32 %s1361, 1
      %p1365 = scmp.eq.s32.totalorder %s131, 1
      %p1366 = scmp.ne.s32.totalorder %s1361, %s1363
      %p1367 = scmp.eq.s32.totalorder %s131, 0
      %p1368 = por %p1366, %p1367
      %p1369 = scmp.ne.s32.totalorder %s1361, %s1363
      %p1370 = scmp.eq.s32.totalorder %s136, 1
      %p1371 = por %p1369, %p1370
      %p1372 = scmp.ne.s32.totalorder %s1363, %s1364
      %p1373 = scmp.eq.s32.totalorder %s136, 0
      %p1374 = por %p1372, %p1373
      %p1375 = scmp.ne.s32.totalorder %s1363, %s1364
      %p1376 = scmp.eq.s32.totalorder %s137, 1
      %p1377 = por %p1375, %p1376
      %p1379 = scmp.ne.s32.totalorder %s1364, %s1378
      %p1380 = scmp.eq.s32.totalorder %s137, 0
      %p1381 = por %p1379, %p1380
      %s1383 = sadd.s32 %s1382, 1
      %p1386 = scmp.eq.s32.totalorder %s131, 1
      %p1387 = scmp.ne.s32.totalorder %s1382, %s1384
      %p1388 = scmp.eq.s32.totalorder %s131, 0
      %p1389 = por %p1387, %p1388
      %p1390 = scmp.ne.s32.totalorder %s1382, %s1384
      %p1391 = scmp.eq.s32.totalorder %s136, 1
      %p1392 = por %p1390, %p1391
      %p1393 = scmp.ne.s32.totalorder %s1384, %s1385
      %p1394 = scmp.eq.s32.totalorder %s136, 0
      %p1395 = por %p1393, %p1394
      %p1396 = scmp.ne.s32.totalorder %s1384, %s1385
      %p1397 = scmp.eq.s32.totalorder %s137, 1
      %p1398 = por %p1396, %p1397
      %p1400 = scmp.ne.s32.totalorder %s1385, %s1399
      %p1401 = scmp.eq.s32.totalorder %s137, 0
      %p1402 = por %p1400, %p1401
      %s1403 = ssub.s32 %s131, %s138
      %p1404 = scmp.eq.s32.totalorder %s1403, 0
      %s1406 = sadd.s32 %s1405, 1
      %s1407 = scalar_select %p1404, %s1405, %s1406
      %p1410 = pneg %p1404
      %p1411 = scmp.eq.s32.totalorder %s131, 1
      %p1412 = por %p1410, %p1411
      %p1413 = scmp.ne.s32.totalorder %s1405, %s1408
      %p1414 = scmp.eq.s32.totalorder %s131, 0
      %p1415 = por %p1413, %p1414
      %p1416 = scmp.ne.s32.totalorder %s1405, %s1408
      %p1417 = scmp.eq.s32.totalorder %s136, 1
      %p1418 = por %p1416, %p1417
      %p1419 = scmp.ne.s32.totalorder %s1408, %s1409
      %p1420 = scmp.eq.s32.totalorder %s136, 0
      %p1421 = por %p1419, %p1420
      %p1422 = scmp.ne.s32.totalorder %s1408, %s1409
      %p1423 = scmp.eq.s32.totalorder %s137, 1
      %p1424 = por %p1422, %p1423
      %p1426 = scmp.ne.s32.totalorder %s1409, %s1425
      %p1427 = scmp.eq.s32.totalorder %s137, 0
      %p1428 = por %p1426, %p1427
      %p1429 = scmp.le.s32.totalorder 1, %s131
      %p1430 = scmp.lt.s32.totalorder %s131, 3
      %p1431 = pnand %p1429, %p1430
      %p1432 = pneg %p1431
      // Predicated region
      $region9: #{cloud_matrix_model_forward.1} parent=5 // pred_check
        _
      $region10: #{cloud_matrix_model_forward.1} parent=5 // pred_check_branch
        %1434 = sbr.rel (%p1431) target = $region12
      $region11: #{cloud_matrix_model_forward.1} parent=5 // pred_region
        %s1435 = ssub.s32 %s131, 1
        // Predicated region
        $region13: #{cloud_matrix_model_forward.1} parent=11 // pred_check
          %p1436 = pneg %p282
        $region14: #{cloud_matrix_model_forward.1} parent=11 // pred_check_branch
          %1438 = sbr.rel (%p1436) target = $region16
        $region15: #{cloud_matrix_model_forward.1} parent=11 // pred_region
          _
        $region16: #{cloud_matrix_model_forward.1} parent=11 // pred_fallthru
          _
        // Predicated region
        $region17: #{cloud_matrix_model_forward.1} parent=11 // pred_check
          %p1439 = pneg %p303
        $region18: #{cloud_matrix_model_forward.1} parent=11 // pred_check_branch
          %1441 = sbr.rel (%p1439) target = $region20
        $region19: #{cloud_matrix_model_forward.1} parent=11 // pred_region
          %s1443 = ssub.s32 16, 16
          %1444 = vsyncadd [#allocation3], %s1443
          %s1446 = sshll.u32 [#allocation2], 4
          %s1447 = int_to_ptr.vmem [resolvable:$true] %s1446
          %1449 = dma.hbm_to_vmem [thread:$0]  %s13, 16, %s1447, [#allocation3]
        $region20: #{cloud_matrix_model_forward.1} parent=11 // pred_fallthru
          _
        // Predicated region
        $region21: #{cloud_matrix_model_forward.1} parent=11 // pred_check
          %p1450 = pneg %p324
        $region22: #{cloud_matrix_model_forward.1} parent=11 // pred_check_branch
          %1452 = sbr.rel (%p1450) target = $region24
        $region23: #{cloud_matrix_model_forward.1} parent=11 // pred_region
          _
        $region24: #{cloud_matrix_model_forward.1} parent=11 // pred_fallthru
          _
        // Predicated region
        $region25: #{cloud_matrix_model_forward.1} parent=11 // pred_check
          %p1453 = pneg %p345
        $region26: #{cloud_matrix_model_forward.1} parent=11 // pred_check_branch
          %1455 = sbr.rel (%p1453) target = $region28
        $region27: #{cloud_matrix_model_forward.1} parent=11 // pred_region
          %s1457 = ssub.s32 16, 16
          %1458 = vsyncadd [#allocation5], %s1457
          %s1460 = sshll.u32 [#allocation4], 4
          %s1461 = int_to_ptr.vmem [resolvable:$true] %s1460
          %1463 = dma.hbm_to_vmem [thread:$0]  %s17, 16, %s1461, [#allocation5]
        $region28: #{cloud_matrix_model_forward.1} parent=11 // pred_fallthru
          _
        // Predicated region
        $region29: #{cloud_matrix_model_forward.1} parent=11 // pred_check
          %p1464 = pneg %p366
        $region30: #{cloud_matrix_model_forward.1} parent=11 // pred_check_branch
          %1466 = sbr.rel (%p1464) target = $region32
        $region31: #{cloud_matrix_model_forward.1} parent=11 // pred_region
          _
        $region32: #{cloud_matrix_model_forward.1} parent=11 // pred_fallthru
          _
        // Predicated region
        $region33: #{cloud_matrix_model_forward.1} parent=11 // pred_check
          %p1467 = pneg %p387
        $region34: #{cloud_matrix_model_forward.1} parent=11 // pred_check_branch
          %1469 = sbr.rel (%p1467) target = $region36
        $region35: #{cloud_matrix_model_forward.1} parent=11 // pred_region
          _
        $region36: #{cloud_matrix_model_forward.1} parent=11 // pred_fallthru
          _
        // Predicated region
        $region37: #{cloud_matrix_model_forward.1} parent=11 // pred_check
          %p1470 = pneg %p408
        $region38: #{cloud_matrix_model_forward.1} parent=11 // pred_check_branch
          %1472 = sbr.rel (%p1470) target = $region40
        $region39: #{cloud_matrix_model_forward.1} parent=11 // pred_region
          _
        $region40: #{cloud_matrix_model_forward.1} parent=11 // pred_fallthru
          _
        // Predicated region
        $region41: #{cloud_matrix_model_forward.1} parent=11 // pred_check
          %p1473 = pneg %p429
        $region42: #{cloud_matrix_model_forward.1} parent=11 // pred_check_branch
          %1475 = sbr.rel (%p1473) target = $region44
        $region43: #{cloud_matrix_model_forward.1} parent=11 // pred_region
          _
        $region44: #{cloud_matrix_model_forward.1} parent=11 // pred_fallthru
          _
        // Predicated region
        $region45: #{cloud_matrix_model_forward.1} parent=11 // pred_check
          %p1476 = pneg %p450
        $region46: #{cloud_matrix_model_forward.1} parent=11 // pred_check_branch
          %1478 = sbr.rel (%p1476) target = $region48
        $region47: #{cloud_matrix_model_forward.1} parent=11 // pred_region
          _
        $region48: #{cloud_matrix_model_forward.1} parent=11 // pred_fallthru
          _
        // Predicated region
        $region49: #{cloud_matrix_model_forward.1} parent=11 // pred_check
          %p1479 = pneg %p471
        $region50: #{cloud_matrix_model_forward.1} parent=11 // pred_check_branch
          %1481 = sbr.rel (%p1479) target = $region52
        $region51: #{cloud_matrix_model_forward.1} parent=11 // pred_region
          _
        $region52: #{cloud_matrix_model_forward.1} parent=11 // pred_fallthru
          _
        // Predicated region
        $region53: #{cloud_matrix_model_forward.1} parent=11 // pred_check
          %p1482 = pneg %p492
        $region54: #{cloud_matrix_model_forward.1} parent=11 // pred_check_branch
          %1484 = sbr.rel (%p1482) target = $region56
        $region55: #{cloud_matrix_model_forward.1} parent=11 // pred_region
          _
        $region56: #{cloud_matrix_model_forward.1} parent=11 // pred_fallthru
          _
        // Predicated region
        $region57: #{cloud_matrix_model_forward.1} parent=11 // pred_check
          %p1485 = pneg %p513
        $region58: #{cloud_matrix_model_forward.1} parent=11 // pred_check_branch
          %1487 = sbr.rel (%p1485) target = $region60
        $region59: #{cloud_matrix_model_forward.1} parent=11 // pred_region
          _
        $region60: #{cloud_matrix_model_forward.1} parent=11 // pred_fallthru
          _
        // Predicated region
        $region61: #{cloud_matrix_model_forward.1} parent=11 // pred_check
          %p1488 = pneg %p534
        $region62: #{cloud_matrix_model_forward.1} parent=11 // pred_check_branch
          %1490 = sbr.rel (%p1488) target = $region64
        $region63: #{cloud_matrix_model_forward.1} parent=11 // pred_region
          _
        $region64: #{cloud_matrix_model_forward.1} parent=11 // pred_fallthru
          _
        // Predicated region
        $region65: #{cloud_matrix_model_forward.1} parent=11 // pred_check
          %p1491 = pneg %p555
        $region66: #{cloud_matrix_model_forward.1} parent=11 // pred_check_branch
          %1493 = sbr.rel (%p1491) target = $region68
        $region67: #{cloud_matrix_model_forward.1} parent=11 // pred_region
          _
        $region68: #{cloud_matrix_model_forward.1} parent=11 // pred_fallthru
          _
        // Predicated region
        $region69: #{cloud_matrix_model_forward.1} parent=11 // pred_check
          %p1494 = pneg %p576
        $region70: #{cloud_matrix_model_forward.1} parent=11 // pred_check_branch
          %1496 = sbr.rel (%p1494) target = $region72
        $region71: #{cloud_matrix_model_forward.1} parent=11 // pred_region
          _
        $region72: #{cloud_matrix_model_forward.1} parent=11 // pred_fallthru
          _
        // Predicated region
        $region73: #{cloud_matrix_model_forward.1} parent=11 // pred_check
          %p1497 = pneg %p597
        $region74: #{cloud_matrix_model_forward.1} parent=11 // pred_check_branch
          %1499 = sbr.rel (%p1497) target = $region76
        $region75: #{cloud_matrix_model_forward.1} parent=11 // pred_region
          _
        $region76: #{cloud_matrix_model_forward.1} parent=11 // pred_fallthru
          _
        // Predicated region
        $region77: #{cloud_matrix_model_forward.1} parent=11 // pred_check
          %p1500 = pneg %p618
        $region78: #{cloud_matrix_model_forward.1} parent=11 // pred_check_branch
          %1502 = sbr.rel (%p1500) target = $region80
        $region79: #{cloud_matrix_model_forward.1} parent=11 // pred_region
          _
        $region80: #{cloud_matrix_model_forward.1} parent=11 // pred_fallthru
          _
        // Predicated region
        $region81: #{cloud_matrix_model_forward.1} parent=11 // pred_check
          %p1503 = pneg %p639
        $region82: #{cloud_matrix_model_forward.1} parent=11 // pred_check_branch
          %1505 = sbr.rel (%p1503) target = $region84
        $region83: #{cloud_matrix_model_forward.1} parent=11 // pred_region
          _
        $region84: #{cloud_matrix_model_forward.1} parent=11 // pred_fallthru
          _
        // Predicated region
        $region85: #{cloud_matrix_model_forward.1} parent=11 // pred_check
          %p1506 = pneg %p660
        $region86: #{cloud_matrix_model_forward.1} parent=11 // pred_check_branch
          %1508 = sbr.rel (%p1506) target = $region88
        $region87: #{cloud_matrix_model_forward.1} parent=11 // pred_region
          _
        $region88: #{cloud_matrix_model_forward.1} parent=11 // pred_fallthru
          _
        // Predicated region
        $region89: #{cloud_matrix_model_forward.1} parent=11 // pred_check
          %p1509 = pneg %p681
        $region90: #{cloud_matrix_model_forward.1} parent=11 // pred_check_branch
          %1511 = sbr.rel (%p1509) target = $region92
        $region91: #{cloud_matrix_model_forward.1} parent=11 // pred_region
          _
        $region92: #{cloud_matrix_model_forward.1} parent=11 // pred_fallthru
          _
        // Predicated region
        $region93: #{cloud_matrix_model_forward.1} parent=11 // pred_check
          %p1512 = pneg %p702
        $region94: #{cloud_matrix_model_forward.1} parent=11 // pred_check_branch
          %1514 = sbr.rel (%p1512) target = $region96
        $region95: #{cloud_matrix_model_forward.1} parent=11 // pred_region
          _
        $region96: #{cloud_matrix_model_forward.1} parent=11 // pred_fallthru
          _
        // Predicated region
        $region97: #{cloud_matrix_model_forward.1} parent=11 // pred_check
          %p1515 = pneg %p723
        $region98: #{cloud_matrix_model_forward.1} parent=11 // pred_check_branch
          %1517 = sbr.rel (%p1515) target = $region100
        $region99: #{cloud_matrix_model_forward.1} parent=11 // pred_region
          _
        $region100: #{cloud_matrix_model_forward.1} parent=11 // pred_fallthru
          _
        // Predicated region
        $region101: #{cloud_matrix_model_forward.1} parent=11 // pred_check
          %p1518 = pneg %p744
        $region102: #{cloud_matrix_model_forward.1} parent=11 // pred_check_branch
          %1520 = sbr.rel (%p1518) target = $region104
        $region103: #{cloud_matrix_model_forward.1} parent=11 // pred_region
          _
        $region104: #{cloud_matrix_model_forward.1} parent=11 // pred_fallthru
          _
        // Predicated region
        $region105: #{cloud_matrix_model_forward.1} parent=11 // pred_check
          %p1521 = pneg %p765
        $region106: #{cloud_matrix_model_forward.1} parent=11 // pred_check_branch
          %1523 = sbr.rel (%p1521) target = $region108
        $region107: #{cloud_matrix_model_forward.1} parent=11 // pred_region
          _
        $region108: #{cloud_matrix_model_forward.1} parent=11 // pred_fallthru
          _
        // Predicated region
        $region109: #{cloud_matrix_model_forward.1} parent=11 // pred_check
          %p1524 = pneg %p786
        $region110: #{cloud_matrix_model_forward.1} parent=11 // pred_check_branch
          %1526 = sbr.rel (%p1524) target = $region112
        $region111: #{cloud_matrix_model_forward.1} parent=11 // pred_region
          _
        $region112: #{cloud_matrix_model_forward.1} parent=11 // pred_fallthru
          _
        // Predicated region
        $region113: #{cloud_matrix_model_forward.1} parent=11 // pred_check
          %p1527 = pneg %p807
        $region114: #{cloud_matrix_model_forward.1} parent=11 // pred_check_branch
          %1529 = sbr.rel (%p1527) target = $region116
        $region115: #{cloud_matrix_model_forward.1} parent=11 // pred_region
          _
        $region116: #{cloud_matrix_model_forward.1} parent=11 // pred_fallthru
          _
        // Predicated region
        $region117: #{cloud_matrix_model_forward.1} parent=11 // pred_check
          %p1530 = pneg %p828
        $region118: #{cloud_matrix_model_forward.1} parent=11 // pred_check_branch
          %1532 = sbr.rel (%p1530) target = $region120
        $region119: #{cloud_matrix_model_forward.1} parent=11 // pred_region
          _
        $region120: #{cloud_matrix_model_forward.1} parent=11 // pred_fallthru
          _
        // Predicated region
        $region121: #{cloud_matrix_model_forward.1} parent=11 // pred_check
          %p1533 = pneg %p849
        $region122: #{cloud_matrix_model_forward.1} parent=11 // pred_check_branch
          %1535 = sbr.rel (%p1533) target = $region124
        $region123: #{cloud_matrix_model_forward.1} parent=11 // pred_region
          _
        $region124: #{cloud_matrix_model_forward.1} parent=11 // pred_fallthru
          _
        // Predicated region
        $region125: #{cloud_matrix_model_forward.1} parent=11 // pred_check
          %p1536 = pneg %p870
        $region126: #{cloud_matrix_model_forward.1} parent=11 // pred_check_branch
          %1538 = sbr.rel (%p1536) target = $region128
        $region127: #{cloud_matrix_model_forward.1} parent=11 // pred_region
          _
        $region128: #{cloud_matrix_model_forward.1} parent=11 // pred_fallthru
          _
        // Predicated region
        $region129: #{cloud_matrix_model_forward.1} parent=11 // pred_check
          %p1539 = pneg %p891
        $region130: #{cloud_matrix_model_forward.1} parent=11 // pred_check_branch
          %1541 = sbr.rel (%p1539) target = $region132
        $region131: #{cloud_matrix_model_forward.1} parent=11 // pred_region
          _
        $region132: #{cloud_matrix_model_forward.1} parent=11 // pred_fallthru
          _
        // Predicated region
        $region133: #{cloud_matrix_model_forward.1} parent=11 // pred_check
          %p1542 = pneg %p912
        $region134: #{cloud_matrix_model_forward.1} parent=11 // pred_check_branch
          %1544 = sbr.rel (%p1542) target = $region136
        $region135: #{cloud_matrix_model_forward.1} parent=11 // pred_region
          _
        $region136: #{cloud_matrix_model_forward.1} parent=11 // pred_fallthru
          _
        // Predicated region
        $region137: #{cloud_matrix_model_forward.1} parent=11 // pred_check
          %p1545 = pneg %p933
        $region138: #{cloud_matrix_model_forward.1} parent=11 // pred_check_branch
          %1547 = sbr.rel (%p1545) target = $region140
        $region139: #{cloud_matrix_model_forward.1} parent=11 // pred_region
          _
        $region140: #{cloud_matrix_model_forward.1} parent=11 // pred_fallthru
          _
        // Predicated region
        $region141: #{cloud_matrix_model_forward.1} parent=11 // pred_check
          %p1548 = pneg %p954
        $region142: #{cloud_matrix_model_forward.1} parent=11 // pred_check_branch
          %1550 = sbr.rel (%p1548) target = $region144
        $region143: #{cloud_matrix_model_forward.1} parent=11 // pred_region
          _
        $region144: #{cloud_matrix_model_forward.1} parent=11 // pred_fallthru
          _
        // Predicated region
        $region145: #{cloud_matrix_model_forward.1} parent=11 // pred_check
          %p1551 = pneg %p975
        $region146: #{cloud_matrix_model_forward.1} parent=11 // pred_check_branch
          %1553 = sbr.rel (%p1551) target = $region148
        $region147: #{cloud_matrix_model_forward.1} parent=11 // pred_region
          _
        $region148: #{cloud_matrix_model_forward.1} parent=11 // pred_fallthru
          _
        // Predicated region
        $region149: #{cloud_matrix_model_forward.1} parent=11 // pred_check
          %p1554 = pneg %p996
        $region150: #{cloud_matrix_model_forward.1} parent=11 // pred_check_branch
          %1556 = sbr.rel (%p1554) target = $region152
        $region151: #{cloud_matrix_model_forward.1} parent=11 // pred_region
          _
        $region152: #{cloud_matrix_model_forward.1} parent=11 // pred_fallthru
          _
        // Predicated region
        $region153: #{cloud_matrix_model_forward.1} parent=11 // pred_check
          %p1557 = pneg %p1017
        $region154: #{cloud_matrix_model_forward.1} parent=11 // pred_check_branch
          %1559 = sbr.rel (%p1557) target = $region156
        $region155: #{cloud_matrix_model_forward.1} parent=11 // pred_region
          _
        $region156: #{cloud_matrix_model_forward.1} parent=11 // pred_fallthru
          _
        // Predicated region
        $region157: #{cloud_matrix_model_forward.1} parent=11 // pred_check
          %p1560 = pneg %p1038
        $region158: #{cloud_matrix_model_forward.1} parent=11 // pred_check_branch
          %1562 = sbr.rel (%p1560) target = $region160
        $region159: #{cloud_matrix_model_forward.1} parent=11 // pred_region
          %s1564 = ssub.s32 16, 16
          %1565 = vsyncadd [#allocation5], %s1564
          %s1567 = sshll.u32 [#allocation6], 4
          %s1568 = int_to_ptr.vmem [resolvable:$true] %s1567
          %1570 = dma.hbm_to_vmem [thread:$0]  %s83, 16, %s1568, [#allocation5]
        $region160: #{cloud_matrix_model_forward.1} parent=11 // pred_fallthru
          _
        // Predicated region
        $region161: #{cloud_matrix_model_forward.1} parent=11 // pred_check
          %p1571 = pneg %p1059
        $region162: #{cloud_matrix_model_forward.1} parent=11 // pred_check_branch
          %1573 = sbr.rel (%p1571) target = $region164
        $region163: #{cloud_matrix_model_forward.1} parent=11 // pred_region
          _
        $region164: #{cloud_matrix_model_forward.1} parent=11 // pred_fallthru
          _
        // Predicated region
        $region165: #{cloud_matrix_model_forward.1} parent=11 // pred_check
          %p1574 = pneg %p1080
        $region166: #{cloud_matrix_model_forward.1} parent=11 // pred_check_branch
          %1576 = sbr.rel (%p1574) target = $region168
        $region167: #{cloud_matrix_model_forward.1} parent=11 // pred_region
          _
        $region168: #{cloud_matrix_model_forward.1} parent=11 // pred_fallthru
          _
        // Predicated region
        $region169: #{cloud_matrix_model_forward.1} parent=11 // pred_check
          %p1577 = pneg %p1101
        $region170: #{cloud_matrix_model_forward.1} parent=11 // pred_check_branch
          %1579 = sbr.rel (%p1577) target = $region172
        $region171: #{cloud_matrix_model_forward.1} parent=11 // pred_region
          _
        $region172: #{cloud_matrix_model_forward.1} parent=11 // pred_fallthru
          _
        // Predicated region
        $region173: #{cloud_matrix_model_forward.1} parent=11 // pred_check
          %p1580 = pneg %p1122
        $region174: #{cloud_matrix_model_forward.1} parent=11 // pred_check_branch
          %1582 = sbr.rel (%p1580) target = $region176
        $region175: #{cloud_matrix_model_forward.1} parent=11 // pred_region
          _
        $region176: #{cloud_matrix_model_forward.1} parent=11 // pred_fallthru
          _
        // Predicated region
        $region177: #{cloud_matrix_model_forward.1} parent=11 // pred_check
          %p1583 = pneg %p1143
        $region178: #{cloud_matrix_model_forward.1} parent=11 // pred_check_branch
          %1585 = sbr.rel (%p1583) target = $region180
        $region179: #{cloud_matrix_model_forward.1} parent=11 // pred_region
          _
        $region180: #{cloud_matrix_model_forward.1} parent=11 // pred_fallthru
          _
        // Predicated region
        $region181: #{cloud_matrix_model_forward.1} parent=11 // pred_check
          %p1586 = pneg %p1164
        $region182: #{cloud_matrix_model_forward.1} parent=11 // pred_check_branch
          %1588 = sbr.rel (%p1586) target = $region184
        $region183: #{cloud_matrix_model_forward.1} parent=11 // pred_region
          _
        $region184: #{cloud_matrix_model_forward.1} parent=11 // pred_fallthru
          _
        // Predicated region
        $region185: #{cloud_matrix_model_forward.1} parent=11 // pred_check
          %p1589 = pneg %p1185
        $region186: #{cloud_matrix_model_forward.1} parent=11 // pred_check_branch
          %1591 = sbr.rel (%p1589) target = $region188
        $region187: #{cloud_matrix_model_forward.1} parent=11 // pred_region
          %s1593 = ssub.s32 32, 32
          %1594 = vsyncadd [#allocation8], %s1593
          %s1595 = sshll.u32 [#allocation7], 4
          %s1596 = int_to_ptr.vmem [resolvable:$true] %s1595
          %1601 = dma.hbm_to_vmem [thread:$0]  %s97, 32, %s1596, [#allocation8], 16, 16, 1
        $region188: #{cloud_matrix_model_forward.1} parent=11 // pred_fallthru
          _
        // Predicated region
        $region189: #{cloud_matrix_model_forward.1} parent=11 // pred_check
          %p1602 = pneg %p1206
        $region190: #{cloud_matrix_model_forward.1} parent=11 // pred_check_branch
          %1604 = sbr.rel (%p1602) target = $region192
        $region191: #{cloud_matrix_model_forward.1} parent=11 // pred_region
          _
        $region192: #{cloud_matrix_model_forward.1} parent=11 // pred_fallthru
          _
        // Predicated region
        $region193: #{cloud_matrix_model_forward.1} parent=11 // pred_check
          %p1605 = pneg %p1227
        $region194: #{cloud_matrix_model_forward.1} parent=11 // pred_check_branch
          %1607 = sbr.rel (%p1605) target = $region196
        $region195: #{cloud_matrix_model_forward.1} parent=11 // pred_region
          %s1609 = ssub.s32 32, 32
          %1610 = vsyncadd [#allocation8], %s1609
          %s1611 = sshll.u32 [#allocation9], 4
          %s1612 = int_to_ptr.vmem [resolvable:$true] %s1611
          %1617 = dma.hbm_to_vmem [thread:$0]  %s101, 32, %s1612, [#allocation8], 16, 16, 1
        $region196: #{cloud_matrix_model_forward.1} parent=11 // pred_fallthru
          _
        // Predicated region
        $region197: #{cloud_matrix_model_forward.1} parent=11 // pred_check
          %p1618 = pneg %p1248
        $region198: #{cloud_matrix_model_forward.1} parent=11 // pred_check_branch
          %1620 = sbr.rel (%p1618) target = $region200
        $region199: #{cloud_matrix_model_forward.1} parent=11 // pred_region
          _
        $region200: #{cloud_matrix_model_forward.1} parent=11 // pred_fallthru
          _
        // Predicated region
        $region201: #{cloud_matrix_model_forward.1} parent=11 // pred_check
          %p1621 = pneg %p1269
        $region202: #{cloud_matrix_model_forward.1} parent=11 // pred_check_branch
          %1623 = sbr.rel (%p1621) target = $region204
        $region203: #{cloud_matrix_model_forward.1} parent=11 // pred_region
          _
        $region204: #{cloud_matrix_model_forward.1} parent=11 // pred_fallthru
          _
        // Predicated region
        $region205: #{cloud_matrix_model_forward.1} parent=11 // pred_check
          %p1624 = pneg %p1290
        $region206: #{cloud_matrix_model_forward.1} parent=11 // pred_check_branch
          %1626 = sbr.rel (%p1624) target = $region208
        $region207: #{cloud_matrix_model_forward.1} parent=11 // pred_region
          %s1628 = ssub.s32 32, 32
          %1629 = vsyncadd [#allocation11], %s1628
          %s1630 = sshll.u32 [#allocation10], 4
          %s1631 = int_to_ptr.vmem [resolvable:$true] %s1630
          %1636 = dma.hbm_to_vmem [thread:$0]  %s107, 32, %s1631, [#allocation11], 16, 16, 1
        $region208: #{cloud_matrix_model_forward.1} parent=11 // pred_fallthru
          _
        // Predicated region
        $region209: #{cloud_matrix_model_forward.1} parent=11 // pred_check
          %p1637 = pneg %p1311
        $region210: #{cloud_matrix_model_forward.1} parent=11 // pred_check_branch
          %1639 = sbr.rel (%p1637) target = $region212
        $region211: #{cloud_matrix_model_forward.1} parent=11 // pred_region
          %s1641 = ssub.s32 32, 32
          %1642 = vsyncadd [#allocation11], %s1641
          %s1643 = sshll.u32 [#allocation12], 4
          %s1644 = int_to_ptr.vmem [resolvable:$true] %s1643
          %1649 = dma.hbm_to_vmem [thread:$0]  %s109, 32, %s1644, [#allocation11], 16, 16, 1
        $region212: #{cloud_matrix_model_forward.1} parent=11 // pred_fallthru
          _
        // Predicated region
        $region213: #{cloud_matrix_model_forward.1} parent=11 // pred_check
          %p1650 = pneg %p1332
        $region214: #{cloud_matrix_model_forward.1} parent=11 // pred_check_branch
          %1652 = sbr.rel (%p1650) target = $region216
        $region215: #{cloud_matrix_model_forward.1} parent=11 // pred_region
          %s1654 = ssub.s32 32, 32
          %1655 = vsyncadd [#allocation14], %s1654
          %s1656 = sshll.u32 [#allocation13], 4
          %s1657 = int_to_ptr.vmem [resolvable:$true] %s1656
          %1662 = dma.hbm_to_vmem [thread:$0]  %s111, 32, %s1657, [#allocation14], 16, 16, 1
        $region216: #{cloud_matrix_model_forward.1} parent=11 // pred_fallthru
          _
        // Predicated region
        $region217: #{cloud_matrix_model_forward.1} parent=11 // pred_check
          %p1663 = pneg %p1353
        $region218: #{cloud_matrix_model_forward.1} parent=11 // pred_check_branch
          %1665 = sbr.rel (%p1663) target = $region220
        $region219: #{cloud_matrix_model_forward.1} parent=11 // pred_region
          %s1667 = ssub.s32 32, 32
          %1668 = vsyncadd [#allocation14], %s1667
          %s1669 = sshll.u32 [#allocation15], 4
          %s1670 = int_to_ptr.vmem [resolvable:$true] %s1669
          %1675 = dma.hbm_to_vmem [thread:$0]  %s113, 32, %s1670, [#allocation14], 16, 16, 1
        $region220: #{cloud_matrix_model_forward.1} parent=11 // pred_fallthru
          _
        // Predicated region
        $region221: #{cloud_matrix_model_forward.1} parent=11 // pred_check
          %p1676 = pneg %p1374
        $region222: #{cloud_matrix_model_forward.1} parent=11 // pred_check_branch
          %1678 = sbr.rel (%p1676) target = $region224
        $region223: #{cloud_matrix_model_forward.1} parent=11 // pred_region
          %s1680 = ssub.s32 32, 32
          %1681 = vsyncadd [#allocation17], %s1680
          %s1682 = sshll.u32 [#allocation16], 4
          %s1683 = int_to_ptr.vmem [resolvable:$true] %s1682
          %1688 = dma.hbm_to_vmem [thread:$0]  %s115, 32, %s1683, [#allocation17], 16, 16, 1
        $region224: #{cloud_matrix_model_forward.1} parent=11 // pred_fallthru
          _
        // Predicated region
        $region225: #{cloud_matrix_model_forward.1} parent=11 // pred_check
          %p1689 = pneg %p1395
        $region226: #{cloud_matrix_model_forward.1} parent=11 // pred_check_branch
          %1691 = sbr.rel (%p1689) target = $region228
        $region227: #{cloud_matrix_model_forward.1} parent=11 // pred_region
          %s1693 = ssub.s32 32, 32
          %1694 = vsyncadd [#allocation17], %s1693
          %s1695 = sshll.u32 [#allocation18], 4
          %s1696 = int_to_ptr.vmem [resolvable:$true] %s1695
          %1701 = dma.hbm_to_vmem [thread:$0]  %s117, 32, %s1696, [#allocation17], 16, 16, 1
        $region228: #{cloud_matrix_model_forward.1} parent=11 // pred_fallthru
          _
      $region12: #{cloud_matrix_model_forward.1} parent=5 // pred_fallthru
        _
      %p1702 = scmp.lt.s32.totalorder %s131, 2
      // Predicated region
      $region229: #{cloud_matrix_model_forward.1} parent=5 // pred_check
        %p1703 = pneg %p1702
      $region230: #{cloud_matrix_model_forward.1} parent=5 // pred_check_branch
        %1705 = sbr.rel (%p1703) target = $region232
      $region231: #{cloud_matrix_model_forward.1} parent=5 // pred_region
        // Predicated region
        $region233: #{cloud_matrix_model_forward.1} parent=231 // pred_check
          %p1706 = pneg %p151
        $region234: #{cloud_matrix_model_forward.1} parent=231 // pred_check_branch
          %1708 = sbr.rel (%p1706) target = $region236
        $region235: #{cloud_matrix_model_forward.1} parent=231 // pred_region
          %p1709 = scmp.lt.s32.totalorder %s131, 1
          %s1710 = scalar_select %p1709, %s131, 1
          %s1711 = smul.addr %s1710, 8
          %s1712 = scalar_lea.vmem %s1, %s1711
        $region236: #{cloud_matrix_model_forward.1} parent=231 // pred_fallthru
          _
        // Predicated region
        $region237: #{cloud_matrix_model_forward.1} parent=231 // pred_check
          %p1713 = pneg %p177
        $region238: #{cloud_matrix_model_forward.1} parent=231 // pred_check_branch
          %1715 = sbr.rel (%p1713) target = $region240
        $region239: #{cloud_matrix_model_forward.1} parent=231 // pred_region
          %p1716 = scmp.lt.s32.totalorder %s131, 1
          %s1717 = scalar_select %p1716, %s131, 1
          %s1718 = smul.addr %s1717, 4
          %s1719 = scalar_lea.vmem %s3, %s1718
        $region240: #{cloud_matrix_model_forward.1} parent=231 // pred_fallthru
          _
        // Predicated region
        $region241: #{cloud_matrix_model_forward.1} parent=231 // pred_check
          %p1720 = pneg %p203
        $region242: #{cloud_matrix_model_forward.1} parent=231 // pred_check_branch
          %1722 = sbr.rel (%p1720) target = $region244
        $region243: #{cloud_matrix_model_forward.1} parent=231 // pred_region
          %p1723 = scmp.lt.s32.totalorder %s131, 1
          %s1724 = scalar_select %p1723, %s131, 1
          %s1725 = smul.addr %s1724, 8
          %s1726 = scalar_lea.vmem %s5, %s1725
        $region244: #{cloud_matrix_model_forward.1} parent=231 // pred_fallthru
          _
        // Predicated region
        $region245: #{cloud_matrix_model_forward.1} parent=231 // pred_check
          %p1727 = pneg %p229
        $region246: #{cloud_matrix_model_forward.1} parent=231 // pred_check_branch
          %1729 = sbr.rel (%p1727) target = $region248
        $region247: #{cloud_matrix_model_forward.1} parent=231 // pred_region
          %p1730 = scmp.lt.s32.totalorder %s131, 1
          %s1731 = scalar_select %p1730, %s131, 1
          %s1732 = smul.addr %s1731, 4
          %s1733 = scalar_lea.vmem %s7, %s1732
        $region248: #{cloud_matrix_model_forward.1} parent=231 // pred_fallthru
          _
        // Predicated region
        $region249: #{cloud_matrix_model_forward.1} parent=231 // pred_check
          %p1734 = pneg %p255
        $region250: #{cloud_matrix_model_forward.1} parent=231 // pred_check_branch
          %1736 = sbr.rel (%p1734) target = $region252
        $region251: #{cloud_matrix_model_forward.1} parent=231 // pred_region
          %p1737 = scmp.lt.s32.totalorder %s131, 1
          %s1738 = scalar_select %p1737, %s131, 1
          %s1739 = smul.addr %s1738, 4
          %s1740 = scalar_lea.vmem %s9, %s1739
        $region252: #{cloud_matrix_model_forward.1} parent=231 // pred_fallthru
          _
      $region232: #{cloud_matrix_model_forward.1} parent=5 // pred_fallthru
        _
      %p1741 = scmp.le.s32.totalorder 1, %s131
      %p1742 = scmp.lt.s32.totalorder %s131, 3
      %p1743 = pnand %p1741, %p1742
      %p1744 = pneg %p1743
      // Predicated region
      $region253: #{cloud_matrix_model_forward.1} parent=5 // pred_check
        _
      $region254: #{cloud_matrix_model_forward.1} parent=5 // pred_check_branch
        %1746 = sbr.rel (%p1743) target = $region256
      $region255: #{cloud_matrix_model_forward.1} parent=5 // pred_region
        %s1747 = ssub.s32 %s131, 1
        // Predicated region
        $region257: #{cloud_matrix_model_forward.1} parent=255 // pred_check
          %p1748 = pneg %p303
        $region258: #{cloud_matrix_model_forward.1} parent=255 // pred_check_branch
          %1750 = sbr.rel (%p1748) target = $region260
        $region259: #{cloud_matrix_model_forward.1} parent=255 // pred_region
          %1751 = dma.done [#allocation3], 16
        $region260: #{cloud_matrix_model_forward.1} parent=255 // pred_fallthru
          _
        // Predicated region
        $region261: #{cloud_matrix_model_forward.1} parent=255 // pred_check
          %p1752 = pneg %p345
        $region262: #{cloud_matrix_model_forward.1} parent=255 // pred_check_branch
          %1754 = sbr.rel (%p1752) target = $region264
        $region263: #{cloud_matrix_model_forward.1} parent=255 // pred_region
          %1755 = dma.done [#allocation5], 16
        $region264: #{cloud_matrix_model_forward.1} parent=255 // pred_fallthru
          _
        // Predicated region
        $region265: #{cloud_matrix_model_forward.1} parent=255 // pred_check
          %p1756 = pneg %p1038
        $region266: #{cloud_matrix_model_forward.1} parent=255 // pred_check_branch
          %1758 = sbr.rel (%p1756) target = $region268
        $region267: #{cloud_matrix_model_forward.1} parent=255 // pred_region
          %1759 = dma.done [#allocation5], 16
        $region268: #{cloud_matrix_model_forward.1} parent=255 // pred_fallthru
          _
        // Predicated region
        $region269: #{cloud_matrix_model_forward.1} parent=255 // pred_check
          %p1760 = pneg %p1185
        $region270: #{cloud_matrix_model_forward.1} parent=255 // pred_check_branch
          %1762 = sbr.rel (%p1760) target = $region272
        $region271: #{cloud_matrix_model_forward.1} parent=255 // pred_region
          %1763 = dma.done [#allocation8], 32
        $region272: #{cloud_matrix_model_forward.1} parent=255 // pred_fallthru
          _
        // Predicated region
        $region273: #{cloud_matrix_model_forward.1} parent=255 // pred_check
          %p1764 = pneg %p1227
        $region274: #{cloud_matrix_model_forward.1} parent=255 // pred_check_branch
          %1766 = sbr.rel (%p1764) target = $region276
        $region275: #{cloud_matrix_model_forward.1} parent=255 // pred_region
          %1767 = dma.done [#allocation8], 32
        $region276: #{cloud_matrix_model_forward.1} parent=255 // pred_fallthru
          _
        // Predicated region
        $region277: #{cloud_matrix_model_forward.1} parent=255 // pred_check
          %p1768 = pneg %p1290
        $region278: #{cloud_matrix_model_forward.1} parent=255 // pred_check_branch
          %1770 = sbr.rel (%p1768) target = $region280
        $region279: #{cloud_matrix_model_forward.1} parent=255 // pred_region
          %1771 = dma.done [#allocation11], 32
        $region280: #{cloud_matrix_model_forward.1} parent=255 // pred_fallthru
          _
        // Predicated region
        $region281: #{cloud_matrix_model_forward.1} parent=255 // pred_check
          %p1772 = pneg %p1311
        $region282: #{cloud_matrix_model_forward.1} parent=255 // pred_check_branch
          %1774 = sbr.rel (%p1772) target = $region284
        $region283: #{cloud_matrix_model_forward.1} parent=255 // pred_region
          %1775 = dma.done [#allocation11], 32
        $region284: #{cloud_matrix_model_forward.1} parent=255 // pred_fallthru
          _
        // Predicated region
        $region285: #{cloud_matrix_model_forward.1} parent=255 // pred_check
          %p1776 = pneg %p1332
        $region286: #{cloud_matrix_model_forward.1} parent=255 // pred_check_branch
          %1778 = sbr.rel (%p1776) target = $region288
        $region287: #{cloud_matrix_model_forward.1} parent=255 // pred_region
          %1779 = dma.done [#allocation14], 32
        $region288: #{cloud_matrix_model_forward.1} parent=255 // pred_fallthru
          _
        // Predicated region
        $region289: #{cloud_matrix_model_forward.1} parent=255 // pred_check
          %p1780 = pneg %p1353
        $region290: #{cloud_matrix_model_forward.1} parent=255 // pred_check_branch
          %1782 = sbr.rel (%p1780) target = $region292
        $region291: #{cloud_matrix_model_forward.1} parent=255 // pred_region
          %1783 = dma.done [#allocation14], 32
        $region292: #{cloud_matrix_model_forward.1} parent=255 // pred_fallthru
          _
        // Predicated region
        $region293: #{cloud_matrix_model_forward.1} parent=255 // pred_check
          %p1784 = pneg %p1374
        $region294: #{cloud_matrix_model_forward.1} parent=255 // pred_check_branch
          %1786 = sbr.rel (%p1784) target = $region296
        $region295: #{cloud_matrix_model_forward.1} parent=255 // pred_region
          %1787 = dma.done [#allocation17], 32
        $region296: #{cloud_matrix_model_forward.1} parent=255 // pred_fallthru
          _
        // Predicated region
        $region297: #{cloud_matrix_model_forward.1} parent=255 // pred_check
          %p1788 = pneg %p1395
        $region298: #{cloud_matrix_model_forward.1} parent=255 // pred_check_branch
          %1790 = sbr.rel (%p1788) target = $region300
        $region299: #{cloud_matrix_model_forward.1} parent=255 // pred_region
          %1791 = dma.done [#allocation17], 32
        $region300: #{cloud_matrix_model_forward.1} parent=255 // pred_fallthru
          _
        %p1792 = scmp.lt.s32.totalorder %s136, 1
        %s1793 = scalar_select %p1792, %s136, 1
        %s1794 = smul.addr %s1793, 8
        %s1795 = scalar_lea.vmem %s1, %s1794
        %p1796 = pneg %p157
        %p1797 = pneg %p154
        %p1798 = scmp.lt.s32.totalorder %s136, 1
        %s1799 = scalar_select %p1798, %s136, 1
        %s1800 = smul.addr %s1799, 4
        %s1801 = scalar_lea.vmem %s3, %s1800
        %p1802 = pneg %p183
        %p1803 = pneg %p180
        %p1804 = scmp.lt.s32.totalorder %s136, 1
        %s1805 = scalar_select %p1804, %s136, 1
        %s1806 = smul.addr %s1805, 8
        %s1807 = scalar_lea.vmem %s5, %s1806
        %p1808 = pneg %p209
        %p1809 = pneg %p206
        %p1810 = scmp.lt.s32.totalorder %s136, 1
        %s1811 = scalar_select %p1810, %s136, 1
        %s1812 = smul.addr %s1811, 4
        %s1813 = scalar_lea.vmem %s7, %s1812
        %p1814 = pneg %p235
        %p1815 = pneg %p232
        %p1816 = scmp.lt.s32.totalorder %s136, 1
        %s1817 = scalar_select %p1816, %s136, 1
        %s1818 = smul.addr %s1817, 4
        %s1819 = scalar_lea.vmem %s9, %s1818
        %p1820 = pneg %p261
        %p1821 = pneg %p258
        %p1822 = pneg %p282
        %p1823 = pneg %p279
        %p1824 = pneg %p303
        %p1825 = pneg %p300
        %p1826 = pneg %p324
        %p1827 = pneg %p321
        %p1828 = pneg %p345
        %p1829 = pneg %p342
        %p1830 = pneg %p366
        %p1831 = pneg %p363
        %p1832 = pneg %p387
        %p1833 = pneg %p384
        %p1834 = pneg %p408
        %p1835 = pneg %p405
        %p1836 = pneg %p429
        %p1837 = pneg %p426
        %p1838 = pneg %p450
        %p1839 = pneg %p447
        %p1840 = pneg %p471
        %p1841 = pneg %p468
        %p1842 = pneg %p492
        %p1843 = pneg %p489
        %p1844 = pneg %p513
        %p1845 = pneg %p510
        %p1846 = pneg %p534
        %p1847 = pneg %p531
        %p1848 = pneg %p555
        %p1849 = pneg %p552
        %p1850 = pneg %p576
        %p1851 = pneg %p573
        %p1852 = pneg %p597
        %p1853 = pneg %p594
        %p1854 = pneg %p618
        %p1855 = pneg %p615
        %p1856 = pneg %p639
        %p1857 = pneg %p636
        %p1858 = pneg %p660
        %p1859 = pneg %p657
        %p1860 = pneg %p681
        %p1861 = pneg %p678
        %p1862 = pneg %p702
        %p1863 = pneg %p699
        %p1864 = pneg %p723
        %p1865 = pneg %p720
        %p1866 = pneg %p744
        %p1867 = pneg %p741
        %p1868 = pneg %p765
        %p1869 = pneg %p762
        %p1870 = pneg %p786
        %p1871 = pneg %p783
        %p1872 = pneg %p807
        %p1873 = pneg %p804
        %p1874 = pneg %p828
        %p1875 = pneg %p825
        %p1876 = pneg %p849
        %p1877 = pneg %p846
        %p1878 = pneg %p870
        %p1879 = pneg %p867
        %p1880 = pneg %p891
        %p1881 = pneg %p888
        %p1882 = pneg %p912
        %p1883 = pneg %p909
        %p1884 = pneg %p933
        %p1885 = pneg %p930
        %p1886 = pneg %p954
        %p1887 = pneg %p951
        %p1888 = pneg %p975
        %p1889 = pneg %p972
        %p1890 = pneg %p996
        %p1891 = pneg %p993
        %p1892 = pneg %p1017
        %p1893 = pneg %p1014
        %p1894 = pneg %p1038
        %p1895 = pneg %p1035
        %p1896 = pneg %p1059
        %p1897 = pneg %p1056
        %p1898 = pneg %p1080
        %p1899 = pneg %p1077
        %p1900 = pneg %p1101
        %p1901 = pneg %p1098
        %p1902 = pneg %p1122
        %p1903 = pneg %p1119
        %p1904 = pneg %p1143
        %p1905 = pneg %p1140
        %p1906 = pneg %p1164
        %p1907 = pneg %p1161
        %p1908 = pneg %p1185
        %p1909 = pneg %p1182
        %p1910 = pneg %p1206
        %p1911 = pneg %p1203
        %p1912 = pneg %p1227
        %p1913 = pneg %p1224
        %p1914 = pneg %p1248
        %p1915 = pneg %p1245
        %p1916 = pneg %p1269
        %p1917 = pneg %p1266
        %p1918 = pneg %p1290
        %p1919 = pneg %p1287
        %p1920 = pneg %p1311
        %p1921 = pneg %p1308
        %p1922 = pneg %p1332
        %p1923 = pneg %p1329
        %p1924 = pneg %p1353
        %p1925 = pneg %p1350
        %p1926 = pneg %p1374
        %p1927 = pneg %p1371
        %p1928 = pneg %p1395
        %p1929 = pneg %p1392
        %p1930 = pneg %p1421
        %p1931 = pneg %p1418
        %p1932 = scmp.lt.s32.totalorder %s136, 1
        %s1933 = scalar_select %p1932, %s136, 1
        %s1934 = smul.addr %s1933, 4
        %s1935 = scalar_lea.vmem %s119, %s1934
        %p1936 = scmp.lt.s32.totalorder %s136, 1
        %s1937 = scalar_select %p1936, %s136, 1
        %s1938 = smul.addr %s1937, 8
        %s1939 = scalar_lea.vmem %s1, %s1938
        %p1940 = scmp.lt.s32.totalorder %s136, 1
        %s1941 = scalar_select %p1940, %s136, 1
        %s1942 = smul.addr %s1941, 4
        %s1943 = scalar_lea.vmem %s3, %s1942
        %p1944 = scmp.lt.s32.totalorder %s136, 1
        %s1945 = scalar_select %p1944, %s136, 1
        %s1946 = smul.addr %s1945, 8
        %s1947 = scalar_lea.vmem %s5, %s1946
        %p1948 = scmp.lt.s32.totalorder %s136, 1
        %s1949 = scalar_select %p1948, %s136, 1
        %s1950 = smul.addr %s1949, 4
        %s1951 = scalar_lea.vmem %s7, %s1950
        %p1952 = scmp.lt.s32.totalorder %s136, 1
        %s1953 = scalar_select %p1952, %s136, 1
        %s1954 = smul.addr %s1953, 4
        %s1955 = scalar_lea.vmem %s9, %s1954
        %p1956 = scmp.lt.s32.totalorder %s136, 1
        %s1957 = scalar_select %p1956, %s136, 1
        %s1958 = smul.addr %s1957, 4
        %s1959 = scalar_lea.vmem %s119, %s1958
        %v1960 = vld [vmem:[%s19] sm:$0xf]
        %v1961 = vld [vmem:[%s21] sm:$0xff]
        %v1962 = vld [vmem:[%s21 + $0x8] sm:$0xff]
        %v1963 = vld [vmem:[%s21 + $0x10] sm:$0xff]
        %v1964 = vld [vmem:[%s21 + $0x18] sm:$0xff]
        %v1965 = vld [vmem:[%s23] sm:$0xf]
        %v1966 = vld [vmem:[%s25] sm:$0xff]
        %v1967 = vld [vmem:[%s25 + $0x8] sm:$0xff]
        %v1968 = vld [vmem:[%s27] sm:$0xff]
        %v1969 = vld [vmem:[%s27 + $0x8] sm:$0xff]
        %v1970 = vld [vmem:[%s29] sm:$0xff]
        %v1971 = vld [vmem:[%s29 + $0x8] sm:$0xff]
        %v1972 = vld [vmem:[%s31] sm:$0xf]
        %v1973 = vld [vmem:[%s33] sm:$0xff]
        %v1974 = vld [vmem:[%s33 + $0x8] sm:$0xff]
        %v1975 = vld [vmem:[%s33 + $0x10] sm:$0xff]
        %v1976 = vld [vmem:[%s33 + $0x18] sm:$0xff]
        %v1977 = vld [vmem:[%s35] sm:$0xff]
        %v1978 = vld [vmem:[%s37] sm:$0xff]
        %v1979 = vld [vmem:[%s37 + $0x8] sm:$0xff]
        %v1980 = vld [vmem:[%s37 + $0x10] sm:$0xff]
        %v1981 = vld [vmem:[%s37 + $0x18] sm:$0xff]
        %v1982 = vld [vmem:[%s39] sm:$0xff]
        %v1983 = vld [vmem:[%s39 + $0x8] sm:$0xff]
        %v1984 = vld [vmem:[%s39 + $0x10] sm:$0xff]
        %v1985 = vld [vmem:[%s39 + $0x18] sm:$0xff]
        %v1986 = vld [vmem:[%s41] sm:$0xff]
        %v1987 = vld [vmem:[%s41 + $0x8] sm:$0xff]
        %v1988 = vld [vmem:[%s41 + $0x10] sm:$0xff]
        %v1989 = vld [vmem:[%s41 + $0x18] sm:$0xff]
        %v1990 = vld [vmem:[%s77] sm:$0xff]
        %v1991 = vld [vmem:[%s77 + $0x8] sm:$0xff]
        %v1992 = vld [vmem:[%s77 + $0x10] sm:$0xff]
        %v1993 = vld [vmem:[%s77 + $0x18] sm:$0xff]
        %v1994 = vld [vmem:[%s79] sm:$0xff]
        %v1995 = vld [vmem:[%s79 + $0x8] sm:$0xff]
        %v1996 = vld [vmem:[%s79 + $0x10] sm:$0xff]
        %v1997 = vld [vmem:[%s79 + $0x18] sm:$0xff]
        %v1998 = vld [vmem:[%s81] sm:$0xff]
        %v1999 = vld [vmem:[%s81 + $0x8] sm:$0xff]
        %v2000 = vld [vmem:[%s81 + $0x10] sm:$0xff]
        %v2001 = vld [vmem:[%s81 + $0x18] sm:$0xff]
        %v2002 = vld [vmem:[#allocation6] sm:$0x1]
        %v2003 = vld [vmem:[%s1939] sm:$0xff]
        %v2004 = vld [vmem:[%s1943] sm:$0xf]
        %v2005 = vld [vmem:[%s1947] sm:$0xff]
        %v2006 = vld [vmem:[%s1951] sm:$0xf]
        %v2007 = vld [vmem:[%s1955] sm:$0xf]
        %v2008 = vld [vmem:[%s15] sm:$0x3f]
        %v2009 = vld [vmem:[#allocation4] sm:$0x1]
        %v2011 = vlaneseq
        %v2012 = vshrl.u32 %v2011, 7
        %v2013 = vsub.s32 0, %v2012
        %v2014 = vrot.slane %v2009, %v2013
        %vm2016 = vcmask 48128
        %v2018 = vsel %vm2016, %v2003, 0
        %vm2020 = vcmask 1045504
        %v2022 = vsel %vm2020, %v2008, 0
        %2024 = vmatprep.subr.mxu0 0.0
        %2025 = vmatpush1.msra.mxu0 %v2022
        %2026 = vmatprep.subr.mxu0 0.0
        %2027 = vmatpush1.msra.mxu0 0.0
        %2028 = vmatprep.subr.mxu0 0.0
        %2029 = vmatpush1.msra.mxu0 0.0
        %2030 = vmatprep.subr.mxu0 0.0
        %2031 = vmatpush1.msra.mxu0 0.0
        %2032 = vmatprep.subr.mxu0 0.0
        %2033 = vmatpush1.msra.mxu0 0.0
        %2034 = vmatprep.subr.mxu0 0.0
        %2035 = vmatpush1.msra.mxu0 0.0
        %2036 = vmatprep.subr.mxu0 0.0
        %2037 = vmatpush1.msra.mxu0 0.0
        %2038 = vmatprep.subr.mxu0 0.0
        %2039 = vmatpush1.msra.mxu0 0.0
        %2040 = vmatprep.subr.mxu0 0.0
        %2041 = vmatpush1.msra.mxu0 0.0
        %2042 = vmatprep.subr.mxu0 0.0
        %2043 = vmatpush1.msra.mxu0 0.0
        %2044 = vmatprep.subr.mxu0 0.0
        %2045 = vmatpush1.msra.mxu0 0.0
        %2046 = vmatprep.subr.mxu0 0.0
        %2047 = vmatpush1.msra.mxu0 0.0
        %2048 = vmatprep.subr.mxu0 0.0
        %2049 = vmatpush1.msra.mxu0 0.0
        %2050 = vmatprep.subr.mxu0 0.0
        %2051 = vmatpush1.msra.mxu0 0.0
        %2052 = vmatprep.subr.mxu0 0.0
        %2053 = vmatpush1.msra.mxu0 0.0
        %2054 = vmatprep.subr.mxu0 0.0
        %2055 = vmatpush1.msra.mxu0 0.0
        %2056 = vmatprep.subr.mxu0 0.0
        %2057 = vmatpush1.msra.mxu0 0.0
        %2058 = vmatprep.subr.mxu0 0.0
        %2059 = vmatpush1.msra.mxu0 0.0
        %2060 = vmatprep.subr.mxu0 0.0
        %2061 = vmatpush1.msra.mxu0 0.0
        %2062 = vmatprep.subr.mxu0 0.0
        %2063 = vmatpush1.msra.mxu0 0.0
        %2064 = vmatprep.subr.mxu0 0.0
        %2065 = vmatpush1.msra.mxu0 0.0
        %2066 = vmatprep.subr.mxu0 0.0
        %2067 = vmatpush1.msra.mxu0 0.0
        %2068 = vmatprep.subr.mxu0 0.0
        %2069 = vmatpush1.msra.mxu0 0.0
        %2070 = vmatprep.subr.mxu0 0.0
        %2071 = vmatpush1.msra.mxu0 0.0
        %2072 = vmatprep.subr.mxu0 0.0
        %2073 = vmatpush1.msra.mxu0 0.0
        %2074 = vmatprep.subr.mxu0 0.0
        %2075 = vmatpush1.msra.mxu0 0.0
        %2076 = vmatprep.subr.mxu0 0.0
        %2077 = vmatpush1.msra.mxu0 0.0
        %2078 = vmatprep.subr.mxu0 0.0
        %2079 = vmatpush1.msra.mxu0 0.0
        %2080 = vmatprep.subr.mxu0 0.0
        %2081 = vmatpush1.msra.mxu0 0.0
        %2082 = vmatprep.subr.mxu0 0.0
        %2083 = vmatpush1.msra.mxu0 0.0
        %2084 = vmatprep.subr.mxu0 0.0
        %2085 = vmatpush1.msra.mxu0 0.0
        %2086 = vmatprep.subr.mxu0 0.0
        %2087 = vmatpush1.msra.mxu0 0.0
        %2088 = vmatprep.mubr.f32.mxu0 0.0
        %2089 = vmatmul.mubr.f32.gmra.mrb[0].mxu0 %v2018
        %v2090 = vpop.f32.mrb[0].mxu0
        %v2091 = vadd.f32 %v2014, %v2090
        %v2092 = vpop.f32.mrb[0].mxu0
        %2093 = vdwg.mxu0
        %v2094 = vld [vmem:[%s11] sm:$0x1f]
        %v2095 = vld [vmem:[#allocation2] sm:$0x1]
        %v2097 = vlaneseq
        %v2098 = vshrl.u32 %v2097, 7
        %v2099 = vsub.s32 0, %v2098
        %v2100 = vrot.slane %v2095, %v2099
        %vm2102 = vcmask 39936
        %v2104 = vsel %vm2102, %v2004, 0
        %vm2106 = vcmask 1044480
        %v2108 = vsel %vm2106, %v2094, 0
        %2110 = vmatprep.subr.mxu0 0.0
        %2111 = vmatpush1.msra.mxu0 %v2108
        %2112 = vmatprep.subr.mxu0 0.0
        %2113 = vmatpush1.msra.mxu0 0.0
        %2114 = vmatprep.subr.mxu0 0.0
        %2115 = vmatpush1.msra.mxu0 0.0
        %2116 = vmatprep.subr.mxu0 0.0
        %2117 = vmatpush1.msra.mxu0 0.0
        %2118 = vmatprep.subr.mxu0 0.0
        %2119 = vmatpush1.msra.mxu0 0.0
        %2120 = vmatprep.subr.mxu0 0.0
        %2121 = vmatpush1.msra.mxu0 0.0
        %2122 = vmatprep.subr.mxu0 0.0
        %2123 = vmatpush1.msra.mxu0 0.0
        %2124 = vmatprep.subr.mxu0 0.0
        %2125 = vmatpush1.msra.mxu0 0.0
        %2126 = vmatprep.subr.mxu0 0.0
        %2127 = vmatpush1.msra.mxu0 0.0
        %2128 = vmatprep.subr.mxu0 0.0
        %2129 = vmatpush1.msra.mxu0 0.0
        %2130 = vmatprep.subr.mxu0 0.0
        %2131 = vmatpush1.msra.mxu0 0.0
        %2132 = vmatprep.subr.mxu0 0.0
        %2133 = vmatpush1.msra.mxu0 0.0
        %2134 = vmatprep.subr.mxu0 0.0
        %2135 = vmatpush1.msra.mxu0 0.0
        %2136 = vmatprep.subr.mxu0 0.0
        %2137 = vmatpush1.msra.mxu0 0.0
        %2138 = vmatprep.subr.mxu0 0.0
        %2139 = vmatpush1.msra.mxu0 0.0
        %2140 = vmatprep.subr.mxu0 0.0
        %2141 = vmatpush1.msra.mxu0 0.0
        %2142 = vmatprep.subr.mxu0 0.0
        %2143 = vmatpush1.msra.mxu0 0.0
        %2144 = vmatprep.subr.mxu0 0.0
        %2145 = vmatpush1.msra.mxu0 0.0
        %2146 = vmatprep.subr.mxu0 0.0
        %2147 = vmatpush1.msra.mxu0 0.0
        %2148 = vmatprep.subr.mxu0 0.0
        %2149 = vmatpush1.msra.mxu0 0.0
        %2150 = vmatprep.subr.mxu0 0.0
        %2151 = vmatpush1.msra.mxu0 0.0
        %2152 = vmatprep.subr.mxu0 0.0
        %2153 = vmatpush1.msra.mxu0 0.0
        %2154 = vmatprep.subr.mxu0 0.0
        %2155 = vmatpush1.msra.mxu0 0.0
        %2156 = vmatprep.subr.mxu0 0.0
        %2157 = vmatpush1.msra.mxu0 0.0
        %2158 = vmatprep.subr.mxu0 0.0
        %2159 = vmatpush1.msra.mxu0 0.0
        %2160 = vmatprep.subr.mxu0 0.0
        %2161 = vmatpush1.msra.mxu0 0.0
        %2162 = vmatprep.subr.mxu0 0.0
        %2163 = vmatpush1.msra.mxu0 0.0
        %2164 = vmatprep.subr.mxu0 0.0
        %2165 = vmatpush1.msra.mxu0 0.0
        %2166 = vmatprep.subr.mxu0 0.0
        %2167 = vmatpush1.msra.mxu0 0.0
        %2168 = vmatprep.subr.mxu0 0.0
        %2169 = vmatpush1.msra.mxu0 0.0
        %2170 = vmatprep.subr.mxu0 0.0
        %2171 = vmatpush1.msra.mxu0 0.0
        %2172 = vmatprep.subr.mxu0 0.0
        %2173 = vmatpush1.msra.mxu0 0.0
        %2174 = vmatprep.mubr.f32.mxu0 0.0
        %2175 = vmatmul.mubr.f32.gmra.mrb[0].mxu0 %v2104
        %v2176 = vpop.f32.mrb[0].mxu0
        %v2177 = vadd.f32 %v2100, %v2176
        %v2178 = vpop.f32.mrb[0].mxu0
        %2179 = vdwg.mxu0
        %v2180 = vld [vmem:[%s93] sm:$0xff]
        %v2181 = vld [vmem:[%s93 + $0x8] sm:$0xff]
        %v2182 = vld [vmem:[%s93 + $0x10] sm:$0xff]
        %v2183 = vld [vmem:[%s93 + $0x18] sm:$0xff]
        %vm2184 = vcmask 261120
        %v2186 = vsel %vm2184, %v2091, 0
        %2188 = vmatprep.subr.mxu0 0.0
        %2189 = vmatpush1.msra.mxu0 %v2180
        %2190 = vmatprep.subr.mxu0 0.0
        %2191 = vmatpush1.msra.mxu0 %v2181
        %2192 = vmatprep.subr.mxu0 0.0
        %2193 = vmatpush1.msra.mxu0 %v2182
        %2194 = vmatprep.subr.mxu0 0.0
        %2195 = vmatpush1.msra.mxu0 %v2183
        %2196 = vmatprep.subr.mxu0 0.0
        %2197 = vmatpush1.msra.mxu0 0.0
        %2198 = vmatprep.subr.mxu0 0.0
        %2199 = vmatpush1.msra.mxu0 0.0
        %2200 = vmatprep.subr.mxu0 0.0
        %2201 = vmatpush1.msra.mxu0 0.0
        %2202 = vmatprep.subr.mxu0 0.0
        %2203 = vmatpush1.msra.mxu0 0.0
        %2204 = vmatprep.subr.mxu0 0.0
        %2205 = vmatpush1.msra.mxu0 0.0
        %2206 = vmatprep.subr.mxu0 0.0
        %2207 = vmatpush1.msra.mxu0 0.0
        %2208 = vmatprep.subr.mxu0 0.0
        %2209 = vmatpush1.msra.mxu0 0.0
        %2210 = vmatprep.subr.mxu0 0.0
        %2211 = vmatpush1.msra.mxu0 0.0
        %2212 = vmatprep.subr.mxu0 0.0
        %2213 = vmatpush1.msra.mxu0 0.0
        %2214 = vmatprep.subr.mxu0 0.0
        %2215 = vmatpush1.msra.mxu0 0.0
        %2216 = vmatprep.subr.mxu0 0.0
        %2217 = vmatpush1.msra.mxu0 0.0
        %2218 = vmatprep.subr.mxu0 0.0
        %2219 = vmatpush1.msra.mxu0 0.0
        %2220 = vmatprep.subr.mxu0 0.0
        %2221 = vmatpush1.msra.mxu0 0.0
        %2222 = vmatprep.subr.mxu0 0.0
        %2223 = vmatpush1.msra.mxu0 0.0
        %2224 = vmatprep.subr.mxu0 0.0
        %2225 = vmatpush1.msra.mxu0 0.0
        %2226 = vmatprep.subr.mxu0 0.0
        %2227 = vmatpush1.msra.mxu0 0.0
        %2228 = vmatprep.subr.mxu0 0.0
        %2229 = vmatpush1.msra.mxu0 0.0
        %2230 = vmatprep.subr.mxu0 0.0
        %2231 = vmatpush1.msra.mxu0 0.0
        %2232 = vmatprep.subr.mxu0 0.0
        %2233 = vmatpush1.msra.mxu0 0.0
        %2234 = vmatprep.subr.mxu0 0.0
        %2235 = vmatpush1.msra.mxu0 0.0
        %2236 = vmatprep.subr.mxu0 0.0
        %2237 = vmatpush1.msra.mxu0 0.0
        %2238 = vmatprep.subr.mxu0 0.0
        %2239 = vmatpush1.msra.mxu0 0.0
        %2240 = vmatprep.subr.mxu0 0.0
        %2241 = vmatpush1.msra.mxu0 0.0
        %2242 = vmatprep.subr.mxu0 0.0
        %2243 = vmatpush1.msra.mxu0 0.0
        %2244 = vmatprep.subr.mxu0 0.0
        %2245 = vmatpush1.msra.mxu0 0.0
        %2246 = vmatprep.subr.mxu0 0.0
        %2247 = vmatpush1.msra.mxu0 0.0
        %2248 = vmatprep.subr.mxu0 0.0
        %2249 = vmatpush1.msra.mxu0 0.0
        %2250 = vmatprep.subr.mxu0 0.0
        %2251 = vmatpush1.msra.mxu0 0.0
        %2252 = vmatprep.mubr.f32.mxu0 0.0
        %2253 = vmatmul.mubr.f32.gmra.mrb[0].mxu0 %v2186
        %v2254 = vpop.f32.mrb[0].mxu0
        %v2255 = vadd.f32 0.0, %v2254
        %v2256 = vpop.f32.mrb[0].mxu0
        %2257 = vdwg.mxu0
        %v2258 = vld [vmem:[%s91] sm:$0xff]
        %v2259 = vld [vmem:[%s91 + $0x8] sm:$0xff]
        %v2260 = vld [vmem:[%s91 + $0x10] sm:$0xff]
        %v2261 = vld [vmem:[%s91 + $0x18] sm:$0xff]
        %v2263 = vsel %vm2184, %v2177, 0
        %2265 = vmatprep.subr.mxu0 0.0
        %2266 = vmatpush1.msra.mxu0 %v2258
        %2267 = vmatprep.subr.mxu0 0.0
        %2268 = vmatpush1.msra.mxu0 %v2259
        %2269 = vmatprep.subr.mxu0 0.0
        %2270 = vmatpush1.msra.mxu0 %v2260
        %2271 = vmatprep.subr.mxu0 0.0
        %2272 = vmatpush1.msra.mxu0 %v2261
        %2273 = vmatprep.subr.mxu0 0.0
        %2274 = vmatpush1.msra.mxu0 0.0
        %2275 = vmatprep.subr.mxu0 0.0
        %2276 = vmatpush1.msra.mxu0 0.0
        %2277 = vmatprep.subr.mxu0 0.0
        %2278 = vmatpush1.msra.mxu0 0.0
        %2279 = vmatprep.subr.mxu0 0.0
        %2280 = vmatpush1.msra.mxu0 0.0
        %2281 = vmatprep.subr.mxu0 0.0
        %2282 = vmatpush1.msra.mxu0 0.0
        %2283 = vmatprep.subr.mxu0 0.0
        %2284 = vmatpush1.msra.mxu0 0.0
        %2285 = vmatprep.subr.mxu0 0.0
        %2286 = vmatpush1.msra.mxu0 0.0
        %2287 = vmatprep.subr.mxu0 0.0
        %2288 = vmatpush1.msra.mxu0 0.0
        %2289 = vmatprep.subr.mxu0 0.0
        %2290 = vmatpush1.msra.mxu0 0.0
        %2291 = vmatprep.subr.mxu0 0.0
        %2292 = vmatpush1.msra.mxu0 0.0
        %2293 = vmatprep.subr.mxu0 0.0
        %2294 = vmatpush1.msra.mxu0 0.0
        %2295 = vmatprep.subr.mxu0 0.0
        %2296 = vmatpush1.msra.mxu0 0.0
        %2297 = vmatprep.subr.mxu0 0.0
        %2298 = vmatpush1.msra.mxu0 0.0
        %2299 = vmatprep.subr.mxu0 0.0
        %2300 = vmatpush1.msra.mxu0 0.0
        %2301 = vmatprep.subr.mxu0 0.0
        %2302 = vmatpush1.msra.mxu0 0.0
        %2303 = vmatprep.subr.mxu0 0.0
        %2304 = vmatpush1.msra.mxu0 0.0
        %2305 = vmatprep.subr.mxu0 0.0
        %2306 = vmatpush1.msra.mxu0 0.0
        %2307 = vmatprep.subr.mxu0 0.0
        %2308 = vmatpush1.msra.mxu0 0.0
        %2309 = vmatprep.subr.mxu0 0.0
        %2310 = vmatpush1.msra.mxu0 0.0
        %2311 = vmatprep.subr.mxu0 0.0
        %2312 = vmatpush1.msra.mxu0 0.0
        %2313 = vmatprep.subr.mxu0 0.0
        %2314 = vmatpush1.msra.mxu0 0.0
        %2315 = vmatprep.subr.mxu0 0.0
        %2316 = vmatpush1.msra.mxu0 0.0
        %2317 = vmatprep.subr.mxu0 0.0
        %2318 = vmatpush1.msra.mxu0 0.0
        %2319 = vmatprep.subr.mxu0 0.0
        %2320 = vmatpush1.msra.mxu0 0.0
        %2321 = vmatprep.subr.mxu0 0.0
        %2322 = vmatpush1.msra.mxu0 0.0
        %2323 = vmatprep.subr.mxu0 0.0
        %2324 = vmatpush1.msra.mxu0 0.0
        %2325 = vmatprep.subr.mxu0 0.0
        %2326 = vmatpush1.msra.mxu0 0.0
        %2327 = vmatprep.subr.mxu0 0.0
        %2328 = vmatpush1.msra.mxu0 0.0
        %2329 = vmatprep.mubr.f32.mxu0 0.0
        %2330 = vmatmul.mubr.f32.gmra.mrb[0].mxu0 %v2263
        %v2331 = vpop.f32.mrb[0].mxu0
        %v2332 = vadd.f32 0.0, %v2331
        %v2333 = vpop.f32.mrb[0].mxu0
        %2334 = vdwg.mxu0
        %2335 = vxpose.xlu0.b32.start [1/16] %v2332, 128
        %2336 = vxpose.xlu0.b32.cont [2/16] 0.0, 128
        %2337 = vxpose.xlu0.b32.cont [3/16] 0.0, 128
        %2338 = vxpose.xlu0.b32.cont [4/16] 0.0, 128
        %2339 = vxpose.xlu0.b32.cont [5/16] 0.0, 128
        %2340 = vxpose.xlu0.b32.cont [6/16] 0.0, 128
        %2341 = vxpose.xlu0.b32.cont [7/16] 0.0, 128
        %2342 = vxpose.xlu0.b32.cont [8/16] 0.0, 128
        %2343 = vxpose.xlu0.b32.cont [9/16] 0.0, 128
        %2344 = vxpose.xlu0.b32.cont [10/16] 0.0, 128
        %2345 = vxpose.xlu0.b32.cont [11/16] 0.0, 128
        %2346 = vxpose.xlu0.b32.cont [12/16] 0.0, 128
        %2347 = vxpose.xlu0.b32.cont [13/16] 0.0, 128
        %2348 = vxpose.xlu0.b32.cont [14/16] 0.0, 128
        %2349 = vxpose.xlu0.b32.cont [15/16] 0.0, 128
        %2350 = vxpose.xlu0.b32.end [16/16] 0.0, 128
        %v2351 = vpop.trf.xlu0
        %v2352 = vpop.trf.xlu0
        %v2353 = vpop.trf.xlu0
        %v2354 = vpop.trf.xlu0
        %v2355 = vpop.trf.xlu0
        %v2356 = vpop.trf.xlu0
        %v2357 = vpop.trf.xlu0
        %v2358 = vpop.trf.xlu0
        %v2359 = vpop.trf.xlu0
        %v2360 = vpop.trf.xlu0
        %v2361 = vpop.trf.xlu0
        %v2362 = vpop.trf.xlu0
        %v2363 = vpop.trf.xlu0
        %v2364 = vpop.trf.xlu0
        %v2365 = vpop.trf.xlu0
        %v2366 = vpop.trf.xlu0
        %vm2367 = vcmask 31744
        %v2369 = vsel %vm2367, %v2351, 0
        %v2372 = vsel %vm2367, %v2352, 0
        %v2375 = vsel %vm2367, %v2353, 0
        %v2378 = vsel %vm2367, %v2354, 0
        %vm2380 = vcmask 1043456
        %v2382 = vsel %vm2380, %v1965, 0
        %2384 = vmatprep.subr.mxu0 0.0
        %2385 = vmatpush1.msra.mxu0 %v2382
        %2386 = vmatprep.subr.mxu0 0.0
        %2387 = vmatpush1.msra.mxu0 0.0
        %2388 = vmatprep.subr.mxu0 0.0
        %2389 = vmatpush1.msra.mxu0 0.0
        %2390 = vmatprep.subr.mxu0 0.0
        %2391 = vmatpush1.msra.mxu0 0.0
        %2392 = vmatprep.subr.mxu0 0.0
        %2393 = vmatpush1.msra.mxu0 0.0
        %2394 = vmatprep.subr.mxu0 0.0
        %2395 = vmatpush1.msra.mxu0 0.0
        %2396 = vmatprep.subr.mxu0 0.0
        %2397 = vmatpush1.msra.mxu0 0.0
        %2398 = vmatprep.subr.mxu0 0.0
        %2399 = vmatpush1.msra.mxu0 0.0
        %2400 = vmatprep.subr.mxu0 0.0
        %2401 = vmatpush1.msra.mxu0 0.0
        %2402 = vmatprep.subr.mxu0 0.0
        %2403 = vmatpush1.msra.mxu0 0.0
        %2404 = vmatprep.subr.mxu0 0.0
        %2405 = vmatpush1.msra.mxu0 0.0
        %2406 = vmatprep.subr.mxu0 0.0
        %2407 = vmatpush1.msra.mxu0 0.0
        %2408 = vmatprep.subr.mxu0 0.0
        %2409 = vmatpush1.msra.mxu0 0.0
        %2410 = vmatprep.subr.mxu0 0.0
        %2411 = vmatpush1.msra.mxu0 0.0
        %2412 = vmatprep.subr.mxu0 0.0
        %2413 = vmatpush1.msra.mxu0 0.0
        %2414 = vmatprep.subr.mxu0 0.0
        %2415 = vmatpush1.msra.mxu0 0.0
        %2416 = vmatprep.subr.mxu0 0.0
        %2417 = vmatpush1.msra.mxu0 0.0
        %2418 = vmatprep.subr.mxu0 0.0
        %2419 = vmatpush1.msra.mxu0 0.0
        %2420 = vmatprep.subr.mxu0 0.0
        %2421 = vmatpush1.msra.mxu0 0.0
        %2422 = vmatprep.subr.mxu0 0.0
        %2423 = vmatpush1.msra.mxu0 0.0
        %2424 = vmatprep.subr.mxu0 0.0
        %2425 = vmatpush1.msra.mxu0 0.0
        %2426 = vmatprep.subr.mxu0 0.0
        %2427 = vmatpush1.msra.mxu0 0.0
        %2428 = vmatprep.subr.mxu0 0.0
        %2429 = vmatpush1.msra.mxu0 0.0
        %2430 = vmatprep.subr.mxu0 0.0
        %2431 = vmatpush1.msra.mxu0 0.0
        %2432 = vmatprep.subr.mxu0 0.0
        %2433 = vmatpush1.msra.mxu0 0.0
        %2434 = vmatprep.subr.mxu0 0.0
        %2435 = vmatpush1.msra.mxu0 0.0
        %2436 = vmatprep.subr.mxu0 0.0
        %2437 = vmatpush1.msra.mxu0 0.0
        %2438 = vmatprep.subr.mxu0 0.0
        %2439 = vmatpush1.msra.mxu0 0.0
        %2440 = vmatprep.subr.mxu0 0.0
        %2441 = vmatpush1.msra.mxu0 0.0
        %2442 = vmatprep.subr.mxu0 0.0
        %2443 = vmatpush1.msra.mxu0 0.0
        %2444 = vmatprep.subr.mxu0 0.0
        %2445 = vmatpush1.msra.mxu0 0.0
        %2446 = vmatprep.subr.mxu0 0.0
        %2447 = vmatpush1.msra.mxu0 0.0
        %2448 = vmatprep.mubr.f32.mxu0 0.0
        %2449 = vmatmul.mubr.f32.gmra.mrb[0].mxu0 %v2369
        %v2450 = vpop.f32.mrb[0].mxu0
        %v2451 = vadd.f32 0.0, %v2450
        %v2452 = vpop.f32.mrb[0].mxu0
        %2453 = vmatprep.mubr.f32.mxu0 0.0
        %2454 = vmatmul.mubr.f32.gmra.mrb[0].mxu0 %v2372
        %v2455 = vpop.f32.mrb[0].mxu0
        %v2456 = vadd.f32 0.0, %v2455
        %v2457 = vpop.f32.mrb[0].mxu0
        %2458 = vmatprep.mubr.f32.mxu0 0.0
        %2459 = vmatmul.mubr.f32.gmra.mrb[0].mxu0 %v2375
        %v2460 = vpop.f32.mrb[0].mxu0
        %v2461 = vadd.f32 0.0, %v2460
        %v2462 = vpop.f32.mrb[0].mxu0
        %2463 = vmatprep.mubr.f32.mxu0 0.0
        %2464 = vmatmul.mubr.f32.gmra.mrb[0].mxu0 %v2378
        %v2465 = vpop.f32.mrb[0].mxu0
        %v2466 = vadd.f32 0.0, %v2465
        %v2467 = vpop.f32.mrb[0].mxu0
        %2468 = vdwg.mxu0
        %v2469 = vmul.f32 %v2451, %v1961
        %v2470 = vmul.f32 %v2456, %v1962
        %v2471 = vmul.f32 %v2461, %v1963
        %v2472 = vmul.f32 %v2466, %v1964
        %v2474 = vsel %vm2184, %v2255, 0
        %2476 = vmatprep.subr.mxu0 0.0
        %2477 = vmatpush1.msra.mxu0 %v2469
        %2478 = vmatprep.subr.mxu0 0.0
        %2479 = vmatpush1.msra.mxu0 %v2470
        %2480 = vmatprep.subr.mxu0 0.0
        %2481 = vmatpush1.msra.mxu0 %v2471
        %2482 = vmatprep.subr.mxu0 0.0
        %2483 = vmatpush1.msra.mxu0 %v2472
        %2484 = vmatprep.subr.mxu0 0.0
        %2485 = vmatpush1.msra.mxu0 0.0
        %2486 = vmatprep.subr.mxu0 0.0
        %2487 = vmatpush1.msra.mxu0 0.0
        %2488 = vmatprep.subr.mxu0 0.0
        %2489 = vmatpush1.msra.mxu0 0.0
        %2490 = vmatprep.subr.mxu0 0.0
        %2491 = vmatpush1.msra.mxu0 0.0
        %2492 = vmatprep.subr.mxu0 0.0
        %2493 = vmatpush1.msra.mxu0 0.0
        %2494 = vmatprep.subr.mxu0 0.0
        %2495 = vmatpush1.msra.mxu0 0.0
        %2496 = vmatprep.subr.mxu0 0.0
        %2497 = vmatpush1.msra.mxu0 0.0
        %2498 = vmatprep.subr.mxu0 0.0
        %2499 = vmatpush1.msra.mxu0 0.0
        %2500 = vmatprep.subr.mxu0 0.0
        %2501 = vmatpush1.msra.mxu0 0.0
        %2502 = vmatprep.subr.mxu0 0.0
        %2503 = vmatpush1.msra.mxu0 0.0
        %2504 = vmatprep.subr.mxu0 0.0
        %2505 = vmatpush1.msra.mxu0 0.0
        %2506 = vmatprep.subr.mxu0 0.0
        %2507 = vmatpush1.msra.mxu0 0.0
        %2508 = vmatprep.subr.mxu0 0.0
        %2509 = vmatpush1.msra.mxu0 0.0
        %2510 = vmatprep.subr.mxu0 0.0
        %2511 = vmatpush1.msra.mxu0 0.0
        %2512 = vmatprep.subr.mxu0 0.0
        %2513 = vmatpush1.msra.mxu0 0.0
        %2514 = vmatprep.subr.mxu0 0.0
        %2515 = vmatpush1.msra.mxu0 0.0
        %2516 = vmatprep.subr.mxu0 0.0
        %2517 = vmatpush1.msra.mxu0 0.0
        %2518 = vmatprep.subr.mxu0 0.0
        %2519 = vmatpush1.msra.mxu0 0.0
        %2520 = vmatprep.subr.mxu0 0.0
        %2521 = vmatpush1.msra.mxu0 0.0
        %2522 = vmatprep.subr.mxu0 0.0
        %2523 = vmatpush1.msra.mxu0 0.0
        %2524 = vmatprep.subr.mxu0 0.0
        %2525 = vmatpush1.msra.mxu0 0.0
        %2526 = vmatprep.subr.mxu0 0.0
        %2527 = vmatpush1.msra.mxu0 0.0
        %2528 = vmatprep.subr.mxu0 0.0
        %2529 = vmatpush1.msra.mxu0 0.0
        %2530 = vmatprep.subr.mxu0 0.0
        %2531 = vmatpush1.msra.mxu0 0.0
        %2532 = vmatprep.subr.mxu0 0.0
        %2533 = vmatpush1.msra.mxu0 0.0
        %2534 = vmatprep.subr.mxu0 0.0
        %2535 = vmatpush1.msra.mxu0 0.0
        %2536 = vmatprep.subr.mxu0 0.0
        %2537 = vmatpush1.msra.mxu0 0.0
        %2538 = vmatprep.subr.mxu0 0.0
        %2539 = vmatpush1.msra.mxu0 0.0
        %2540 = vmatprep.mubr.f32.mxu0 0.0
        %2541 = vmatmul.mubr.f32.gmra.mrb[0].mxu0 %v2474
        %v2542 = vpop.f32.mrb[0].mxu0
        %v2543 = vadd.f32 0.0, %v2542
        %v2544 = vpop.f32.mrb[0].mxu0
        %2545 = vdwg.mxu0
        %v2546 = vld [vmem:[%s89] sm:$0xff]
        %v2547 = vld [vmem:[%s89 + $0x8] sm:$0xff]
        %v2548 = vld [vmem:[%s89 + $0x10] sm:$0xff]
        %v2549 = vld [vmem:[%s89 + $0x18] sm:$0xff]
        %v2550 = vld [vmem:[%s87] sm:$0xff]
        %v2552 = vcombine.high %v2550, %v2550
        %v2554 = vsel %vm2367, %v2005, 0
        %v2556 = vsel %vm2380, %v2550, 0
        %v2558 = vsel %vm2380, %v2552, 0
        %2560 = vmatprep.subr.mxu0 %v2558
        %2561 = vmatpush1.msra.mxu0 %v2556
        %2562 = vmatprep.subr.mxu0 0.0
        %2563 = vmatpush1.msra.mxu0 0.0
        %2564 = vmatprep.subr.mxu0 0.0
        %2565 = vmatpush1.msra.mxu0 0.0
        %2566 = vmatprep.subr.mxu0 0.0
        %2567 = vmatpush1.msra.mxu0 0.0
        %2568 = vmatprep.subr.mxu0 0.0
        %2569 = vmatpush1.msra.mxu0 0.0
        %2570 = vmatprep.subr.mxu0 0.0
        %2571 = vmatpush1.msra.mxu0 0.0
        %2572 = vmatprep.subr.mxu0 0.0
        %2573 = vmatpush1.msra.mxu0 0.0
        %2574 = vmatprep.subr.mxu0 0.0
        %2575 = vmatpush1.msra.mxu0 0.0
        %2576 = vmatprep.subr.mxu0 0.0
        %2577 = vmatpush1.msra.mxu0 0.0
        %2578 = vmatprep.subr.mxu0 0.0
        %2579 = vmatpush1.msra.mxu0 0.0
        %2580 = vmatprep.subr.mxu0 0.0
        %2581 = vmatpush1.msra.mxu0 0.0
        %2582 = vmatprep.subr.mxu0 0.0
        %2583 = vmatpush1.msra.mxu0 0.0
        %2584 = vmatprep.subr.mxu0 0.0
        %2585 = vmatpush1.msra.mxu0 0.0
        %2586 = vmatprep.subr.mxu0 0.0
        %2587 = vmatpush1.msra.mxu0 0.0
        %2588 = vmatprep.subr.mxu0 0.0
        %2589 = vmatpush1.msra.mxu0 0.0
        %2590 = vmatprep.subr.mxu0 0.0
        %2591 = vmatpush1.msra.mxu0 0.0
        %2592 = vmatprep.subr.mxu0 0.0
        %2593 = vmatpush1.msra.mxu0 0.0
        %2594 = vmatprep.subr.mxu0 0.0
        %2595 = vmatpush1.msra.mxu0 0.0
        %2596 = vmatprep.subr.mxu0 0.0
        %2597 = vmatpush1.msra.mxu0 0.0
        %2598 = vmatprep.subr.mxu0 0.0
        %2599 = vmatpush1.msra.mxu0 0.0
        %2600 = vmatprep.subr.mxu0 0.0
        %2601 = vmatpush1.msra.mxu0 0.0
        %2602 = vmatprep.subr.mxu0 0.0
        %2603 = vmatpush1.msra.mxu0 0.0
        %2604 = vmatprep.subr.mxu0 0.0
        %2605 = vmatpush1.msra.mxu0 0.0
        %2606 = vmatprep.subr.mxu0 0.0
        %2607 = vmatpush1.msra.mxu0 0.0
        %2608 = vmatprep.subr.mxu0 0.0
        %2609 = vmatpush1.msra.mxu0 0.0
        %2610 = vmatprep.subr.mxu0 0.0
        %2611 = vmatpush1.msra.mxu0 0.0
        %2612 = vmatprep.subr.mxu0 0.0
        %2613 = vmatpush1.msra.mxu0 0.0
        %2614 = vmatprep.subr.mxu0 0.0
        %2615 = vmatpush1.msra.mxu0 0.0
        %2616 = vmatprep.subr.mxu0 0.0
        %2617 = vmatpush1.msra.mxu0 0.0
        %2618 = vmatprep.subr.mxu0 0.0
        %2619 = vmatpush1.msra.mxu0 0.0
        %2620 = vmatprep.subr.mxu0 0.0
        %2621 = vmatpush1.msra.mxu0 0.0
        %2622 = vmatprep.subr.mxu0 0.0
        %2623 = vmatpush1.msra.mxu0 0.0
        %2624 = vmatprep.mubr.f32.mxu0 0.0
        %2625 = vmatmul.mubr.f32.gmra.mrb[0].mxu0 %v2554
        %v2626 = vpop.f32.mrb[0].mxu0
        %v2627 = vadd.f32 0.0, %v2626
        %v2628 = vpop.f32.mrb[0].mxu0
        %v2629 = vadd.f32 0.0, %v2628
        %2630 = vdwg.mxu0
        %vm2631 = vcmask 130048
        %v2633 = vsel %vm2631, %v2543, 0
        %2635 = vmatprep.subr.mxu0 %v2547
        %2636 = vmatpush1.msra.mxu0 %v2546
        %2637 = vmatprep.subr.mxu0 %v2549
        %2638 = vmatpush1.msra.mxu0 %v2548
        %2639 = vmatprep.subr.mxu0 0.0
        %2640 = vmatpush1.msra.mxu0 0.0
        %2641 = vmatprep.subr.mxu0 0.0
        %2642 = vmatpush1.msra.mxu0 0.0
        %2643 = vmatprep.subr.mxu0 0.0
        %2644 = vmatpush1.msra.mxu0 0.0
        %2645 = vmatprep.subr.mxu0 0.0
        %2646 = vmatpush1.msra.mxu0 0.0
        %2647 = vmatprep.subr.mxu0 0.0
        %2648 = vmatpush1.msra.mxu0 0.0
        %2649 = vmatprep.subr.mxu0 0.0
        %2650 = vmatpush1.msra.mxu0 0.0
        %2651 = vmatprep.subr.mxu0 0.0
        %2652 = vmatpush1.msra.mxu0 0.0
        %2653 = vmatprep.subr.mxu0 0.0
        %2654 = vmatpush1.msra.mxu0 0.0
        %2655 = vmatprep.subr.mxu0 0.0
        %2656 = vmatpush1.msra.mxu0 0.0
        %2657 = vmatprep.subr.mxu0 0.0
        %2658 = vmatpush1.msra.mxu0 0.0
        %2659 = vmatprep.subr.mxu0 0.0
        %2660 = vmatpush1.msra.mxu0 0.0
        %2661 = vmatprep.subr.mxu0 0.0
        %2662 = vmatpush1.msra.mxu0 0.0
        %2663 = vmatprep.subr.mxu0 0.0
        %2664 = vmatpush1.msra.mxu0 0.0
        %2665 = vmatprep.subr.mxu0 0.0
        %2666 = vmatpush1.msra.mxu0 0.0
        %2667 = vmatprep.subr.mxu0 0.0
        %2668 = vmatpush1.msra.mxu0 0.0
        %2669 = vmatprep.subr.mxu0 0.0
        %2670 = vmatpush1.msra.mxu0 0.0
        %2671 = vmatprep.subr.mxu0 0.0
        %2672 = vmatpush1.msra.mxu0 0.0
        %2673 = vmatprep.subr.mxu0 0.0
        %2674 = vmatpush1.msra.mxu0 0.0
        %2675 = vmatprep.subr.mxu0 0.0
        %2676 = vmatpush1.msra.mxu0 0.0
        %2677 = vmatprep.subr.mxu0 0.0
        %2678 = vmatpush1.msra.mxu0 0.0
        %2679 = vmatprep.subr.mxu0 0.0
        %2680 = vmatpush1.msra.mxu0 0.0
        %2681 = vmatprep.subr.mxu0 0.0
        %2682 = vmatpush1.msra.mxu0 0.0
        %2683 = vmatprep.subr.mxu0 0.0
        %2684 = vmatpush1.msra.mxu0 0.0
        %2685 = vmatprep.subr.mxu0 0.0
        %2686 = vmatpush1.msra.mxu0 0.0
        %2687 = vmatprep.subr.mxu0 0.0
        %2688 = vmatpush1.msra.mxu0 0.0
        %2689 = vmatprep.subr.mxu0 0.0
        %2690 = vmatpush1.msra.mxu0 0.0
        %2691 = vmatprep.subr.mxu0 0.0
        %2692 = vmatpush1.msra.mxu0 0.0
        %2693 = vmatprep.subr.mxu0 0.0
        %2694 = vmatpush1.msra.mxu0 0.0
        %2695 = vmatprep.subr.mxu0 0.0
        %2696 = vmatpush1.msra.mxu0 0.0
        %2697 = vmatprep.subr.mxu0 0.0
        %2698 = vmatpush1.msra.mxu0 0.0
        %2699 = vmatprep.mubr.f32.mxu0 0.0
        %2700 = vmatmul.mubr.f32.gmra.mrb[0].mxu0 %v2633
        %v2701 = vpop.f32.mrb[0].mxu0
        %v2702 = vadd.f32 %v2627, %v2701
        %v2703 = vpop.f32.mrb[0].mxu0
        %v2704 = vadd.f32 %v2629, %v2703
        %2705 = vdwg.mxu0
        %v2706 = vld [vmem:[%s95] sm:$0x3]
        %v2708 = vlaneseq
        %v2709 = vshrl.u32 %v2708, 7
        %v2710 = vsub.s32 0, %v2709
        %v2711 = vrot.slane %v2706, %v2710
        %v2712 = vlaneseq
        %v2713 = vshrl.u32 %v2712, 7
        %v2714 = vsub.s32 1, %v2713
        %v2715 = vrot.slane %v2706, %v2714
        %v2718 = vadd.f32 %v2702, %v2711
        %v2719 = vadd.f32 %v2704, %v2715
        %v2720 = vmax.f32 %v2718, 0.0
        %v2721 = vmax.f32 %v2719, 0.0
        %v2722 = vld [vmem:[%s85] sm:$0xff]
        %v2723 = vld [vmem:[%s85 + $0x8] sm:$0xff]
        %v2724 = vld [vmem:[%s85 + $0x10] sm:$0xff]
        %v2725 = vld [vmem:[%s85 + $0x18] sm:$0xff]
        %v2726 = vld [vmem:[%s85 + $0x20] sm:$0xff]
        %v2727 = vld [vmem:[%s85 + $0x28] sm:$0xff]
        %v2728 = vld [vmem:[%s85 + $0x30] sm:$0xff]
        %v2729 = vld [vmem:[%s85 + $0x38] sm:$0xff]
        %v2730 = vld [vmem:[%s85 + $0x40] sm:$0xff]
        %v2731 = vld [vmem:[%s85 + $0x48] sm:$0xff]
        %v2732 = vld [vmem:[%s85 + $0x50] sm:$0xff]
        %v2733 = vld [vmem:[%s85 + $0x58] sm:$0xff]
        %v2734 = vld [vmem:[%s85 + $0x60] sm:$0xff]
        %v2735 = vld [vmem:[%s85 + $0x68] sm:$0xff]
        %v2736 = vld [vmem:[%s85 + $0x70] sm:$0xff]
        %v2737 = vld [vmem:[%s85 + $0x78] sm:$0xff]
        %v2738 = vld [vmem:[%s85 + $0x80] sm:$0xff]
        %v2739 = vld [vmem:[%s85 + $0x88] sm:$0xff]
        %v2740 = vld [vmem:[%s85 + $0x90] sm:$0xff]
        %v2741 = vld [vmem:[%s85 + $0x98] sm:$0xff]
        %v2742 = vld [vmem:[%s85 + $0xa0] sm:$0xff]
        %v2743 = vld [vmem:[%s85 + $0xa8] sm:$0xff]
        %v2744 = vld [vmem:[%s85 + $0xb0] sm:$0xff]
        %v2745 = vld [vmem:[%s85 + $0xb8] sm:$0xff]
        %v2746 = vld [vmem:[%s85 + $0xc0] sm:$0xff]
        %v2747 = vld [vmem:[%s85 + $0xc8] sm:$0xff]
        %v2748 = vld [vmem:[%s85 + $0xd0] sm:$0xff]
        %v2749 = vld [vmem:[%s85 + $0xd8] sm:$0xff]
        %v2750 = vld [vmem:[%s85 + $0xe0] sm:$0xff]
        %v2751 = vld [vmem:[%s85 + $0xe8] sm:$0xff]
        %v2752 = vld [vmem:[%s85 + $0xf0] sm:$0xff]
        %v2753 = vld [vmem:[%s85 + $0xf8] sm:$0xff]
        %v2754 = vld [vmem:[#allocation7] sm:$0x1]
        %v2756 = vlaneseq
        %v2757 = vshrl.u32 %v2756, 7
        %v2758 = vsub.s32 0, %v2757
        %v2759 = vrot.slane %v2754, %v2758
        %2761 = vmatprep.subr.mxu0 0.0
        %2762 = vmatpush1.msra.mxu0 %v2722
        %2763 = vmatprep.subr.mxu0 0.0
        %2764 = vmatpush1.msra.mxu0 %v2723
        %2765 = vmatprep.subr.mxu0 0.0
        %2766 = vmatpush1.msra.mxu0 %v2724
        %2767 = vmatprep.subr.mxu0 0.0
        %2768 = vmatpush1.msra.mxu0 %v2725
        %2769 = vmatprep.subr.mxu0 0.0
        %2770 = vmatpush1.msra.mxu0 %v2726
        %2771 = vmatprep.subr.mxu0 0.0
        %2772 = vmatpush1.msra.mxu0 %v2727
        %2773 = vmatprep.subr.mxu0 0.0
        %2774 = vmatpush1.msra.mxu0 %v2728
        %2775 = vmatprep.subr.mxu0 0.0
        %2776 = vmatpush1.msra.mxu0 %v2729
        %2777 = vmatprep.subr.mxu0 0.0
        %2778 = vmatpush1.msra.mxu0 %v2730
        %2779 = vmatprep.subr.mxu0 0.0
        %2780 = vmatpush1.msra.mxu0 %v2731
        %2781 = vmatprep.subr.mxu0 0.0
        %2782 = vmatpush1.msra.mxu0 %v2732
        %2783 = vmatprep.subr.mxu0 0.0
        %2784 = vmatpush1.msra.mxu0 %v2733
        %2785 = vmatprep.subr.mxu0 0.0
        %2786 = vmatpush1.msra.mxu0 %v2734
        %2787 = vmatprep.subr.mxu0 0.0
        %2788 = vmatpush1.msra.mxu0 %v2735
        %2789 = vmatprep.subr.mxu0 0.0
        %2790 = vmatpush1.msra.mxu0 %v2736
        %2791 = vmatprep.subr.mxu0 0.0
        %2792 = vmatpush1.msra.mxu0 %v2737
        %2793 = vmatprep.subr.mxu0 0.0
        %2794 = vmatpush1.msra.mxu0 %v2738
        %2795 = vmatprep.subr.mxu0 0.0
        %2796 = vmatpush1.msra.mxu0 %v2739
        %2797 = vmatprep.subr.mxu0 0.0
        %2798 = vmatpush1.msra.mxu0 %v2740
        %2799 = vmatprep.subr.mxu0 0.0
        %2800 = vmatpush1.msra.mxu0 %v2741
        %2801 = vmatprep.subr.mxu0 0.0
        %2802 = vmatpush1.msra.mxu0 %v2742
        %2803 = vmatprep.subr.mxu0 0.0
        %2804 = vmatpush1.msra.mxu0 %v2743
        %2805 = vmatprep.subr.mxu0 0.0
        %2806 = vmatpush1.msra.mxu0 %v2744
        %2807 = vmatprep.subr.mxu0 0.0
        %2808 = vmatpush1.msra.mxu0 %v2745
        %2809 = vmatprep.subr.mxu0 0.0
        %2810 = vmatpush1.msra.mxu0 %v2746
        %2811 = vmatprep.subr.mxu0 0.0
        %2812 = vmatpush1.msra.mxu0 %v2747
        %2813 = vmatprep.subr.mxu0 0.0
        %2814 = vmatpush1.msra.mxu0 %v2748
        %2815 = vmatprep.subr.mxu0 0.0
        %2816 = vmatpush1.msra.mxu0 %v2749
        %2817 = vmatprep.subr.mxu0 0.0
        %2818 = vmatpush1.msra.mxu0 %v2750
        %2819 = vmatprep.subr.mxu0 0.0
        %2820 = vmatpush1.msra.mxu0 %v2751
        %2821 = vmatprep.subr.mxu0 0.0
        %2822 = vmatpush1.msra.mxu0 %v2752
        %2823 = vmatprep.subr.mxu0 0.0
        %2824 = vmatpush1.msra.mxu0 %v2753
        %2825 = vmatprep.mubr.f32.mxu0 %v2721
        %2826 = vmatmul.mubr.f32.gmra.mrb[0].mxu0 %v2720
        %v2827 = vpop.f32.mrb[0].mxu0
        %v2828 = vadd.f32 %v2759, %v2827
        %v2829 = vpop.f32.mrb[0].mxu0
        %2830 = vdwg.mxu0
        %v2831 = vsel %vm2367, %v2828, -inf
        %2832 = vmax.xlane.f32.xlu0 %v2831
        %v2833 = vpop.xlane.xlu0 %2832
        %v2834 = vlaneseq
        %v2835 = vshrl.u32 %v2834, 7
        %v2836 = vsub.s32 0, %v2835
        %v2837 = vrot.slane %v1960, %v2836
        %v2838 = vmul.f32 %v2833, %v2837
        %v2839 = vadd.f32 %v2838, 0.0
        %vm2840 = vcmask 64544
        %v2841 = vsel %vm2840, %v2828, -inf
        %2842 = vmax.xlane.f32.xlu0 %v2841
        %v2843 = vpop.xlane.xlu0 %2842
        %v2844 = vlaneseq
        %v2845 = vshrl.u32 %v2844, 7
        %v2846 = vsub.s32 1, %v2845
        %v2847 = vrot.slane %v1960, %v2846
        %v2848 = vmul.f32 %v2843, %v2847
        %v2849 = vadd.f32 %v2839, %v2848
        %vm2850 = vcmask 97344
        %v2851 = vsel %vm2850, %v2828, -inf
        %2852 = vmax.xlane.f32.xlu0 %v2851
        %v2853 = vpop.xlane.xlu0 %2852
        %v2854 = vlaneseq
        %v2855 = vshrl.u32 %v2854, 7
        %v2856 = vsub.s32 2, %v2855
        %v2857 = vrot.slane %v1960, %v2856
        %v2858 = vmul.f32 %v2853, %v2857
        %v2859 = vadd.f32 %v2849, %v2858
        %vm2860 = vcmask 130144
        %v2861 = vsel %vm2860, %v2828, -inf
        %2862 = vmax.xlane.f32.xlu0 %v2861
        %v2863 = vpop.xlane.xlu0 %2862
        %v2864 = vlaneseq
        %v2865 = vshrl.u32 %v2864, 7
        %v2866 = vsub.s32 3, %v2865
        %v2867 = vrot.slane %v1960, %v2866
        %v2868 = vmul.f32 %v2863, %v2867
        %v2869 = vadd.f32 %v2859, %v2868
        %v2870 = vsub.f32 %v2828, %v2869
        %v2871 = vmul.f32 %v2870, 1.442695
        %v2872 = vpow.pop %v2871
        %v2874 = vsel %vm2631, %v2872, 0
        %2876 = vmatprep.subr.mxu0 0.0
        %2877 = vmatpush1.msra.mxu0 %v1968
        %2878 = vmatprep.subr.mxu0 0.0
        %2879 = vmatpush1.msra.mxu0 %v1969
        %2880 = vmatprep.subr.mxu0 0.0
        %2881 = vmatpush1.msra.mxu0 0.0
        %2882 = vmatprep.subr.mxu0 0.0
        %2883 = vmatpush1.msra.mxu0 0.0
        %2884 = vmatprep.subr.mxu0 0.0
        %2885 = vmatpush1.msra.mxu0 0.0
        %2886 = vmatprep.subr.mxu0 0.0
        %2887 = vmatpush1.msra.mxu0 0.0
        %2888 = vmatprep.subr.mxu0 0.0
        %2889 = vmatpush1.msra.mxu0 0.0
        %2890 = vmatprep.subr.mxu0 0.0
        %2891 = vmatpush1.msra.mxu0 0.0
        %2892 = vmatprep.subr.mxu0 0.0
        %2893 = vmatpush1.msra.mxu0 0.0
        %2894 = vmatprep.subr.mxu0 0.0
        %2895 = vmatpush1.msra.mxu0 0.0
        %2896 = vmatprep.subr.mxu0 0.0
        %2897 = vmatpush1.msra.mxu0 0.0
        %2898 = vmatprep.subr.mxu0 0.0
        %2899 = vmatpush1.msra.mxu0 0.0
        %2900 = vmatprep.subr.mxu0 0.0
        %2901 = vmatpush1.msra.mxu0 0.0
        %2902 = vmatprep.subr.mxu0 0.0
        %2903 = vmatpush1.msra.mxu0 0.0
        %2904 = vmatprep.subr.mxu0 0.0
        %2905 = vmatpush1.msra.mxu0 0.0
        %2906 = vmatprep.subr.mxu0 0.0
        %2907 = vmatpush1.msra.mxu0 0.0
        %2908 = vmatprep.subr.mxu0 0.0
        %2909 = vmatpush1.msra.mxu0 0.0
        %2910 = vmatprep.subr.mxu0 0.0
        %2911 = vmatpush1.msra.mxu0 0.0
        %2912 = vmatprep.subr.mxu0 0.0
        %2913 = vmatpush1.msra.mxu0 0.0
        %2914 = vmatprep.subr.mxu0 0.0
        %2915 = vmatpush1.msra.mxu0 0.0
        %2916 = vmatprep.subr.mxu0 0.0
        %2917 = vmatpush1.msra.mxu0 0.0
        %2918 = vmatprep.subr.mxu0 0.0
        %2919 = vmatpush1.msra.mxu0 0.0
        %2920 = vmatprep.subr.mxu0 0.0
        %2921 = vmatpush1.msra.mxu0 0.0
        %2922 = vmatprep.subr.mxu0 0.0
        %2923 = vmatpush1.msra.mxu0 0.0
        %2924 = vmatprep.subr.mxu0 0.0
        %2925 = vmatpush1.msra.mxu0 0.0
        %2926 = vmatprep.subr.mxu0 0.0
        %2927 = vmatpush1.msra.mxu0 0.0
        %2928 = vmatprep.subr.mxu0 0.0
        %2929 = vmatpush1.msra.mxu0 0.0
        %2930 = vmatprep.subr.mxu0 0.0
        %2931 = vmatpush1.msra.mxu0 0.0
        %2932 = vmatprep.subr.mxu0 0.0
        %2933 = vmatpush1.msra.mxu0 0.0
        %2934 = vmatprep.subr.mxu0 0.0
        %2935 = vmatpush1.msra.mxu0 0.0
        %2936 = vmatprep.subr.mxu0 0.0
        %2937 = vmatpush1.msra.mxu0 0.0
        %2938 = vmatprep.subr.mxu0 0.0
        %2939 = vmatpush1.msra.mxu0 0.0
        %2940 = vmatprep.mubr.f32.mxu0 0.0
        %2941 = vmatmul.mubr.f32.gmra.mrb[0].mxu0 %v2874
        %v2942 = vpop.f32.mrb[0].mxu0
        %v2943 = vadd.f32 0.0, %v2942
        %v2944 = vpop.f32.mrb[0].mxu0
        %2945 = vdwg.mxu0
        %v2946 = vrcp.pop %v2943
        %v2947 = vmul.f32 %v2872, %v2946
        %2949 = vrot.lane.b32.xlu0 %v2332, 96
        %v2950 = vpop.permute.xlu0 %2949
        %v2952 = vsel %vm2367, %v1966, 0
        %v2955 = vsel %vm2367, %v1967, 0
        %v2957 = vsel %vm2380, %v2950, 0
        %2959 = vmatprep.subr.mxu0 0.0
        %2960 = vmatpush1.msra.mxu0 %v2957
        %2961 = vmatprep.subr.mxu0 0.0
        %2962 = vmatpush1.msra.mxu0 0.0
        %2963 = vmatprep.subr.mxu0 0.0
        %2964 = vmatpush1.msra.mxu0 0.0
        %2965 = vmatprep.subr.mxu0 0.0
        %2966 = vmatpush1.msra.mxu0 0.0
        %2967 = vmatprep.subr.mxu0 0.0
        %2968 = vmatpush1.msra.mxu0 0.0
        %2969 = vmatprep.subr.mxu0 0.0
        %2970 = vmatpush1.msra.mxu0 0.0
        %2971 = vmatprep.subr.mxu0 0.0
        %2972 = vmatpush1.msra.mxu0 0.0
        %2973 = vmatprep.subr.mxu0 0.0
        %2974 = vmatpush1.msra.mxu0 0.0
        %2975 = vmatprep.subr.mxu0 0.0
        %2976 = vmatpush1.msra.mxu0 0.0
        %2977 = vmatprep.subr.mxu0 0.0
        %2978 = vmatpush1.msra.mxu0 0.0
        %2979 = vmatprep.subr.mxu0 0.0
        %2980 = vmatpush1.msra.mxu0 0.0
        %2981 = vmatprep.subr.mxu0 0.0
        %2982 = vmatpush1.msra.mxu0 0.0
        %2983 = vmatprep.subr.mxu0 0.0
        %2984 = vmatpush1.msra.mxu0 0.0
        %2985 = vmatprep.subr.mxu0 0.0
        %2986 = vmatpush1.msra.mxu0 0.0
        %2987 = vmatprep.subr.mxu0 0.0
        %2988 = vmatpush1.msra.mxu0 0.0
        %2989 = vmatprep.subr.mxu0 0.0
        %2990 = vmatpush1.msra.mxu0 0.0
        %2991 = vmatprep.subr.mxu0 0.0
        %2992 = vmatpush1.msra.mxu0 0.0
        %2993 = vmatprep.subr.mxu0 0.0
        %2994 = vmatpush1.msra.mxu0 0.0
        %2995 = vmatprep.subr.mxu0 0.0
        %2996 = vmatpush1.msra.mxu0 0.0
        %2997 = vmatprep.subr.mxu0 0.0
        %2998 = vmatpush1.msra.mxu0 0.0
        %2999 = vmatprep.subr.mxu0 0.0
        %3000 = vmatpush1.msra.mxu0 0.0
        %3001 = vmatprep.subr.mxu0 0.0
        %3002 = vmatpush1.msra.mxu0 0.0
        %3003 = vmatprep.subr.mxu0 0.0
        %3004 = vmatpush1.msra.mxu0 0.0
        %3005 = vmatprep.subr.mxu0 0.0
        %3006 = vmatpush1.msra.mxu0 0.0
        %3007 = vmatprep.subr.mxu0 0.0
        %3008 = vmatpush1.msra.mxu0 0.0
        %3009 = vmatprep.subr.mxu0 0.0
        %3010 = vmatpush1.msra.mxu0 0.0
        %3011 = vmatprep.subr.mxu0 0.0
        %3012 = vmatpush1.msra.mxu0 0.0
        %3013 = vmatprep.subr.mxu0 0.0
        %3014 = vmatpush1.msra.mxu0 0.0
        %3015 = vmatprep.subr.mxu0 0.0
        %3016 = vmatpush1.msra.mxu0 0.0
        %3017 = vmatprep.subr.mxu0 0.0
        %3018 = vmatpush1.msra.mxu0 0.0
        %3019 = vmatprep.subr.mxu0 0.0
        %3020 = vmatpush1.msra.mxu0 0.0
        %3021 = vmatprep.subr.mxu0 0.0
        %3022 = vmatpush1.msra.mxu0 0.0
        %3023 = vmatprep.mubr.f32.mxu0 0.0
        %3024 = vmatmul.mubr.f32.gmra.mrb[0].mxu0 %v2952
        %v3025 = vpop.f32.mrb[0].mxu0
        %v3026 = vadd.f32 0.0, %v3025
        %v3027 = vpop.f32.mrb[0].mxu0
        %3028 = vmatprep.mubr.f32.mxu0 0.0
        %3029 = vmatmul.mubr.f32.gmra.mrb[0].mxu0 %v2955
        %v3030 = vpop.f32.mrb[0].mxu0
        %v3031 = vadd.f32 0.0, %v3030
        %v3032 = vpop.f32.mrb[0].mxu0
        %3033 = vdwg.mxu0
        %v3034 = vmul.f32 %v3026, %v1970
        %v3035 = vmul.f32 %v3031, %v1971
        %v3037 = vsel %vm2631, %v2947, 0
        %3039 = vmatprep.subr.mxu0 0.0
        %3040 = vmatpush1.msra.mxu0 %v3034
        %3041 = vmatprep.subr.mxu0 0.0
        %3042 = vmatpush1.msra.mxu0 %v3035
        %3043 = vmatprep.subr.mxu0 0.0
        %3044 = vmatpush1.msra.mxu0 0.0
        %3045 = vmatprep.subr.mxu0 0.0
        %3046 = vmatpush1.msra.mxu0 0.0
        %3047 = vmatprep.subr.mxu0 0.0
        %3048 = vmatpush1.msra.mxu0 0.0
        %3049 = vmatprep.subr.mxu0 0.0
        %3050 = vmatpush1.msra.mxu0 0.0
        %3051 = vmatprep.subr.mxu0 0.0
        %3052 = vmatpush1.msra.mxu0 0.0
        %3053 = vmatprep.subr.mxu0 0.0
        %3054 = vmatpush1.msra.mxu0 0.0
        %3055 = vmatprep.subr.mxu0 0.0
        %3056 = vmatpush1.msra.mxu0 0.0
        %3057 = vmatprep.subr.mxu0 0.0
        %3058 = vmatpush1.msra.mxu0 0.0
        %3059 = vmatprep.subr.mxu0 0.0
        %3060 = vmatpush1.msra.mxu0 0.0
        %3061 = vmatprep.subr.mxu0 0.0
        %3062 = vmatpush1.msra.mxu0 0.0
        %3063 = vmatprep.subr.mxu0 0.0
        %3064 = vmatpush1.msra.mxu0 0.0
        %3065 = vmatprep.subr.mxu0 0.0
        %3066 = vmatpush1.msra.mxu0 0.0
        %3067 = vmatprep.subr.mxu0 0.0
        %3068 = vmatpush1.msra.mxu0 0.0
        %3069 = vmatprep.subr.mxu0 0.0
        %3070 = vmatpush1.msra.mxu0 0.0
        %3071 = vmatprep.subr.mxu0 0.0
        %3072 = vmatpush1.msra.mxu0 0.0
        %3073 = vmatprep.subr.mxu0 0.0
        %3074 = vmatpush1.msra.mxu0 0.0
        %3075 = vmatprep.subr.mxu0 0.0
        %3076 = vmatpush1.msra.mxu0 0.0
        %3077 = vmatprep.subr.mxu0 0.0
        %3078 = vmatpush1.msra.mxu0 0.0
        %3079 = vmatprep.subr.mxu0 0.0
        %3080 = vmatpush1.msra.mxu0 0.0
        %3081 = vmatprep.subr.mxu0 0.0
        %3082 = vmatpush1.msra.mxu0 0.0
        %3083 = vmatprep.subr.mxu0 0.0
        %3084 = vmatpush1.msra.mxu0 0.0
        %3085 = vmatprep.subr.mxu0 0.0
        %3086 = vmatpush1.msra.mxu0 0.0
        %3087 = vmatprep.subr.mxu0 0.0
        %3088 = vmatpush1.msra.mxu0 0.0
        %3089 = vmatprep.subr.mxu0 0.0
        %3090 = vmatpush1.msra.mxu0 0.0
        %3091 = vmatprep.subr.mxu0 0.0
        %3092 = vmatpush1.msra.mxu0 0.0
        %3093 = vmatprep.subr.mxu0 0.0
        %3094 = vmatpush1.msra.mxu0 0.0
        %3095 = vmatprep.subr.mxu0 0.0
        %3096 = vmatpush1.msra.mxu0 0.0
        %3097 = vmatprep.subr.mxu0 0.0
        %3098 = vmatpush1.msra.mxu0 0.0
        %3099 = vmatprep.subr.mxu0 0.0
        %3100 = vmatpush1.msra.mxu0 0.0
        %3101 = vmatprep.subr.mxu0 0.0
        %3102 = vmatpush1.msra.mxu0 0.0
        %3103 = vmatprep.mubr.f32.mxu0 0.0
        %3104 = vmatmul.mubr.f32.gmra.mrb[0].mxu0 %v3037
        %v3105 = vpop.f32.mrb[0].mxu0
        %v3106 = vadd.f32 0.0, %v3105
        %v3107 = vpop.f32.mrb[0].mxu0
        %3108 = vdwg.mxu0
        %v3109 = vld [vmem:[%s99] sm:$0xff]
        %v3110 = vld [vmem:[%s99 + $0x8] sm:$0xff]
        %v3111 = vld [vmem:[%s99 + $0x10] sm:$0xff]
        %v3112 = vld [vmem:[%s99 + $0x18] sm:$0xff]
        %v3113 = vld [vmem:[#allocation9] sm:$0x1]
        %v3115 = vlaneseq
        %v3116 = vshrl.u32 %v3115, 7
        %v3117 = vsub.s32 0, %v3116
        %v3118 = vrot.slane %v3113, %v3117
        %v3121 = vsel %vm2184, %v3106, 0
        %3123 = vmatprep.subr.mxu0 0.0
        %3124 = vmatpush1.msra.mxu0 %v3109
        %3125 = vmatprep.subr.mxu0 0.0
        %3126 = vmatpush1.msra.mxu0 %v3110
        %3127 = vmatprep.subr.mxu0 0.0
        %3128 = vmatpush1.msra.mxu0 %v3111
        %3129 = vmatprep.subr.mxu0 0.0
        %3130 = vmatpush1.msra.mxu0 %v3112
        %3131 = vmatprep.subr.mxu0 0.0
        %3132 = vmatpush1.msra.mxu0 0.0
        %3133 = vmatprep.subr.mxu0 0.0
        %3134 = vmatpush1.msra.mxu0 0.0
        %3135 = vmatprep.subr.mxu0 0.0
        %3136 = vmatpush1.msra.mxu0 0.0
        %3137 = vmatprep.subr.mxu0 0.0
        %3138 = vmatpush1.msra.mxu0 0.0
        %3139 = vmatprep.subr.mxu0 0.0
        %3140 = vmatpush1.msra.mxu0 0.0
        %3141 = vmatprep.subr.mxu0 0.0
        %3142 = vmatpush1.msra.mxu0 0.0
        %3143 = vmatprep.subr.mxu0 0.0
        %3144 = vmatpush1.msra.mxu0 0.0
        %3145 = vmatprep.subr.mxu0 0.0
        %3146 = vmatpush1.msra.mxu0 0.0
        %3147 = vmatprep.subr.mxu0 0.0
        %3148 = vmatpush1.msra.mxu0 0.0
        %3149 = vmatprep.subr.mxu0 0.0
        %3150 = vmatpush1.msra.mxu0 0.0
        %3151 = vmatprep.subr.mxu0 0.0
        %3152 = vmatpush1.msra.mxu0 0.0
        %3153 = vmatprep.subr.mxu0 0.0
        %3154 = vmatpush1.msra.mxu0 0.0
        %3155 = vmatprep.subr.mxu0 0.0
        %3156 = vmatpush1.msra.mxu0 0.0
        %3157 = vmatprep.subr.mxu0 0.0
        %3158 = vmatpush1.msra.mxu0 0.0
        %3159 = vmatprep.subr.mxu0 0.0
        %3160 = vmatpush1.msra.mxu0 0.0
        %3161 = vmatprep.subr.mxu0 0.0
        %3162 = vmatpush1.msra.mxu0 0.0
        %3163 = vmatprep.subr.mxu0 0.0
        %3164 = vmatpush1.msra.mxu0 0.0
        %3165 = vmatprep.subr.mxu0 0.0
        %3166 = vmatpush1.msra.mxu0 0.0
        %3167 = vmatprep.subr.mxu0 0.0
        %3168 = vmatpush1.msra.mxu0 0.0
        %3169 = vmatprep.subr.mxu0 0.0
        %3170 = vmatpush1.msra.mxu0 0.0
        %3171 = vmatprep.subr.mxu0 0.0
        %3172 = vmatpush1.msra.mxu0 0.0
        %3173 = vmatprep.subr.mxu0 0.0
        %3174 = vmatpush1.msra.mxu0 0.0
        %3175 = vmatprep.subr.mxu0 0.0
        %3176 = vmatpush1.msra.mxu0 0.0
        %3177 = vmatprep.subr.mxu0 0.0
        %3178 = vmatpush1.msra.mxu0 0.0
        %3179 = vmatprep.subr.mxu0 0.0
        %3180 = vmatpush1.msra.mxu0 0.0
        %3181 = vmatprep.subr.mxu0 0.0
        %3182 = vmatpush1.msra.mxu0 0.0
        %3183 = vmatprep.subr.mxu0 0.0
        %3184 = vmatpush1.msra.mxu0 0.0
        %3185 = vmatprep.subr.mxu0 0.0
        %3186 = vmatpush1.msra.mxu0 0.0
        %3187 = vmatprep.mubr.f32.mxu0 0.0
        %3188 = vmatmul.mubr.f32.gmra.mrb[0].mxu0 %v3121
        %v3189 = vpop.f32.mrb[0].mxu0
        %v3190 = vadd.f32 %v3118, %v3189
        %v3191 = vpop.f32.mrb[0].mxu0
        %3192 = vdwg.mxu0
        %v3193 = vld [vmem:[#allocation15] sm:$0x1]
        %v3194 = vld [vmem:[#allocation13] sm:$0x1]
        %v3195 = vadd.f32 %v2091, %v3190
        %v3196 = vsel %vm2184, %v3195, 0.0
        %v3197 = vrot.slane %v3196, 4
        %v3198 = vadd.f32 %v3196, %v3197
        %v3199 = vrot.slane %v3198, 2
        %v3200 = vadd.f32 %v3198, %v3199
        %v3201 = vrot.slane %v3200, 1
        %v3202 = vadd.f32 %v3200, %v3201
        %v3203 = vrcp.pop 8.0
        %v3204 = vmul.f32 %v3202, %v3203
        %v3205 = vsub.f32 %v3195, %v3204
        %v3206 = vmul.f32 %v3205, %v3205
        %v3207 = vsel %vm2184, %v3206, 0.0
        %v3208 = vrot.slane %v3207, 4
        %v3209 = vadd.f32 %v3207, %v3208
        %v3210 = vrot.slane %v3209, 2
        %v3211 = vadd.f32 %v3209, %v3210
        %v3212 = vrot.slane %v3211, 1
        %v3213 = vadd.f32 %v3211, %v3212
        %v3214 = vmul.f32 %v3213, %v3203
        %v3215 = vadd.f32 %v3214, 1e-05
        %v3216 = vrsqrt.pop %v3215
        %v3217 = vmul.f32 %v3205, %v3216
        %v3219 = vlaneseq
        %v3220 = vshrl.u32 %v3219, 7
        %v3221 = vsub.s32 0, %v3220
        %v3222 = vrot.slane %v3193, %v3221
        %v3224 = vmul.f32 %v3217, %v3222
        %v3226 = vlaneseq
        %v3227 = vshrl.u32 %v3226, 7
        %v3228 = vsub.s32 0, %v3227
        %v3229 = vrot.slane %v3194, %v3228
        %v3231 = vadd.f32 %v3224, %v3229
        %v3232 = vld [vmem:[%s103] sm:$0xff]
        %v3233 = vld [vmem:[%s103 + $0x8] sm:$0xff]
        %v3234 = vld [vmem:[%s103 + $0x10] sm:$0xff]
        %v3235 = vld [vmem:[%s103 + $0x18] sm:$0xff]
        %v3236 = vld [vmem:[#allocation10] sm:$0x1]
        %v3238 = vlaneseq
        %v3239 = vshrl.u32 %v3238, 7
        %v3240 = vsub.s32 0, %v3239
        %v3241 = vrot.slane %v3236, %v3240
        %v3244 = vsel %vm2184, %v3231, 0
        %3246 = vmatprep.subr.mxu0 0.0
        %3247 = vmatpush1.msra.mxu0 %v3232
        %3248 = vmatprep.subr.mxu0 0.0
        %3249 = vmatpush1.msra.mxu0 %v3233
        %3250 = vmatprep.subr.mxu0 0.0
        %3251 = vmatpush1.msra.mxu0 %v3234
        %3252 = vmatprep.subr.mxu0 0.0
        %3253 = vmatpush1.msra.mxu0 %v3235
        %3254 = vmatprep.subr.mxu0 0.0
        %3255 = vmatpush1.msra.mxu0 0.0
        %3256 = vmatprep.subr.mxu0 0.0
        %3257 = vmatpush1.msra.mxu0 0.0
        %3258 = vmatprep.subr.mxu0 0.0
        %3259 = vmatpush1.msra.mxu0 0.0
        %3260 = vmatprep.subr.mxu0 0.0
        %3261 = vmatpush1.msra.mxu0 0.0
        %3262 = vmatprep.subr.mxu0 0.0
        %3263 = vmatpush1.msra.mxu0 0.0
        %3264 = vmatprep.subr.mxu0 0.0
        %3265 = vmatpush1.msra.mxu0 0.0
        %3266 = vmatprep.subr.mxu0 0.0
        %3267 = vmatpush1.msra.mxu0 0.0
        %3268 = vmatprep.subr.mxu0 0.0
        %3269 = vmatpush1.msra.mxu0 0.0
        %3270 = vmatprep.subr.mxu0 0.0
        %3271 = vmatpush1.msra.mxu0 0.0
        %3272 = vmatprep.subr.mxu0 0.0
        %3273 = vmatpush1.msra.mxu0 0.0
        %3274 = vmatprep.subr.mxu0 0.0
        %3275 = vmatpush1.msra.mxu0 0.0
        %3276 = vmatprep.subr.mxu0 0.0
        %3277 = vmatpush1.msra.mxu0 0.0
        %3278 = vmatprep.subr.mxu0 0.0
        %3279 = vmatpush1.msra.mxu0 0.0
        %3280 = vmatprep.subr.mxu0 0.0
        %3281 = vmatpush1.msra.mxu0 0.0
        %3282 = vmatprep.subr.mxu0 0.0
        %3283 = vmatpush1.msra.mxu0 0.0
        %3284 = vmatprep.subr.mxu0 0.0
        %3285 = vmatpush1.msra.mxu0 0.0
        %3286 = vmatprep.subr.mxu0 0.0
        %3287 = vmatpush1.msra.mxu0 0.0
        %3288 = vmatprep.subr.mxu0 0.0
        %3289 = vmatpush1.msra.mxu0 0.0
        %3290 = vmatprep.subr.mxu0 0.0
        %3291 = vmatpush1.msra.mxu0 0.0
        %3292 = vmatprep.subr.mxu0 0.0
        %3293 = vmatpush1.msra.mxu0 0.0
        %3294 = vmatprep.subr.mxu0 0.0
        %3295 = vmatpush1.msra.mxu0 0.0
        %3296 = vmatprep.subr.mxu0 0.0
        %3297 = vmatpush1.msra.mxu0 0.0
        %3298 = vmatprep.subr.mxu0 0.0
        %3299 = vmatpush1.msra.mxu0 0.0
        %3300 = vmatprep.subr.mxu0 0.0
        %3301 = vmatpush1.msra.mxu0 0.0
        %3302 = vmatprep.subr.mxu0 0.0
        %3303 = vmatpush1.msra.mxu0 0.0
        %3304 = vmatprep.subr.mxu0 0.0
        %3305 = vmatpush1.msra.mxu0 0.0
        %3306 = vmatprep.subr.mxu0 0.0
        %3307 = vmatpush1.msra.mxu0 0.0
        %3308 = vmatprep.subr.mxu0 0.0
        %3309 = vmatpush1.msra.mxu0 0.0
        %3310 = vmatprep.mubr.f32.mxu0 0.0
        %3311 = vmatmul.mubr.f32.gmra.mrb[0].mxu0 %v3244
        %v3312 = vpop.f32.mrb[0].mxu0
        %v3313 = vadd.f32 %v3241, %v3312
        %v3314 = vpop.f32.mrb[0].mxu0
        %3315 = vdwg.mxu0
        %v3316 = vmax.f32 %v3313, 0.0
        %v3317 = vld [vmem:[%s105] sm:$0xff]
        %v3318 = vld [vmem:[%s105 + $0x8] sm:$0xff]
        %v3319 = vld [vmem:[%s105 + $0x10] sm:$0xff]
        %v3320 = vld [vmem:[%s105 + $0x18] sm:$0xff]
        %v3321 = vld [vmem:[%s105 + $0x20] sm:$0xff]
        %v3322 = vld [vmem:[%s105 + $0x28] sm:$0xff]
        %v3323 = vld [vmem:[%s105 + $0x30] sm:$0xff]
        %v3324 = vld [vmem:[%s105 + $0x38] sm:$0xff]
        %v3325 = vld [vmem:[#allocation12] sm:$0x1]
        %v3327 = vlaneseq
        %v3328 = vshrl.u32 %v3327, 7
        %v3329 = vsub.s32 0, %v3328
        %v3330 = vrot.slane %v3325, %v3329
        %vm3332 = vcmask 523264
        %v3334 = vsel %vm3332, %v3316, 0
        %3336 = vmatprep.subr.mxu0 0.0
        %3337 = vmatpush1.msra.mxu0 %v3317
        %3338 = vmatprep.subr.mxu0 0.0
        %3339 = vmatpush1.msra.mxu0 %v3318
        %3340 = vmatprep.subr.mxu0 0.0
        %3341 = vmatpush1.msra.mxu0 %v3319
        %3342 = vmatprep.subr.mxu0 0.0
        %3343 = vmatpush1.msra.mxu0 %v3320
        %3344 = vmatprep.subr.mxu0 0.0
        %3345 = vmatpush1.msra.mxu0 %v3321
        %3346 = vmatprep.subr.mxu0 0.0
        %3347 = vmatpush1.msra.mxu0 %v3322
        %3348 = vmatprep.subr.mxu0 0.0
        %3349 = vmatpush1.msra.mxu0 %v3323
        %3350 = vmatprep.subr.mxu0 0.0
        %3351 = vmatpush1.msra.mxu0 %v3324
        %3352 = vmatprep.subr.mxu0 0.0
        %3353 = vmatpush1.msra.mxu0 0.0
        %3354 = vmatprep.subr.mxu0 0.0
        %3355 = vmatpush1.msra.mxu0 0.0
        %3356 = vmatprep.subr.mxu0 0.0
        %3357 = vmatpush1.msra.mxu0 0.0
        %3358 = vmatprep.subr.mxu0 0.0
        %3359 = vmatpush1.msra.mxu0 0.0
        %3360 = vmatprep.subr.mxu0 0.0
        %3361 = vmatpush1.msra.mxu0 0.0
        %3362 = vmatprep.subr.mxu0 0.0
        %3363 = vmatpush1.msra.mxu0 0.0
        %3364 = vmatprep.subr.mxu0 0.0
        %3365 = vmatpush1.msra.mxu0 0.0
        %3366 = vmatprep.subr.mxu0 0.0
        %3367 = vmatpush1.msra.mxu0 0.0
        %3368 = vmatprep.subr.mxu0 0.0
        %3369 = vmatpush1.msra.mxu0 0.0
        %3370 = vmatprep.subr.mxu0 0.0
        %3371 = vmatpush1.msra.mxu0 0.0
        %3372 = vmatprep.subr.mxu0 0.0
        %3373 = vmatpush1.msra.mxu0 0.0
        %3374 = vmatprep.subr.mxu0 0.0
        %3375 = vmatpush1.msra.mxu0 0.0
        %3376 = vmatprep.subr.mxu0 0.0
        %3377 = vmatpush1.msra.mxu0 0.0
        %3378 = vmatprep.subr.mxu0 0.0
        %3379 = vmatpush1.msra.mxu0 0.0
        %3380 = vmatprep.subr.mxu0 0.0
        %3381 = vmatpush1.msra.mxu0 0.0
        %3382 = vmatprep.subr.mxu0 0.0
        %3383 = vmatpush1.msra.mxu0 0.0
        %3384 = vmatprep.subr.mxu0 0.0
        %3385 = vmatpush1.msra.mxu0 0.0
        %3386 = vmatprep.subr.mxu0 0.0
        %3387 = vmatpush1.msra.mxu0 0.0
        %3388 = vmatprep.subr.mxu0 0.0
        %3389 = vmatpush1.msra.mxu0 0.0
        %3390 = vmatprep.subr.mxu0 0.0
        %3391 = vmatpush1.msra.mxu0 0.0
        %3392 = vmatprep.subr.mxu0 0.0
        %3393 = vmatpush1.msra.mxu0 0.0
        %3394 = vmatprep.subr.mxu0 0.0
        %3395 = vmatpush1.msra.mxu0 0.0
        %3396 = vmatprep.subr.mxu0 0.0
        %3397 = vmatpush1.msra.mxu0 0.0
        %3398 = vmatprep.subr.mxu0 0.0
        %3399 = vmatpush1.msra.mxu0 0.0
        %3400 = vmatprep.mubr.f32.mxu0 0.0
        %3401 = vmatmul.mubr.f32.gmra.mrb[0].mxu0 %v3334
        %v3402 = vpop.f32.mrb[0].mxu0
        %v3403 = vadd.f32 %v3330, %v3402
        %v3404 = vpop.f32.mrb[0].mxu0
        %3405 = vdwg.mxu0
        %v3406 = vld [vmem:[#allocation18] sm:$0x1]
        %v3407 = vld [vmem:[#allocation16] sm:$0x1]
        %v3408 = vadd.f32 %v3231, %v3403
        %v3409 = vsel %vm2184, %v3408, 0.0
        %v3410 = vrot.slane %v3409, 4
        %v3411 = vadd.f32 %v3409, %v3410
        %v3412 = vrot.slane %v3411, 2
        %v3413 = vadd.f32 %v3411, %v3412
        %v3414 = vrot.slane %v3413, 1
        %v3415 = vadd.f32 %v3413, %v3414
        %v3416 = vmul.f32 %v3415, %v3203
        %v3417 = vsub.f32 %v3408, %v3416
        %v3418 = vmul.f32 %v3417, %v3417
        %v3419 = vsel %vm2184, %v3418, 0.0
        %v3420 = vrot.slane %v3419, 4
        %v3421 = vadd.f32 %v3419, %v3420
        %v3422 = vrot.slane %v3421, 2
        %v3423 = vadd.f32 %v3421, %v3422
        %v3424 = vrot.slane %v3423, 1
        %v3425 = vadd.f32 %v3423, %v3424
        %v3426 = vmul.f32 %v3425, %v3203
        %v3427 = vadd.f32 %v3426, 1e-05
        %v3428 = vrsqrt.pop %v3427
        %v3429 = vmul.f32 %v3417, %v3428
        %v3431 = vlaneseq
        %v3432 = vshrl.u32 %v3431, 7
        %v3433 = vsub.s32 0, %v3432
        %v3434 = vrot.slane %v3406, %v3433
        %v3436 = vmul.f32 %v3429, %v3434
        %v3438 = vlaneseq
        %v3439 = vshrl.u32 %v3438, 7
        %v3440 = vsub.s32 0, %v3439
        %v3441 = vrot.slane %v3407, %v3440
        %v3443 = vadd.f32 %v3436, %v3441
        %v3444 = vld [vmem:[%s51] sm:$0xff]
        %v3445 = vld [vmem:[%s51 + $0x8] sm:$0xff]
        %v3446 = vld [vmem:[%s51 + $0x10] sm:$0xff]
        %v3447 = vld [vmem:[%s51 + $0x18] sm:$0xff]
        %3448 = vmatprep.subr.mxu0 0.0
        %3449 = vmatpush1.msra.mxu0 %v3444
        %3450 = vmatprep.subr.mxu0 0.0
        %3451 = vmatpush1.msra.mxu0 %v3445
        %3452 = vmatprep.subr.mxu0 0.0
        %3453 = vmatpush1.msra.mxu0 %v3446
        %3454 = vmatprep.subr.mxu0 0.0
        %3455 = vmatpush1.msra.mxu0 %v3447
        %3456 = vmatprep.subr.mxu0 0.0
        %3457 = vmatpush1.msra.mxu0 0.0
        %3458 = vmatprep.subr.mxu0 0.0
        %3459 = vmatpush1.msra.mxu0 0.0
        %3460 = vmatprep.subr.mxu0 0.0
        %3461 = vmatpush1.msra.mxu0 0.0
        %3462 = vmatprep.subr.mxu0 0.0
        %3463 = vmatpush1.msra.mxu0 0.0
        %3464 = vmatprep.subr.mxu0 0.0
        %3465 = vmatpush1.msra.mxu0 0.0
        %3466 = vmatprep.subr.mxu0 0.0
        %3467 = vmatpush1.msra.mxu0 0.0
        %3468 = vmatprep.subr.mxu0 0.0
        %3469 = vmatpush1.msra.mxu0 0.0
        %3470 = vmatprep.subr.mxu0 0.0
        %3471 = vmatpush1.msra.mxu0 0.0
        %3472 = vmatprep.subr.mxu0 0.0
        %3473 = vmatpush1.msra.mxu0 0.0
        %3474 = vmatprep.subr.mxu0 0.0
        %3475 = vmatpush1.msra.mxu0 0.0
        %3476 = vmatprep.subr.mxu0 0.0
        %3477 = vmatpush1.msra.mxu0 0.0
        %3478 = vmatprep.subr.mxu0 0.0
        %3479 = vmatpush1.msra.mxu0 0.0
        %3480 = vmatprep.subr.mxu0 0.0
        %3481 = vmatpush1.msra.mxu0 0.0
        %3482 = vmatprep.subr.mxu0 0.0
        %3483 = vmatpush1.msra.mxu0 0.0
        %3484 = vmatprep.subr.mxu0 0.0
        %3485 = vmatpush1.msra.mxu0 0.0
        %3486 = vmatprep.subr.mxu0 0.0
        %3487 = vmatpush1.msra.mxu0 0.0
        %3488 = vmatprep.subr.mxu0 0.0
        %3489 = vmatpush1.msra.mxu0 0.0
        %3490 = vmatprep.subr.mxu0 0.0
        %3491 = vmatpush1.msra.mxu0 0.0
        %3492 = vmatprep.subr.mxu0 0.0
        %3493 = vmatpush1.msra.mxu0 0.0
        %3494 = vmatprep.subr.mxu0 0.0
        %3495 = vmatpush1.msra.mxu0 0.0
        %3496 = vmatprep.subr.mxu0 0.0
        %3497 = vmatpush1.msra.mxu0 0.0
        %3498 = vmatprep.subr.mxu0 0.0
        %3499 = vmatpush1.msra.mxu0 0.0
        %3500 = vmatprep.subr.mxu0 0.0
        %3501 = vmatpush1.msra.mxu0 0.0
        %3502 = vmatprep.subr.mxu0 0.0
        %3503 = vmatpush1.msra.mxu0 0.0
        %3504 = vmatprep.subr.mxu0 0.0
        %3505 = vmatpush1.msra.mxu0 0.0
        %3506 = vmatprep.subr.mxu0 0.0
        %3507 = vmatpush1.msra.mxu0 0.0
        %3508 = vmatprep.subr.mxu0 0.0
        %3509 = vmatpush1.msra.mxu0 0.0
        %3510 = vmatprep.subr.mxu0 0.0
        %3511 = vmatpush1.msra.mxu0 0.0
        %3512 = vmatprep.mubr.f32.mxu0 0.0
        %3513 = vmatmul.mubr.f32.gmra.mrb[0].mxu0 %v2263
        %v3514 = vpop.f32.mrb[0].mxu0
        %v3515 = vadd.f32 0.0, %v3514
        %v3516 = vpop.f32.mrb[0].mxu0
        %3517 = vdwg.mxu0
        %v3518 = vld [vmem:[%s49] sm:$0xff]
        %v3519 = vld [vmem:[%s49 + $0x8] sm:$0xff]
        %v3520 = vld [vmem:[%s49 + $0x10] sm:$0xff]
        %v3521 = vld [vmem:[%s49 + $0x18] sm:$0xff]
        %3522 = vmatprep.subr.mxu0 0.0
        %3523 = vmatpush1.msra.mxu0 %v3518
        %3524 = vmatprep.subr.mxu0 0.0
        %3525 = vmatpush1.msra.mxu0 %v3519
        %3526 = vmatprep.subr.mxu0 0.0
        %3527 = vmatpush1.msra.mxu0 %v3520
        %3528 = vmatprep.subr.mxu0 0.0
        %3529 = vmatpush1.msra.mxu0 %v3521
        %3530 = vmatprep.subr.mxu0 0.0
        %3531 = vmatpush1.msra.mxu0 0.0
        %3532 = vmatprep.subr.mxu0 0.0
        %3533 = vmatpush1.msra.mxu0 0.0
        %3534 = vmatprep.subr.mxu0 0.0
        %3535 = vmatpush1.msra.mxu0 0.0
        %3536 = vmatprep.subr.mxu0 0.0
        %3537 = vmatpush1.msra.mxu0 0.0
        %3538 = vmatprep.subr.mxu0 0.0
        %3539 = vmatpush1.msra.mxu0 0.0
        %3540 = vmatprep.subr.mxu0 0.0
        %3541 = vmatpush1.msra.mxu0 0.0
        %3542 = vmatprep.subr.mxu0 0.0
        %3543 = vmatpush1.msra.mxu0 0.0
        %3544 = vmatprep.subr.mxu0 0.0
        %3545 = vmatpush1.msra.mxu0 0.0
        %3546 = vmatprep.subr.mxu0 0.0
        %3547 = vmatpush1.msra.mxu0 0.0
        %3548 = vmatprep.subr.mxu0 0.0
        %3549 = vmatpush1.msra.mxu0 0.0
        %3550 = vmatprep.subr.mxu0 0.0
        %3551 = vmatpush1.msra.mxu0 0.0
        %3552 = vmatprep.subr.mxu0 0.0
        %3553 = vmatpush1.msra.mxu0 0.0
        %3554 = vmatprep.subr.mxu0 0.0
        %3555 = vmatpush1.msra.mxu0 0.0
        %3556 = vmatprep.subr.mxu0 0.0
        %3557 = vmatpush1.msra.mxu0 0.0
        %3558 = vmatprep.subr.mxu0 0.0
        %3559 = vmatpush1.msra.mxu0 0.0
        %3560 = vmatprep.subr.mxu0 0.0
        %3561 = vmatpush1.msra.mxu0 0.0
        %3562 = vmatprep.subr.mxu0 0.0
        %3563 = vmatpush1.msra.mxu0 0.0
        %3564 = vmatprep.subr.mxu0 0.0
        %3565 = vmatpush1.msra.mxu0 0.0
        %3566 = vmatprep.subr.mxu0 0.0
        %3567 = vmatpush1.msra.mxu0 0.0
        %3568 = vmatprep.subr.mxu0 0.0
        %3569 = vmatpush1.msra.mxu0 0.0
        %3570 = vmatprep.subr.mxu0 0.0
        %3571 = vmatpush1.msra.mxu0 0.0
        %3572 = vmatprep.subr.mxu0 0.0
        %3573 = vmatpush1.msra.mxu0 0.0
        %3574 = vmatprep.subr.mxu0 0.0
        %3575 = vmatpush1.msra.mxu0 0.0
        %3576 = vmatprep.subr.mxu0 0.0
        %3577 = vmatpush1.msra.mxu0 0.0
        %3578 = vmatprep.subr.mxu0 0.0
        %3579 = vmatpush1.msra.mxu0 0.0
        %3580 = vmatprep.subr.mxu0 0.0
        %3581 = vmatpush1.msra.mxu0 0.0
        %3582 = vmatprep.subr.mxu0 0.0
        %3583 = vmatpush1.msra.mxu0 0.0
        %3584 = vmatprep.subr.mxu0 0.0
        %3585 = vmatpush1.msra.mxu0 0.0
        %3586 = vmatprep.mubr.f32.mxu0 0.0
        %3587 = vmatmul.mubr.f32.gmra.mrb[0].mxu0 %v2186
        %v3588 = vpop.f32.mrb[0].mxu0
        %v3589 = vadd.f32 0.0, %v3588
        %v3590 = vpop.f32.mrb[0].mxu0
        %3591 = vdwg.mxu0
        %3592 = vxpose.xlu0.b32.start [1/16] %v3589, 128
        %3593 = vxpose.xlu0.b32.cont [2/16] 0.0, 128
        %3594 = vxpose.xlu0.b32.cont [3/16] 0.0, 128
        %3595 = vxpose.xlu0.b32.cont [4/16] 0.0, 128
        %3596 = vxpose.xlu0.b32.cont [5/16] 0.0, 128
        %3597 = vxpose.xlu0.b32.cont [6/16] 0.0, 128
        %3598 = vxpose.xlu0.b32.cont [7/16] 0.0, 128
        %3599 = vxpose.xlu0.b32.cont [8/16] 0.0, 128
        %3600 = vxpose.xlu0.b32.cont [9/16] 0.0, 128
        %3601 = vxpose.xlu0.b32.cont [10/16] 0.0, 128
        %3602 = vxpose.xlu0.b32.cont [11/16] 0.0, 128
        %3603 = vxpose.xlu0.b32.cont [12/16] 0.0, 128
        %3604 = vxpose.xlu0.b32.cont [13/16] 0.0, 128
        %3605 = vxpose.xlu0.b32.cont [14/16] 0.0, 128
        %3606 = vxpose.xlu0.b32.cont [15/16] 0.0, 128
        %3607 = vxpose.xlu0.b32.end [16/16] 0.0, 128
        %v3608 = vpop.trf.xlu0
        %v3609 = vpop.trf.xlu0
        %v3610 = vpop.trf.xlu0
        %v3611 = vpop.trf.xlu0
        %v3612 = vpop.trf.xlu0
        %v3613 = vpop.trf.xlu0
        %v3614 = vpop.trf.xlu0
        %v3615 = vpop.trf.xlu0
        %v3616 = vpop.trf.xlu0
        %v3617 = vpop.trf.xlu0
        %v3618 = vpop.trf.xlu0
        %v3619 = vpop.trf.xlu0
        %v3620 = vpop.trf.xlu0
        %v3621 = vpop.trf.xlu0
        %v3622 = vpop.trf.xlu0
        %v3623 = vpop.trf.xlu0
        %vm3624 = vcmask 64512
        %v3626 = vsel %vm3624, %v3608, 0
        %v3629 = vsel %vm3624, %v3609, 0
        %v3632 = vsel %vm3624, %v3610, 0
        %v3635 = vsel %vm3624, %v3611, 0
        %3637 = vmatprep.subr.mxu0 0.0
        %3638 = vmatpush1.msra.mxu0 %v1977
        %3639 = vmatprep.subr.mxu0 0.0
        %3640 = vmatpush1.msra.mxu0 0.0
        %3641 = vmatprep.subr.mxu0 0.0
        %3642 = vmatpush1.msra.mxu0 0.0
        %3643 = vmatprep.subr.mxu0 0.0
        %3644 = vmatpush1.msra.mxu0 0.0
        %3645 = vmatprep.subr.mxu0 0.0
        %3646 = vmatpush1.msra.mxu0 0.0
        %3647 = vmatprep.subr.mxu0 0.0
        %3648 = vmatpush1.msra.mxu0 0.0
        %3649 = vmatprep.subr.mxu0 0.0
        %3650 = vmatpush1.msra.mxu0 0.0
        %3651 = vmatprep.subr.mxu0 0.0
        %3652 = vmatpush1.msra.mxu0 0.0
        %3653 = vmatprep.subr.mxu0 0.0
        %3654 = vmatpush1.msra.mxu0 0.0
        %3655 = vmatprep.subr.mxu0 0.0
        %3656 = vmatpush1.msra.mxu0 0.0
        %3657 = vmatprep.subr.mxu0 0.0
        %3658 = vmatpush1.msra.mxu0 0.0
        %3659 = vmatprep.subr.mxu0 0.0
        %3660 = vmatpush1.msra.mxu0 0.0
        %3661 = vmatprep.subr.mxu0 0.0
        %3662 = vmatpush1.msra.mxu0 0.0
        %3663 = vmatprep.subr.mxu0 0.0
        %3664 = vmatpush1.msra.mxu0 0.0
        %3665 = vmatprep.subr.mxu0 0.0
        %3666 = vmatpush1.msra.mxu0 0.0
        %3667 = vmatprep.subr.mxu0 0.0
        %3668 = vmatpush1.msra.mxu0 0.0
        %3669 = vmatprep.subr.mxu0 0.0
        %3670 = vmatpush1.msra.mxu0 0.0
        %3671 = vmatprep.subr.mxu0 0.0
        %3672 = vmatpush1.msra.mxu0 0.0
        %3673 = vmatprep.subr.mxu0 0.0
        %3674 = vmatpush1.msra.mxu0 0.0
        %3675 = vmatprep.subr.mxu0 0.0
        %3676 = vmatpush1.msra.mxu0 0.0
        %3677 = vmatprep.subr.mxu0 0.0
        %3678 = vmatpush1.msra.mxu0 0.0
        %3679 = vmatprep.subr.mxu0 0.0
        %3680 = vmatpush1.msra.mxu0 0.0
        %3681 = vmatprep.subr.mxu0 0.0
        %3682 = vmatpush1.msra.mxu0 0.0
        %3683 = vmatprep.subr.mxu0 0.0
        %3684 = vmatpush1.msra.mxu0 0.0
        %3685 = vmatprep.subr.mxu0 0.0
        %3686 = vmatpush1.msra.mxu0 0.0
        %3687 = vmatprep.subr.mxu0 0.0
        %3688 = vmatpush1.msra.mxu0 0.0
        %3689 = vmatprep.subr.mxu0 0.0
        %3690 = vmatpush1.msra.mxu0 0.0
        %3691 = vmatprep.subr.mxu0 0.0
        %3692 = vmatpush1.msra.mxu0 0.0
        %3693 = vmatprep.subr.mxu0 0.0
        %3694 = vmatpush1.msra.mxu0 0.0
        %3695 = vmatprep.subr.mxu0 0.0
        %3696 = vmatpush1.msra.mxu0 0.0
        %3697 = vmatprep.subr.mxu0 0.0
        %3698 = vmatpush1.msra.mxu0 0.0
        %3699 = vmatprep.subr.mxu0 0.0
        %3700 = vmatpush1.msra.mxu0 0.0
        %3701 = vmatprep.mubr.f32.mxu0 0.0
        %3702 = vmatmul.mubr.f32.gmra.mrb[0].mxu0 %v3626
        %v3703 = vpop.f32.mrb[0].mxu0
        %v3704 = vadd.f32 0.0, %v3703
        %v3705 = vpop.f32.mrb[0].mxu0
        %3706 = vmatprep.mubr.f32.mxu0 0.0
        %3707 = vmatmul.mubr.f32.gmra.mrb[0].mxu0 %v3629
        %v3708 = vpop.f32.mrb[0].mxu0
        %v3709 = vadd.f32 0.0, %v3708
        %v3710 = vpop.f32.mrb[0].mxu0
        %3711 = vmatprep.mubr.f32.mxu0 0.0
        %3712 = vmatmul.mubr.f32.gmra.mrb[0].mxu0 %v3632
        %v3713 = vpop.f32.mrb[0].mxu0
        %v3714 = vadd.f32 0.0, %v3713
        %v3715 = vpop.f32.mrb[0].mxu0
        %3716 = vmatprep.mubr.f32.mxu0 0.0
        %3717 = vmatmul.mubr.f32.gmra.mrb[0].mxu0 %v3635
        %v3718 = vpop.f32.mrb[0].mxu0
        %v3719 = vadd.f32 0.0, %v3718
        %v3720 = vpop.f32.mrb[0].mxu0
        %3721 = vdwg.mxu0
        %v3722 = vmul.f32 %v3704, %v1973
        %v3723 = vmul.f32 %v3709, %v1974
        %v3724 = vmul.f32 %v3714, %v1975
        %v3725 = vmul.f32 %v3719, %v1976
        %v3727 = vsel %vm2184, %v3515, 0
        %3729 = vmatprep.subr.mxu0 0.0
        %3730 = vmatpush1.msra.mxu0 %v3722
        %3731 = vmatprep.subr.mxu0 0.0
        %3732 = vmatpush1.msra.mxu0 %v3723
        %3733 = vmatprep.subr.mxu0 0.0
        %3734 = vmatpush1.msra.mxu0 %v3724
        %3735 = vmatprep.subr.mxu0 0.0
        %3736 = vmatpush1.msra.mxu0 %v3725
        %3737 = vmatprep.subr.mxu0 0.0
        %3738 = vmatpush1.msra.mxu0 0.0
        %3739 = vmatprep.subr.mxu0 0.0
        %3740 = vmatpush1.msra.mxu0 0.0
        %3741 = vmatprep.subr.mxu0 0.0
        %3742 = vmatpush1.msra.mxu0 0.0
        %3743 = vmatprep.subr.mxu0 0.0
        %3744 = vmatpush1.msra.mxu0 0.0
        %3745 = vmatprep.subr.mxu0 0.0
        %3746 = vmatpush1.msra.mxu0 0.0
        %3747 = vmatprep.subr.mxu0 0.0
        %3748 = vmatpush1.msra.mxu0 0.0
        %3749 = vmatprep.subr.mxu0 0.0
        %3750 = vmatpush1.msra.mxu0 0.0
        %3751 = vmatprep.subr.mxu0 0.0
        %3752 = vmatpush1.msra.mxu0 0.0
        %3753 = vmatprep.subr.mxu0 0.0
        %3754 = vmatpush1.msra.mxu0 0.0
        %3755 = vmatprep.subr.mxu0 0.0
        %3756 = vmatpush1.msra.mxu0 0.0
        %3757 = vmatprep.subr.mxu0 0.0
        %3758 = vmatpush1.msra.mxu0 0.0
        %3759 = vmatprep.subr.mxu0 0.0
        %3760 = vmatpush1.msra.mxu0 0.0
        %3761 = vmatprep.subr.mxu0 0.0
        %3762 = vmatpush1.msra.mxu0 0.0
        %3763 = vmatprep.subr.mxu0 0.0
        %3764 = vmatpush1.msra.mxu0 0.0
        %3765 = vmatprep.subr.mxu0 0.0
        %3766 = vmatpush1.msra.mxu0 0.0
        %3767 = vmatprep.subr.mxu0 0.0
        %3768 = vmatpush1.msra.mxu0 0.0
        %3769 = vmatprep.subr.mxu0 0.0
        %3770 = vmatpush1.msra.mxu0 0.0
        %3771 = vmatprep.subr.mxu0 0.0
        %3772 = vmatpush1.msra.mxu0 0.0
        %3773 = vmatprep.subr.mxu0 0.0
        %3774 = vmatpush1.msra.mxu0 0.0
        %3775 = vmatprep.subr.mxu0 0.0
        %3776 = vmatpush1.msra.mxu0 0.0
        %3777 = vmatprep.subr.mxu0 0.0
        %3778 = vmatpush1.msra.mxu0 0.0
        %3779 = vmatprep.subr.mxu0 0.0
        %3780 = vmatpush1.msra.mxu0 0.0
        %3781 = vmatprep.subr.mxu0 0.0
        %3782 = vmatpush1.msra.mxu0 0.0
        %3783 = vmatprep.subr.mxu0 0.0
        %3784 = vmatpush1.msra.mxu0 0.0
        %3785 = vmatprep.subr.mxu0 0.0
        %3786 = vmatpush1.msra.mxu0 0.0
        %3787 = vmatprep.subr.mxu0 0.0
        %3788 = vmatpush1.msra.mxu0 0.0
        %3789 = vmatprep.subr.mxu0 0.0
        %3790 = vmatpush1.msra.mxu0 0.0
        %3791 = vmatprep.subr.mxu0 0.0
        %3792 = vmatpush1.msra.mxu0 0.0
        %3793 = vmatprep.mubr.f32.mxu0 0.0
        %3794 = vmatmul.mubr.f32.gmra.mrb[0].mxu0 %v3727
        %v3795 = vpop.f32.mrb[0].mxu0
        %v3796 = vadd.f32 0.0, %v3795
        %v3797 = vpop.f32.mrb[0].mxu0
        %3798 = vdwg.mxu0
        %v3799 = vld [vmem:[%s47] sm:$0xff]
        %v3800 = vld [vmem:[%s47 + $0x8] sm:$0xff]
        %v3801 = vld [vmem:[%s47 + $0x10] sm:$0xff]
        %v3802 = vld [vmem:[%s47 + $0x18] sm:$0xff]
        %v3803 = vld [vmem:[%s47 + $0x20] sm:$0xff]
        %v3804 = vld [vmem:[%s47 + $0x28] sm:$0xff]
        %v3805 = vld [vmem:[%s47 + $0x30] sm:$0xff]
        %v3806 = vld [vmem:[%s47 + $0x38] sm:$0xff]
        %v3807 = vld [vmem:[%s47 + $0x40] sm:$0xff]
        %v3808 = vld [vmem:[%s47 + $0x48] sm:$0xff]
        %v3809 = vld [vmem:[%s47 + $0x50] sm:$0xff]
        %v3810 = vld [vmem:[%s47 + $0x58] sm:$0xff]
        %v3811 = vld [vmem:[%s47 + $0x60] sm:$0xff]
        %v3812 = vld [vmem:[%s47 + $0x68] sm:$0xff]
        %v3813 = vld [vmem:[%s47 + $0x70] sm:$0xff]
        %v3814 = vld [vmem:[%s47 + $0x78] sm:$0xff]
        %v3815 = vld [vmem:[%s45] sm:$0xff]
        %v3816 = vld [vmem:[%s45 + $0x8] sm:$0xff]
        %v3817 = vld [vmem:[%s45 + $0x10] sm:$0xff]
        %v3818 = vld [vmem:[%s45 + $0x18] sm:$0xff]
        %v3820 = vsel %vm3624, %v2006, 0
        %3822 = vmatprep.subr.mxu0 %v3816
        %3823 = vmatpush1.msra.mxu0 %v3815
        %3824 = vmatprep.subr.mxu0 0.0
        %3825 = vmatpush1.msra.mxu0 0.0
        %3826 = vmatprep.subr.mxu0 0.0
        %3827 = vmatpush1.msra.mxu0 0.0
        %3828 = vmatprep.subr.mxu0 0.0
        %3829 = vmatpush1.msra.mxu0 0.0
        %3830 = vmatprep.subr.mxu0 0.0
        %3831 = vmatpush1.msra.mxu0 0.0
        %3832 = vmatprep.subr.mxu0 0.0
        %3833 = vmatpush1.msra.mxu0 0.0
        %3834 = vmatprep.subr.mxu0 0.0
        %3835 = vmatpush1.msra.mxu0 0.0
        %3836 = vmatprep.subr.mxu0 0.0
        %3837 = vmatpush1.msra.mxu0 0.0
        %3838 = vmatprep.subr.mxu0 0.0
        %3839 = vmatpush1.msra.mxu0 0.0
        %3840 = vmatprep.subr.mxu0 0.0
        %3841 = vmatpush1.msra.mxu0 0.0
        %3842 = vmatprep.subr.mxu0 0.0
        %3843 = vmatpush1.msra.mxu0 0.0
        %3844 = vmatprep.subr.mxu0 0.0
        %3845 = vmatpush1.msra.mxu0 0.0
        %3846 = vmatprep.subr.mxu0 0.0
        %3847 = vmatpush1.msra.mxu0 0.0
        %3848 = vmatprep.subr.mxu0 0.0
        %3849 = vmatpush1.msra.mxu0 0.0
        %3850 = vmatprep.subr.mxu0 0.0
        %3851 = vmatpush1.msra.mxu0 0.0
        %3852 = vmatprep.subr.mxu0 0.0
        %3853 = vmatpush1.msra.mxu0 0.0
        %3854 = vmatprep.subr.mxu0 0.0
        %3855 = vmatpush1.msra.mxu0 0.0
        %3856 = vmatprep.subr.mxu0 0.0
        %3857 = vmatpush1.msra.mxu0 0.0
        %3858 = vmatprep.subr.mxu0 0.0
        %3859 = vmatpush1.msra.mxu0 0.0
        %3860 = vmatprep.subr.mxu0 0.0
        %3861 = vmatpush1.msra.mxu0 0.0
        %3862 = vmatprep.subr.mxu0 0.0
        %3863 = vmatpush1.msra.mxu0 0.0
        %3864 = vmatprep.subr.mxu0 0.0
        %3865 = vmatpush1.msra.mxu0 0.0
        %3866 = vmatprep.subr.mxu0 0.0
        %3867 = vmatpush1.msra.mxu0 0.0
        %3868 = vmatprep.subr.mxu0 0.0
        %3869 = vmatpush1.msra.mxu0 0.0
        %3870 = vmatprep.subr.mxu0 0.0
        %3871 = vmatpush1.msra.mxu0 0.0
        %3872 = vmatprep.subr.mxu0 0.0
        %3873 = vmatpush1.msra.mxu0 0.0
        %3874 = vmatprep.subr.mxu0 0.0
        %3875 = vmatpush1.msra.mxu0 0.0
        %3876 = vmatprep.subr.mxu0 0.0
        %3877 = vmatpush1.msra.mxu0 0.0
        %3878 = vmatprep.subr.mxu0 0.0
        %3879 = vmatpush1.msra.mxu0 0.0
        %3880 = vmatprep.subr.mxu0 0.0
        %3881 = vmatpush1.msra.mxu0 0.0
        %3882 = vmatprep.subr.mxu0 0.0
        %3883 = vmatpush1.msra.mxu0 0.0
        %3884 = vmatprep.subr.mxu0 0.0
        %3885 = vmatpush1.msra.mxu0 0.0
        %3886 = vmatprep.mubr.f32.mxu0 0.0
        %3887 = vmatmul.mubr.f32.gmra.mrb[0].mxu0 %v3820
        %v3888 = vpop.f32.mrb[0].mxu0
        %v3889 = vadd.f32 0.0, %v3888
        %v3890 = vpop.f32.mrb[0].mxu0
        %v3891 = vadd.f32 0.0, %v3890
        %3892 = vdwg.mxu0
        %3893 = vmatprep.subr.mxu0 %v3818
        %3894 = vmatpush1.msra.mxu0 %v3817
        %3895 = vmatprep.subr.mxu0 0.0
        %3896 = vmatpush1.msra.mxu0 0.0
        %3897 = vmatprep.subr.mxu0 0.0
        %3898 = vmatpush1.msra.mxu0 0.0
        %3899 = vmatprep.subr.mxu0 0.0
        %3900 = vmatpush1.msra.mxu0 0.0
        %3901 = vmatprep.subr.mxu0 0.0
        %3902 = vmatpush1.msra.mxu0 0.0
        %3903 = vmatprep.subr.mxu0 0.0
        %3904 = vmatpush1.msra.mxu0 0.0
        %3905 = vmatprep.subr.mxu0 0.0
        %3906 = vmatpush1.msra.mxu0 0.0
        %3907 = vmatprep.subr.mxu0 0.0
        %3908 = vmatpush1.msra.mxu0 0.0
        %3909 = vmatprep.subr.mxu0 0.0
        %3910 = vmatpush1.msra.mxu0 0.0
        %3911 = vmatprep.subr.mxu0 0.0
        %3912 = vmatpush1.msra.mxu0 0.0
        %3913 = vmatprep.subr.mxu0 0.0
        %3914 = vmatpush1.msra.mxu0 0.0
        %3915 = vmatprep.subr.mxu0 0.0
        %3916 = vmatpush1.msra.mxu0 0.0
        %3917 = vmatprep.subr.mxu0 0.0
        %3918 = vmatpush1.msra.mxu0 0.0
        %3919 = vmatprep.subr.mxu0 0.0
        %3920 = vmatpush1.msra.mxu0 0.0
        %3921 = vmatprep.subr.mxu0 0.0
        %3922 = vmatpush1.msra.mxu0 0.0
        %3923 = vmatprep.subr.mxu0 0.0
        %3924 = vmatpush1.msra.mxu0 0.0
        %3925 = vmatprep.subr.mxu0 0.0
        %3926 = vmatpush1.msra.mxu0 0.0
        %3927 = vmatprep.subr.mxu0 0.0
        %3928 = vmatpush1.msra.mxu0 0.0
        %3929 = vmatprep.subr.mxu0 0.0
        %3930 = vmatpush1.msra.mxu0 0.0
        %3931 = vmatprep.subr.mxu0 0.0
        %3932 = vmatpush1.msra.mxu0 0.0
        %3933 = vmatprep.subr.mxu0 0.0
        %3934 = vmatpush1.msra.mxu0 0.0
        %3935 = vmatprep.subr.mxu0 0.0
        %3936 = vmatpush1.msra.mxu0 0.0
        %3937 = vmatprep.subr.mxu0 0.0
        %3938 = vmatpush1.msra.mxu0 0.0
        %3939 = vmatprep.subr.mxu0 0.0
        %3940 = vmatpush1.msra.mxu0 0.0
        %3941 = vmatprep.subr.mxu0 0.0
        %3942 = vmatpush1.msra.mxu0 0.0
        %3943 = vmatprep.subr.mxu0 0.0
        %3944 = vmatpush1.msra.mxu0 0.0
        %3945 = vmatprep.subr.mxu0 0.0
        %3946 = vmatpush1.msra.mxu0 0.0
        %3947 = vmatprep.subr.mxu0 0.0
        %3948 = vmatpush1.msra.mxu0 0.0
        %3949 = vmatprep.subr.mxu0 0.0
        %3950 = vmatpush1.msra.mxu0 0.0
        %3951 = vmatprep.subr.mxu0 0.0
        %3952 = vmatpush1.msra.mxu0 0.0
        %3953 = vmatprep.subr.mxu0 0.0
        %3954 = vmatpush1.msra.mxu0 0.0
        %3955 = vmatprep.subr.mxu0 0.0
        %3956 = vmatpush1.msra.mxu0 0.0
        %3957 = vmatprep.mubr.f32.mxu0 0.0
        %3958 = vmatmul.mubr.f32.gmra.mrb[0].mxu0 %v3820
        %v3959 = vpop.f32.mrb[0].mxu0
        %v3960 = vadd.f32 0.0, %v3959
        %v3961 = vpop.f32.mrb[0].mxu0
        %v3962 = vadd.f32 0.0, %v3961
        %3963 = vdwg.mxu0
        %v3965 = vsel %vm2184, %v3796, 0
        %3967 = vmatprep.subr.mxu0 %v3800
        %3968 = vmatpush1.msra.mxu0 %v3799
        %3969 = vmatprep.subr.mxu0 %v3804
        %3970 = vmatpush1.msra.mxu0 %v3803
        %3971 = vmatprep.subr.mxu0 %v3808
        %3972 = vmatpush1.msra.mxu0 %v3807
        %3973 = vmatprep.subr.mxu0 %v3812
        %3974 = vmatpush1.msra.mxu0 %v3811
        %3975 = vmatprep.subr.mxu0 0.0
        %3976 = vmatpush1.msra.mxu0 0.0
        %3977 = vmatprep.subr.mxu0 0.0
        %3978 = vmatpush1.msra.mxu0 0.0
        %3979 = vmatprep.subr.mxu0 0.0
        %3980 = vmatpush1.msra.mxu0 0.0
        %3981 = vmatprep.subr.mxu0 0.0
        %3982 = vmatpush1.msra.mxu0 0.0
        %3983 = vmatprep.subr.mxu0 0.0
        %3984 = vmatpush1.msra.mxu0 0.0
        %3985 = vmatprep.subr.mxu0 0.0
        %3986 = vmatpush1.msra.mxu0 0.0
        %3987 = vmatprep.subr.mxu0 0.0
        %3988 = vmatpush1.msra.mxu0 0.0
        %3989 = vmatprep.subr.mxu0 0.0
        %3990 = vmatpush1.msra.mxu0 0.0
        %3991 = vmatprep.subr.mxu0 0.0
        %3992 = vmatpush1.msra.mxu0 0.0
        %3993 = vmatprep.subr.mxu0 0.0
        %3994 = vmatpush1.msra.mxu0 0.0
        %3995 = vmatprep.subr.mxu0 0.0
        %3996 = vmatpush1.msra.mxu0 0.0
        %3997 = vmatprep.subr.mxu0 0.0
        %3998 = vmatpush1.msra.mxu0 0.0
        %3999 = vmatprep.subr.mxu0 0.0
        %4000 = vmatpush1.msra.mxu0 0.0
        %4001 = vmatprep.subr.mxu0 0.0
        %4002 = vmatpush1.msra.mxu0 0.0
        %4003 = vmatprep.subr.mxu0 0.0
        %4004 = vmatpush1.msra.mxu0 0.0
        %4005 = vmatprep.subr.mxu0 0.0
        %4006 = vmatpush1.msra.mxu0 0.0
        %4007 = vmatprep.subr.mxu0 0.0
        %4008 = vmatpush1.msra.mxu0 0.0
        %4009 = vmatprep.subr.mxu0 0.0
        %4010 = vmatpush1.msra.mxu0 0.0
        %4011 = vmatprep.subr.mxu0 0.0
        %4012 = vmatpush1.msra.mxu0 0.0
        %4013 = vmatprep.subr.mxu0 0.0
        %4014 = vmatpush1.msra.mxu0 0.0
        %4015 = vmatprep.subr.mxu0 0.0
        %4016 = vmatpush1.msra.mxu0 0.0
        %4017 = vmatprep.subr.mxu0 0.0
        %4018 = vmatpush1.msra.mxu0 0.0
        %4019 = vmatprep.subr.mxu0 0.0
        %4020 = vmatpush1.msra.mxu0 0.0
        %4021 = vmatprep.subr.mxu0 0.0
        %4022 = vmatpush1.msra.mxu0 0.0
        %4023 = vmatprep.subr.mxu0 0.0
        %4024 = vmatpush1.msra.mxu0 0.0
        %4025 = vmatprep.subr.mxu0 0.0
        %4026 = vmatpush1.msra.mxu0 0.0
        %4027 = vmatprep.subr.mxu0 0.0
        %4028 = vmatpush1.msra.mxu0 0.0
        %4029 = vmatprep.subr.mxu0 0.0
        %4030 = vmatpush1.msra.mxu0 0.0
        %4031 = vmatprep.mubr.f32.mxu0 0.0
        %4032 = vmatmul.mubr.f32.gmra.mrb[0].mxu0 %v3965
        %v4033 = vpop.f32.mrb[0].mxu0
        %v4034 = vadd.f32 %v3889, %v4033
        %v4035 = vpop.f32.mrb[0].mxu0
        %v4036 = vadd.f32 %v3891, %v4035
        %4037 = vdwg.mxu0
        %4038 = vmatprep.subr.mxu0 %v3802
        %4039 = vmatpush1.msra.mxu0 %v3801
        %4040 = vmatprep.subr.mxu0 %v3806
        %4041 = vmatpush1.msra.mxu0 %v3805
        %4042 = vmatprep.subr.mxu0 %v3810
        %4043 = vmatpush1.msra.mxu0 %v3809
        %4044 = vmatprep.subr.mxu0 %v3814
        %4045 = vmatpush1.msra.mxu0 %v3813
        %4046 = vmatprep.subr.mxu0 0.0
        %4047 = vmatpush1.msra.mxu0 0.0
        %4048 = vmatprep.subr.mxu0 0.0
        %4049 = vmatpush1.msra.mxu0 0.0
        %4050 = vmatprep.subr.mxu0 0.0
        %4051 = vmatpush1.msra.mxu0 0.0
        %4052 = vmatprep.subr.mxu0 0.0
        %4053 = vmatpush1.msra.mxu0 0.0
        %4054 = vmatprep.subr.mxu0 0.0
        %4055 = vmatpush1.msra.mxu0 0.0
        %4056 = vmatprep.subr.mxu0 0.0
        %4057 = vmatpush1.msra.mxu0 0.0
        %4058 = vmatprep.subr.mxu0 0.0
        %4059 = vmatpush1.msra.mxu0 0.0
        %4060 = vmatprep.subr.mxu0 0.0
        %4061 = vmatpush1.msra.mxu0 0.0
        %4062 = vmatprep.subr.mxu0 0.0
        %4063 = vmatpush1.msra.mxu0 0.0
        %4064 = vmatprep.subr.mxu0 0.0
        %4065 = vmatpush1.msra.mxu0 0.0
        %4066 = vmatprep.subr.mxu0 0.0
        %4067 = vmatpush1.msra.mxu0 0.0
        %4068 = vmatprep.subr.mxu0 0.0
        %4069 = vmatpush1.msra.mxu0 0.0
        %4070 = vmatprep.subr.mxu0 0.0
        %4071 = vmatpush1.msra.mxu0 0.0
        %4072 = vmatprep.subr.mxu0 0.0
        %4073 = vmatpush1.msra.mxu0 0.0
        %4074 = vmatprep.subr.mxu0 0.0
        %4075 = vmatpush1.msra.mxu0 0.0
        %4076 = vmatprep.subr.mxu0 0.0
        %4077 = vmatpush1.msra.mxu0 0.0
        %4078 = vmatprep.subr.mxu0 0.0
        %4079 = vmatpush1.msra.mxu0 0.0
        %4080 = vmatprep.subr.mxu0 0.0
        %4081 = vmatpush1.msra.mxu0 0.0
        %4082 = vmatprep.subr.mxu0 0.0
        %4083 = vmatpush1.msra.mxu0 0.0
        %4084 = vmatprep.subr.mxu0 0.0
        %4085 = vmatpush1.msra.mxu0 0.0
        %4086 = vmatprep.subr.mxu0 0.0
        %4087 = vmatpush1.msra.mxu0 0.0
        %4088 = vmatprep.subr.mxu0 0.0
        %4089 = vmatpush1.msra.mxu0 0.0
        %4090 = vmatprep.subr.mxu0 0.0
        %4091 = vmatpush1.msra.mxu0 0.0
        %4092 = vmatprep.subr.mxu0 0.0
        %4093 = vmatpush1.msra.mxu0 0.0
        %4094 = vmatprep.subr.mxu0 0.0
        %4095 = vmatpush1.msra.mxu0 0.0
        %4096 = vmatprep.subr.mxu0 0.0
        %4097 = vmatpush1.msra.mxu0 0.0
        %4098 = vmatprep.subr.mxu0 0.0
        %4099 = vmatpush1.msra.mxu0 0.0
        %4100 = vmatprep.subr.mxu0 0.0
        %4101 = vmatpush1.msra.mxu0 0.0
        %4102 = vmatprep.mubr.f32.mxu0 0.0
        %4103 = vmatmul.mubr.f32.gmra.mrb[0].mxu0 %v3965
        %v4104 = vpop.f32.mrb[0].mxu0
        %v4105 = vadd.f32 %v3960, %v4104
        %v4106 = vpop.f32.mrb[0].mxu0
        %v4107 = vadd.f32 %v3962, %v4106
        %4108 = vdwg.mxu0
        %v4109 = vld [vmem:[%s53] sm:$0xf]
        %v4111 = vlaneseq
        %v4112 = vshrl.u32 %v4111, 7
        %v4113 = vsub.s32 0, %v4112
        %v4114 = vrot.slane %v4109, %v4113
        %v4115 = vlaneseq
        %v4116 = vshrl.u32 %v4115, 7
        %v4117 = vsub.s32 1, %v4116
        %v4118 = vrot.slane %v4109, %v4117
        %v4119 = vlaneseq
        %v4120 = vshrl.u32 %v4119, 7
        %v4121 = vsub.s32 2, %v4120
        %v4122 = vrot.slane %v4109, %v4121
        %v4123 = vlaneseq
        %v4124 = vshrl.u32 %v4123, 7
        %v4125 = vsub.s32 3, %v4124
        %v4126 = vrot.slane %v4109, %v4125
        %v4131 = vadd.f32 %v4034, %v4114
        %v4132 = vadd.f32 %v4036, %v4118
        %v4133 = vadd.f32 %v4105, %v4122
        %v4134 = vadd.f32 %v4107, %v4126
        %v4135 = vmax.f32 %v4131, 0.0
        %v4136 = vmax.f32 %v4132, 0.0
        %v4137 = vmax.f32 %v4133, 0.0
        %v4138 = vmax.f32 %v4134, 0.0
        %v4139 = vld [vmem:[%s43] sm:$0xff]
        %v4140 = vld [vmem:[%s43 + $0x8] sm:$0xff]
        %v4141 = vld [vmem:[%s43 + $0x10] sm:$0xff]
        %v4142 = vld [vmem:[%s43 + $0x18] sm:$0xff]
        %v4143 = vld [vmem:[%s43 + $0x20] sm:$0xff]
        %v4144 = vld [vmem:[%s43 + $0x28] sm:$0xff]
        %v4145 = vld [vmem:[%s43 + $0x30] sm:$0xff]
        %v4146 = vld [vmem:[%s43 + $0x38] sm:$0xff]
        %v4147 = vld [vmem:[%s43 + $0x40] sm:$0xff]
        %v4148 = vld [vmem:[%s43 + $0x48] sm:$0xff]
        %v4149 = vld [vmem:[%s43 + $0x50] sm:$0xff]
        %v4150 = vld [vmem:[%s43 + $0x58] sm:$0xff]
        %v4151 = vld [vmem:[%s43 + $0x60] sm:$0xff]
        %v4152 = vld [vmem:[%s43 + $0x68] sm:$0xff]
        %v4153 = vld [vmem:[%s43 + $0x70] sm:$0xff]
        %v4154 = vld [vmem:[%s43 + $0x78] sm:$0xff]
        %v4155 = vld [vmem:[%s43 + $0x80] sm:$0xff]
        %v4156 = vld [vmem:[%s43 + $0x88] sm:$0xff]
        %v4157 = vld [vmem:[%s43 + $0x90] sm:$0xff]
        %v4158 = vld [vmem:[%s43 + $0x98] sm:$0xff]
        %v4159 = vld [vmem:[%s43 + $0xa0] sm:$0xff]
        %v4160 = vld [vmem:[%s43 + $0xa8] sm:$0xff]
        %v4161 = vld [vmem:[%s43 + $0xb0] sm:$0xff]
        %v4162 = vld [vmem:[%s43 + $0xb8] sm:$0xff]
        %v4163 = vld [vmem:[%s43 + $0xc0] sm:$0xff]
        %v4164 = vld [vmem:[%s43 + $0xc8] sm:$0xff]
        %v4165 = vld [vmem:[%s43 + $0xd0] sm:$0xff]
        %v4166 = vld [vmem:[%s43 + $0xd8] sm:$0xff]
        %v4167 = vld [vmem:[%s43 + $0xe0] sm:$0xff]
        %v4168 = vld [vmem:[%s43 + $0xe8] sm:$0xff]
        %v4169 = vld [vmem:[%s43 + $0xf0] sm:$0xff]
        %v4170 = vld [vmem:[%s43 + $0xf8] sm:$0xff]
        %v4171 = vld [vmem:[%s43 + $0x100] sm:$0xff]
        %v4172 = vld [vmem:[%s43 + $0x108] sm:$0xff]
        %v4173 = vld [vmem:[%s43 + $0x110] sm:$0xff]
        %v4174 = vld [vmem:[%s43 + $0x118] sm:$0xff]
        %v4175 = vld [vmem:[%s43 + $0x120] sm:$0xff]
        %v4176 = vld [vmem:[%s43 + $0x128] sm:$0xff]
        %v4177 = vld [vmem:[%s43 + $0x130] sm:$0xff]
        %v4178 = vld [vmem:[%s43 + $0x138] sm:$0xff]
        %v4179 = vld [vmem:[%s43 + $0x140] sm:$0xff]
        %v4180 = vld [vmem:[%s43 + $0x148] sm:$0xff]
        %v4181 = vld [vmem:[%s43 + $0x150] sm:$0xff]
        %v4182 = vld [vmem:[%s43 + $0x158] sm:$0xff]
        %v4183 = vld [vmem:[%s43 + $0x160] sm:$0xff]
        %v4184 = vld [vmem:[%s43 + $0x168] sm:$0xff]
        %v4185 = vld [vmem:[%s43 + $0x170] sm:$0xff]
        %v4186 = vld [vmem:[%s43 + $0x178] sm:$0xff]
        %v4187 = vld [vmem:[%s43 + $0x180] sm:$0xff]
        %v4188 = vld [vmem:[%s43 + $0x188] sm:$0xff]
        %v4189 = vld [vmem:[%s43 + $0x190] sm:$0xff]
        %v4190 = vld [vmem:[%s43 + $0x198] sm:$0xff]
        %v4191 = vld [vmem:[%s43 + $0x1a0] sm:$0xff]
        %v4192 = vld [vmem:[%s43 + $0x1a8] sm:$0xff]
        %v4193 = vld [vmem:[%s43 + $0x1b0] sm:$0xff]
        %v4194 = vld [vmem:[%s43 + $0x1b8] sm:$0xff]
        %v4195 = vld [vmem:[%s43 + $0x1c0] sm:$0xff]
        %v4196 = vld [vmem:[%s43 + $0x1c8] sm:$0xff]
        %v4197 = vld [vmem:[%s43 + $0x1d0] sm:$0xff]
        %v4198 = vld [vmem:[%s43 + $0x1d8] sm:$0xff]
        %v4199 = vld [vmem:[%s43 + $0x1e0] sm:$0xff]
        %v4200 = vld [vmem:[%s43 + $0x1e8] sm:$0xff]
        %v4201 = vld [vmem:[%s43 + $0x1f0] sm:$0xff]
        %v4202 = vld [vmem:[%s43 + $0x1f8] sm:$0xff]
        %v4203 = vld [vmem:[%s55] sm:$0x1]
        %v4205 = vlaneseq
        %v4206 = vshrl.u32 %v4205, 7
        %v4207 = vsub.s32 0, %v4206
        %v4208 = vrot.slane %v4203, %v4207
        %4210 = vmatprep.subr.mxu0 0.0
        %4211 = vmatpush1.msra.mxu0 %v4139
        %4212 = vmatprep.subr.mxu0 0.0
        %4213 = vmatpush1.msra.mxu0 %v4140
        %4214 = vmatprep.subr.mxu0 0.0
        %4215 = vmatpush1.msra.mxu0 %v4141
        %4216 = vmatprep.subr.mxu0 0.0
        %4217 = vmatpush1.msra.mxu0 %v4142
        %4218 = vmatprep.subr.mxu0 0.0
        %4219 = vmatpush1.msra.mxu0 %v4143
        %4220 = vmatprep.subr.mxu0 0.0
        %4221 = vmatpush1.msra.mxu0 %v4144
        %4222 = vmatprep.subr.mxu0 0.0
        %4223 = vmatpush1.msra.mxu0 %v4145
        %4224 = vmatprep.subr.mxu0 0.0
        %4225 = vmatpush1.msra.mxu0 %v4146
        %4226 = vmatprep.subr.mxu0 0.0
        %4227 = vmatpush1.msra.mxu0 %v4147
        %4228 = vmatprep.subr.mxu0 0.0
        %4229 = vmatpush1.msra.mxu0 %v4148
        %4230 = vmatprep.subr.mxu0 0.0
        %4231 = vmatpush1.msra.mxu0 %v4149
        %4232 = vmatprep.subr.mxu0 0.0
        %4233 = vmatpush1.msra.mxu0 %v4150
        %4234 = vmatprep.subr.mxu0 0.0
        %4235 = vmatpush1.msra.mxu0 %v4151
        %4236 = vmatprep.subr.mxu0 0.0
        %4237 = vmatpush1.msra.mxu0 %v4152
        %4238 = vmatprep.subr.mxu0 0.0
        %4239 = vmatpush1.msra.mxu0 %v4153
        %4240 = vmatprep.subr.mxu0 0.0
        %4241 = vmatpush1.msra.mxu0 %v4154
        %4242 = vmatprep.subr.mxu0 0.0
        %4243 = vmatpush1.msra.mxu0 %v4155
        %4244 = vmatprep.subr.mxu0 0.0
        %4245 = vmatpush1.msra.mxu0 %v4156
        %4246 = vmatprep.subr.mxu0 0.0
        %4247 = vmatpush1.msra.mxu0 %v4157
        %4248 = vmatprep.subr.mxu0 0.0
        %4249 = vmatpush1.msra.mxu0 %v4158
        %4250 = vmatprep.subr.mxu0 0.0
        %4251 = vmatpush1.msra.mxu0 %v4159
        %4252 = vmatprep.subr.mxu0 0.0
        %4253 = vmatpush1.msra.mxu0 %v4160
        %4254 = vmatprep.subr.mxu0 0.0
        %4255 = vmatpush1.msra.mxu0 %v4161
        %4256 = vmatprep.subr.mxu0 0.0
        %4257 = vmatpush1.msra.mxu0 %v4162
        %4258 = vmatprep.subr.mxu0 0.0
        %4259 = vmatpush1.msra.mxu0 %v4163
        %4260 = vmatprep.subr.mxu0 0.0
        %4261 = vmatpush1.msra.mxu0 %v4164
        %4262 = vmatprep.subr.mxu0 0.0
        %4263 = vmatpush1.msra.mxu0 %v4165
        %4264 = vmatprep.subr.mxu0 0.0
        %4265 = vmatpush1.msra.mxu0 %v4166
        %4266 = vmatprep.subr.mxu0 0.0
        %4267 = vmatpush1.msra.mxu0 %v4167
        %4268 = vmatprep.subr.mxu0 0.0
        %4269 = vmatpush1.msra.mxu0 %v4168
        %4270 = vmatprep.subr.mxu0 0.0
        %4271 = vmatpush1.msra.mxu0 %v4169
        %4272 = vmatprep.subr.mxu0 0.0
        %4273 = vmatpush1.msra.mxu0 %v4170
        %4274 = vmatprep.mubr.f32.mxu0 %v4136
        %4275 = vmatmul.mubr.f32.gmra.mrb[0].mxu0 %v4135
        %v4276 = vpop.f32.mrb[0].mxu0
        %v4277 = vadd.f32 %v4208, %v4276
        %v4278 = vpop.f32.mrb[0].mxu0
        %4279 = vdwg.mxu0
        %4280 = vmatprep.subr.mxu0 0.0
        %4281 = vmatpush1.msra.mxu0 %v4171
        %4282 = vmatprep.subr.mxu0 0.0
        %4283 = vmatpush1.msra.mxu0 %v4172
        %4284 = vmatprep.subr.mxu0 0.0
        %4285 = vmatpush1.msra.mxu0 %v4173
        %4286 = vmatprep.subr.mxu0 0.0
        %4287 = vmatpush1.msra.mxu0 %v4174
        %4288 = vmatprep.subr.mxu0 0.0
        %4289 = vmatpush1.msra.mxu0 %v4175
        %4290 = vmatprep.subr.mxu0 0.0
        %4291 = vmatpush1.msra.mxu0 %v4176
        %4292 = vmatprep.subr.mxu0 0.0
        %4293 = vmatpush1.msra.mxu0 %v4177
        %4294 = vmatprep.subr.mxu0 0.0
        %4295 = vmatpush1.msra.mxu0 %v4178
        %4296 = vmatprep.subr.mxu0 0.0
        %4297 = vmatpush1.msra.mxu0 %v4179
        %4298 = vmatprep.subr.mxu0 0.0
        %4299 = vmatpush1.msra.mxu0 %v4180
        %4300 = vmatprep.subr.mxu0 0.0
        %4301 = vmatpush1.msra.mxu0 %v4181
        %4302 = vmatprep.subr.mxu0 0.0
        %4303 = vmatpush1.msra.mxu0 %v4182
        %4304 = vmatprep.subr.mxu0 0.0
        %4305 = vmatpush1.msra.mxu0 %v4183
        %4306 = vmatprep.subr.mxu0 0.0
        %4307 = vmatpush1.msra.mxu0 %v4184
        %4308 = vmatprep.subr.mxu0 0.0
        %4309 = vmatpush1.msra.mxu0 %v4185
        %4310 = vmatprep.subr.mxu0 0.0
        %4311 = vmatpush1.msra.mxu0 %v4186
        %4312 = vmatprep.subr.mxu0 0.0
        %4313 = vmatpush1.msra.mxu0 %v4187
        %4314 = vmatprep.subr.mxu0 0.0
        %4315 = vmatpush1.msra.mxu0 %v4188
        %4316 = vmatprep.subr.mxu0 0.0
        %4317 = vmatpush1.msra.mxu0 %v4189
        %4318 = vmatprep.subr.mxu0 0.0
        %4319 = vmatpush1.msra.mxu0 %v4190
        %4320 = vmatprep.subr.mxu0 0.0
        %4321 = vmatpush1.msra.mxu0 %v4191
        %4322 = vmatprep.subr.mxu0 0.0
        %4323 = vmatpush1.msra.mxu0 %v4192
        %4324 = vmatprep.subr.mxu0 0.0
        %4325 = vmatpush1.msra.mxu0 %v4193
        %4326 = vmatprep.subr.mxu0 0.0
        %4327 = vmatpush1.msra.mxu0 %v4194
        %4328 = vmatprep.subr.mxu0 0.0
        %4329 = vmatpush1.msra.mxu0 %v4195
        %4330 = vmatprep.subr.mxu0 0.0
        %4331 = vmatpush1.msra.mxu0 %v4196
        %4332 = vmatprep.subr.mxu0 0.0
        %4333 = vmatpush1.msra.mxu0 %v4197
        %4334 = vmatprep.subr.mxu0 0.0
        %4335 = vmatpush1.msra.mxu0 %v4198
        %4336 = vmatprep.subr.mxu0 0.0
        %4337 = vmatpush1.msra.mxu0 %v4199
        %4338 = vmatprep.subr.mxu0 0.0
        %4339 = vmatpush1.msra.mxu0 %v4200
        %4340 = vmatprep.subr.mxu0 0.0
        %4341 = vmatpush1.msra.mxu0 %v4201
        %4342 = vmatprep.subr.mxu0 0.0
        %4343 = vmatpush1.msra.mxu0 %v4202
        %4344 = vmatprep.mubr.f32.mxu0 %v4138
        %4345 = vmatmul.mubr.f32.gmra.mrb[0].mxu0 %v4137
        %v4346 = vpop.f32.mrb[0].mxu0
        %v4347 = vadd.f32 %v4277, %v4346
        %v4348 = vpop.f32.mrb[0].mxu0
        %4349 = vdwg.mxu0
        %vm4350 = vcmask 60416
        %v4351 = vsel %vm4350, %v4347, -inf
        %4352 = vmax.xlane.f32.xlu0 %v4351
        %v4353 = vpop.xlane.xlu0 %4352
        %v4354 = vlaneseq
        %v4355 = vshrl.u32 %v4354, 7
        %v4356 = vsub.s32 0, %v4355
        %v4357 = vrot.slane %v1972, %v4356
        %v4358 = vmul.f32 %v4353, %v4357
        %v4359 = vadd.f32 %v4358, 0.0
        %vm4360 = vcmask 126016
        %v4361 = vsel %vm4360, %v4347, -inf
        %4362 = vmax.xlane.f32.xlu0 %v4361
        %v4363 = vpop.xlane.xlu0 %4362
        %v4364 = vlaneseq
        %v4365 = vshrl.u32 %v4364, 7
        %v4366 = vsub.s32 1, %v4365
        %v4367 = vrot.slane %v1972, %v4366
        %v4368 = vmul.f32 %v4363, %v4367
        %v4369 = vadd.f32 %v4359, %v4368
        %vm4370 = vcmask 191616
        %v4371 = vsel %vm4370, %v4347, -inf
        %4372 = vmax.xlane.f32.xlu0 %v4371
        %v4373 = vpop.xlane.xlu0 %4372
        %v4374 = vlaneseq
        %v4375 = vshrl.u32 %v4374, 7
        %v4376 = vsub.s32 2, %v4375
        %v4377 = vrot.slane %v1972, %v4376
        %v4378 = vmul.f32 %v4373, %v4377
        %v4379 = vadd.f32 %v4369, %v4378
        %vm4380 = vcmask 257216
        %v4381 = vsel %vm4380, %v4347, -inf
        %4382 = vmax.xlane.f32.xlu0 %v4381
        %v4383 = vpop.xlane.xlu0 %4382
        %v4384 = vlaneseq
        %v4385 = vshrl.u32 %v4384, 7
        %v4386 = vsub.s32 3, %v4385
        %v4387 = vrot.slane %v1972, %v4386
        %v4388 = vmul.f32 %v4383, %v4387
        %v4389 = vadd.f32 %v4379, %v4388
        %v4390 = vsub.f32 %v4347, %v4389
        %v4391 = vmul.f32 %v4390, 1.442695
        %v4392 = vpow.pop %v4391
        %v4394 = vsel %vm2184, %v4392, 0
        %4396 = vmatprep.subr.mxu0 0.0
        %4397 = vmatpush1.msra.mxu0 %v1982
        %4398 = vmatprep.subr.mxu0 0.0
        %4399 = vmatpush1.msra.mxu0 %v1983
        %4400 = vmatprep.subr.mxu0 0.0
        %4401 = vmatpush1.msra.mxu0 %v1984
        %4402 = vmatprep.subr.mxu0 0.0
        %4403 = vmatpush1.msra.mxu0 %v1985
        %4404 = vmatprep.subr.mxu0 0.0
        %4405 = vmatpush1.msra.mxu0 0.0
        %4406 = vmatprep.subr.mxu0 0.0
        %4407 = vmatpush1.msra.mxu0 0.0
        %4408 = vmatprep.subr.mxu0 0.0
        %4409 = vmatpush1.msra.mxu0 0.0
        %4410 = vmatprep.subr.mxu0 0.0
        %4411 = vmatpush1.msra.mxu0 0.0
        %4412 = vmatprep.subr.mxu0 0.0
        %4413 = vmatpush1.msra.mxu0 0.0
        %4414 = vmatprep.subr.mxu0 0.0
        %4415 = vmatpush1.msra.mxu0 0.0
        %4416 = vmatprep.subr.mxu0 0.0
        %4417 = vmatpush1.msra.mxu0 0.0
        %4418 = vmatprep.subr.mxu0 0.0
        %4419 = vmatpush1.msra.mxu0 0.0
        %4420 = vmatprep.subr.mxu0 0.0
        %4421 = vmatpush1.msra.mxu0 0.0
        %4422 = vmatprep.subr.mxu0 0.0
        %4423 = vmatpush1.msra.mxu0 0.0
        %4424 = vmatprep.subr.mxu0 0.0
        %4425 = vmatpush1.msra.mxu0 0.0
        %4426 = vmatprep.subr.mxu0 0.0
        %4427 = vmatpush1.msra.mxu0 0.0
        %4428 = vmatprep.subr.mxu0 0.0
        %4429 = vmatpush1.msra.mxu0 0.0
        %4430 = vmatprep.subr.mxu0 0.0
        %4431 = vmatpush1.msra.mxu0 0.0
        %4432 = vmatprep.subr.mxu0 0.0
        %4433 = vmatpush1.msra.mxu0 0.0
        %4434 = vmatprep.subr.mxu0 0.0
        %4435 = vmatpush1.msra.mxu0 0.0
        %4436 = vmatprep.subr.mxu0 0.0
        %4437 = vmatpush1.msra.mxu0 0.0
        %4438 = vmatprep.subr.mxu0 0.0
        %4439 = vmatpush1.msra.mxu0 0.0
        %4440 = vmatprep.subr.mxu0 0.0
        %4441 = vmatpush1.msra.mxu0 0.0
        %4442 = vmatprep.subr.mxu0 0.0
        %4443 = vmatpush1.msra.mxu0 0.0
        %4444 = vmatprep.subr.mxu0 0.0
        %4445 = vmatpush1.msra.mxu0 0.0
        %4446 = vmatprep.subr.mxu0 0.0
        %4447 = vmatpush1.msra.mxu0 0.0
        %4448 = vmatprep.subr.mxu0 0.0
        %4449 = vmatpush1.msra.mxu0 0.0
        %4450 = vmatprep.subr.mxu0 0.0
        %4451 = vmatpush1.msra.mxu0 0.0
        %4452 = vmatprep.subr.mxu0 0.0
        %4453 = vmatpush1.msra.mxu0 0.0
        %4454 = vmatprep.subr.mxu0 0.0
        %4455 = vmatpush1.msra.mxu0 0.0
        %4456 = vmatprep.subr.mxu0 0.0
        %4457 = vmatpush1.msra.mxu0 0.0
        %4458 = vmatprep.subr.mxu0 0.0
        %4459 = vmatpush1.msra.mxu0 0.0
        %4460 = vmatprep.mubr.f32.mxu0 0.0
        %4461 = vmatmul.mubr.f32.gmra.mrb[0].mxu0 %v4394
        %v4462 = vpop.f32.mrb[0].mxu0
        %v4463 = vadd.f32 0.0, %v4462
        %v4464 = vpop.f32.mrb[0].mxu0
        %4465 = vdwg.mxu0
        %v4466 = vrcp.pop %v4463
        %v4467 = vmul.f32 %v4392, %v4466
        %4469 = vrot.lane.b32.xlu0 %v3589, 96
        %v4470 = vpop.permute.xlu0 %4469
        %v4473 = vsel %vm3624, %v1978, 0
        %v4476 = vsel %vm3624, %v1979, 0
        %v4479 = vsel %vm3624, %v1980, 0
        %v4482 = vsel %vm3624, %v1981, 0
        %4484 = vmatprep.subr.mxu0 0.0
        %4485 = vmatpush1.msra.mxu0 %v4470
        %4486 = vmatprep.subr.mxu0 0.0
        %4487 = vmatpush1.msra.mxu0 0.0
        %4488 = vmatprep.subr.mxu0 0.0
        %4489 = vmatpush1.msra.mxu0 0.0
        %4490 = vmatprep.subr.mxu0 0.0
        %4491 = vmatpush1.msra.mxu0 0.0
        %4492 = vmatprep.subr.mxu0 0.0
        %4493 = vmatpush1.msra.mxu0 0.0
        %4494 = vmatprep.subr.mxu0 0.0
        %4495 = vmatpush1.msra.mxu0 0.0
        %4496 = vmatprep.subr.mxu0 0.0
        %4497 = vmatpush1.msra.mxu0 0.0
        %4498 = vmatprep.subr.mxu0 0.0
        %4499 = vmatpush1.msra.mxu0 0.0
        %4500 = vmatprep.subr.mxu0 0.0
        %4501 = vmatpush1.msra.mxu0 0.0
        %4502 = vmatprep.subr.mxu0 0.0
        %4503 = vmatpush1.msra.mxu0 0.0
        %4504 = vmatprep.subr.mxu0 0.0
        %4505 = vmatpush1.msra.mxu0 0.0
        %4506 = vmatprep.subr.mxu0 0.0
        %4507 = vmatpush1.msra.mxu0 0.0
        %4508 = vmatprep.subr.mxu0 0.0
        %4509 = vmatpush1.msra.mxu0 0.0
        %4510 = vmatprep.subr.mxu0 0.0
        %4511 = vmatpush1.msra.mxu0 0.0
        %4512 = vmatprep.subr.mxu0 0.0
        %4513 = vmatpush1.msra.mxu0 0.0
        %4514 = vmatprep.subr.mxu0 0.0
        %4515 = vmatpush1.msra.mxu0 0.0
        %4516 = vmatprep.subr.mxu0 0.0
        %4517 = vmatpush1.msra.mxu0 0.0
        %4518 = vmatprep.subr.mxu0 0.0
        %4519 = vmatpush1.msra.mxu0 0.0
        %4520 = vmatprep.subr.mxu0 0.0
        %4521 = vmatpush1.msra.mxu0 0.0
        %4522 = vmatprep.subr.mxu0 0.0
        %4523 = vmatpush1.msra.mxu0 0.0
        %4524 = vmatprep.subr.mxu0 0.0
        %4525 = vmatpush1.msra.mxu0 0.0
        %4526 = vmatprep.subr.mxu0 0.0
        %4527 = vmatpush1.msra.mxu0 0.0
        %4528 = vmatprep.subr.mxu0 0.0
        %4529 = vmatpush1.msra.mxu0 0.0
        %4530 = vmatprep.subr.mxu0 0.0
        %4531 = vmatpush1.msra.mxu0 0.0
        %4532 = vmatprep.subr.mxu0 0.0
        %4533 = vmatpush1.msra.mxu0 0.0
        %4534 = vmatprep.subr.mxu0 0.0
        %4535 = vmatpush1.msra.mxu0 0.0
        %4536 = vmatprep.subr.mxu0 0.0
        %4537 = vmatpush1.msra.mxu0 0.0
        %4538 = vmatprep.subr.mxu0 0.0
        %4539 = vmatpush1.msra.mxu0 0.0
        %4540 = vmatprep.subr.mxu0 0.0
        %4541 = vmatpush1.msra.mxu0 0.0
        %4542 = vmatprep.subr.mxu0 0.0
        %4543 = vmatpush1.msra.mxu0 0.0
        %4544 = vmatprep.subr.mxu0 0.0
        %4545 = vmatpush1.msra.mxu0 0.0
        %4546 = vmatprep.subr.mxu0 0.0
        %4547 = vmatpush1.msra.mxu0 0.0
        %4548 = vmatprep.mubr.f32.mxu0 0.0
        %4549 = vmatmul.mubr.f32.gmra.mrb[0].mxu0 %v4473
        %v4550 = vpop.f32.mrb[0].mxu0
        %v4551 = vadd.f32 0.0, %v4550
        %v4552 = vpop.f32.mrb[0].mxu0
        %4553 = vmatprep.mubr.f32.mxu0 0.0
        %4554 = vmatmul.mubr.f32.gmra.mrb[0].mxu0 %v4476
        %v4555 = vpop.f32.mrb[0].mxu0
        %v4556 = vadd.f32 0.0, %v4555
        %v4557 = vpop.f32.mrb[0].mxu0
        %4558 = vmatprep.mubr.f32.mxu0 0.0
        %4559 = vmatmul.mubr.f32.gmra.mrb[0].mxu0 %v4479
        %v4560 = vpop.f32.mrb[0].mxu0
        %v4561 = vadd.f32 0.0, %v4560
        %v4562 = vpop.f32.mrb[0].mxu0
        %4563 = vmatprep.mubr.f32.mxu0 0.0
        %4564 = vmatmul.mubr.f32.gmra.mrb[0].mxu0 %v4482
        %v4565 = vpop.f32.mrb[0].mxu0
        %v4566 = vadd.f32 0.0, %v4565
        %v4567 = vpop.f32.mrb[0].mxu0
        %4568 = vdwg.mxu0
        %v4569 = vmul.f32 %v4551, %v1986
        %v4570 = vmul.f32 %v4556, %v1987
        %v4571 = vmul.f32 %v4561, %v1988
        %v4572 = vmul.f32 %v4566, %v1989
        %v4574 = vsel %vm2184, %v4467, 0
        %4576 = vmatprep.subr.mxu0 0.0
        %4577 = vmatpush1.msra.mxu0 %v4569
        %4578 = vmatprep.subr.mxu0 0.0
        %4579 = vmatpush1.msra.mxu0 %v4570
        %4580 = vmatprep.subr.mxu0 0.0
        %4581 = vmatpush1.msra.mxu0 %v4571
        %4582 = vmatprep.subr.mxu0 0.0
        %4583 = vmatpush1.msra.mxu0 %v4572
        %4584 = vmatprep.subr.mxu0 0.0
        %4585 = vmatpush1.msra.mxu0 0.0
        %4586 = vmatprep.subr.mxu0 0.0
        %4587 = vmatpush1.msra.mxu0 0.0
        %4588 = vmatprep.subr.mxu0 0.0
        %4589 = vmatpush1.msra.mxu0 0.0
        %4590 = vmatprep.subr.mxu0 0.0
        %4591 = vmatpush1.msra.mxu0 0.0
        %4592 = vmatprep.subr.mxu0 0.0
        %4593 = vmatpush1.msra.mxu0 0.0
        %4594 = vmatprep.subr.mxu0 0.0
        %4595 = vmatpush1.msra.mxu0 0.0
        %4596 = vmatprep.subr.mxu0 0.0
        %4597 = vmatpush1.msra.mxu0 0.0
        %4598 = vmatprep.subr.mxu0 0.0
        %4599 = vmatpush1.msra.mxu0 0.0
        %4600 = vmatprep.subr.mxu0 0.0
        %4601 = vmatpush1.msra.mxu0 0.0
        %4602 = vmatprep.subr.mxu0 0.0
        %4603 = vmatpush1.msra.mxu0 0.0
        %4604 = vmatprep.subr.mxu0 0.0
        %4605 = vmatpush1.msra.mxu0 0.0
        %4606 = vmatprep.subr.mxu0 0.0
        %4607 = vmatpush1.msra.mxu0 0.0
        %4608 = vmatprep.subr.mxu0 0.0
        %4609 = vmatpush1.msra.mxu0 0.0
        %4610 = vmatprep.subr.mxu0 0.0
        %4611 = vmatpush1.msra.mxu0 0.0
        %4612 = vmatprep.subr.mxu0 0.0
        %4613 = vmatpush1.msra.mxu0 0.0
        %4614 = vmatprep.subr.mxu0 0.0
        %4615 = vmatpush1.msra.mxu0 0.0
        %4616 = vmatprep.subr.mxu0 0.0
        %4617 = vmatpush1.msra.mxu0 0.0
        %4618 = vmatprep.subr.mxu0 0.0
        %4619 = vmatpush1.msra.mxu0 0.0
        %4620 = vmatprep.subr.mxu0 0.0
        %4621 = vmatpush1.msra.mxu0 0.0
        %4622 = vmatprep.subr.mxu0 0.0
        %4623 = vmatpush1.msra.mxu0 0.0
        %4624 = vmatprep.subr.mxu0 0.0
        %4625 = vmatpush1.msra.mxu0 0.0
        %4626 = vmatprep.subr.mxu0 0.0
        %4627 = vmatpush1.msra.mxu0 0.0
        %4628 = vmatprep.subr.mxu0 0.0
        %4629 = vmatpush1.msra.mxu0 0.0
        %4630 = vmatprep.subr.mxu0 0.0
        %4631 = vmatpush1.msra.mxu0 0.0
        %4632 = vmatprep.subr.mxu0 0.0
        %4633 = vmatpush1.msra.mxu0 0.0
        %4634 = vmatprep.subr.mxu0 0.0
        %4635 = vmatpush1.msra.mxu0 0.0
        %4636 = vmatprep.subr.mxu0 0.0
        %4637 = vmatpush1.msra.mxu0 0.0
        %4638 = vmatprep.subr.mxu0 0.0
        %4639 = vmatpush1.msra.mxu0 0.0
        %4640 = vmatprep.mubr.f32.mxu0 0.0
        %4641 = vmatmul.mubr.f32.gmra.mrb[0].mxu0 %v4574
        %v4642 = vpop.f32.mrb[0].mxu0
        %v4643 = vadd.f32 0.0, %v4642
        %v4644 = vpop.f32.mrb[0].mxu0
        %4645 = vdwg.mxu0
        %v4646 = vld [vmem:[%s57] sm:$0xff]
        %v4647 = vld [vmem:[%s57 + $0x8] sm:$0xff]
        %v4648 = vld [vmem:[%s57 + $0x10] sm:$0xff]
        %v4649 = vld [vmem:[%s57 + $0x18] sm:$0xff]
        %v4650 = vld [vmem:[%s59] sm:$0x1]
        %v4652 = vlaneseq
        %v4653 = vshrl.u32 %v4652, 7
        %v4654 = vsub.s32 0, %v4653
        %v4655 = vrot.slane %v4650, %v4654
        %v4658 = vsel %vm2184, %v4643, 0
        %4660 = vmatprep.subr.mxu0 0.0
        %4661 = vmatpush1.msra.mxu0 %v4646
        %4662 = vmatprep.subr.mxu0 0.0
        %4663 = vmatpush1.msra.mxu0 %v4647
        %4664 = vmatprep.subr.mxu0 0.0
        %4665 = vmatpush1.msra.mxu0 %v4648
        %4666 = vmatprep.subr.mxu0 0.0
        %4667 = vmatpush1.msra.mxu0 %v4649
        %4668 = vmatprep.subr.mxu0 0.0
        %4669 = vmatpush1.msra.mxu0 0.0
        %4670 = vmatprep.subr.mxu0 0.0
        %4671 = vmatpush1.msra.mxu0 0.0
        %4672 = vmatprep.subr.mxu0 0.0
        %4673 = vmatpush1.msra.mxu0 0.0
        %4674 = vmatprep.subr.mxu0 0.0
        %4675 = vmatpush1.msra.mxu0 0.0
        %4676 = vmatprep.subr.mxu0 0.0
        %4677 = vmatpush1.msra.mxu0 0.0
        %4678 = vmatprep.subr.mxu0 0.0
        %4679 = vmatpush1.msra.mxu0 0.0
        %4680 = vmatprep.subr.mxu0 0.0
        %4681 = vmatpush1.msra.mxu0 0.0
        %4682 = vmatprep.subr.mxu0 0.0
        %4683 = vmatpush1.msra.mxu0 0.0
        %4684 = vmatprep.subr.mxu0 0.0
        %4685 = vmatpush1.msra.mxu0 0.0
        %4686 = vmatprep.subr.mxu0 0.0
        %4687 = vmatpush1.msra.mxu0 0.0
        %4688 = vmatprep.subr.mxu0 0.0
        %4689 = vmatpush1.msra.mxu0 0.0
        %4690 = vmatprep.subr.mxu0 0.0
        %4691 = vmatpush1.msra.mxu0 0.0
        %4692 = vmatprep.subr.mxu0 0.0
        %4693 = vmatpush1.msra.mxu0 0.0
        %4694 = vmatprep.subr.mxu0 0.0
        %4695 = vmatpush1.msra.mxu0 0.0
        %4696 = vmatprep.subr.mxu0 0.0
        %4697 = vmatpush1.msra.mxu0 0.0
        %4698 = vmatprep.subr.mxu0 0.0
        %4699 = vmatpush1.msra.mxu0 0.0
        %4700 = vmatprep.subr.mxu0 0.0
        %4701 = vmatpush1.msra.mxu0 0.0
        %4702 = vmatprep.subr.mxu0 0.0
        %4703 = vmatpush1.msra.mxu0 0.0
        %4704 = vmatprep.subr.mxu0 0.0
        %4705 = vmatpush1.msra.mxu0 0.0
        %4706 = vmatprep.subr.mxu0 0.0
        %4707 = vmatpush1.msra.mxu0 0.0
        %4708 = vmatprep.subr.mxu0 0.0
        %4709 = vmatpush1.msra.mxu0 0.0
        %4710 = vmatprep.subr.mxu0 0.0
        %4711 = vmatpush1.msra.mxu0 0.0
        %4712 = vmatprep.subr.mxu0 0.0
        %4713 = vmatpush1.msra.mxu0 0.0
        %4714 = vmatprep.subr.mxu0 0.0
        %4715 = vmatpush1.msra.mxu0 0.0
        %4716 = vmatprep.subr.mxu0 0.0
        %4717 = vmatpush1.msra.mxu0 0.0
        %4718 = vmatprep.subr.mxu0 0.0
        %4719 = vmatpush1.msra.mxu0 0.0
        %4720 = vmatprep.subr.mxu0 0.0
        %4721 = vmatpush1.msra.mxu0 0.0
        %4722 = vmatprep.subr.mxu0 0.0
        %4723 = vmatpush1.msra.mxu0 0.0
        %4724 = vmatprep.mubr.f32.mxu0 0.0
        %4725 = vmatmul.mubr.f32.gmra.mrb[0].mxu0 %v4658
        %v4726 = vpop.f32.mrb[0].mxu0
        %v4727 = vadd.f32 %v4655, %v4726
        %v4728 = vpop.f32.mrb[0].mxu0
        %4729 = vdwg.mxu0
        %v4730 = vld [vmem:[%s71] sm:$0x1]
        %v4731 = vld [vmem:[%s69] sm:$0x1]
        %v4732 = vadd.f32 %v2177, %v4727
        %vm4733 = vcmask 257024
        %v4734 = vsel %vm4733, %v4732, 0.0
        %v4735 = vrot.slane %v4734, 4
        %v4736 = vadd.f32 %v4734, %v4735
        %v4737 = vrot.slane %v4736, 2
        %v4738 = vadd.f32 %v4736, %v4737
        %v4739 = vrot.slane %v4738, 1
        %v4740 = vadd.f32 %v4738, %v4739
        %v4741 = vrcp.pop 4.0
        %v4742 = vmul.f32 %v4740, %v4741
        %v4743 = vsub.f32 %v4732, %v4742
        %v4744 = vmul.f32 %v4743, %v4743
        %v4745 = vsel %vm4733, %v4744, 0.0
        %v4746 = vrot.slane %v4745, 4
        %v4747 = vadd.f32 %v4745, %v4746
        %v4748 = vrot.slane %v4747, 2
        %v4749 = vadd.f32 %v4747, %v4748
        %v4750 = vrot.slane %v4749, 1
        %v4751 = vadd.f32 %v4749, %v4750
        %v4752 = vmul.f32 %v4751, %v4741
        %v4753 = vadd.f32 %v4752, 1e-05
        %v4754 = vrsqrt.pop %v4753
        %v4755 = vmul.f32 %v4743, %v4754
        %v4757 = vlaneseq
        %v4758 = vshrl.u32 %v4757, 7
        %v4759 = vsub.s32 0, %v4758
        %v4760 = vrot.slane %v4730, %v4759
        %v4762 = vmul.f32 %v4755, %v4760
        %v4764 = vlaneseq
        %v4765 = vshrl.u32 %v4764, 7
        %v4766 = vsub.s32 0, %v4765
        %v4767 = vrot.slane %v4731, %v4766
        %v4769 = vadd.f32 %v4762, %v4767
        %v4770 = vld [vmem:[%s61] sm:$0xff]
        %v4771 = vld [vmem:[%s61 + $0x8] sm:$0xff]
        %v4772 = vld [vmem:[%s61 + $0x10] sm:$0xff]
        %v4773 = vld [vmem:[%s61 + $0x18] sm:$0xff]
        %v4774 = vld [vmem:[%s65] sm:$0x1]
        %v4776 = vlaneseq
        %v4777 = vshrl.u32 %v4776, 7
        %v4778 = vsub.s32 0, %v4777
        %v4779 = vrot.slane %v4774, %v4778
        %v4782 = vsel %vm2184, %v4769, 0
        %4784 = vmatprep.subr.mxu0 0.0
        %4785 = vmatpush1.msra.mxu0 %v4770
        %4786 = vmatprep.subr.mxu0 0.0
        %4787 = vmatpush1.msra.mxu0 %v4771
        %4788 = vmatprep.subr.mxu0 0.0
        %4789 = vmatpush1.msra.mxu0 %v4772
        %4790 = vmatprep.subr.mxu0 0.0
        %4791 = vmatpush1.msra.mxu0 %v4773
        %4792 = vmatprep.subr.mxu0 0.0
        %4793 = vmatpush1.msra.mxu0 0.0
        %4794 = vmatprep.subr.mxu0 0.0
        %4795 = vmatpush1.msra.mxu0 0.0
        %4796 = vmatprep.subr.mxu0 0.0
        %4797 = vmatpush1.msra.mxu0 0.0
        %4798 = vmatprep.subr.mxu0 0.0
        %4799 = vmatpush1.msra.mxu0 0.0
        %4800 = vmatprep.subr.mxu0 0.0
        %4801 = vmatpush1.msra.mxu0 0.0
        %4802 = vmatprep.subr.mxu0 0.0
        %4803 = vmatpush1.msra.mxu0 0.0
        %4804 = vmatprep.subr.mxu0 0.0
        %4805 = vmatpush1.msra.mxu0 0.0
        %4806 = vmatprep.subr.mxu0 0.0
        %4807 = vmatpush1.msra.mxu0 0.0
        %4808 = vmatprep.subr.mxu0 0.0
        %4809 = vmatpush1.msra.mxu0 0.0
        %4810 = vmatprep.subr.mxu0 0.0
        %4811 = vmatpush1.msra.mxu0 0.0
        %4812 = vmatprep.subr.mxu0 0.0
        %4813 = vmatpush1.msra.mxu0 0.0
        %4814 = vmatprep.subr.mxu0 0.0
        %4815 = vmatpush1.msra.mxu0 0.0
        %4816 = vmatprep.subr.mxu0 0.0
        %4817 = vmatpush1.msra.mxu0 0.0
        %4818 = vmatprep.subr.mxu0 0.0
        %4819 = vmatpush1.msra.mxu0 0.0
        %4820 = vmatprep.subr.mxu0 0.0
        %4821 = vmatpush1.msra.mxu0 0.0
        %4822 = vmatprep.subr.mxu0 0.0
        %4823 = vmatpush1.msra.mxu0 0.0
        %4824 = vmatprep.subr.mxu0 0.0
        %4825 = vmatpush1.msra.mxu0 0.0
        %4826 = vmatprep.subr.mxu0 0.0
        %4827 = vmatpush1.msra.mxu0 0.0
        %4828 = vmatprep.subr.mxu0 0.0
        %4829 = vmatpush1.msra.mxu0 0.0
        %4830 = vmatprep.subr.mxu0 0.0
        %4831 = vmatpush1.msra.mxu0 0.0
        %4832 = vmatprep.subr.mxu0 0.0
        %4833 = vmatpush1.msra.mxu0 0.0
        %4834 = vmatprep.subr.mxu0 0.0
        %4835 = vmatpush1.msra.mxu0 0.0
        %4836 = vmatprep.subr.mxu0 0.0
        %4837 = vmatpush1.msra.mxu0 0.0
        %4838 = vmatprep.subr.mxu0 0.0
        %4839 = vmatpush1.msra.mxu0 0.0
        %4840 = vmatprep.subr.mxu0 0.0
        %4841 = vmatpush1.msra.mxu0 0.0
        %4842 = vmatprep.subr.mxu0 0.0
        %4843 = vmatpush1.msra.mxu0 0.0
        %4844 = vmatprep.subr.mxu0 0.0
        %4845 = vmatpush1.msra.mxu0 0.0
        %4846 = vmatprep.subr.mxu0 0.0
        %4847 = vmatpush1.msra.mxu0 0.0
        %4848 = vmatprep.mubr.f32.mxu0 0.0
        %4849 = vmatmul.mubr.f32.gmra.mrb[0].mxu0 %v4782
        %v4850 = vpop.f32.mrb[0].mxu0
        %v4851 = vadd.f32 %v4779, %v4850
        %v4852 = vpop.f32.mrb[0].mxu0
        %4853 = vdwg.mxu0
        %v4854 = vmax.f32 %v4851, 0.0
        %v4855 = vld [vmem:[%s63] sm:$0xff]
        %v4856 = vld [vmem:[%s63 + $0x8] sm:$0xff]
        %v4857 = vld [vmem:[%s63 + $0x10] sm:$0xff]
        %v4858 = vld [vmem:[%s63 + $0x18] sm:$0xff]
        %v4859 = vld [vmem:[%s63 + $0x20] sm:$0xff]
        %v4860 = vld [vmem:[%s63 + $0x28] sm:$0xff]
        %v4861 = vld [vmem:[%s63 + $0x30] sm:$0xff]
        %v4862 = vld [vmem:[%s63 + $0x38] sm:$0xff]
        %v4863 = vld [vmem:[%s67] sm:$0x1]
        %v4865 = vlaneseq
        %v4866 = vshrl.u32 %v4865, 7
        %v4867 = vsub.s32 0, %v4866
        %v4868 = vrot.slane %v4863, %v4867
        %v4871 = vsel %vm3332, %v4854, 0
        %4873 = vmatprep.subr.mxu0 0.0
        %4874 = vmatpush1.msra.mxu0 %v4855
        %4875 = vmatprep.subr.mxu0 0.0
        %4876 = vmatpush1.msra.mxu0 %v4856
        %4877 = vmatprep.subr.mxu0 0.0
        %4878 = vmatpush1.msra.mxu0 %v4857
        %4879 = vmatprep.subr.mxu0 0.0
        %4880 = vmatpush1.msra.mxu0 %v4858
        %4881 = vmatprep.subr.mxu0 0.0
        %4882 = vmatpush1.msra.mxu0 %v4859
        %4883 = vmatprep.subr.mxu0 0.0
        %4884 = vmatpush1.msra.mxu0 %v4860
        %4885 = vmatprep.subr.mxu0 0.0
        %4886 = vmatpush1.msra.mxu0 %v4861
        %4887 = vmatprep.subr.mxu0 0.0
        %4888 = vmatpush1.msra.mxu0 %v4862
        %4889 = vmatprep.subr.mxu0 0.0
        %4890 = vmatpush1.msra.mxu0 0.0
        %4891 = vmatprep.subr.mxu0 0.0
        %4892 = vmatpush1.msra.mxu0 0.0
        %4893 = vmatprep.subr.mxu0 0.0
        %4894 = vmatpush1.msra.mxu0 0.0
        %4895 = vmatprep.subr.mxu0 0.0
        %4896 = vmatpush1.msra.mxu0 0.0
        %4897 = vmatprep.subr.mxu0 0.0
        %4898 = vmatpush1.msra.mxu0 0.0
        %4899 = vmatprep.subr.mxu0 0.0
        %4900 = vmatpush1.msra.mxu0 0.0
        %4901 = vmatprep.subr.mxu0 0.0
        %4902 = vmatpush1.msra.mxu0 0.0
        %4903 = vmatprep.subr.mxu0 0.0
        %4904 = vmatpush1.msra.mxu0 0.0
        %4905 = vmatprep.subr.mxu0 0.0
        %4906 = vmatpush1.msra.mxu0 0.0
        %4907 = vmatprep.subr.mxu0 0.0
        %4908 = vmatpush1.msra.mxu0 0.0
        %4909 = vmatprep.subr.mxu0 0.0
        %4910 = vmatpush1.msra.mxu0 0.0
        %4911 = vmatprep.subr.mxu0 0.0
        %4912 = vmatpush1.msra.mxu0 0.0
        %4913 = vmatprep.subr.mxu0 0.0
        %4914 = vmatpush1.msra.mxu0 0.0
        %4915 = vmatprep.subr.mxu0 0.0
        %4916 = vmatpush1.msra.mxu0 0.0
        %4917 = vmatprep.subr.mxu0 0.0
        %4918 = vmatpush1.msra.mxu0 0.0
        %4919 = vmatprep.subr.mxu0 0.0
        %4920 = vmatpush1.msra.mxu0 0.0
        %4921 = vmatprep.subr.mxu0 0.0
        %4922 = vmatpush1.msra.mxu0 0.0
        %4923 = vmatprep.subr.mxu0 0.0
        %4924 = vmatpush1.msra.mxu0 0.0
        %4925 = vmatprep.subr.mxu0 0.0
        %4926 = vmatpush1.msra.mxu0 0.0
        %4927 = vmatprep.subr.mxu0 0.0
        %4928 = vmatpush1.msra.mxu0 0.0
        %4929 = vmatprep.subr.mxu0 0.0
        %4930 = vmatpush1.msra.mxu0 0.0
        %4931 = vmatprep.subr.mxu0 0.0
        %4932 = vmatpush1.msra.mxu0 0.0
        %4933 = vmatprep.subr.mxu0 0.0
        %4934 = vmatpush1.msra.mxu0 0.0
        %4935 = vmatprep.subr.mxu0 0.0
        %4936 = vmatpush1.msra.mxu0 0.0
        %4937 = vmatprep.mubr.f32.mxu0 0.0
        %4938 = vmatmul.mubr.f32.gmra.mrb[0].mxu0 %v4871
        %v4939 = vpop.f32.mrb[0].mxu0
        %v4940 = vadd.f32 %v4868, %v4939
        %v4941 = vpop.f32.mrb[0].mxu0
        %4942 = vdwg.mxu0
        %v4943 = vld [vmem:[%s75] sm:$0x1]
        %v4944 = vld [vmem:[%s73] sm:$0x1]
        %v4945 = vadd.f32 %v4769, %v4940
        %v4946 = vsel %vm4733, %v4945, 0.0
        %v4947 = vrot.slane %v4946, 4
        %v4948 = vadd.f32 %v4946, %v4947
        %v4949 = vrot.slane %v4948, 2
        %v4950 = vadd.f32 %v4948, %v4949
        %v4951 = vrot.slane %v4950, 1
        %v4952 = vadd.f32 %v4950, %v4951
        %v4953 = vmul.f32 %v4952, %v4741
        %v4954 = vsub.f32 %v4945, %v4953
        %v4955 = vmul.f32 %v4954, %v4954
        %v4956 = vsel %vm4733, %v4955, 0.0
        %v4957 = vrot.slane %v4956, 4
        %v4958 = vadd.f32 %v4956, %v4957
        %v4959 = vrot.slane %v4958, 2
        %v4960 = vadd.f32 %v4958, %v4959
        %v4961 = vrot.slane %v4960, 1
        %v4962 = vadd.f32 %v4960, %v4961
        %v4963 = vmul.f32 %v4962, %v4741
        %v4964 = vadd.f32 %v4963, 1e-05
        %v4965 = vrsqrt.pop %v4964
        %v4966 = vmul.f32 %v4954, %v4965
        %v4968 = vlaneseq
        %v4969 = vshrl.u32 %v4968, 7
        %v4970 = vsub.s32 0, %v4969
        %v4971 = vrot.slane %v4943, %v4970
        %v4973 = vmul.f32 %v4966, %v4971
        %v4975 = vlaneseq
        %v4976 = vshrl.u32 %v4975, 7
        %v4977 = vsub.s32 0, %v4976
        %v4978 = vrot.slane %v4944, %v4977
        %v4980 = vadd.f32 %v4973, %v4978
        %s4981 = scalar_lea.vmem %s93, 32
        %v4982 = vld [vmem:[%s4981] sm:$0xff]
        %v4983 = vld [vmem:[%s4981 + $0x8] sm:$0xff]
        %v4984 = vld [vmem:[%s4981 + $0x10] sm:$0xff]
        %v4985 = vld [vmem:[%s4981 + $0x18] sm:$0xff]
        %v4987 = vsel %vm2184, %v3443, 0
        %4989 = vmatprep.subr.mxu0 0.0
        %4990 = vmatpush1.msra.mxu0 %v4982
        %4991 = vmatprep.subr.mxu0 0.0
        %4992 = vmatpush1.msra.mxu0 %v4983
        %4993 = vmatprep.subr.mxu0 0.0
        %4994 = vmatpush1.msra.mxu0 %v4984
        %4995 = vmatprep.subr.mxu0 0.0
        %4996 = vmatpush1.msra.mxu0 %v4985
        %4997 = vmatprep.subr.mxu0 0.0
        %4998 = vmatpush1.msra.mxu0 0.0
        %4999 = vmatprep.subr.mxu0 0.0
        %5000 = vmatpush1.msra.mxu0 0.0
        %5001 = vmatprep.subr.mxu0 0.0
        %5002 = vmatpush1.msra.mxu0 0.0
        %5003 = vmatprep.subr.mxu0 0.0
        %5004 = vmatpush1.msra.mxu0 0.0
        %5005 = vmatprep.subr.mxu0 0.0
        %5006 = vmatpush1.msra.mxu0 0.0
        %5007 = vmatprep.subr.mxu0 0.0
        %5008 = vmatpush1.msra.mxu0 0.0
        %5009 = vmatprep.subr.mxu0 0.0
        %5010 = vmatpush1.msra.mxu0 0.0
        %5011 = vmatprep.subr.mxu0 0.0
        %5012 = vmatpush1.msra.mxu0 0.0
        %5013 = vmatprep.subr.mxu0 0.0
        %5014 = vmatpush1.msra.mxu0 0.0
        %5015 = vmatprep.subr.mxu0 0.0
        %5016 = vmatpush1.msra.mxu0 0.0
        %5017 = vmatprep.subr.mxu0 0.0
        %5018 = vmatpush1.msra.mxu0 0.0
        %5019 = vmatprep.subr.mxu0 0.0
        %5020 = vmatpush1.msra.mxu0 0.0
        %5021 = vmatprep.subr.mxu0 0.0
        %5022 = vmatpush1.msra.mxu0 0.0
        %5023 = vmatprep.subr.mxu0 0.0
        %5024 = vmatpush1.msra.mxu0 0.0
        %5025 = vmatprep.subr.mxu0 0.0
        %5026 = vmatpush1.msra.mxu0 0.0
        %5027 = vmatprep.subr.mxu0 0.0
        %5028 = vmatpush1.msra.mxu0 0.0
        %5029 = vmatprep.subr.mxu0 0.0
        %5030 = vmatpush1.msra.mxu0 0.0
        %5031 = vmatprep.subr.mxu0 0.0
        %5032 = vmatpush1.msra.mxu0 0.0
        %5033 = vmatprep.subr.mxu0 0.0
        %5034 = vmatpush1.msra.mxu0 0.0
        %5035 = vmatprep.subr.mxu0 0.0
        %5036 = vmatpush1.msra.mxu0 0.0
        %5037 = vmatprep.subr.mxu0 0.0
        %5038 = vmatpush1.msra.mxu0 0.0
        %5039 = vmatprep.subr.mxu0 0.0
        %5040 = vmatpush1.msra.mxu0 0.0
        %5041 = vmatprep.subr.mxu0 0.0
        %5042 = vmatpush1.msra.mxu0 0.0
        %5043 = vmatprep.subr.mxu0 0.0
        %5044 = vmatpush1.msra.mxu0 0.0
        %5045 = vmatprep.subr.mxu0 0.0
        %5046 = vmatpush1.msra.mxu0 0.0
        %5047 = vmatprep.subr.mxu0 0.0
        %5048 = vmatpush1.msra.mxu0 0.0
        %5049 = vmatprep.subr.mxu0 0.0
        %5050 = vmatpush1.msra.mxu0 0.0
        %5051 = vmatprep.subr.mxu0 0.0
        %5052 = vmatpush1.msra.mxu0 0.0
        %5053 = vmatprep.mubr.f32.mxu0 0.0
        %5054 = vmatmul.mubr.f32.gmra.mrb[0].mxu0 %v4987
        %v5055 = vpop.f32.mrb[0].mxu0
        %v5056 = vadd.f32 0.0, %v5055
        %v5057 = vpop.f32.mrb[0].mxu0
        %5058 = vdwg.mxu0
        %s5059 = scalar_lea.vmem %s91, 32
        %v5060 = vld [vmem:[%s5059] sm:$0xff]
        %v5061 = vld [vmem:[%s5059 + $0x8] sm:$0xff]
        %v5062 = vld [vmem:[%s5059 + $0x10] sm:$0xff]
        %v5063 = vld [vmem:[%s5059 + $0x18] sm:$0xff]
        %v5065 = vsel %vm2184, %v4980, 0
        %5067 = vmatprep.subr.mxu0 0.0
        %5068 = vmatpush1.msra.mxu0 %v5060
        %5069 = vmatprep.subr.mxu0 0.0
        %5070 = vmatpush1.msra.mxu0 %v5061
        %5071 = vmatprep.subr.mxu0 0.0
        %5072 = vmatpush1.msra.mxu0 %v5062
        %5073 = vmatprep.subr.mxu0 0.0
        %5074 = vmatpush1.msra.mxu0 %v5063
        %5075 = vmatprep.subr.mxu0 0.0
        %5076 = vmatpush1.msra.mxu0 0.0
        %5077 = vmatprep.subr.mxu0 0.0
        %5078 = vmatpush1.msra.mxu0 0.0
        %5079 = vmatprep.subr.mxu0 0.0
        %5080 = vmatpush1.msra.mxu0 0.0
        %5081 = vmatprep.subr.mxu0 0.0
        %5082 = vmatpush1.msra.mxu0 0.0
        %5083 = vmatprep.subr.mxu0 0.0
        %5084 = vmatpush1.msra.mxu0 0.0
        %5085 = vmatprep.subr.mxu0 0.0
        %5086 = vmatpush1.msra.mxu0 0.0
        %5087 = vmatprep.subr.mxu0 0.0
        %5088 = vmatpush1.msra.mxu0 0.0
        %5089 = vmatprep.subr.mxu0 0.0
        %5090 = vmatpush1.msra.mxu0 0.0
        %5091 = vmatprep.subr.mxu0 0.0
        %5092 = vmatpush1.msra.mxu0 0.0
        %5093 = vmatprep.subr.mxu0 0.0
        %5094 = vmatpush1.msra.mxu0 0.0
        %5095 = vmatprep.subr.mxu0 0.0
        %5096 = vmatpush1.msra.mxu0 0.0
        %5097 = vmatprep.subr.mxu0 0.0
        %5098 = vmatpush1.msra.mxu0 0.0
        %5099 = vmatprep.subr.mxu0 0.0
        %5100 = vmatpush1.msra.mxu0 0.0
        %5101 = vmatprep.subr.mxu0 0.0
        %5102 = vmatpush1.msra.mxu0 0.0
        %5103 = vmatprep.subr.mxu0 0.0
        %5104 = vmatpush1.msra.mxu0 0.0
        %5105 = vmatprep.subr.mxu0 0.0
        %5106 = vmatpush1.msra.mxu0 0.0
        %5107 = vmatprep.subr.mxu0 0.0
        %5108 = vmatpush1.msra.mxu0 0.0
        %5109 = vmatprep.subr.mxu0 0.0
        %5110 = vmatpush1.msra.mxu0 0.0
        %5111 = vmatprep.subr.mxu0 0.0
        %5112 = vmatpush1.msra.mxu0 0.0
        %5113 = vmatprep.subr.mxu0 0.0
        %5114 = vmatpush1.msra.mxu0 0.0
        %5115 = vmatprep.subr.mxu0 0.0
        %5116 = vmatpush1.msra.mxu0 0.0
        %5117 = vmatprep.subr.mxu0 0.0
        %5118 = vmatpush1.msra.mxu0 0.0
        %5119 = vmatprep.subr.mxu0 0.0
        %5120 = vmatpush1.msra.mxu0 0.0
        %5121 = vmatprep.subr.mxu0 0.0
        %5122 = vmatpush1.msra.mxu0 0.0
        %5123 = vmatprep.subr.mxu0 0.0
        %5124 = vmatpush1.msra.mxu0 0.0
        %5125 = vmatprep.subr.mxu0 0.0
        %5126 = vmatpush1.msra.mxu0 0.0
        %5127 = vmatprep.subr.mxu0 0.0
        %5128 = vmatpush1.msra.mxu0 0.0
        %5129 = vmatprep.subr.mxu0 0.0
        %5130 = vmatpush1.msra.mxu0 0.0
        %5131 = vmatprep.mubr.f32.mxu0 0.0
        %5132 = vmatmul.mubr.f32.gmra.mrb[0].mxu0 %v5065
        %v5133 = vpop.f32.mrb[0].mxu0
        %v5134 = vadd.f32 0.0, %v5133
        %v5135 = vpop.f32.mrb[0].mxu0
        %5136 = vdwg.mxu0
        %5137 = vxpose.xlu0.b32.start [1/16] %v5134, 128
        %5138 = vxpose.xlu0.b32.cont [2/16] 0.0, 128
        %5139 = vxpose.xlu0.b32.cont [3/16] 0.0, 128
        %5140 = vxpose.xlu0.b32.cont [4/16] 0.0, 128
        %5141 = vxpose.xlu0.b32.cont [5/16] 0.0, 128
        %5142 = vxpose.xlu0.b32.cont [6/16] 0.0, 128
        %5143 = vxpose.xlu0.b32.cont [7/16] 0.0, 128
        %5144 = vxpose.xlu0.b32.cont [8/16] 0.0, 128
        %5145 = vxpose.xlu0.b32.cont [9/16] 0.0, 128
        %5146 = vxpose.xlu0.b32.cont [10/16] 0.0, 128
        %5147 = vxpose.xlu0.b32.cont [11/16] 0.0, 128
        %5148 = vxpose.xlu0.b32.cont [12/16] 0.0, 128
        %5149 = vxpose.xlu0.b32.cont [13/16] 0.0, 128
        %5150 = vxpose.xlu0.b32.cont [14/16] 0.0, 128
        %5151 = vxpose.xlu0.b32.cont [15/16] 0.0, 128
        %5152 = vxpose.xlu0.b32.end [16/16] 0.0, 128
        %v5153 = vpop.trf.xlu0
        %v5154 = vpop.trf.xlu0
        %v5155 = vpop.trf.xlu0
        %v5156 = vpop.trf.xlu0
        %v5157 = vpop.trf.xlu0
        %v5158 = vpop.trf.xlu0
        %v5159 = vpop.trf.xlu0
        %v5160 = vpop.trf.xlu0
        %v5161 = vpop.trf.xlu0
        %v5162 = vpop.trf.xlu0
        %v5163 = vpop.trf.xlu0
        %v5164 = vpop.trf.xlu0
        %v5165 = vpop.trf.xlu0
        %v5166 = vpop.trf.xlu0
        %v5167 = vpop.trf.xlu0
        %v5168 = vpop.trf.xlu0
        %v5170 = vsel %vm2367, %v5153, 0
        %v5173 = vsel %vm2367, %v5154, 0
        %v5176 = vsel %vm2367, %v5155, 0
        %v5179 = vsel %vm2367, %v5156, 0
        %5181 = vmatprep.subr.mxu0 0.0
        %5182 = vmatpush1.msra.mxu0 %v2382
        %5183 = vmatprep.subr.mxu0 0.0
        %5184 = vmatpush1.msra.mxu0 0.0
        %5185 = vmatprep.subr.mxu0 0.0
        %5186 = vmatpush1.msra.mxu0 0.0
        %5187 = vmatprep.subr.mxu0 0.0
        %5188 = vmatpush1.msra.mxu0 0.0
        %5189 = vmatprep.subr.mxu0 0.0
        %5190 = vmatpush1.msra.mxu0 0.0
        %5191 = vmatprep.subr.mxu0 0.0
        %5192 = vmatpush1.msra.mxu0 0.0
        %5193 = vmatprep.subr.mxu0 0.0
        %5194 = vmatpush1.msra.mxu0 0.0
        %5195 = vmatprep.subr.mxu0 0.0
        %5196 = vmatpush1.msra.mxu0 0.0
        %5197 = vmatprep.subr.mxu0 0.0
        %5198 = vmatpush1.msra.mxu0 0.0
        %5199 = vmatprep.subr.mxu0 0.0
        %5200 = vmatpush1.msra.mxu0 0.0
        %5201 = vmatprep.subr.mxu0 0.0
        %5202 = vmatpush1.msra.mxu0 0.0
        %5203 = vmatprep.subr.mxu0 0.0
        %5204 = vmatpush1.msra.mxu0 0.0
        %5205 = vmatprep.subr.mxu0 0.0
        %5206 = vmatpush1.msra.mxu0 0.0
        %5207 = vmatprep.subr.mxu0 0.0
        %5208 = vmatpush1.msra.mxu0 0.0
        %5209 = vmatprep.subr.mxu0 0.0
        %5210 = vmatpush1.msra.mxu0 0.0
        %5211 = vmatprep.subr.mxu0 0.0
        %5212 = vmatpush1.msra.mxu0 0.0
        %5213 = vmatprep.subr.mxu0 0.0
        %5214 = vmatpush1.msra.mxu0 0.0
        %5215 = vmatprep.subr.mxu0 0.0
        %5216 = vmatpush1.msra.mxu0 0.0
        %5217 = vmatprep.subr.mxu0 0.0
        %5218 = vmatpush1.msra.mxu0 0.0
        %5219 = vmatprep.subr.mxu0 0.0
        %5220 = vmatpush1.msra.mxu0 0.0
        %5221 = vmatprep.subr.mxu0 0.0
        %5222 = vmatpush1.msra.mxu0 0.0
        %5223 = vmatprep.subr.mxu0 0.0
        %5224 = vmatpush1.msra.mxu0 0.0
        %5225 = vmatprep.subr.mxu0 0.0
        %5226 = vmatpush1.msra.mxu0 0.0
        %5227 = vmatprep.subr.mxu0 0.0
        %5228 = vmatpush1.msra.mxu0 0.0
        %5229 = vmatprep.subr.mxu0 0.0
        %5230 = vmatpush1.msra.mxu0 0.0
        %5231 = vmatprep.subr.mxu0 0.0
        %5232 = vmatpush1.msra.mxu0 0.0
        %5233 = vmatprep.subr.mxu0 0.0
        %5234 = vmatpush1.msra.mxu0 0.0
        %5235 = vmatprep.subr.mxu0 0.0
        %5236 = vmatpush1.msra.mxu0 0.0
        %5237 = vmatprep.subr.mxu0 0.0
        %5238 = vmatpush1.msra.mxu0 0.0
        %5239 = vmatprep.subr.mxu0 0.0
        %5240 = vmatpush1.msra.mxu0 0.0
        %5241 = vmatprep.subr.mxu0 0.0
        %5242 = vmatpush1.msra.mxu0 0.0
        %5243 = vmatprep.subr.mxu0 0.0
        %5244 = vmatpush1.msra.mxu0 0.0
        %5245 = vmatprep.mubr.f32.mxu0 0.0
        %5246 = vmatmul.mubr.f32.gmra.mrb[0].mxu0 %v5170
        %v5247 = vpop.f32.mrb[0].mxu0
        %v5248 = vadd.f32 0.0, %v5247
        %v5249 = vpop.f32.mrb[0].mxu0
        %5250 = vmatprep.mubr.f32.mxu0 0.0
        %5251 = vmatmul.mubr.f32.gmra.mrb[0].mxu0 %v5173
        %v5252 = vpop.f32.mrb[0].mxu0
        %v5253 = vadd.f32 0.0, %v5252
        %v5254 = vpop.f32.mrb[0].mxu0
        %5255 = vmatprep.mubr.f32.mxu0 0.0
        %5256 = vmatmul.mubr.f32.gmra.mrb[0].mxu0 %v5176
        %v5257 = vpop.f32.mrb[0].mxu0
        %v5258 = vadd.f32 0.0, %v5257
        %v5259 = vpop.f32.mrb[0].mxu0
        %5260 = vmatprep.mubr.f32.mxu0 0.0
        %5261 = vmatmul.mubr.f32.gmra.mrb[0].mxu0 %v5179
        %v5262 = vpop.f32.mrb[0].mxu0
        %v5263 = vadd.f32 0.0, %v5262
        %v5264 = vpop.f32.mrb[0].mxu0
        %5265 = vdwg.mxu0
        %v5266 = vmul.f32 %v5248, %v1961
        %v5267 = vmul.f32 %v5253, %v1962
        %v5268 = vmul.f32 %v5258, %v1963
        %v5269 = vmul.f32 %v5263, %v1964
        %v5271 = vsel %vm2184, %v5056, 0
        %5273 = vmatprep.subr.mxu0 0.0
        %5274 = vmatpush1.msra.mxu0 %v5266
        %5275 = vmatprep.subr.mxu0 0.0
        %5276 = vmatpush1.msra.mxu0 %v5267
        %5277 = vmatprep.subr.mxu0 0.0
        %5278 = vmatpush1.msra.mxu0 %v5268
        %5279 = vmatprep.subr.mxu0 0.0
        %5280 = vmatpush1.msra.mxu0 %v5269
        %5281 = vmatprep.subr.mxu0 0.0
        %5282 = vmatpush1.msra.mxu0 0.0
        %5283 = vmatprep.subr.mxu0 0.0
        %5284 = vmatpush1.msra.mxu0 0.0
        %5285 = vmatprep.subr.mxu0 0.0
        %5286 = vmatpush1.msra.mxu0 0.0
        %5287 = vmatprep.subr.mxu0 0.0
        %5288 = vmatpush1.msra.mxu0 0.0
        %5289 = vmatprep.subr.mxu0 0.0
        %5290 = vmatpush1.msra.mxu0 0.0
        %5291 = vmatprep.subr.mxu0 0.0
        %5292 = vmatpush1.msra.mxu0 0.0
        %5293 = vmatprep.subr.mxu0 0.0
        %5294 = vmatpush1.msra.mxu0 0.0
        %5295 = vmatprep.subr.mxu0 0.0
        %5296 = vmatpush1.msra.mxu0 0.0
        %5297 = vmatprep.subr.mxu0 0.0
        %5298 = vmatpush1.msra.mxu0 0.0
        %5299 = vmatprep.subr.mxu0 0.0
        %5300 = vmatpush1.msra.mxu0 0.0
        %5301 = vmatprep.subr.mxu0 0.0
        %5302 = vmatpush1.msra.mxu0 0.0
        %5303 = vmatprep.subr.mxu0 0.0
        %5304 = vmatpush1.msra.mxu0 0.0
        %5305 = vmatprep.subr.mxu0 0.0
        %5306 = vmatpush1.msra.mxu0 0.0
        %5307 = vmatprep.subr.mxu0 0.0
        %5308 = vmatpush1.msra.mxu0 0.0
        %5309 = vmatprep.subr.mxu0 0.0
        %5310 = vmatpush1.msra.mxu0 0.0
        %5311 = vmatprep.subr.mxu0 0.0
        %5312 = vmatpush1.msra.mxu0 0.0
        %5313 = vmatprep.subr.mxu0 0.0
        %5314 = vmatpush1.msra.mxu0 0.0
        %5315 = vmatprep.subr.mxu0 0.0
        %5316 = vmatpush1.msra.mxu0 0.0
        %5317 = vmatprep.subr.mxu0 0.0
        %5318 = vmatpush1.msra.mxu0 0.0
        %5319 = vmatprep.subr.mxu0 0.0
        %5320 = vmatpush1.msra.mxu0 0.0
        %5321 = vmatprep.subr.mxu0 0.0
        %5322 = vmatpush1.msra.mxu0 0.0
        %5323 = vmatprep.subr.mxu0 0.0
        %5324 = vmatpush1.msra.mxu0 0.0
        %5325 = vmatprep.subr.mxu0 0.0
        %5326 = vmatpush1.msra.mxu0 0.0
        %5327 = vmatprep.subr.mxu0 0.0
        %5328 = vmatpush1.msra.mxu0 0.0
        %5329 = vmatprep.subr.mxu0 0.0
        %5330 = vmatpush1.msra.mxu0 0.0
        %5331 = vmatprep.subr.mxu0 0.0
        %5332 = vmatpush1.msra.mxu0 0.0
        %5333 = vmatprep.subr.mxu0 0.0
        %5334 = vmatpush1.msra.mxu0 0.0
        %5335 = vmatprep.subr.mxu0 0.0
        %5336 = vmatpush1.msra.mxu0 0.0
        %5337 = vmatprep.mubr.f32.mxu0 0.0
        %5338 = vmatmul.mubr.f32.gmra.mrb[0].mxu0 %v5271
        %v5339 = vpop.f32.mrb[0].mxu0
        %v5340 = vadd.f32 0.0, %v5339
        %v5341 = vpop.f32.mrb[0].mxu0
        %5342 = vdwg.mxu0
        %s5343 = scalar_lea.vmem %s89, 32
        %v5344 = vld [vmem:[%s5343] sm:$0xff]
        %v5345 = vld [vmem:[%s5343 + $0x8] sm:$0xff]
        %v5346 = vld [vmem:[%s5343 + $0x10] sm:$0xff]
        %v5347 = vld [vmem:[%s5343 + $0x18] sm:$0xff]
        %s5348 = scalar_lea.vmem %s87, 8
        %v5349 = vld [vmem:[%s5348] sm:$0xff]
        %v5351 = vcombine.high %v5349, %v5349
        %v5352 = vsel %vm2380, %v5349, 0
        %v5354 = vsel %vm2380, %v5351, 0
        %5356 = vmatprep.subr.mxu0 %v5354
        %5357 = vmatpush1.msra.mxu0 %v5352
        %5358 = vmatprep.subr.mxu0 0.0
        %5359 = vmatpush1.msra.mxu0 0.0
        %5360 = vmatprep.subr.mxu0 0.0
        %5361 = vmatpush1.msra.mxu0 0.0
        %5362 = vmatprep.subr.mxu0 0.0
        %5363 = vmatpush1.msra.mxu0 0.0
        %5364 = vmatprep.subr.mxu0 0.0
        %5365 = vmatpush1.msra.mxu0 0.0
        %5366 = vmatprep.subr.mxu0 0.0
        %5367 = vmatpush1.msra.mxu0 0.0
        %5368 = vmatprep.subr.mxu0 0.0
        %5369 = vmatpush1.msra.mxu0 0.0
        %5370 = vmatprep.subr.mxu0 0.0
        %5371 = vmatpush1.msra.mxu0 0.0
        %5372 = vmatprep.subr.mxu0 0.0
        %5373 = vmatpush1.msra.mxu0 0.0
        %5374 = vmatprep.subr.mxu0 0.0
        %5375 = vmatpush1.msra.mxu0 0.0
        %5376 = vmatprep.subr.mxu0 0.0
        %5377 = vmatpush1.msra.mxu0 0.0
        %5378 = vmatprep.subr.mxu0 0.0
        %5379 = vmatpush1.msra.mxu0 0.0
        %5380 = vmatprep.subr.mxu0 0.0
        %5381 = vmatpush1.msra.mxu0 0.0
        %5382 = vmatprep.subr.mxu0 0.0
        %5383 = vmatpush1.msra.mxu0 0.0
        %5384 = vmatprep.subr.mxu0 0.0
        %5385 = vmatpush1.msra.mxu0 0.0
        %5386 = vmatprep.subr.mxu0 0.0
        %5387 = vmatpush1.msra.mxu0 0.0
        %5388 = vmatprep.subr.mxu0 0.0
        %5389 = vmatpush1.msra.mxu0 0.0
        %5390 = vmatprep.subr.mxu0 0.0
        %5391 = vmatpush1.msra.mxu0 0.0
        %5392 = vmatprep.subr.mxu0 0.0
        %5393 = vmatpush1.msra.mxu0 0.0
        %5394 = vmatprep.subr.mxu0 0.0
        %5395 = vmatpush1.msra.mxu0 0.0
        %5396 = vmatprep.subr.mxu0 0.0
        %5397 = vmatpush1.msra.mxu0 0.0
        %5398 = vmatprep.subr.mxu0 0.0
        %5399 = vmatpush1.msra.mxu0 0.0
        %5400 = vmatprep.subr.mxu0 0.0
        %5401 = vmatpush1.msra.mxu0 0.0
        %5402 = vmatprep.subr.mxu0 0.0
        %5403 = vmatpush1.msra.mxu0 0.0
        %5404 = vmatprep.subr.mxu0 0.0
        %5405 = vmatpush1.msra.mxu0 0.0
        %5406 = vmatprep.subr.mxu0 0.0
        %5407 = vmatpush1.msra.mxu0 0.0
        %5408 = vmatprep.subr.mxu0 0.0
        %5409 = vmatpush1.msra.mxu0 0.0
        %5410 = vmatprep.subr.mxu0 0.0
        %5411 = vmatpush1.msra.mxu0 0.0
        %5412 = vmatprep.subr.mxu0 0.0
        %5413 = vmatpush1.msra.mxu0 0.0
        %5414 = vmatprep.subr.mxu0 0.0
        %5415 = vmatpush1.msra.mxu0 0.0
        %5416 = vmatprep.subr.mxu0 0.0
        %5417 = vmatpush1.msra.mxu0 0.0
        %5418 = vmatprep.subr.mxu0 0.0
        %5419 = vmatpush1.msra.mxu0 0.0
        %5420 = vmatprep.mubr.f32.mxu0 0.0
        %5421 = vmatmul.mubr.f32.gmra.mrb[0].mxu0 %v2554
        %v5422 = vpop.f32.mrb[0].mxu0
        %v5423 = vadd.f32 0.0, %v5422
        %v5424 = vpop.f32.mrb[0].mxu0
        %v5425 = vadd.f32 0.0, %v5424
        %5426 = vdwg.mxu0
        %v5428 = vsel %vm2631, %v5340, 0
        %5430 = vmatprep.subr.mxu0 %v5345
        %5431 = vmatpush1.msra.mxu0 %v5344
        %5432 = vmatprep.subr.mxu0 %v5347
        %5433 = vmatpush1.msra.mxu0 %v5346
        %5434 = vmatprep.subr.mxu0 0.0
        %5435 = vmatpush1.msra.mxu0 0.0
        %5436 = vmatprep.subr.mxu0 0.0
        %5437 = vmatpush1.msra.mxu0 0.0
        %5438 = vmatprep.subr.mxu0 0.0
        %5439 = vmatpush1.msra.mxu0 0.0
        %5440 = vmatprep.subr.mxu0 0.0
        %5441 = vmatpush1.msra.mxu0 0.0
        %5442 = vmatprep.subr.mxu0 0.0
        %5443 = vmatpush1.msra.mxu0 0.0
        %5444 = vmatprep.subr.mxu0 0.0
        %5445 = vmatpush1.msra.mxu0 0.0
        %5446 = vmatprep.subr.mxu0 0.0
        %5447 = vmatpush1.msra.mxu0 0.0
        %5448 = vmatprep.subr.mxu0 0.0
        %5449 = vmatpush1.msra.mxu0 0.0
        %5450 = vmatprep.subr.mxu0 0.0
        %5451 = vmatpush1.msra.mxu0 0.0
        %5452 = vmatprep.subr.mxu0 0.0
        %5453 = vmatpush1.msra.mxu0 0.0
        %5454 = vmatprep.subr.mxu0 0.0
        %5455 = vmatpush1.msra.mxu0 0.0
        %5456 = vmatprep.subr.mxu0 0.0
        %5457 = vmatpush1.msra.mxu0 0.0
        %5458 = vmatprep.subr.mxu0 0.0
        %5459 = vmatpush1.msra.mxu0 0.0
        %5460 = vmatprep.subr.mxu0 0.0
        %5461 = vmatpush1.msra.mxu0 0.0
        %5462 = vmatprep.subr.mxu0 0.0
        %5463 = vmatpush1.msra.mxu0 0.0
        %5464 = vmatprep.subr.mxu0 0.0
        %5465 = vmatpush1.msra.mxu0 0.0
        %5466 = vmatprep.subr.mxu0 0.0
        %5467 = vmatpush1.msra.mxu0 0.0
        %5468 = vmatprep.subr.mxu0 0.0
        %5469 = vmatpush1.msra.mxu0 0.0
        %5470 = vmatprep.subr.mxu0 0.0
        %5471 = vmatpush1.msra.mxu0 0.0
        %5472 = vmatprep.subr.mxu0 0.0
        %5473 = vmatpush1.msra.mxu0 0.0
        %5474 = vmatprep.subr.mxu0 0.0
        %5475 = vmatpush1.msra.mxu0 0.0
        %5476 = vmatprep.subr.mxu0 0.0
        %5477 = vmatpush1.msra.mxu0 0.0
        %5478 = vmatprep.subr.mxu0 0.0
        %5479 = vmatpush1.msra.mxu0 0.0
        %5480 = vmatprep.subr.mxu0 0.0
        %5481 = vmatpush1.msra.mxu0 0.0
        %5482 = vmatprep.subr.mxu0 0.0
        %5483 = vmatpush1.msra.mxu0 0.0
        %5484 = vmatprep.subr.mxu0 0.0
        %5485 = vmatpush1.msra.mxu0 0.0
        %5486 = vmatprep.subr.mxu0 0.0
        %5487 = vmatpush1.msra.mxu0 0.0
        %5488 = vmatprep.subr.mxu0 0.0
        %5489 = vmatpush1.msra.mxu0 0.0
        %5490 = vmatprep.subr.mxu0 0.0
        %5491 = vmatpush1.msra.mxu0 0.0
        %5492 = vmatprep.subr.mxu0 0.0
        %5493 = vmatpush1.msra.mxu0 0.0
        %5494 = vmatprep.mubr.f32.mxu0 0.0
        %5495 = vmatmul.mubr.f32.gmra.mrb[0].mxu0 %v5428
        %v5496 = vpop.f32.mrb[0].mxu0
        %v5497 = vadd.f32 %v5423, %v5496
        %v5498 = vpop.f32.mrb[0].mxu0
        %v5499 = vadd.f32 %v5425, %v5498
        %5500 = vdwg.mxu0
        %s5501 = scalar_lea.vmem %s95, 2
        %v5502 = vld [vmem:[%s5501] sm:$0x3]
        %v5504 = vlaneseq
        %v5505 = vshrl.u32 %v5504, 7
        %v5506 = vsub.s32 0, %v5505
        %v5507 = vrot.slane %v5502, %v5506
        %v5508 = vlaneseq
        %v5509 = vshrl.u32 %v5508, 7
        %v5510 = vsub.s32 1, %v5509
        %v5511 = vrot.slane %v5502, %v5510
        %v5514 = vadd.f32 %v5497, %v5507
        %v5515 = vadd.f32 %v5499, %v5511
        %v5516 = vmax.f32 %v5514, 0.0
        %v5517 = vmax.f32 %v5515, 0.0
        %s5518 = scalar_lea.vmem %s85, 256
        %v5519 = vld [vmem:[%s5518] sm:$0xff]
        %v5520 = vld [vmem:[%s5518 + $0x8] sm:$0xff]
        %v5521 = vld [vmem:[%s5518 + $0x10] sm:$0xff]
        %v5522 = vld [vmem:[%s5518 + $0x18] sm:$0xff]
        %v5523 = vld [vmem:[%s5518 + $0x20] sm:$0xff]
        %v5524 = vld [vmem:[%s5518 + $0x28] sm:$0xff]
        %v5525 = vld [vmem:[%s5518 + $0x30] sm:$0xff]
        %v5526 = vld [vmem:[%s5518 + $0x38] sm:$0xff]
        %v5527 = vld [vmem:[%s5518 + $0x40] sm:$0xff]
        %v5528 = vld [vmem:[%s5518 + $0x48] sm:$0xff]
        %v5529 = vld [vmem:[%s5518 + $0x50] sm:$0xff]
        %v5530 = vld [vmem:[%s5518 + $0x58] sm:$0xff]
        %v5531 = vld [vmem:[%s5518 + $0x60] sm:$0xff]
        %v5532 = vld [vmem:[%s5518 + $0x68] sm:$0xff]
        %v5533 = vld [vmem:[%s5518 + $0x70] sm:$0xff]
        %v5534 = vld [vmem:[%s5518 + $0x78] sm:$0xff]
        %v5535 = vld [vmem:[%s5518 + $0x80] sm:$0xff]
        %v5536 = vld [vmem:[%s5518 + $0x88] sm:$0xff]
        %v5537 = vld [vmem:[%s5518 + $0x90] sm:$0xff]
        %v5538 = vld [vmem:[%s5518 + $0x98] sm:$0xff]
        %v5539 = vld [vmem:[%s5518 + $0xa0] sm:$0xff]
        %v5540 = vld [vmem:[%s5518 + $0xa8] sm:$0xff]
        %v5541 = vld [vmem:[%s5518 + $0xb0] sm:$0xff]
        %v5542 = vld [vmem:[%s5518 + $0xb8] sm:$0xff]
        %v5543 = vld [vmem:[%s5518 + $0xc0] sm:$0xff]
        %v5544 = vld [vmem:[%s5518 + $0xc8] sm:$0xff]
        %v5545 = vld [vmem:[%s5518 + $0xd0] sm:$0xff]
        %v5546 = vld [vmem:[%s5518 + $0xd8] sm:$0xff]
        %v5547 = vld [vmem:[%s5518 + $0xe0] sm:$0xff]
        %v5548 = vld [vmem:[%s5518 + $0xe8] sm:$0xff]
        %v5549 = vld [vmem:[%s5518 + $0xf0] sm:$0xff]
        %v5550 = vld [vmem:[%s5518 + $0xf8] sm:$0xff]
        %s5551 = scalar_lea.vmem [#allocation7], 1
        %v5552 = vld [vmem:[%s5551] sm:$0x1]
        %v5554 = vlaneseq
        %v5555 = vshrl.u32 %v5554, 7
        %v5556 = vsub.s32 0, %v5555
        %v5557 = vrot.slane %v5552, %v5556
        %5559 = vmatprep.subr.mxu0 0.0
        %5560 = vmatpush1.msra.mxu0 %v5519
        %5561 = vmatprep.subr.mxu0 0.0
        %5562 = vmatpush1.msra.mxu0 %v5520
        %5563 = vmatprep.subr.mxu0 0.0
        %5564 = vmatpush1.msra.mxu0 %v5521
        %5565 = vmatprep.subr.mxu0 0.0
        %5566 = vmatpush1.msra.mxu0 %v5522
        %5567 = vmatprep.subr.mxu0 0.0
        %5568 = vmatpush1.msra.mxu0 %v5523
        %5569 = vmatprep.subr.mxu0 0.0
        %5570 = vmatpush1.msra.mxu0 %v5524
        %5571 = vmatprep.subr.mxu0 0.0
        %5572 = vmatpush1.msra.mxu0 %v5525
        %5573 = vmatprep.subr.mxu0 0.0
        %5574 = vmatpush1.msra.mxu0 %v5526
        %5575 = vmatprep.subr.mxu0 0.0
        %5576 = vmatpush1.msra.mxu0 %v5527
        %5577 = vmatprep.subr.mxu0 0.0
        %5578 = vmatpush1.msra.mxu0 %v5528
        %5579 = vmatprep.subr.mxu0 0.0
        %5580 = vmatpush1.msra.mxu0 %v5529
        %5581 = vmatprep.subr.mxu0 0.0
        %5582 = vmatpush1.msra.mxu0 %v5530
        %5583 = vmatprep.subr.mxu0 0.0
        %5584 = vmatpush1.msra.mxu0 %v5531
        %5585 = vmatprep.subr.mxu0 0.0
        %5586 = vmatpush1.msra.mxu0 %v5532
        %5587 = vmatprep.subr.mxu0 0.0
        %5588 = vmatpush1.msra.mxu0 %v5533
        %5589 = vmatprep.subr.mxu0 0.0
        %5590 = vmatpush1.msra.mxu0 %v5534
        %5591 = vmatprep.subr.mxu0 0.0
        %5592 = vmatpush1.msra.mxu0 %v5535
        %5593 = vmatprep.subr.mxu0 0.0
        %5594 = vmatpush1.msra.mxu0 %v5536
        %5595 = vmatprep.subr.mxu0 0.0
        %5596 = vmatpush1.msra.mxu0 %v5537
        %5597 = vmatprep.subr.mxu0 0.0
        %5598 = vmatpush1.msra.mxu0 %v5538
        %5599 = vmatprep.subr.mxu0 0.0
        %5600 = vmatpush1.msra.mxu0 %v5539
        %5601 = vmatprep.subr.mxu0 0.0
        %5602 = vmatpush1.msra.mxu0 %v5540
        %5603 = vmatprep.subr.mxu0 0.0
        %5604 = vmatpush1.msra.mxu0 %v5541
        %5605 = vmatprep.subr.mxu0 0.0
        %5606 = vmatpush1.msra.mxu0 %v5542
        %5607 = vmatprep.subr.mxu0 0.0
        %5608 = vmatpush1.msra.mxu0 %v5543
        %5609 = vmatprep.subr.mxu0 0.0
        %5610 = vmatpush1.msra.mxu0 %v5544
        %5611 = vmatprep.subr.mxu0 0.0
        %5612 = vmatpush1.msra.mxu0 %v5545
        %5613 = vmatprep.subr.mxu0 0.0
        %5614 = vmatpush1.msra.mxu0 %v5546
        %5615 = vmatprep.subr.mxu0 0.0
        %5616 = vmatpush1.msra.mxu0 %v5547
        %5617 = vmatprep.subr.mxu0 0.0
        %5618 = vmatpush1.msra.mxu0 %v5548
        %5619 = vmatprep.subr.mxu0 0.0
        %5620 = vmatpush1.msra.mxu0 %v5549
        %5621 = vmatprep.subr.mxu0 0.0
        %5622 = vmatpush1.msra.mxu0 %v5550
        %5623 = vmatprep.mubr.f32.mxu0 %v5517
        %5624 = vmatmul.mubr.f32.gmra.mrb[0].mxu0 %v5516
        %v5625 = vpop.f32.mrb[0].mxu0
        %v5626 = vadd.f32 %v5557, %v5625
        %v5627 = vpop.f32.mrb[0].mxu0
        %5628 = vdwg.mxu0
        %v5629 = vsel %vm2367, %v5626, -inf
        %5630 = vmax.xlane.f32.xlu0 %v5629
        %v5631 = vpop.xlane.xlu0 %5630
        %v5632 = vmul.f32 %v5631, %v2837
        %v5633 = vadd.f32 %v5632, 0.0
        %v5634 = vsel %vm2840, %v5626, -inf
        %5635 = vmax.xlane.f32.xlu0 %v5634
        %v5636 = vpop.xlane.xlu0 %5635
        %v5637 = vmul.f32 %v5636, %v2847
        %v5638 = vadd.f32 %v5633, %v5637
        %v5639 = vsel %vm2850, %v5626, -inf
        %5640 = vmax.xlane.f32.xlu0 %v5639
        %v5641 = vpop.xlane.xlu0 %5640
        %v5642 = vmul.f32 %v5641, %v2857
        %v5643 = vadd.f32 %v5638, %v5642
        %v5644 = vsel %vm2860, %v5626, -inf
        %5645 = vmax.xlane.f32.xlu0 %v5644
        %v5646 = vpop.xlane.xlu0 %5645
        %v5647 = vmul.f32 %v5646, %v2867
        %v5648 = vadd.f32 %v5643, %v5647
        %v5649 = vsub.f32 %v5626, %v5648
        %v5650 = vmul.f32 %v5649, 1.442695
        %v5651 = vpow.pop %v5650
        %v5653 = vsel %vm2631, %v5651, 0
        %5655 = vmatprep.subr.mxu0 0.0
        %5656 = vmatpush1.msra.mxu0 %v1968
        %5657 = vmatprep.subr.mxu0 0.0
        %5658 = vmatpush1.msra.mxu0 %v1969
        %5659 = vmatprep.subr.mxu0 0.0
        %5660 = vmatpush1.msra.mxu0 0.0
        %5661 = vmatprep.subr.mxu0 0.0
        %5662 = vmatpush1.msra.mxu0 0.0
        %5663 = vmatprep.subr.mxu0 0.0
        %5664 = vmatpush1.msra.mxu0 0.0
        %5665 = vmatprep.subr.mxu0 0.0
        %5666 = vmatpush1.msra.mxu0 0.0
        %5667 = vmatprep.subr.mxu0 0.0
        %5668 = vmatpush1.msra.mxu0 0.0
        %5669 = vmatprep.subr.mxu0 0.0
        %5670 = vmatpush1.msra.mxu0 0.0
        %5671 = vmatprep.subr.mxu0 0.0
        %5672 = vmatpush1.msra.mxu0 0.0
        %5673 = vmatprep.subr.mxu0 0.0
        %5674 = vmatpush1.msra.mxu0 0.0
        %5675 = vmatprep.subr.mxu0 0.0
        %5676 = vmatpush1.msra.mxu0 0.0
        %5677 = vmatprep.subr.mxu0 0.0
        %5678 = vmatpush1.msra.mxu0 0.0
        %5679 = vmatprep.subr.mxu0 0.0
        %5680 = vmatpush1.msra.mxu0 0.0
        %5681 = vmatprep.subr.mxu0 0.0
        %5682 = vmatpush1.msra.mxu0 0.0
        %5683 = vmatprep.subr.mxu0 0.0
        %5684 = vmatpush1.msra.mxu0 0.0
        %5685 = vmatprep.subr.mxu0 0.0
        %5686 = vmatpush1.msra.mxu0 0.0
        %5687 = vmatprep.subr.mxu0 0.0
        %5688 = vmatpush1.msra.mxu0 0.0
        %5689 = vmatprep.subr.mxu0 0.0
        %5690 = vmatpush1.msra.mxu0 0.0
        %5691 = vmatprep.subr.mxu0 0.0
        %5692 = vmatpush1.msra.mxu0 0.0
        %5693 = vmatprep.subr.mxu0 0.0
        %5694 = vmatpush1.msra.mxu0 0.0
        %5695 = vmatprep.subr.mxu0 0.0
        %5696 = vmatpush1.msra.mxu0 0.0
        %5697 = vmatprep.subr.mxu0 0.0
        %5698 = vmatpush1.msra.mxu0 0.0
        %5699 = vmatprep.subr.mxu0 0.0
        %5700 = vmatpush1.msra.mxu0 0.0
        %5701 = vmatprep.subr.mxu0 0.0
        %5702 = vmatpush1.msra.mxu0 0.0
        %5703 = vmatprep.subr.mxu0 0.0
        %5704 = vmatpush1.msra.mxu0 0.0
        %5705 = vmatprep.subr.mxu0 0.0
        %5706 = vmatpush1.msra.mxu0 0.0
        %5707 = vmatprep.subr.mxu0 0.0
        %5708 = vmatpush1.msra.mxu0 0.0
        %5709 = vmatprep.subr.mxu0 0.0
        %5710 = vmatpush1.msra.mxu0 0.0
        %5711 = vmatprep.subr.mxu0 0.0
        %5712 = vmatpush1.msra.mxu0 0.0
        %5713 = vmatprep.subr.mxu0 0.0
        %5714 = vmatpush1.msra.mxu0 0.0
        %5715 = vmatprep.subr.mxu0 0.0
        %5716 = vmatpush1.msra.mxu0 0.0
        %5717 = vmatprep.subr.mxu0 0.0
        %5718 = vmatpush1.msra.mxu0 0.0
        %5719 = vmatprep.mubr.f32.mxu0 0.0
        %5720 = vmatmul.mubr.f32.gmra.mrb[0].mxu0 %v5653
        %v5721 = vpop.f32.mrb[0].mxu0
        %v5722 = vadd.f32 0.0, %v5721
        %v5723 = vpop.f32.mrb[0].mxu0
        %5724 = vdwg.mxu0
        %v5725 = vrcp.pop %v5722
        %v5726 = vmul.f32 %v5651, %v5725
        %5728 = vrot.lane.b32.xlu0 %v5134, 96
        %v5729 = vpop.permute.xlu0 %5728
        %v5730 = vsel %vm2380, %v5729, 0
        %5732 = vmatprep.subr.mxu0 0.0
        %5733 = vmatpush1.msra.mxu0 %v5730
        %5734 = vmatprep.subr.mxu0 0.0
        %5735 = vmatpush1.msra.mxu0 0.0
        %5736 = vmatprep.subr.mxu0 0.0
        %5737 = vmatpush1.msra.mxu0 0.0
        %5738 = vmatprep.subr.mxu0 0.0
        %5739 = vmatpush1.msra.mxu0 0.0
        %5740 = vmatprep.subr.mxu0 0.0
        %5741 = vmatpush1.msra.mxu0 0.0
        %5742 = vmatprep.subr.mxu0 0.0
        %5743 = vmatpush1.msra.mxu0 0.0
        %5744 = vmatprep.subr.mxu0 0.0
        %5745 = vmatpush1.msra.mxu0 0.0
        %5746 = vmatprep.subr.mxu0 0.0
        %5747 = vmatpush1.msra.mxu0 0.0
        %5748 = vmatprep.subr.mxu0 0.0
        %5749 = vmatpush1.msra.mxu0 0.0
        %5750 = vmatprep.subr.mxu0 0.0
        %5751 = vmatpush1.msra.mxu0 0.0
        %5752 = vmatprep.subr.mxu0 0.0
        %5753 = vmatpush1.msra.mxu0 0.0
        %5754 = vmatprep.subr.mxu0 0.0
        %5755 = vmatpush1.msra.mxu0 0.0
        %5756 = vmatprep.subr.mxu0 0.0
        %5757 = vmatpush1.msra.mxu0 0.0
        %5758 = vmatprep.subr.mxu0 0.0
        %5759 = vmatpush1.msra.mxu0 0.0
        %5760 = vmatprep.subr.mxu0 0.0
        %5761 = vmatpush1.msra.mxu0 0.0
        %5762 = vmatprep.subr.mxu0 0.0
        %5763 = vmatpush1.msra.mxu0 0.0
        %5764 = vmatprep.subr.mxu0 0.0
        %5765 = vmatpush1.msra.mxu0 0.0
        %5766 = vmatprep.subr.mxu0 0.0
        %5767 = vmatpush1.msra.mxu0 0.0
        %5768 = vmatprep.subr.mxu0 0.0
        %5769 = vmatpush1.msra.mxu0 0.0
        %5770 = vmatprep.subr.mxu0 0.0
        %5771 = vmatpush1.msra.mxu0 0.0
        %5772 = vmatprep.subr.mxu0 0.0
        %5773 = vmatpush1.msra.mxu0 0.0
        %5774 = vmatprep.subr.mxu0 0.0
        %5775 = vmatpush1.msra.mxu0 0.0
        %5776 = vmatprep.subr.mxu0 0.0
        %5777 = vmatpush1.msra.mxu0 0.0
        %5778 = vmatprep.subr.mxu0 0.0
        %5779 = vmatpush1.msra.mxu0 0.0
        %5780 = vmatprep.subr.mxu0 0.0
        %5781 = vmatpush1.msra.mxu0 0.0
        %5782 = vmatprep.subr.mxu0 0.0
        %5783 = vmatpush1.msra.mxu0 0.0
        %5784 = vmatprep.subr.mxu0 0.0
        %5785 = vmatpush1.msra.mxu0 0.0
        %5786 = vmatprep.subr.mxu0 0.0
        %5787 = vmatpush1.msra.mxu0 0.0
        %5788 = vmatprep.subr.mxu0 0.0
        %5789 = vmatpush1.msra.mxu0 0.0
        %5790 = vmatprep.subr.mxu0 0.0
        %5791 = vmatpush1.msra.mxu0 0.0
        %5792 = vmatprep.subr.mxu0 0.0
        %5793 = vmatpush1.msra.mxu0 0.0
        %5794 = vmatprep.subr.mxu0 0.0
        %5795 = vmatpush1.msra.mxu0 0.0
        %5796 = vmatprep.mubr.f32.mxu0 0.0
        %5797 = vmatmul.mubr.f32.gmra.mrb[0].mxu0 %v2952
        %v5798 = vpop.f32.mrb[0].mxu0
        %v5799 = vadd.f32 0.0, %v5798
        %v5800 = vpop.f32.mrb[0].mxu0
        %5801 = vmatprep.mubr.f32.mxu0 0.0
        %5802 = vmatmul.mubr.f32.gmra.mrb[0].mxu0 %v2955
        %v5803 = vpop.f32.mrb[0].mxu0
        %v5804 = vadd.f32 0.0, %v5803
        %v5805 = vpop.f32.mrb[0].mxu0
        %5806 = vdwg.mxu0
        %v5807 = vmul.f32 %v5799, %v1970
        %v5808 = vmul.f32 %v5804, %v1971
        %v5810 = vsel %vm2631, %v5726, 0
        %5812 = vmatprep.subr.mxu0 0.0
        %5813 = vmatpush1.msra.mxu0 %v5807
        %5814 = vmatprep.subr.mxu0 0.0
        %5815 = vmatpush1.msra.mxu0 %v5808
        %5816 = vmatprep.subr.mxu0 0.0
        %5817 = vmatpush1.msra.mxu0 0.0
        %5818 = vmatprep.subr.mxu0 0.0
        %5819 = vmatpush1.msra.mxu0 0.0
        %5820 = vmatprep.subr.mxu0 0.0
        %5821 = vmatpush1.msra.mxu0 0.0
        %5822 = vmatprep.subr.mxu0 0.0
        %5823 = vmatpush1.msra.mxu0 0.0
        %5824 = vmatprep.subr.mxu0 0.0
        %5825 = vmatpush1.msra.mxu0 0.0
        %5826 = vmatprep.subr.mxu0 0.0
        %5827 = vmatpush1.msra.mxu0 0.0
        %5828 = vmatprep.subr.mxu0 0.0
        %5829 = vmatpush1.msra.mxu0 0.0
        %5830 = vmatprep.subr.mxu0 0.0
        %5831 = vmatpush1.msra.mxu0 0.0
        %5832 = vmatprep.subr.mxu0 0.0
        %5833 = vmatpush1.msra.mxu0 0.0
        %5834 = vmatprep.subr.mxu0 0.0
        %5835 = vmatpush1.msra.mxu0 0.0
        %5836 = vmatprep.subr.mxu0 0.0
        %5837 = vmatpush1.msra.mxu0 0.0
        %5838 = vmatprep.subr.mxu0 0.0
        %5839 = vmatpush1.msra.mxu0 0.0
        %5840 = vmatprep.subr.mxu0 0.0
        %5841 = vmatpush1.msra.mxu0 0.0
        %5842 = vmatprep.subr.mxu0 0.0
        %5843 = vmatpush1.msra.mxu0 0.0
        %5844 = vmatprep.subr.mxu0 0.0
        %5845 = vmatpush1.msra.mxu0 0.0
        %5846 = vmatprep.subr.mxu0 0.0
        %5847 = vmatpush1.msra.mxu0 0.0
        %5848 = vmatprep.subr.mxu0 0.0
        %5849 = vmatpush1.msra.mxu0 0.0
        %5850 = vmatprep.subr.mxu0 0.0
        %5851 = vmatpush1.msra.mxu0 0.0
        %5852 = vmatprep.subr.mxu0 0.0
        %5853 = vmatpush1.msra.mxu0 0.0
        %5854 = vmatprep.subr.mxu0 0.0
        %5855 = vmatpush1.msra.mxu0 0.0
        %5856 = vmatprep.subr.mxu0 0.0
        %5857 = vmatpush1.msra.mxu0 0.0
        %5858 = vmatprep.subr.mxu0 0.0
        %5859 = vmatpush1.msra.mxu0 0.0
        %5860 = vmatprep.subr.mxu0 0.0
        %5861 = vmatpush1.msra.mxu0 0.0
        %5862 = vmatprep.subr.mxu0 0.0
        %5863 = vmatpush1.msra.mxu0 0.0
        %5864 = vmatprep.subr.mxu0 0.0
        %5865 = vmatpush1.msra.mxu0 0.0
        %5866 = vmatprep.subr.mxu0 0.0
        %5867 = vmatpush1.msra.mxu0 0.0
        %5868 = vmatprep.subr.mxu0 0.0
        %5869 = vmatpush1.msra.mxu0 0.0
        %5870 = vmatprep.subr.mxu0 0.0
        %5871 = vmatpush1.msra.mxu0 0.0
        %5872 = vmatprep.subr.mxu0 0.0
        %5873 = vmatpush1.msra.mxu0 0.0
        %5874 = vmatprep.subr.mxu0 0.0
        %5875 = vmatpush1.msra.mxu0 0.0
        %5876 = vmatprep.mubr.f32.mxu0 0.0
        %5877 = vmatmul.mubr.f32.gmra.mrb[0].mxu0 %v5810
        %v5878 = vpop.f32.mrb[0].mxu0
        %v5879 = vadd.f32 0.0, %v5878
        %v5880 = vpop.f32.mrb[0].mxu0
        %5881 = vdwg.mxu0
        %s5882 = scalar_lea.vmem %s99, 32
        %v5883 = vld [vmem:[%s5882] sm:$0xff]
        %v5884 = vld [vmem:[%s5882 + $0x8] sm:$0xff]
        %v5885 = vld [vmem:[%s5882 + $0x10] sm:$0xff]
        %v5886 = vld [vmem:[%s5882 + $0x18] sm:$0xff]
        %s5887 = scalar_lea.vmem [#allocation9], 1
        %v5888 = vld [vmem:[%s5887] sm:$0x1]
        %v5890 = vlaneseq
        %v5891 = vshrl.u32 %v5890, 7
        %v5892 = vsub.s32 0, %v5891
        %v5893 = vrot.slane %v5888, %v5892
        %v5896 = vsel %vm2184, %v5879, 0
        %5898 = vmatprep.subr.mxu0 0.0
        %5899 = vmatpush1.msra.mxu0 %v5883
        %5900 = vmatprep.subr.mxu0 0.0
        %5901 = vmatpush1.msra.mxu0 %v5884
        %5902 = vmatprep.subr.mxu0 0.0
        %5903 = vmatpush1.msra.mxu0 %v5885
        %5904 = vmatprep.subr.mxu0 0.0
        %5905 = vmatpush1.msra.mxu0 %v5886
        %5906 = vmatprep.subr.mxu0 0.0
        %5907 = vmatpush1.msra.mxu0 0.0
        %5908 = vmatprep.subr.mxu0 0.0
        %5909 = vmatpush1.msra.mxu0 0.0
        %5910 = vmatprep.subr.mxu0 0.0
        %5911 = vmatpush1.msra.mxu0 0.0
        %5912 = vmatprep.subr.mxu0 0.0
        %5913 = vmatpush1.msra.mxu0 0.0
        %5914 = vmatprep.subr.mxu0 0.0
        %5915 = vmatpush1.msra.mxu0 0.0
        %5916 = vmatprep.subr.mxu0 0.0
        %5917 = vmatpush1.msra.mxu0 0.0
        %5918 = vmatprep.subr.mxu0 0.0
        %5919 = vmatpush1.msra.mxu0 0.0
        %5920 = vmatprep.subr.mxu0 0.0
        %5921 = vmatpush1.msra.mxu0 0.0
        %5922 = vmatprep.subr.mxu0 0.0
        %5923 = vmatpush1.msra.mxu0 0.0
        %5924 = vmatprep.subr.mxu0 0.0
        %5925 = vmatpush1.msra.mxu0 0.0
        %5926 = vmatprep.subr.mxu0 0.0
        %5927 = vmatpush1.msra.mxu0 0.0
        %5928 = vmatprep.subr.mxu0 0.0
        %5929 = vmatpush1.msra.mxu0 0.0
        %5930 = vmatprep.subr.mxu0 0.0
        %5931 = vmatpush1.msra.mxu0 0.0
        %5932 = vmatprep.subr.mxu0 0.0
        %5933 = vmatpush1.msra.mxu0 0.0
        %5934 = vmatprep.subr.mxu0 0.0
        %5935 = vmatpush1.msra.mxu0 0.0
        %5936 = vmatprep.subr.mxu0 0.0
        %5937 = vmatpush1.msra.mxu0 0.0
        %5938 = vmatprep.subr.mxu0 0.0
        %5939 = vmatpush1.msra.mxu0 0.0
        %5940 = vmatprep.subr.mxu0 0.0
        %5941 = vmatpush1.msra.mxu0 0.0
        %5942 = vmatprep.subr.mxu0 0.0
        %5943 = vmatpush1.msra.mxu0 0.0
        %5944 = vmatprep.subr.mxu0 0.0
        %5945 = vmatpush1.msra.mxu0 0.0
        %5946 = vmatprep.subr.mxu0 0.0
        %5947 = vmatpush1.msra.mxu0 0.0
        %5948 = vmatprep.subr.mxu0 0.0
        %5949 = vmatpush1.msra.mxu0 0.0
        %5950 = vmatprep.subr.mxu0 0.0
        %5951 = vmatpush1.msra.mxu0 0.0
        %5952 = vmatprep.subr.mxu0 0.0
        %5953 = vmatpush1.msra.mxu0 0.0
        %5954 = vmatprep.subr.mxu0 0.0
        %5955 = vmatpush1.msra.mxu0 0.0
        %5956 = vmatprep.subr.mxu0 0.0
        %5957 = vmatpush1.msra.mxu0 0.0
        %5958 = vmatprep.subr.mxu0 0.0
        %5959 = vmatpush1.msra.mxu0 0.0
        %5960 = vmatprep.subr.mxu0 0.0
        %5961 = vmatpush1.msra.mxu0 0.0
        %5962 = vmatprep.mubr.f32.mxu0 0.0
        %5963 = vmatmul.mubr.f32.gmra.mrb[0].mxu0 %v5896
        %v5964 = vpop.f32.mrb[0].mxu0
        %v5965 = vadd.f32 %v5893, %v5964
        %v5966 = vpop.f32.mrb[0].mxu0
        %5967 = vdwg.mxu0
        %s5968 = scalar_lea.vmem [#allocation15], 1
        %v5969 = vld [vmem:[%s5968] sm:$0x1]
        %s5970 = scalar_lea.vmem [#allocation13], 1
        %v5971 = vld [vmem:[%s5970] sm:$0x1]
        %v5972 = vadd.f32 %v3443, %v5965
        %v5973 = vsel %vm2184, %v5972, 0.0
        %v5974 = vrot.slane %v5973, 4
        %v5975 = vadd.f32 %v5973, %v5974
        %v5976 = vrot.slane %v5975, 2
        %v5977 = vadd.f32 %v5975, %v5976
        %v5978 = vrot.slane %v5977, 1
        %v5979 = vadd.f32 %v5977, %v5978
        %v5980 = vmul.f32 %v5979, %v3203
        %v5981 = vsub.f32 %v5972, %v5980
        %v5982 = vmul.f32 %v5981, %v5981
        %v5983 = vsel %vm2184, %v5982, 0.0
        %v5984 = vrot.slane %v5983, 4
        %v5985 = vadd.f32 %v5983, %v5984
        %v5986 = vrot.slane %v5985, 2
        %v5987 = vadd.f32 %v5985, %v5986
        %v5988 = vrot.slane %v5987, 1
        %v5989 = vadd.f32 %v5987, %v5988
        %v5990 = vmul.f32 %v5989, %v3203
        %v5991 = vadd.f32 %v5990, 1e-05
        %v5992 = vrsqrt.pop %v5991
        %v5993 = vmul.f32 %v5981, %v5992
        %v5995 = vlaneseq
        %v5996 = vshrl.u32 %v5995, 7
        %v5997 = vsub.s32 0, %v5996
        %v5998 = vrot.slane %v5969, %v5997
        %v6000 = vmul.f32 %v5993, %v5998
        %v6002 = vlaneseq
        %v6003 = vshrl.u32 %v6002, 7
        %v6004 = vsub.s32 0, %v6003
        %v6005 = vrot.slane %v5971, %v6004
        %v6007 = vadd.f32 %v6000, %v6005
        %s6008 = scalar_lea.vmem %s103, 32
        %v6009 = vld [vmem:[%s6008] sm:$0xff]
        %v6010 = vld [vmem:[%s6008 + $0x8] sm:$0xff]
        %v6011 = vld [vmem:[%s6008 + $0x10] sm:$0xff]
        %v6012 = vld [vmem:[%s6008 + $0x18] sm:$0xff]
        %s6013 = scalar_lea.vmem [#allocation10], 1
        %v6014 = vld [vmem:[%s6013] sm:$0x1]
        %v6016 = vlaneseq
        %v6017 = vshrl.u32 %v6016, 7
        %v6018 = vsub.s32 0, %v6017
        %v6019 = vrot.slane %v6014, %v6018
        %v6022 = vsel %vm2184, %v6007, 0
        %6024 = vmatprep.subr.mxu0 0.0
        %6025 = vmatpush1.msra.mxu0 %v6009
        %6026 = vmatprep.subr.mxu0 0.0
        %6027 = vmatpush1.msra.mxu0 %v6010
        %6028 = vmatprep.subr.mxu0 0.0
        %6029 = vmatpush1.msra.mxu0 %v6011
        %6030 = vmatprep.subr.mxu0 0.0
        %6031 = vmatpush1.msra.mxu0 %v6012
        %6032 = vmatprep.subr.mxu0 0.0
        %6033 = vmatpush1.msra.mxu0 0.0
        %6034 = vmatprep.subr.mxu0 0.0
        %6035 = vmatpush1.msra.mxu0 0.0
        %6036 = vmatprep.subr.mxu0 0.0
        %6037 = vmatpush1.msra.mxu0 0.0
        %6038 = vmatprep.subr.mxu0 0.0
        %6039 = vmatpush1.msra.mxu0 0.0
        %6040 = vmatprep.subr.mxu0 0.0
        %6041 = vmatpush1.msra.mxu0 0.0
        %6042 = vmatprep.subr.mxu0 0.0
        %6043 = vmatpush1.msra.mxu0 0.0
        %6044 = vmatprep.subr.mxu0 0.0
        %6045 = vmatpush1.msra.mxu0 0.0
        %6046 = vmatprep.subr.mxu0 0.0
        %6047 = vmatpush1.msra.mxu0 0.0
        %6048 = vmatprep.subr.mxu0 0.0
        %6049 = vmatpush1.msra.mxu0 0.0
        %6050 = vmatprep.subr.mxu0 0.0
        %6051 = vmatpush1.msra.mxu0 0.0
        %6052 = vmatprep.subr.mxu0 0.0
        %6053 = vmatpush1.msra.mxu0 0.0
        %6054 = vmatprep.subr.mxu0 0.0
        %6055 = vmatpush1.msra.mxu0 0.0
        %6056 = vmatprep.subr.mxu0 0.0
        %6057 = vmatpush1.msra.mxu0 0.0
        %6058 = vmatprep.subr.mxu0 0.0
        %6059 = vmatpush1.msra.mxu0 0.0
        %6060 = vmatprep.subr.mxu0 0.0
        %6061 = vmatpush1.msra.mxu0 0.0
        %6062 = vmatprep.subr.mxu0 0.0
        %6063 = vmatpush1.msra.mxu0 0.0
        %6064 = vmatprep.subr.mxu0 0.0
        %6065 = vmatpush1.msra.mxu0 0.0
        %6066 = vmatprep.subr.mxu0 0.0
        %6067 = vmatpush1.msra.mxu0 0.0
        %6068 = vmatprep.subr.mxu0 0.0
        %6069 = vmatpush1.msra.mxu0 0.0
        %6070 = vmatprep.subr.mxu0 0.0
        %6071 = vmatpush1.msra.mxu0 0.0
        %6072 = vmatprep.subr.mxu0 0.0
        %6073 = vmatpush1.msra.mxu0 0.0
        %6074 = vmatprep.subr.mxu0 0.0
        %6075 = vmatpush1.msra.mxu0 0.0
        %6076 = vmatprep.subr.mxu0 0.0
        %6077 = vmatpush1.msra.mxu0 0.0
        %6078 = vmatprep.subr.mxu0 0.0
        %6079 = vmatpush1.msra.mxu0 0.0
        %6080 = vmatprep.subr.mxu0 0.0
        %6081 = vmatpush1.msra.mxu0 0.0
        %6082 = vmatprep.subr.mxu0 0.0
        %6083 = vmatpush1.msra.mxu0 0.0
        %6084 = vmatprep.subr.mxu0 0.0
        %6085 = vmatpush1.msra.mxu0 0.0
        %6086 = vmatprep.subr.mxu0 0.0
        %6087 = vmatpush1.msra.mxu0 0.0
        %6088 = vmatprep.mubr.f32.mxu0 0.0
        %6089 = vmatmul.mubr.f32.gmra.mrb[0].mxu0 %v6022
        %v6090 = vpop.f32.mrb[0].mxu0
        %v6091 = vadd.f32 %v6019, %v6090
        %v6092 = vpop.f32.mrb[0].mxu0
        %6093 = vdwg.mxu0
        %v6094 = vmax.f32 %v6091, 0.0
        %s6095 = scalar_lea.vmem %s105, 64
        %v6096 = vld [vmem:[%s6095] sm:$0xff]
        %v6097 = vld [vmem:[%s6095 + $0x8] sm:$0xff]
        %v6098 = vld [vmem:[%s6095 + $0x10] sm:$0xff]
        %v6099 = vld [vmem:[%s6095 + $0x18] sm:$0xff]
        %v6100 = vld [vmem:[%s6095 + $0x20] sm:$0xff]
        %v6101 = vld [vmem:[%s6095 + $0x28] sm:$0xff]
        %v6102 = vld [vmem:[%s6095 + $0x30] sm:$0xff]
        %v6103 = vld [vmem:[%s6095 + $0x38] sm:$0xff]
        %s6104 = scalar_lea.vmem [#allocation12], 1
        %v6105 = vld [vmem:[%s6104] sm:$0x1]
        %v6107 = vlaneseq
        %v6108 = vshrl.u32 %v6107, 7
        %v6109 = vsub.s32 0, %v6108
        %v6110 = vrot.slane %v6105, %v6109
        %v6113 = vsel %vm3332, %v6094, 0
        %6115 = vmatprep.subr.mxu0 0.0
        %6116 = vmatpush1.msra.mxu0 %v6096
        %6117 = vmatprep.subr.mxu0 0.0
        %6118 = vmatpush1.msra.mxu0 %v6097
        %6119 = vmatprep.subr.mxu0 0.0
        %6120 = vmatpush1.msra.mxu0 %v6098
        %6121 = vmatprep.subr.mxu0 0.0
        %6122 = vmatpush1.msra.mxu0 %v6099
        %6123 = vmatprep.subr.mxu0 0.0
        %6124 = vmatpush1.msra.mxu0 %v6100
        %6125 = vmatprep.subr.mxu0 0.0
        %6126 = vmatpush1.msra.mxu0 %v6101
        %6127 = vmatprep.subr.mxu0 0.0
        %6128 = vmatpush1.msra.mxu0 %v6102
        %6129 = vmatprep.subr.mxu0 0.0
        %6130 = vmatpush1.msra.mxu0 %v6103
        %6131 = vmatprep.subr.mxu0 0.0
        %6132 = vmatpush1.msra.mxu0 0.0
        %6133 = vmatprep.subr.mxu0 0.0
        %6134 = vmatpush1.msra.mxu0 0.0
        %6135 = vmatprep.subr.mxu0 0.0
        %6136 = vmatpush1.msra.mxu0 0.0
        %6137 = vmatprep.subr.mxu0 0.0
        %6138 = vmatpush1.msra.mxu0 0.0
        %6139 = vmatprep.subr.mxu0 0.0
        %6140 = vmatpush1.msra.mxu0 0.0
        %6141 = vmatprep.subr.mxu0 0.0
        %6142 = vmatpush1.msra.mxu0 0.0
        %6143 = vmatprep.subr.mxu0 0.0
        %6144 = vmatpush1.msra.mxu0 0.0
        %6145 = vmatprep.subr.mxu0 0.0
        %6146 = vmatpush1.msra.mxu0 0.0
        %6147 = vmatprep.subr.mxu0 0.0
        %6148 = vmatpush1.msra.mxu0 0.0
        %6149 = vmatprep.subr.mxu0 0.0
        %6150 = vmatpush1.msra.mxu0 0.0
        %6151 = vmatprep.subr.mxu0 0.0
        %6152 = vmatpush1.msra.mxu0 0.0
        %6153 = vmatprep.subr.mxu0 0.0
        %6154 = vmatpush1.msra.mxu0 0.0
        %6155 = vmatprep.subr.mxu0 0.0
        %6156 = vmatpush1.msra.mxu0 0.0
        %6157 = vmatprep.subr.mxu0 0.0
        %6158 = vmatpush1.msra.mxu0 0.0
        %6159 = vmatprep.subr.mxu0 0.0
        %6160 = vmatpush1.msra.mxu0 0.0
        %6161 = vmatprep.subr.mxu0 0.0
        %6162 = vmatpush1.msra.mxu0 0.0
        %6163 = vmatprep.subr.mxu0 0.0
        %6164 = vmatpush1.msra.mxu0 0.0
        %6165 = vmatprep.subr.mxu0 0.0
        %6166 = vmatpush1.msra.mxu0 0.0
        %6167 = vmatprep.subr.mxu0 0.0
        %6168 = vmatpush1.msra.mxu0 0.0
        %6169 = vmatprep.subr.mxu0 0.0
        %6170 = vmatpush1.msra.mxu0 0.0
        %6171 = vmatprep.subr.mxu0 0.0
        %6172 = vmatpush1.msra.mxu0 0.0
        %6173 = vmatprep.subr.mxu0 0.0
        %6174 = vmatpush1.msra.mxu0 0.0
        %6175 = vmatprep.subr.mxu0 0.0
        %6176 = vmatpush1.msra.mxu0 0.0
        %6177 = vmatprep.subr.mxu0 0.0
        %6178 = vmatpush1.msra.mxu0 0.0
        %6179 = vmatprep.mubr.f32.mxu0 0.0
        %6180 = vmatmul.mubr.f32.gmra.mrb[0].mxu0 %v6113
        %v6181 = vpop.f32.mrb[0].mxu0
        %v6182 = vadd.f32 %v6110, %v6181
        %v6183 = vpop.f32.mrb[0].mxu0
        %6184 = vdwg.mxu0
        %s6185 = scalar_lea.vmem [#allocation18], 1
        %v6186 = vld [vmem:[%s6185] sm:$0x1]
        %s6187 = scalar_lea.vmem [#allocation16], 1
        %v6188 = vld [vmem:[%s6187] sm:$0x1]
        %v6189 = vadd.f32 %v6007, %v6182
        %v6190 = vsel %vm2184, %v6189, 0.0
        %v6191 = vrot.slane %v6190, 4
        %v6192 = vadd.f32 %v6190, %v6191
        %v6193 = vrot.slane %v6192, 2
        %v6194 = vadd.f32 %v6192, %v6193
        %v6195 = vrot.slane %v6194, 1
        %v6196 = vadd.f32 %v6194, %v6195
        %v6197 = vmul.f32 %v6196, %v3203
        %v6198 = vsub.f32 %v6189, %v6197
        %v6199 = vmul.f32 %v6198, %v6198
        %v6200 = vsel %vm2184, %v6199, 0.0
        %v6201 = vrot.slane %v6200, 4
        %v6202 = vadd.f32 %v6200, %v6201
        %v6203 = vrot.slane %v6202, 2
        %v6204 = vadd.f32 %v6202, %v6203
        %v6205 = vrot.slane %v6204, 1
        %v6206 = vadd.f32 %v6204, %v6205
        %v6207 = vmul.f32 %v6206, %v3203
        %v6208 = vadd.f32 %v6207, 1e-05
        %v6209 = vrsqrt.pop %v6208
        %v6210 = vmul.f32 %v6198, %v6209
        %v6212 = vlaneseq
        %v6213 = vshrl.u32 %v6212, 7
        %v6214 = vsub.s32 0, %v6213
        %v6215 = vrot.slane %v6186, %v6214
        %v6217 = vmul.f32 %v6210, %v6215
        %v6219 = vlaneseq
        %v6220 = vshrl.u32 %v6219, 7
        %v6221 = vsub.s32 0, %v6220
        %v6222 = vrot.slane %v6188, %v6221
        %v6224 = vadd.f32 %v6217, %v6222
        %s6225 = scalar_lea.vmem %s51, 32
        %v6226 = vld [vmem:[%s6225] sm:$0xff]
        %v6227 = vld [vmem:[%s6225 + $0x8] sm:$0xff]
        %v6228 = vld [vmem:[%s6225 + $0x10] sm:$0xff]
        %v6229 = vld [vmem:[%s6225 + $0x18] sm:$0xff]
        %6230 = vmatprep.subr.mxu0 0.0
        %6231 = vmatpush1.msra.mxu0 %v6226
        %6232 = vmatprep.subr.mxu0 0.0
        %6233 = vmatpush1.msra.mxu0 %v6227
        %6234 = vmatprep.subr.mxu0 0.0
        %6235 = vmatpush1.msra.mxu0 %v6228
        %6236 = vmatprep.subr.mxu0 0.0
        %6237 = vmatpush1.msra.mxu0 %v6229
        %6238 = vmatprep.subr.mxu0 0.0
        %6239 = vmatpush1.msra.mxu0 0.0
        %6240 = vmatprep.subr.mxu0 0.0
        %6241 = vmatpush1.msra.mxu0 0.0
        %6242 = vmatprep.subr.mxu0 0.0
        %6243 = vmatpush1.msra.mxu0 0.0
        %6244 = vmatprep.subr.mxu0 0.0
        %6245 = vmatpush1.msra.mxu0 0.0
        %6246 = vmatprep.subr.mxu0 0.0
        %6247 = vmatpush1.msra.mxu0 0.0
        %6248 = vmatprep.subr.mxu0 0.0
        %6249 = vmatpush1.msra.mxu0 0.0
        %6250 = vmatprep.subr.mxu0 0.0
        %6251 = vmatpush1.msra.mxu0 0.0
        %6252 = vmatprep.subr.mxu0 0.0
        %6253 = vmatpush1.msra.mxu0 0.0
        %6254 = vmatprep.subr.mxu0 0.0
        %6255 = vmatpush1.msra.mxu0 0.0
        %6256 = vmatprep.subr.mxu0 0.0
        %6257 = vmatpush1.msra.mxu0 0.0
        %6258 = vmatprep.subr.mxu0 0.0
        %6259 = vmatpush1.msra.mxu0 0.0
        %6260 = vmatprep.subr.mxu0 0.0
        %6261 = vmatpush1.msra.mxu0 0.0
        %6262 = vmatprep.subr.mxu0 0.0
        %6263 = vmatpush1.msra.mxu0 0.0
        %6264 = vmatprep.subr.mxu0 0.0
        %6265 = vmatpush1.msra.mxu0 0.0
        %6266 = vmatprep.subr.mxu0 0.0
        %6267 = vmatpush1.msra.mxu0 0.0
        %6268 = vmatprep.subr.mxu0 0.0
        %6269 = vmatpush1.msra.mxu0 0.0
        %6270 = vmatprep.subr.mxu0 0.0
        %6271 = vmatpush1.msra.mxu0 0.0
        %6272 = vmatprep.subr.mxu0 0.0
        %6273 = vmatpush1.msra.mxu0 0.0
        %6274 = vmatprep.subr.mxu0 0.0
        %6275 = vmatpush1.msra.mxu0 0.0
        %6276 = vmatprep.subr.mxu0 0.0
        %6277 = vmatpush1.msra.mxu0 0.0
        %6278 = vmatprep.subr.mxu0 0.0
        %6279 = vmatpush1.msra.mxu0 0.0
        %6280 = vmatprep.subr.mxu0 0.0
        %6281 = vmatpush1.msra.mxu0 0.0
        %6282 = vmatprep.subr.mxu0 0.0
        %6283 = vmatpush1.msra.mxu0 0.0
        %6284 = vmatprep.subr.mxu0 0.0
        %6285 = vmatpush1.msra.mxu0 0.0
        %6286 = vmatprep.subr.mxu0 0.0
        %6287 = vmatpush1.msra.mxu0 0.0
        %6288 = vmatprep.subr.mxu0 0.0
        %6289 = vmatpush1.msra.mxu0 0.0
        %6290 = vmatprep.subr.mxu0 0.0
        %6291 = vmatpush1.msra.mxu0 0.0
        %6292 = vmatprep.subr.mxu0 0.0
        %6293 = vmatpush1.msra.mxu0 0.0
        %6294 = vmatprep.mubr.f32.mxu0 0.0
        %6295 = vmatmul.mubr.f32.gmra.mrb[0].mxu0 %v5065
        %v6296 = vpop.f32.mrb[0].mxu0
        %v6297 = vadd.f32 0.0, %v6296
        %v6298 = vpop.f32.mrb[0].mxu0
        %6299 = vdwg.mxu0
        %s6300 = scalar_lea.vmem %s49, 32
        %v6301 = vld [vmem:[%s6300] sm:$0xff]
        %v6302 = vld [vmem:[%s6300 + $0x8] sm:$0xff]
        %v6303 = vld [vmem:[%s6300 + $0x10] sm:$0xff]
        %v6304 = vld [vmem:[%s6300 + $0x18] sm:$0xff]
        %6305 = vmatprep.subr.mxu0 0.0
        %6306 = vmatpush1.msra.mxu0 %v6301
        %6307 = vmatprep.subr.mxu0 0.0
        %6308 = vmatpush1.msra.mxu0 %v6302
        %6309 = vmatprep.subr.mxu0 0.0
        %6310 = vmatpush1.msra.mxu0 %v6303
        %6311 = vmatprep.subr.mxu0 0.0
        %6312 = vmatpush1.msra.mxu0 %v6304
        %6313 = vmatprep.subr.mxu0 0.0
        %6314 = vmatpush1.msra.mxu0 0.0
        %6315 = vmatprep.subr.mxu0 0.0
        %6316 = vmatpush1.msra.mxu0 0.0
        %6317 = vmatprep.subr.mxu0 0.0
        %6318 = vmatpush1.msra.mxu0 0.0
        %6319 = vmatprep.subr.mxu0 0.0
        %6320 = vmatpush1.msra.mxu0 0.0
        %6321 = vmatprep.subr.mxu0 0.0
        %6322 = vmatpush1.msra.mxu0 0.0
        %6323 = vmatprep.subr.mxu0 0.0
        %6324 = vmatpush1.msra.mxu0 0.0
        %6325 = vmatprep.subr.mxu0 0.0
        %6326 = vmatpush1.msra.mxu0 0.0
        %6327 = vmatprep.subr.mxu0 0.0
        %6328 = vmatpush1.msra.mxu0 0.0
        %6329 = vmatprep.subr.mxu0 0.0
        %6330 = vmatpush1.msra.mxu0 0.0
        %6331 = vmatprep.subr.mxu0 0.0
        %6332 = vmatpush1.msra.mxu0 0.0
        %6333 = vmatprep.subr.mxu0 0.0
        %6334 = vmatpush1.msra.mxu0 0.0
        %6335 = vmatprep.subr.mxu0 0.0
        %6336 = vmatpush1.msra.mxu0 0.0
        %6337 = vmatprep.subr.mxu0 0.0
        %6338 = vmatpush1.msra.mxu0 0.0
        %6339 = vmatprep.subr.mxu0 0.0
        %6340 = vmatpush1.msra.mxu0 0.0
        %6341 = vmatprep.subr.mxu0 0.0
        %6342 = vmatpush1.msra.mxu0 0.0
        %6343 = vmatprep.subr.mxu0 0.0
        %6344 = vmatpush1.msra.mxu0 0.0
        %6345 = vmatprep.subr.mxu0 0.0
        %6346 = vmatpush1.msra.mxu0 0.0
        %6347 = vmatprep.subr.mxu0 0.0
        %6348 = vmatpush1.msra.mxu0 0.0
        %6349 = vmatprep.subr.mxu0 0.0
        %6350 = vmatpush1.msra.mxu0 0.0
        %6351 = vmatprep.subr.mxu0 0.0
        %6352 = vmatpush1.msra.mxu0 0.0
        %6353 = vmatprep.subr.mxu0 0.0
        %6354 = vmatpush1.msra.mxu0 0.0
        %6355 = vmatprep.subr.mxu0 0.0
        %6356 = vmatpush1.msra.mxu0 0.0
        %6357 = vmatprep.subr.mxu0 0.0
        %6358 = vmatpush1.msra.mxu0 0.0
        %6359 = vmatprep.subr.mxu0 0.0
        %6360 = vmatpush1.msra.mxu0 0.0
        %6361 = vmatprep.subr.mxu0 0.0
        %6362 = vmatpush1.msra.mxu0 0.0
        %6363 = vmatprep.subr.mxu0 0.0
        %6364 = vmatpush1.msra.mxu0 0.0
        %6365 = vmatprep.subr.mxu0 0.0
        %6366 = vmatpush1.msra.mxu0 0.0
        %6367 = vmatprep.subr.mxu0 0.0
        %6368 = vmatpush1.msra.mxu0 0.0
        %6369 = vmatprep.mubr.f32.mxu0 0.0
        %6370 = vmatmul.mubr.f32.gmra.mrb[0].mxu0 %v4987
        %v6371 = vpop.f32.mrb[0].mxu0
        %v6372 = vadd.f32 0.0, %v6371
        %v6373 = vpop.f32.mrb[0].mxu0
        %6374 = vdwg.mxu0
        %6375 = vxpose.xlu0.b32.start [1/16] %v6372, 128
        %6376 = vxpose.xlu0.b32.cont [2/16] 0.0, 128
        %6377 = vxpose.xlu0.b32.cont [3/16] 0.0, 128
        %6378 = vxpose.xlu0.b32.cont [4/16] 0.0, 128
        %6379 = vxpose.xlu0.b32.cont [5/16] 0.0, 128
        %6380 = vxpose.xlu0.b32.cont [6/16] 0.0, 128
        %6381 = vxpose.xlu0.b32.cont [7/16] 0.0, 128
        %6382 = vxpose.xlu0.b32.cont [8/16] 0.0, 128
        %6383 = vxpose.xlu0.b32.cont [9/16] 0.0, 128
        %6384 = vxpose.xlu0.b32.cont [10/16] 0.0, 128
        %6385 = vxpose.xlu0.b32.cont [11/16] 0.0, 128
        %6386 = vxpose.xlu0.b32.cont [12/16] 0.0, 128
        %6387 = vxpose.xlu0.b32.cont [13/16] 0.0, 128
        %6388 = vxpose.xlu0.b32.cont [14/16] 0.0, 128
        %6389 = vxpose.xlu0.b32.cont [15/16] 0.0, 128
        %6390 = vxpose.xlu0.b32.end [16/16] 0.0, 128
        %v6391 = vpop.trf.xlu0
        %v6392 = vpop.trf.xlu0
        %v6393 = vpop.trf.xlu0
        %v6394 = vpop.trf.xlu0
        %v6395 = vpop.trf.xlu0
        %v6396 = vpop.trf.xlu0
        %v6397 = vpop.trf.xlu0
        %v6398 = vpop.trf.xlu0
        %v6399 = vpop.trf.xlu0
        %v6400 = vpop.trf.xlu0
        %v6401 = vpop.trf.xlu0
        %v6402 = vpop.trf.xlu0
        %v6403 = vpop.trf.xlu0
        %v6404 = vpop.trf.xlu0
        %v6405 = vpop.trf.xlu0
        %v6406 = vpop.trf.xlu0
        %v6408 = vsel %vm3624, %v6391, 0
        %v6411 = vsel %vm3624, %v6392, 0
        %v6414 = vsel %vm3624, %v6393, 0
        %v6417 = vsel %vm3624, %v6394, 0
        %6419 = vmatprep.subr.mxu0 0.0
        %6420 = vmatpush1.msra.mxu0 %v1977
        %6421 = vmatprep.subr.mxu0 0.0
        %6422 = vmatpush1.msra.mxu0 0.0
        %6423 = vmatprep.subr.mxu0 0.0
        %6424 = vmatpush1.msra.mxu0 0.0
        %6425 = vmatprep.subr.mxu0 0.0
        %6426 = vmatpush1.msra.mxu0 0.0
        %6427 = vmatprep.subr.mxu0 0.0
        %6428 = vmatpush1.msra.mxu0 0.0
        %6429 = vmatprep.subr.mxu0 0.0
        %6430 = vmatpush1.msra.mxu0 0.0
        %6431 = vmatprep.subr.mxu0 0.0
        %6432 = vmatpush1.msra.mxu0 0.0
        %6433 = vmatprep.subr.mxu0 0.0
        %6434 = vmatpush1.msra.mxu0 0.0
        %6435 = vmatprep.subr.mxu0 0.0
        %6436 = vmatpush1.msra.mxu0 0.0
        %6437 = vmatprep.subr.mxu0 0.0
        %6438 = vmatpush1.msra.mxu0 0.0
        %6439 = vmatprep.subr.mxu0 0.0
        %6440 = vmatpush1.msra.mxu0 0.0
        %6441 = vmatprep.subr.mxu0 0.0
        %6442 = vmatpush1.msra.mxu0 0.0
        %6443 = vmatprep.subr.mxu0 0.0
        %6444 = vmatpush1.msra.mxu0 0.0
        %6445 = vmatprep.subr.mxu0 0.0
        %6446 = vmatpush1.msra.mxu0 0.0
        %6447 = vmatprep.subr.mxu0 0.0
        %6448 = vmatpush1.msra.mxu0 0.0
        %6449 = vmatprep.subr.mxu0 0.0
        %6450 = vmatpush1.msra.mxu0 0.0
        %6451 = vmatprep.subr.mxu0 0.0
        %6452 = vmatpush1.msra.mxu0 0.0
        %6453 = vmatprep.subr.mxu0 0.0
        %6454 = vmatpush1.msra.mxu0 0.0
        %6455 = vmatprep.subr.mxu0 0.0
        %6456 = vmatpush1.msra.mxu0 0.0
        %6457 = vmatprep.subr.mxu0 0.0
        %6458 = vmatpush1.msra.mxu0 0.0
        %6459 = vmatprep.subr.mxu0 0.0
        %6460 = vmatpush1.msra.mxu0 0.0
        %6461 = vmatprep.subr.mxu0 0.0
        %6462 = vmatpush1.msra.mxu0 0.0
        %6463 = vmatprep.subr.mxu0 0.0
        %6464 = vmatpush1.msra.mxu0 0.0
        %6465 = vmatprep.subr.mxu0 0.0
        %6466 = vmatpush1.msra.mxu0 0.0
        %6467 = vmatprep.subr.mxu0 0.0
        %6468 = vmatpush1.msra.mxu0 0.0
        %6469 = vmatprep.subr.mxu0 0.0
        %6470 = vmatpush1.msra.mxu0 0.0
        %6471 = vmatprep.subr.mxu0 0.0
        %6472 = vmatpush1.msra.mxu0 0.0
        %6473 = vmatprep.subr.mxu0 0.0
        %6474 = vmatpush1.msra.mxu0 0.0
        %6475 = vmatprep.subr.mxu0 0.0
        %6476 = vmatpush1.msra.mxu0 0.0
        %6477 = vmatprep.subr.mxu0 0.0
        %6478 = vmatpush1.msra.mxu0 0.0
        %6479 = vmatprep.subr.mxu0 0.0
        %6480 = vmatpush1.msra.mxu0 0.0
        %6481 = vmatprep.subr.mxu0 0.0
        %6482 = vmatpush1.msra.mxu0 0.0
        %6483 = vmatprep.mubr.f32.mxu0 0.0
        %6484 = vmatmul.mubr.f32.gmra.mrb[0].mxu0 %v6408
        %v6485 = vpop.f32.mrb[0].mxu0
        %v6486 = vadd.f32 0.0, %v6485
        %v6487 = vpop.f32.mrb[0].mxu0
        %6488 = vmatprep.mubr.f32.mxu0 0.0
        %6489 = vmatmul.mubr.f32.gmra.mrb[0].mxu0 %v6411
        %v6490 = vpop.f32.mrb[0].mxu0
        %v6491 = vadd.f32 0.0, %v6490
        %v6492 = vpop.f32.mrb[0].mxu0
        %6493 = vmatprep.mubr.f32.mxu0 0.0
        %6494 = vmatmul.mubr.f32.gmra.mrb[0].mxu0 %v6414
        %v6495 = vpop.f32.mrb[0].mxu0
        %v6496 = vadd.f32 0.0, %v6495
        %v6497 = vpop.f32.mrb[0].mxu0
        %6498 = vmatprep.mubr.f32.mxu0 0.0
        %6499 = vmatmul.mubr.f32.gmra.mrb[0].mxu0 %v6417
        %v6500 = vpop.f32.mrb[0].mxu0
        %v6501 = vadd.f32 0.0, %v6500
        %v6502 = vpop.f32.mrb[0].mxu0
        %6503 = vdwg.mxu0
        %v6504 = vmul.f32 %v6486, %v1973
        %v6505 = vmul.f32 %v6491, %v1974
        %v6506 = vmul.f32 %v6496, %v1975
        %v6507 = vmul.f32 %v6501, %v1976
        %v6509 = vsel %vm2184, %v6297, 0
        %6511 = vmatprep.subr.mxu0 0.0
        %6512 = vmatpush1.msra.mxu0 %v6504
        %6513 = vmatprep.subr.mxu0 0.0
        %6514 = vmatpush1.msra.mxu0 %v6505
        %6515 = vmatprep.subr.mxu0 0.0
        %6516 = vmatpush1.msra.mxu0 %v6506
        %6517 = vmatprep.subr.mxu0 0.0
        %6518 = vmatpush1.msra.mxu0 %v6507
        %6519 = vmatprep.subr.mxu0 0.0
        %6520 = vmatpush1.msra.mxu0 0.0
        %6521 = vmatprep.subr.mxu0 0.0
        %6522 = vmatpush1.msra.mxu0 0.0
        %6523 = vmatprep.subr.mxu0 0.0
        %6524 = vmatpush1.msra.mxu0 0.0
        %6525 = vmatprep.subr.mxu0 0.0
        %6526 = vmatpush1.msra.mxu0 0.0
        %6527 = vmatprep.subr.mxu0 0.0
        %6528 = vmatpush1.msra.mxu0 0.0
        %6529 = vmatprep.subr.mxu0 0.0
        %6530 = vmatpush1.msra.mxu0 0.0
        %6531 = vmatprep.subr.mxu0 0.0
        %6532 = vmatpush1.msra.mxu0 0.0
        %6533 = vmatprep.subr.mxu0 0.0
        %6534 = vmatpush1.msra.mxu0 0.0
        %6535 = vmatprep.subr.mxu0 0.0
        %6536 = vmatpush1.msra.mxu0 0.0
        %6537 = vmatprep.subr.mxu0 0.0
        %6538 = vmatpush1.msra.mxu0 0.0
        %6539 = vmatprep.subr.mxu0 0.0
        %6540 = vmatpush1.msra.mxu0 0.0
        %6541 = vmatprep.subr.mxu0 0.0
        %6542 = vmatpush1.msra.mxu0 0.0
        %6543 = vmatprep.subr.mxu0 0.0
        %6544 = vmatpush1.msra.mxu0 0.0
        %6545 = vmatprep.subr.mxu0 0.0
        %6546 = vmatpush1.msra.mxu0 0.0
        %6547 = vmatprep.subr.mxu0 0.0
        %6548 = vmatpush1.msra.mxu0 0.0
        %6549 = vmatprep.subr.mxu0 0.0
        %6550 = vmatpush1.msra.mxu0 0.0
        %6551 = vmatprep.subr.mxu0 0.0
        %6552 = vmatpush1.msra.mxu0 0.0
        %6553 = vmatprep.subr.mxu0 0.0
        %6554 = vmatpush1.msra.mxu0 0.0
        %6555 = vmatprep.subr.mxu0 0.0
        %6556 = vmatpush1.msra.mxu0 0.0
        %6557 = vmatprep.subr.mxu0 0.0
        %6558 = vmatpush1.msra.mxu0 0.0
        %6559 = vmatprep.subr.mxu0 0.0
        %6560 = vmatpush1.msra.mxu0 0.0
        %6561 = vmatprep.subr.mxu0 0.0
        %6562 = vmatpush1.msra.mxu0 0.0
        %6563 = vmatprep.subr.mxu0 0.0
        %6564 = vmatpush1.msra.mxu0 0.0
        %6565 = vmatprep.subr.mxu0 0.0
        %6566 = vmatpush1.msra.mxu0 0.0
        %6567 = vmatprep.subr.mxu0 0.0
        %6568 = vmatpush1.msra.mxu0 0.0
        %6569 = vmatprep.subr.mxu0 0.0
        %6570 = vmatpush1.msra.mxu0 0.0
        %6571 = vmatprep.subr.mxu0 0.0
        %6572 = vmatpush1.msra.mxu0 0.0
        %6573 = vmatprep.subr.mxu0 0.0
        %6574 = vmatpush1.msra.mxu0 0.0
        %6575 = vmatprep.mubr.f32.mxu0 0.0
        %6576 = vmatmul.mubr.f32.gmra.mrb[0].mxu0 %v6509
        %v6577 = vpop.f32.mrb[0].mxu0
        %v6578 = vadd.f32 0.0, %v6577
        %v6579 = vpop.f32.mrb[0].mxu0
        %6580 = vdwg.mxu0
        %s6581 = scalar_lea.vmem %s47, 128
        %v6582 = vld [vmem:[%s6581] sm:$0xff]
        %v6583 = vld [vmem:[%s6581 + $0x8] sm:$0xff]
        %v6584 = vld [vmem:[%s6581 + $0x10] sm:$0xff]
        %v6585 = vld [vmem:[%s6581 + $0x18] sm:$0xff]
        %v6586 = vld [vmem:[%s6581 + $0x20] sm:$0xff]
        %v6587 = vld [vmem:[%s6581 + $0x28] sm:$0xff]
        %v6588 = vld [vmem:[%s6581 + $0x30] sm:$0xff]
        %v6589 = vld [vmem:[%s6581 + $0x38] sm:$0xff]
        %v6590 = vld [vmem:[%s6581 + $0x40] sm:$0xff]
        %v6591 = vld [vmem:[%s6581 + $0x48] sm:$0xff]
        %v6592 = vld [vmem:[%s6581 + $0x50] sm:$0xff]
        %v6593 = vld [vmem:[%s6581 + $0x58] sm:$0xff]
        %v6594 = vld [vmem:[%s6581 + $0x60] sm:$0xff]
        %v6595 = vld [vmem:[%s6581 + $0x68] sm:$0xff]
        %v6596 = vld [vmem:[%s6581 + $0x70] sm:$0xff]
        %v6597 = vld [vmem:[%s6581 + $0x78] sm:$0xff]
        %s6598 = scalar_lea.vmem %s45, 32
        %v6599 = vld [vmem:[%s6598] sm:$0xff]
        %v6600 = vld [vmem:[%s6598 + $0x8] sm:$0xff]
        %v6601 = vld [vmem:[%s6598 + $0x10] sm:$0xff]
        %v6602 = vld [vmem:[%s6598 + $0x18] sm:$0xff]
        %6603 = vmatprep.subr.mxu0 %v6600
        %6604 = vmatpush1.msra.mxu0 %v6599
        %6605 = vmatprep.subr.mxu0 0.0
        %6606 = vmatpush1.msra.mxu0 0.0
        %6607 = vmatprep.subr.mxu0 0.0
        %6608 = vmatpush1.msra.mxu0 0.0
        %6609 = vmatprep.subr.mxu0 0.0
        %6610 = vmatpush1.msra.mxu0 0.0
        %6611 = vmatprep.subr.mxu0 0.0
        %6612 = vmatpush1.msra.mxu0 0.0
        %6613 = vmatprep.subr.mxu0 0.0
        %6614 = vmatpush1.msra.mxu0 0.0
        %6615 = vmatprep.subr.mxu0 0.0
        %6616 = vmatpush1.msra.mxu0 0.0
        %6617 = vmatprep.subr.mxu0 0.0
        %6618 = vmatpush1.msra.mxu0 0.0
        %6619 = vmatprep.subr.mxu0 0.0
        %6620 = vmatpush1.msra.mxu0 0.0
        %6621 = vmatprep.subr.mxu0 0.0
        %6622 = vmatpush1.msra.mxu0 0.0
        %6623 = vmatprep.subr.mxu0 0.0
        %6624 = vmatpush1.msra.mxu0 0.0
        %6625 = vmatprep.subr.mxu0 0.0
        %6626 = vmatpush1.msra.mxu0 0.0
        %6627 = vmatprep.subr.mxu0 0.0
        %6628 = vmatpush1.msra.mxu0 0.0
        %6629 = vmatprep.subr.mxu0 0.0
        %6630 = vmatpush1.msra.mxu0 0.0
        %6631 = vmatprep.subr.mxu0 0.0
        %6632 = vmatpush1.msra.mxu0 0.0
        %6633 = vmatprep.subr.mxu0 0.0
        %6634 = vmatpush1.msra.mxu0 0.0
        %6635 = vmatprep.subr.mxu0 0.0
        %6636 = vmatpush1.msra.mxu0 0.0
        %6637 = vmatprep.subr.mxu0 0.0
        %6638 = vmatpush1.msra.mxu0 0.0
        %6639 = vmatprep.subr.mxu0 0.0
        %6640 = vmatpush1.msra.mxu0 0.0
        %6641 = vmatprep.subr.mxu0 0.0
        %6642 = vmatpush1.msra.mxu0 0.0
        %6643 = vmatprep.subr.mxu0 0.0
        %6644 = vmatpush1.msra.mxu0 0.0
        %6645 = vmatprep.subr.mxu0 0.0
        %6646 = vmatpush1.msra.mxu0 0.0
        %6647 = vmatprep.subr.mxu0 0.0
        %6648 = vmatpush1.msra.mxu0 0.0
        %6649 = vmatprep.subr.mxu0 0.0
        %6650 = vmatpush1.msra.mxu0 0.0
        %6651 = vmatprep.subr.mxu0 0.0
        %6652 = vmatpush1.msra.mxu0 0.0
        %6653 = vmatprep.subr.mxu0 0.0
        %6654 = vmatpush1.msra.mxu0 0.0
        %6655 = vmatprep.subr.mxu0 0.0
        %6656 = vmatpush1.msra.mxu0 0.0
        %6657 = vmatprep.subr.mxu0 0.0
        %6658 = vmatpush1.msra.mxu0 0.0
        %6659 = vmatprep.subr.mxu0 0.0
        %6660 = vmatpush1.msra.mxu0 0.0
        %6661 = vmatprep.subr.mxu0 0.0
        %6662 = vmatpush1.msra.mxu0 0.0
        %6663 = vmatprep.subr.mxu0 0.0
        %6664 = vmatpush1.msra.mxu0 0.0
        %6665 = vmatprep.subr.mxu0 0.0
        %6666 = vmatpush1.msra.mxu0 0.0
        %6667 = vmatprep.mubr.f32.mxu0 0.0
        %6668 = vmatmul.mubr.f32.gmra.mrb[0].mxu0 %v3820
        %v6669 = vpop.f32.mrb[0].mxu0
        %v6670 = vadd.f32 0.0, %v6669
        %v6671 = vpop.f32.mrb[0].mxu0
        %v6672 = vadd.f32 0.0, %v6671
        %6673 = vdwg.mxu0
        %6674 = vmatprep.subr.mxu0 %v6602
        %6675 = vmatpush1.msra.mxu0 %v6601
        %6676 = vmatprep.subr.mxu0 0.0
        %6677 = vmatpush1.msra.mxu0 0.0
        %6678 = vmatprep.subr.mxu0 0.0
        %6679 = vmatpush1.msra.mxu0 0.0
        %6680 = vmatprep.subr.mxu0 0.0
        %6681 = vmatpush1.msra.mxu0 0.0
        %6682 = vmatprep.subr.mxu0 0.0
        %6683 = vmatpush1.msra.mxu0 0.0
        %6684 = vmatprep.subr.mxu0 0.0
        %6685 = vmatpush1.msra.mxu0 0.0
        %6686 = vmatprep.subr.mxu0 0.0
        %6687 = vmatpush1.msra.mxu0 0.0
        %6688 = vmatprep.subr.mxu0 0.0
        %6689 = vmatpush1.msra.mxu0 0.0
        %6690 = vmatprep.subr.mxu0 0.0
        %6691 = vmatpush1.msra.mxu0 0.0
        %6692 = vmatprep.subr.mxu0 0.0
        %6693 = vmatpush1.msra.mxu0 0.0
        %6694 = vmatprep.subr.mxu0 0.0
        %6695 = vmatpush1.msra.mxu0 0.0
        %6696 = vmatprep.subr.mxu0 0.0
        %6697 = vmatpush1.msra.mxu0 0.0
        %6698 = vmatprep.subr.mxu0 0.0
        %6699 = vmatpush1.msra.mxu0 0.0
        %6700 = vmatprep.subr.mxu0 0.0
        %6701 = vmatpush1.msra.mxu0 0.0
        %6702 = vmatprep.subr.mxu0 0.0
        %6703 = vmatpush1.msra.mxu0 0.0
        %6704 = vmatprep.subr.mxu0 0.0
        %6705 = vmatpush1.msra.mxu0 0.0
        %6706 = vmatprep.subr.mxu0 0.0
        %6707 = vmatpush1.msra.mxu0 0.0
        %6708 = vmatprep.subr.mxu0 0.0
        %6709 = vmatpush1.msra.mxu0 0.0
        %6710 = vmatprep.subr.mxu0 0.0
        %6711 = vmatpush1.msra.mxu0 0.0
        %6712 = vmatprep.subr.mxu0 0.0
        %6713 = vmatpush1.msra.mxu0 0.0
        %6714 = vmatprep.subr.mxu0 0.0
        %6715 = vmatpush1.msra.mxu0 0.0
        %6716 = vmatprep.subr.mxu0 0.0
        %6717 = vmatpush1.msra.mxu0 0.0
        %6718 = vmatprep.subr.mxu0 0.0
        %6719 = vmatpush1.msra.mxu0 0.0
        %6720 = vmatprep.subr.mxu0 0.0
        %6721 = vmatpush1.msra.mxu0 0.0
        %6722 = vmatprep.subr.mxu0 0.0
        %6723 = vmatpush1.msra.mxu0 0.0
        %6724 = vmatprep.subr.mxu0 0.0
        %6725 = vmatpush1.msra.mxu0 0.0
        %6726 = vmatprep.subr.mxu0 0.0
        %6727 = vmatpush1.msra.mxu0 0.0
        %6728 = vmatprep.subr.mxu0 0.0
        %6729 = vmatpush1.msra.mxu0 0.0
        %6730 = vmatprep.subr.mxu0 0.0
        %6731 = vmatpush1.msra.mxu0 0.0
        %6732 = vmatprep.subr.mxu0 0.0
        %6733 = vmatpush1.msra.mxu0 0.0
        %6734 = vmatprep.subr.mxu0 0.0
        %6735 = vmatpush1.msra.mxu0 0.0
        %6736 = vmatprep.subr.mxu0 0.0
        %6737 = vmatpush1.msra.mxu0 0.0
        %6738 = vmatprep.mubr.f32.mxu0 0.0
        %6739 = vmatmul.mubr.f32.gmra.mrb[0].mxu0 %v3820
        %v6740 = vpop.f32.mrb[0].mxu0
        %v6741 = vadd.f32 0.0, %v6740
        %v6742 = vpop.f32.mrb[0].mxu0
        %v6743 = vadd.f32 0.0, %v6742
        %6744 = vdwg.mxu0
        %v6746 = vsel %vm2184, %v6578, 0
        %6748 = vmatprep.subr.mxu0 %v6583
        %6749 = vmatpush1.msra.mxu0 %v6582
        %6750 = vmatprep.subr.mxu0 %v6587
        %6751 = vmatpush1.msra.mxu0 %v6586
        %6752 = vmatprep.subr.mxu0 %v6591
        %6753 = vmatpush1.msra.mxu0 %v6590
        %6754 = vmatprep.subr.mxu0 %v6595
        %6755 = vmatpush1.msra.mxu0 %v6594
        %6756 = vmatprep.subr.mxu0 0.0
        %6757 = vmatpush1.msra.mxu0 0.0
        %6758 = vmatprep.subr.mxu0 0.0
        %6759 = vmatpush1.msra.mxu0 0.0
        %6760 = vmatprep.subr.mxu0 0.0
        %6761 = vmatpush1.msra.mxu0 0.0
        %6762 = vmatprep.subr.mxu0 0.0
        %6763 = vmatpush1.msra.mxu0 0.0
        %6764 = vmatprep.subr.mxu0 0.0
        %6765 = vmatpush1.msra.mxu0 0.0
        %6766 = vmatprep.subr.mxu0 0.0
        %6767 = vmatpush1.msra.mxu0 0.0
        %6768 = vmatprep.subr.mxu0 0.0
        %6769 = vmatpush1.msra.mxu0 0.0
        %6770 = vmatprep.subr.mxu0 0.0
        %6771 = vmatpush1.msra.mxu0 0.0
        %6772 = vmatprep.subr.mxu0 0.0
        %6773 = vmatpush1.msra.mxu0 0.0
        %6774 = vmatprep.subr.mxu0 0.0
        %6775 = vmatpush1.msra.mxu0 0.0
        %6776 = vmatprep.subr.mxu0 0.0
        %6777 = vmatpush1.msra.mxu0 0.0
        %6778 = vmatprep.subr.mxu0 0.0
        %6779 = vmatpush1.msra.mxu0 0.0
        %6780 = vmatprep.subr.mxu0 0.0
        %6781 = vmatpush1.msra.mxu0 0.0
        %6782 = vmatprep.subr.mxu0 0.0
        %6783 = vmatpush1.msra.mxu0 0.0
        %6784 = vmatprep.subr.mxu0 0.0
        %6785 = vmatpush1.msra.mxu0 0.0
        %6786 = vmatprep.subr.mxu0 0.0
        %6787 = vmatpush1.msra.mxu0 0.0
        %6788 = vmatprep.subr.mxu0 0.0
        %6789 = vmatpush1.msra.mxu0 0.0
        %6790 = vmatprep.subr.mxu0 0.0
        %6791 = vmatpush1.msra.mxu0 0.0
        %6792 = vmatprep.subr.mxu0 0.0
        %6793 = vmatpush1.msra.mxu0 0.0
        %6794 = vmatprep.subr.mxu0 0.0
        %6795 = vmatpush1.msra.mxu0 0.0
        %6796 = vmatprep.subr.mxu0 0.0
        %6797 = vmatpush1.msra.mxu0 0.0
        %6798 = vmatprep.subr.mxu0 0.0
        %6799 = vmatpush1.msra.mxu0 0.0
        %6800 = vmatprep.subr.mxu0 0.0
        %6801 = vmatpush1.msra.mxu0 0.0
        %6802 = vmatprep.subr.mxu0 0.0
        %6803 = vmatpush1.msra.mxu0 0.0
        %6804 = vmatprep.subr.mxu0 0.0
        %6805 = vmatpush1.msra.mxu0 0.0
        %6806 = vmatprep.subr.mxu0 0.0
        %6807 = vmatpush1.msra.mxu0 0.0
        %6808 = vmatprep.subr.mxu0 0.0
        %6809 = vmatpush1.msra.mxu0 0.0
        %6810 = vmatprep.subr.mxu0 0.0
        %6811 = vmatpush1.msra.mxu0 0.0
        %6812 = vmatprep.mubr.f32.mxu0 0.0
        %6813 = vmatmul.mubr.f32.gmra.mrb[0].mxu0 %v6746
        %v6814 = vpop.f32.mrb[0].mxu0
        %v6815 = vadd.f32 %v6670, %v6814
        %v6816 = vpop.f32.mrb[0].mxu0
        %v6817 = vadd.f32 %v6672, %v6816
        %6818 = vdwg.mxu0
        %6819 = vmatprep.subr.mxu0 %v6585
        %6820 = vmatpush1.msra.mxu0 %v6584
        %6821 = vmatprep.subr.mxu0 %v6589
        %6822 = vmatpush1.msra.mxu0 %v6588
        %6823 = vmatprep.subr.mxu0 %v6593
        %6824 = vmatpush1.msra.mxu0 %v6592
        %6825 = vmatprep.subr.mxu0 %v6597
        %6826 = vmatpush1.msra.mxu0 %v6596
        %6827 = vmatprep.subr.mxu0 0.0
        %6828 = vmatpush1.msra.mxu0 0.0
        %6829 = vmatprep.subr.mxu0 0.0
        %6830 = vmatpush1.msra.mxu0 0.0
        %6831 = vmatprep.subr.mxu0 0.0
        %6832 = vmatpush1.msra.mxu0 0.0
        %6833 = vmatprep.subr.mxu0 0.0
        %6834 = vmatpush1.msra.mxu0 0.0
        %6835 = vmatprep.subr.mxu0 0.0
        %6836 = vmatpush1.msra.mxu0 0.0
        %6837 = vmatprep.subr.mxu0 0.0
        %6838 = vmatpush1.msra.mxu0 0.0
        %6839 = vmatprep.subr.mxu0 0.0
        %6840 = vmatpush1.msra.mxu0 0.0
        %6841 = vmatprep.subr.mxu0 0.0
        %6842 = vmatpush1.msra.mxu0 0.0
        %6843 = vmatprep.subr.mxu0 0.0
        %6844 = vmatpush1.msra.mxu0 0.0
        %6845 = vmatprep.subr.mxu0 0.0
        %6846 = vmatpush1.msra.mxu0 0.0
        %6847 = vmatprep.subr.mxu0 0.0
        %6848 = vmatpush1.msra.mxu0 0.0
        %6849 = vmatprep.subr.mxu0 0.0
        %6850 = vmatpush1.msra.mxu0 0.0
        %6851 = vmatprep.subr.mxu0 0.0
        %6852 = vmatpush1.msra.mxu0 0.0
        %6853 = vmatprep.subr.mxu0 0.0
        %6854 = vmatpush1.msra.mxu0 0.0
        %6855 = vmatprep.subr.mxu0 0.0
        %6856 = vmatpush1.msra.mxu0 0.0
        %6857 = vmatprep.subr.mxu0 0.0
        %6858 = vmatpush1.msra.mxu0 0.0
        %6859 = vmatprep.subr.mxu0 0.0
        %6860 = vmatpush1.msra.mxu0 0.0
        %6861 = vmatprep.subr.mxu0 0.0
        %6862 = vmatpush1.msra.mxu0 0.0
        %6863 = vmatprep.subr.mxu0 0.0
        %6864 = vmatpush1.msra.mxu0 0.0
        %6865 = vmatprep.subr.mxu0 0.0
        %6866 = vmatpush1.msra.mxu0 0.0
        %6867 = vmatprep.subr.mxu0 0.0
        %6868 = vmatpush1.msra.mxu0 0.0
        %6869 = vmatprep.subr.mxu0 0.0
        %6870 = vmatpush1.msra.mxu0 0.0
        %6871 = vmatprep.subr.mxu0 0.0
        %6872 = vmatpush1.msra.mxu0 0.0
        %6873 = vmatprep.subr.mxu0 0.0
        %6874 = vmatpush1.msra.mxu0 0.0
        %6875 = vmatprep.subr.mxu0 0.0
        %6876 = vmatpush1.msra.mxu0 0.0
        %6877 = vmatprep.subr.mxu0 0.0
        %6878 = vmatpush1.msra.mxu0 0.0
        %6879 = vmatprep.subr.mxu0 0.0
        %6880 = vmatpush1.msra.mxu0 0.0
        %6881 = vmatprep.subr.mxu0 0.0
        %6882 = vmatpush1.msra.mxu0 0.0
        %6883 = vmatprep.mubr.f32.mxu0 0.0
        %6884 = vmatmul.mubr.f32.gmra.mrb[0].mxu0 %v6746
        %v6885 = vpop.f32.mrb[0].mxu0
        %v6886 = vadd.f32 %v6741, %v6885
        %v6887 = vpop.f32.mrb[0].mxu0
        %v6888 = vadd.f32 %v6743, %v6887
        %6889 = vdwg.mxu0
        %s6890 = scalar_lea.vmem %s53, 4
        %v6891 = vld [vmem:[%s6890] sm:$0xf]
        %v6893 = vlaneseq
        %v6894 = vshrl.u32 %v6893, 7
        %v6895 = vsub.s32 0, %v6894
        %v6896 = vrot.slane %v6891, %v6895
        %v6897 = vlaneseq
        %v6898 = vshrl.u32 %v6897, 7
        %v6899 = vsub.s32 1, %v6898
        %v6900 = vrot.slane %v6891, %v6899
        %v6901 = vlaneseq
        %v6902 = vshrl.u32 %v6901, 7
        %v6903 = vsub.s32 2, %v6902
        %v6904 = vrot.slane %v6891, %v6903
        %v6905 = vlaneseq
        %v6906 = vshrl.u32 %v6905, 7
        %v6907 = vsub.s32 3, %v6906
        %v6908 = vrot.slane %v6891, %v6907
        %v6913 = vadd.f32 %v6815, %v6896
        %v6914 = vadd.f32 %v6817, %v6900
        %v6915 = vadd.f32 %v6886, %v6904
        %v6916 = vadd.f32 %v6888, %v6908
        %v6917 = vmax.f32 %v6913, 0.0
        %v6918 = vmax.f32 %v6914, 0.0
        %v6919 = vmax.f32 %v6915, 0.0
        %v6920 = vmax.f32 %v6916, 0.0
        %s6921 = scalar_lea.vmem %s43, 512
        %v6922 = vld [vmem:[%s6921] sm:$0xff]
        %v6923 = vld [vmem:[%s6921 + $0x8] sm:$0xff]
        %v6924 = vld [vmem:[%s6921 + $0x10] sm:$0xff]
        %v6925 = vld [vmem:[%s6921 + $0x18] sm:$0xff]
        %v6926 = vld [vmem:[%s6921 + $0x20] sm:$0xff]
        %v6927 = vld [vmem:[%s6921 + $0x28] sm:$0xff]
        %v6928 = vld [vmem:[%s6921 + $0x30] sm:$0xff]
        %v6929 = vld [vmem:[%s6921 + $0x38] sm:$0xff]
        %v6930 = vld [vmem:[%s6921 + $0x40] sm:$0xff]
        %v6931 = vld [vmem:[%s6921 + $0x48] sm:$0xff]
        %v6932 = vld [vmem:[%s6921 + $0x50] sm:$0xff]
        %v6933 = vld [vmem:[%s6921 + $0x58] sm:$0xff]
        %v6934 = vld [vmem:[%s6921 + $0x60] sm:$0xff]
        %v6935 = vld [vmem:[%s6921 + $0x68] sm:$0xff]
        %v6936 = vld [vmem:[%s6921 + $0x70] sm:$0xff]
        %v6937 = vld [vmem:[%s6921 + $0x78] sm:$0xff]
        %v6938 = vld [vmem:[%s6921 + $0x80] sm:$0xff]
        %v6939 = vld [vmem:[%s6921 + $0x88] sm:$0xff]
        %v6940 = vld [vmem:[%s6921 + $0x90] sm:$0xff]
        %v6941 = vld [vmem:[%s6921 + $0x98] sm:$0xff]
        %v6942 = vld [vmem:[%s6921 + $0xa0] sm:$0xff]
        %v6943 = vld [vmem:[%s6921 + $0xa8] sm:$0xff]
        %v6944 = vld [vmem:[%s6921 + $0xb0] sm:$0xff]
        %v6945 = vld [vmem:[%s6921 + $0xb8] sm:$0xff]
        %v6946 = vld [vmem:[%s6921 + $0xc0] sm:$0xff]
        %v6947 = vld [vmem:[%s6921 + $0xc8] sm:$0xff]
        %v6948 = vld [vmem:[%s6921 + $0xd0] sm:$0xff]
        %v6949 = vld [vmem:[%s6921 + $0xd8] sm:$0xff]
        %v6950 = vld [vmem:[%s6921 + $0xe0] sm:$0xff]
        %v6951 = vld [vmem:[%s6921 + $0xe8] sm:$0xff]
        %v6952 = vld [vmem:[%s6921 + $0xf0] sm:$0xff]
        %v6953 = vld [vmem:[%s6921 + $0xf8] sm:$0xff]
        %v6954 = vld [vmem:[%s6921 + $0x100] sm:$0xff]
        %v6955 = vld [vmem:[%s6921 + $0x108] sm:$0xff]
        %v6956 = vld [vmem:[%s6921 + $0x110] sm:$0xff]
        %v6957 = vld [vmem:[%s6921 + $0x118] sm:$0xff]
        %v6958 = vld [vmem:[%s6921 + $0x120] sm:$0xff]
        %v6959 = vld [vmem:[%s6921 + $0x128] sm:$0xff]
        %v6960 = vld [vmem:[%s6921 + $0x130] sm:$0xff]
        %v6961 = vld [vmem:[%s6921 + $0x138] sm:$0xff]
        %v6962 = vld [vmem:[%s6921 + $0x140] sm:$0xff]
        %v6963 = vld [vmem:[%s6921 + $0x148] sm:$0xff]
        %v6964 = vld [vmem:[%s6921 + $0x150] sm:$0xff]
        %v6965 = vld [vmem:[%s6921 + $0x158] sm:$0xff]
        %v6966 = vld [vmem:[%s6921 + $0x160] sm:$0xff]
        %v6967 = vld [vmem:[%s6921 + $0x168] sm:$0xff]
        %v6968 = vld [vmem:[%s6921 + $0x170] sm:$0xff]
        %v6969 = vld [vmem:[%s6921 + $0x178] sm:$0xff]
        %v6970 = vld [vmem:[%s6921 + $0x180] sm:$0xff]
        %v6971 = vld [vmem:[%s6921 + $0x188] sm:$0xff]
        %v6972 = vld [vmem:[%s6921 + $0x190] sm:$0xff]
        %v6973 = vld [vmem:[%s6921 + $0x198] sm:$0xff]
        %v6974 = vld [vmem:[%s6921 + $0x1a0] sm:$0xff]
        %v6975 = vld [vmem:[%s6921 + $0x1a8] sm:$0xff]
        %v6976 = vld [vmem:[%s6921 + $0x1b0] sm:$0xff]
        %v6977 = vld [vmem:[%s6921 + $0x1b8] sm:$0xff]
        %v6978 = vld [vmem:[%s6921 + $0x1c0] sm:$0xff]
        %v6979 = vld [vmem:[%s6921 + $0x1c8] sm:$0xff]
        %v6980 = vld [vmem:[%s6921 + $0x1d0] sm:$0xff]
        %v6981 = vld [vmem:[%s6921 + $0x1d8] sm:$0xff]
        %v6982 = vld [vmem:[%s6921 + $0x1e0] sm:$0xff]
        %v6983 = vld [vmem:[%s6921 + $0x1e8] sm:$0xff]
        %v6984 = vld [vmem:[%s6921 + $0x1f0] sm:$0xff]
        %v6985 = vld [vmem:[%s6921 + $0x1f8] sm:$0xff]
        %s6986 = scalar_lea.vmem %s55, 1
        %v6987 = vld [vmem:[%s6986] sm:$0x1]
        %v6989 = vlaneseq
        %v6990 = vshrl.u32 %v6989, 7
        %v6991 = vsub.s32 0, %v6990
        %v6992 = vrot.slane %v6987, %v6991
        %6994 = vmatprep.subr.mxu0 0.0
        %6995 = vmatpush1.msra.mxu0 %v6922
        %6996 = vmatprep.subr.mxu0 0.0
        %6997 = vmatpush1.msra.mxu0 %v6923
        %6998 = vmatprep.subr.mxu0 0.0
        %6999 = vmatpush1.msra.mxu0 %v6924
        %7000 = vmatprep.subr.mxu0 0.0
        %7001 = vmatpush1.msra.mxu0 %v6925
        %7002 = vmatprep.subr.mxu0 0.0
        %7003 = vmatpush1.msra.mxu0 %v6926
        %7004 = vmatprep.subr.mxu0 0.0
        %7005 = vmatpush1.msra.mxu0 %v6927
        %7006 = vmatprep.subr.mxu0 0.0
        %7007 = vmatpush1.msra.mxu0 %v6928
        %7008 = vmatprep.subr.mxu0 0.0
        %7009 = vmatpush1.msra.mxu0 %v6929
        %7010 = vmatprep.subr.mxu0 0.0
        %7011 = vmatpush1.msra.mxu0 %v6930
        %7012 = vmatprep.subr.mxu0 0.0
        %7013 = vmatpush1.msra.mxu0 %v6931
        %7014 = vmatprep.subr.mxu0 0.0
        %7015 = vmatpush1.msra.mxu0 %v6932
        %7016 = vmatprep.subr.mxu0 0.0
        %7017 = vmatpush1.msra.mxu0 %v6933
        %7018 = vmatprep.subr.mxu0 0.0
        %7019 = vmatpush1.msra.mxu0 %v6934
        %7020 = vmatprep.subr.mxu0 0.0
        %7021 = vmatpush1.msra.mxu0 %v6935
        %7022 = vmatprep.subr.mxu0 0.0
        %7023 = vmatpush1.msra.mxu0 %v6936
        %7024 = vmatprep.subr.mxu0 0.0
        %7025 = vmatpush1.msra.mxu0 %v6937
        %7026 = vmatprep.subr.mxu0 0.0
        %7027 = vmatpush1.msra.mxu0 %v6938
        %7028 = vmatprep.subr.mxu0 0.0
        %7029 = vmatpush1.msra.mxu0 %v6939
        %7030 = vmatprep.subr.mxu0 0.0
        %7031 = vmatpush1.msra.mxu0 %v6940
        %7032 = vmatprep.subr.mxu0 0.0
        %7033 = vmatpush1.msra.mxu0 %v6941
        %7034 = vmatprep.subr.mxu0 0.0
        %7035 = vmatpush1.msra.mxu0 %v6942
        %7036 = vmatprep.subr.mxu0 0.0
        %7037 = vmatpush1.msra.mxu0 %v6943
        %7038 = vmatprep.subr.mxu0 0.0
        %7039 = vmatpush1.msra.mxu0 %v6944
        %7040 = vmatprep.subr.mxu0 0.0
        %7041 = vmatpush1.msra.mxu0 %v6945
        %7042 = vmatprep.subr.mxu0 0.0
        %7043 = vmatpush1.msra.mxu0 %v6946
        %7044 = vmatprep.subr.mxu0 0.0
        %7045 = vmatpush1.msra.mxu0 %v6947
        %7046 = vmatprep.subr.mxu0 0.0
        %7047 = vmatpush1.msra.mxu0 %v6948
        %7048 = vmatprep.subr.mxu0 0.0
        %7049 = vmatpush1.msra.mxu0 %v6949
        %7050 = vmatprep.subr.mxu0 0.0
        %7051 = vmatpush1.msra.mxu0 %v6950
        %7052 = vmatprep.subr.mxu0 0.0
        %7053 = vmatpush1.msra.mxu0 %v6951
        %7054 = vmatprep.subr.mxu0 0.0
        %7055 = vmatpush1.msra.mxu0 %v6952
        %7056 = vmatprep.subr.mxu0 0.0
        %7057 = vmatpush1.msra.mxu0 %v6953
        %7058 = vmatprep.mubr.f32.mxu0 %v6918
        %7059 = vmatmul.mubr.f32.gmra.mrb[0].mxu0 %v6917
        %v7060 = vpop.f32.mrb[0].mxu0
        %v7061 = vadd.f32 %v6992, %v7060
        %v7062 = vpop.f32.mrb[0].mxu0
        %7063 = vdwg.mxu0
        %7064 = vmatprep.subr.mxu0 0.0
        %7065 = vmatpush1.msra.mxu0 %v6954
        %7066 = vmatprep.subr.mxu0 0.0
        %7067 = vmatpush1.msra.mxu0 %v6955
        %7068 = vmatprep.subr.mxu0 0.0
        %7069 = vmatpush1.msra.mxu0 %v6956
        %7070 = vmatprep.subr.mxu0 0.0
        %7071 = vmatpush1.msra.mxu0 %v6957
        %7072 = vmatprep.subr.mxu0 0.0
        %7073 = vmatpush1.msra.mxu0 %v6958
        %7074 = vmatprep.subr.mxu0 0.0
        %7075 = vmatpush1.msra.mxu0 %v6959
        %7076 = vmatprep.subr.mxu0 0.0
        %7077 = vmatpush1.msra.mxu0 %v6960
        %7078 = vmatprep.subr.mxu0 0.0
        %7079 = vmatpush1.msra.mxu0 %v6961
        %7080 = vmatprep.subr.mxu0 0.0
        %7081 = vmatpush1.msra.mxu0 %v6962
        %7082 = vmatprep.subr.mxu0 0.0
        %7083 = vmatpush1.msra.mxu0 %v6963
        %7084 = vmatprep.subr.mxu0 0.0
        %7085 = vmatpush1.msra.mxu0 %v6964
        %7086 = vmatprep.subr.mxu0 0.0
        %7087 = vmatpush1.msra.mxu0 %v6965
        %7088 = vmatprep.subr.mxu0 0.0
        %7089 = vmatpush1.msra.mxu0 %v6966
        %7090 = vmatprep.subr.mxu0 0.0
        %7091 = vmatpush1.msra.mxu0 %v6967
        %7092 = vmatprep.subr.mxu0 0.0
        %7093 = vmatpush1.msra.mxu0 %v6968
        %7094 = vmatprep.subr.mxu0 0.0
        %7095 = vmatpush1.msra.mxu0 %v6969
        %7096 = vmatprep.subr.mxu0 0.0
        %7097 = vmatpush1.msra.mxu0 %v6970
        %7098 = vmatprep.subr.mxu0 0.0
        %7099 = vmatpush1.msra.mxu0 %v6971
        %7100 = vmatprep.subr.mxu0 0.0
        %7101 = vmatpush1.msra.mxu0 %v6972
        %7102 = vmatprep.subr.mxu0 0.0
        %7103 = vmatpush1.msra.mxu0 %v6973
        %7104 = vmatprep.subr.mxu0 0.0
        %7105 = vmatpush1.msra.mxu0 %v6974
        %7106 = vmatprep.subr.mxu0 0.0
        %7107 = vmatpush1.msra.mxu0 %v6975
        %7108 = vmatprep.subr.mxu0 0.0
        %7109 = vmatpush1.msra.mxu0 %v6976
        %7110 = vmatprep.subr.mxu0 0.0
        %7111 = vmatpush1.msra.mxu0 %v6977
        %7112 = vmatprep.subr.mxu0 0.0
        %7113 = vmatpush1.msra.mxu0 %v6978
        %7114 = vmatprep.subr.mxu0 0.0
        %7115 = vmatpush1.msra.mxu0 %v6979
        %7116 = vmatprep.subr.mxu0 0.0
        %7117 = vmatpush1.msra.mxu0 %v6980
        %7118 = vmatprep.subr.mxu0 0.0
        %7119 = vmatpush1.msra.mxu0 %v6981
        %7120 = vmatprep.subr.mxu0 0.0
        %7121 = vmatpush1.msra.mxu0 %v6982
        %7122 = vmatprep.subr.mxu0 0.0
        %7123 = vmatpush1.msra.mxu0 %v6983
        %7124 = vmatprep.subr.mxu0 0.0
        %7125 = vmatpush1.msra.mxu0 %v6984
        %7126 = vmatprep.subr.mxu0 0.0
        %7127 = vmatpush1.msra.mxu0 %v6985
        %7128 = vmatprep.mubr.f32.mxu0 %v6920
        %7129 = vmatmul.mubr.f32.gmra.mrb[0].mxu0 %v6919
        %v7130 = vpop.f32.mrb[0].mxu0
        %v7131 = vadd.f32 %v7061, %v7130
        %v7132 = vpop.f32.mrb[0].mxu0
        %7133 = vdwg.mxu0
        %v7134 = vsel %vm4350, %v7131, -inf
        %7135 = vmax.xlane.f32.xlu0 %v7134
        %v7136 = vpop.xlane.xlu0 %7135
        %v7137 = vmul.f32 %v7136, %v4357
        %v7138 = vadd.f32 %v7137, 0.0
        %v7139 = vsel %vm4360, %v7131, -inf
        %7140 = vmax.xlane.f32.xlu0 %v7139
        %v7141 = vpop.xlane.xlu0 %7140
        %v7142 = vmul.f32 %v7141, %v4367
        %v7143 = vadd.f32 %v7138, %v7142
        %v7144 = vsel %vm4370, %v7131, -inf
        %7145 = vmax.xlane.f32.xlu0 %v7144
        %v7146 = vpop.xlane.xlu0 %7145
        %v7147 = vmul.f32 %v7146, %v4377
        %v7148 = vadd.f32 %v7143, %v7147
        %v7149 = vsel %vm4380, %v7131, -inf
        %7150 = vmax.xlane.f32.xlu0 %v7149
        %v7151 = vpop.xlane.xlu0 %7150
        %v7152 = vmul.f32 %v7151, %v4387
        %v7153 = vadd.f32 %v7148, %v7152
        %v7154 = vsub.f32 %v7131, %v7153
        %v7155 = vmul.f32 %v7154, 1.442695
        %v7156 = vpow.pop %v7155
        %v7158 = vsel %vm2184, %v7156, 0
        %7160 = vmatprep.subr.mxu0 0.0
        %7161 = vmatpush1.msra.mxu0 %v1982
        %7162 = vmatprep.subr.mxu0 0.0
        %7163 = vmatpush1.msra.mxu0 %v1983
        %7164 = vmatprep.subr.mxu0 0.0
        %7165 = vmatpush1.msra.mxu0 %v1984
        %7166 = vmatprep.subr.mxu0 0.0
        %7167 = vmatpush1.msra.mxu0 %v1985
        %7168 = vmatprep.subr.mxu0 0.0
        %7169 = vmatpush1.msra.mxu0 0.0
        %7170 = vmatprep.subr.mxu0 0.0
        %7171 = vmatpush1.msra.mxu0 0.0
        %7172 = vmatprep.subr.mxu0 0.0
        %7173 = vmatpush1.msra.mxu0 0.0
        %7174 = vmatprep.subr.mxu0 0.0
        %7175 = vmatpush1.msra.mxu0 0.0
        %7176 = vmatprep.subr.mxu0 0.0
        %7177 = vmatpush1.msra.mxu0 0.0
        %7178 = vmatprep.subr.mxu0 0.0
        %7179 = vmatpush1.msra.mxu0 0.0
        %7180 = vmatprep.subr.mxu0 0.0
        %7181 = vmatpush1.msra.mxu0 0.0
        %7182 = vmatprep.subr.mxu0 0.0
        %7183 = vmatpush1.msra.mxu0 0.0
        %7184 = vmatprep.subr.mxu0 0.0
        %7185 = vmatpush1.msra.mxu0 0.0
        %7186 = vmatprep.subr.mxu0 0.0
        %7187 = vmatpush1.msra.mxu0 0.0
        %7188 = vmatprep.subr.mxu0 0.0
        %7189 = vmatpush1.msra.mxu0 0.0
        %7190 = vmatprep.subr.mxu0 0.0
        %7191 = vmatpush1.msra.mxu0 0.0
        %7192 = vmatprep.subr.mxu0 0.0
        %7193 = vmatpush1.msra.mxu0 0.0
        %7194 = vmatprep.subr.mxu0 0.0
        %7195 = vmatpush1.msra.mxu0 0.0
        %7196 = vmatprep.subr.mxu0 0.0
        %7197 = vmatpush1.msra.mxu0 0.0
        %7198 = vmatprep.subr.mxu0 0.0
        %7199 = vmatpush1.msra.mxu0 0.0
        %7200 = vmatprep.subr.mxu0 0.0
        %7201 = vmatpush1.msra.mxu0 0.0
        %7202 = vmatprep.subr.mxu0 0.0
        %7203 = vmatpush1.msra.mxu0 0.0
        %7204 = vmatprep.subr.mxu0 0.0
        %7205 = vmatpush1.msra.mxu0 0.0
        %7206 = vmatprep.subr.mxu0 0.0
        %7207 = vmatpush1.msra.mxu0 0.0
        %7208 = vmatprep.subr.mxu0 0.0
        %7209 = vmatpush1.msra.mxu0 0.0
        %7210 = vmatprep.subr.mxu0 0.0
        %7211 = vmatpush1.msra.mxu0 0.0
        %7212 = vmatprep.subr.mxu0 0.0
        %7213 = vmatpush1.msra.mxu0 0.0
        %7214 = vmatprep.subr.mxu0 0.0
        %7215 = vmatpush1.msra.mxu0 0.0
        %7216 = vmatprep.subr.mxu0 0.0
        %7217 = vmatpush1.msra.mxu0 0.0
        %7218 = vmatprep.subr.mxu0 0.0
        %7219 = vmatpush1.msra.mxu0 0.0
        %7220 = vmatprep.subr.mxu0 0.0
        %7221 = vmatpush1.msra.mxu0 0.0
        %7222 = vmatprep.subr.mxu0 0.0
        %7223 = vmatpush1.msra.mxu0 0.0
        %7224 = vmatprep.mubr.f32.mxu0 0.0
        %7225 = vmatmul.mubr.f32.gmra.mrb[0].mxu0 %v7158
        %v7226 = vpop.f32.mrb[0].mxu0
        %v7227 = vadd.f32 0.0, %v7226
        %v7228 = vpop.f32.mrb[0].mxu0
        %7229 = vdwg.mxu0
        %v7230 = vrcp.pop %v7227
        %v7231 = vmul.f32 %v7156, %v7230
        %7233 = vrot.lane.b32.xlu0 %v6372, 96
        %v7234 = vpop.permute.xlu0 %7233
        %7236 = vmatprep.subr.mxu0 0.0
        %7237 = vmatpush1.msra.mxu0 %v7234
        %7238 = vmatprep.subr.mxu0 0.0
        %7239 = vmatpush1.msra.mxu0 0.0
        %7240 = vmatprep.subr.mxu0 0.0
        %7241 = vmatpush1.msra.mxu0 0.0
        %7242 = vmatprep.subr.mxu0 0.0
        %7243 = vmatpush1.msra.mxu0 0.0
        %7244 = vmatprep.subr.mxu0 0.0
        %7245 = vmatpush1.msra.mxu0 0.0
        %7246 = vmatprep.subr.mxu0 0.0
        %7247 = vmatpush1.msra.mxu0 0.0
        %7248 = vmatprep.subr.mxu0 0.0
        %7249 = vmatpush1.msra.mxu0 0.0
        %7250 = vmatprep.subr.mxu0 0.0
        %7251 = vmatpush1.msra.mxu0 0.0
        %7252 = vmatprep.subr.mxu0 0.0
        %7253 = vmatpush1.msra.mxu0 0.0
        %7254 = vmatprep.subr.mxu0 0.0
        %7255 = vmatpush1.msra.mxu0 0.0
        %7256 = vmatprep.subr.mxu0 0.0
        %7257 = vmatpush1.msra.mxu0 0.0
        %7258 = vmatprep.subr.mxu0 0.0
        %7259 = vmatpush1.msra.mxu0 0.0
        %7260 = vmatprep.subr.mxu0 0.0
        %7261 = vmatpush1.msra.mxu0 0.0
        %7262 = vmatprep.subr.mxu0 0.0
        %7263 = vmatpush1.msra.mxu0 0.0
        %7264 = vmatprep.subr.mxu0 0.0
        %7265 = vmatpush1.msra.mxu0 0.0
        %7266 = vmatprep.subr.mxu0 0.0
        %7267 = vmatpush1.msra.mxu0 0.0
        %7268 = vmatprep.subr.mxu0 0.0
        %7269 = vmatpush1.msra.mxu0 0.0
        %7270 = vmatprep.subr.mxu0 0.0
        %7271 = vmatpush1.msra.mxu0 0.0
        %7272 = vmatprep.subr.mxu0 0.0
        %7273 = vmatpush1.msra.mxu0 0.0
        %7274 = vmatprep.subr.mxu0 0.0
        %7275 = vmatpush1.msra.mxu0 0.0
        %7276 = vmatprep.subr.mxu0 0.0
        %7277 = vmatpush1.msra.mxu0 0.0
        %7278 = vmatprep.subr.mxu0 0.0
        %7279 = vmatpush1.msra.mxu0 0.0
        %7280 = vmatprep.subr.mxu0 0.0
        %7281 = vmatpush1.msra.mxu0 0.0
        %7282 = vmatprep.subr.mxu0 0.0
        %7283 = vmatpush1.msra.mxu0 0.0
        %7284 = vmatprep.subr.mxu0 0.0
        %7285 = vmatpush1.msra.mxu0 0.0
        %7286 = vmatprep.subr.mxu0 0.0
        %7287 = vmatpush1.msra.mxu0 0.0
        %7288 = vmatprep.subr.mxu0 0.0
        %7289 = vmatpush1.msra.mxu0 0.0
        %7290 = vmatprep.subr.mxu0 0.0
        %7291 = vmatpush1.msra.mxu0 0.0
        %7292 = vmatprep.subr.mxu0 0.0
        %7293 = vmatpush1.msra.mxu0 0.0
        %7294 = vmatprep.subr.mxu0 0.0
        %7295 = vmatpush1.msra.mxu0 0.0
        %7296 = vmatprep.subr.mxu0 0.0
        %7297 = vmatpush1.msra.mxu0 0.0
        %7298 = vmatprep.subr.mxu0 0.0
        %7299 = vmatpush1.msra.mxu0 0.0
        %7300 = vmatprep.mubr.f32.mxu0 0.0
        %7301 = vmatmul.mubr.f32.gmra.mrb[0].mxu0 %v4473
        %v7302 = vpop.f32.mrb[0].mxu0
        %v7303 = vadd.f32 0.0, %v7302
        %v7304 = vpop.f32.mrb[0].mxu0
        %7305 = vmatprep.mubr.f32.mxu0 0.0
        %7306 = vmatmul.mubr.f32.gmra.mrb[0].mxu0 %v4476
        %v7307 = vpop.f32.mrb[0].mxu0
        %v7308 = vadd.f32 0.0, %v7307
        %v7309 = vpop.f32.mrb[0].mxu0
        %7310 = vmatprep.mubr.f32.mxu0 0.0
        %7311 = vmatmul.mubr.f32.gmra.mrb[0].mxu0 %v4479
        %v7312 = vpop.f32.mrb[0].mxu0
        %v7313 = vadd.f32 0.0, %v7312
        %v7314 = vpop.f32.mrb[0].mxu0
        %7315 = vmatprep.mubr.f32.mxu0 0.0
        %7316 = vmatmul.mubr.f32.gmra.mrb[0].mxu0 %v4482
        %v7317 = vpop.f32.mrb[0].mxu0
        %v7318 = vadd.f32 0.0, %v7317
        %v7319 = vpop.f32.mrb[0].mxu0
        %7320 = vdwg.mxu0
        %v7321 = vmul.f32 %v7303, %v1986
        %v7322 = vmul.f32 %v7308, %v1987
        %v7323 = vmul.f32 %v7313, %v1988
        %v7324 = vmul.f32 %v7318, %v1989
        %v7326 = vsel %vm2184, %v7231, 0
        %7328 = vmatprep.subr.mxu0 0.0
        %7329 = vmatpush1.msra.mxu0 %v7321
        %7330 = vmatprep.subr.mxu0 0.0
        %7331 = vmatpush1.msra.mxu0 %v7322
        %7332 = vmatprep.subr.mxu0 0.0
        %7333 = vmatpush1.msra.mxu0 %v7323
        %7334 = vmatprep.subr.mxu0 0.0
        %7335 = vmatpush1.msra.mxu0 %v7324
        %7336 = vmatprep.subr.mxu0 0.0
        %7337 = vmatpush1.msra.mxu0 0.0
        %7338 = vmatprep.subr.mxu0 0.0
        %7339 = vmatpush1.msra.mxu0 0.0
        %7340 = vmatprep.subr.mxu0 0.0
        %7341 = vmatpush1.msra.mxu0 0.0
        %7342 = vmatprep.subr.mxu0 0.0
        %7343 = vmatpush1.msra.mxu0 0.0
        %7344 = vmatprep.subr.mxu0 0.0
        %7345 = vmatpush1.msra.mxu0 0.0
        %7346 = vmatprep.subr.mxu0 0.0
        %7347 = vmatpush1.msra.mxu0 0.0
        %7348 = vmatprep.subr.mxu0 0.0
        %7349 = vmatpush1.msra.mxu0 0.0
        %7350 = vmatprep.subr.mxu0 0.0
        %7351 = vmatpush1.msra.mxu0 0.0
        %7352 = vmatprep.subr.mxu0 0.0
        %7353 = vmatpush1.msra.mxu0 0.0
        %7354 = vmatprep.subr.mxu0 0.0
        %7355 = vmatpush1.msra.mxu0 0.0
        %7356 = vmatprep.subr.mxu0 0.0
        %7357 = vmatpush1.msra.mxu0 0.0
        %7358 = vmatprep.subr.mxu0 0.0
        %7359 = vmatpush1.msra.mxu0 0.0
        %7360 = vmatprep.subr.mxu0 0.0
        %7361 = vmatpush1.msra.mxu0 0.0
        %7362 = vmatprep.subr.mxu0 0.0
        %7363 = vmatpush1.msra.mxu0 0.0
        %7364 = vmatprep.subr.mxu0 0.0
        %7365 = vmatpush1.msra.mxu0 0.0
        %7366 = vmatprep.subr.mxu0 0.0
        %7367 = vmatpush1.msra.mxu0 0.0
        %7368 = vmatprep.subr.mxu0 0.0
        %7369 = vmatpush1.msra.mxu0 0.0
        %7370 = vmatprep.subr.mxu0 0.0
        %7371 = vmatpush1.msra.mxu0 0.0
        %7372 = vmatprep.subr.mxu0 0.0
        %7373 = vmatpush1.msra.mxu0 0.0
        %7374 = vmatprep.subr.mxu0 0.0
        %7375 = vmatpush1.msra.mxu0 0.0
        %7376 = vmatprep.subr.mxu0 0.0
        %7377 = vmatpush1.msra.mxu0 0.0
        %7378 = vmatprep.subr.mxu0 0.0
        %7379 = vmatpush1.msra.mxu0 0.0
        %7380 = vmatprep.subr.mxu0 0.0
        %7381 = vmatpush1.msra.mxu0 0.0
        %7382 = vmatprep.subr.mxu0 0.0
        %7383 = vmatpush1.msra.mxu0 0.0
        %7384 = vmatprep.subr.mxu0 0.0
        %7385 = vmatpush1.msra.mxu0 0.0
        %7386 = vmatprep.subr.mxu0 0.0
        %7387 = vmatpush1.msra.mxu0 0.0
        %7388 = vmatprep.subr.mxu0 0.0
        %7389 = vmatpush1.msra.mxu0 0.0
        %7390 = vmatprep.subr.mxu0 0.0
        %7391 = vmatpush1.msra.mxu0 0.0
        %7392 = vmatprep.mubr.f32.mxu0 0.0
        %7393 = vmatmul.mubr.f32.gmra.mrb[0].mxu0 %v7326
        %v7394 = vpop.f32.mrb[0].mxu0
        %v7395 = vadd.f32 0.0, %v7394
        %v7396 = vpop.f32.mrb[0].mxu0
        %7397 = vdwg.mxu0
        %s7398 = scalar_lea.vmem %s57, 32
        %v7399 = vld [vmem:[%s7398] sm:$0xff]
        %v7400 = vld [vmem:[%s7398 + $0x8] sm:$0xff]
        %v7401 = vld [vmem:[%s7398 + $0x10] sm:$0xff]
        %v7402 = vld [vmem:[%s7398 + $0x18] sm:$0xff]
        %s7403 = scalar_lea.vmem %s59, 1
        %v7404 = vld [vmem:[%s7403] sm:$0x1]
        %v7406 = vlaneseq
        %v7407 = vshrl.u32 %v7406, 7
        %v7408 = vsub.s32 0, %v7407
        %v7409 = vrot.slane %v7404, %v7408
        %v7412 = vsel %vm2184, %v7395, 0
        %7414 = vmatprep.subr.mxu0 0.0
        %7415 = vmatpush1.msra.mxu0 %v7399
        %7416 = vmatprep.subr.mxu0 0.0
        %7417 = vmatpush1.msra.mxu0 %v7400
        %7418 = vmatprep.subr.mxu0 0.0
        %7419 = vmatpush1.msra.mxu0 %v7401
        %7420 = vmatprep.subr.mxu0 0.0
        %7421 = vmatpush1.msra.mxu0 %v7402
        %7422 = vmatprep.subr.mxu0 0.0
        %7423 = vmatpush1.msra.mxu0 0.0
        %7424 = vmatprep.subr.mxu0 0.0
        %7425 = vmatpush1.msra.mxu0 0.0
        %7426 = vmatprep.subr.mxu0 0.0
        %7427 = vmatpush1.msra.mxu0 0.0
        %7428 = vmatprep.subr.mxu0 0.0
        %7429 = vmatpush1.msra.mxu0 0.0
        %7430 = vmatprep.subr.mxu0 0.0
        %7431 = vmatpush1.msra.mxu0 0.0
        %7432 = vmatprep.subr.mxu0 0.0
        %7433 = vmatpush1.msra.mxu0 0.0
        %7434 = vmatprep.subr.mxu0 0.0
        %7435 = vmatpush1.msra.mxu0 0.0
        %7436 = vmatprep.subr.mxu0 0.0
        %7437 = vmatpush1.msra.mxu0 0.0
        %7438 = vmatprep.subr.mxu0 0.0
        %7439 = vmatpush1.msra.mxu0 0.0
        %7440 = vmatprep.subr.mxu0 0.0
        %7441 = vmatpush1.msra.mxu0 0.0
        %7442 = vmatprep.subr.mxu0 0.0
        %7443 = vmatpush1.msra.mxu0 0.0
        %7444 = vmatprep.subr.mxu0 0.0
        %7445 = vmatpush1.msra.mxu0 0.0
        %7446 = vmatprep.subr.mxu0 0.0
        %7447 = vmatpush1.msra.mxu0 0.0
        %7448 = vmatprep.subr.mxu0 0.0
        %7449 = vmatpush1.msra.mxu0 0.0
        %7450 = vmatprep.subr.mxu0 0.0
        %7451 = vmatpush1.msra.mxu0 0.0
        %7452 = vmatprep.subr.mxu0 0.0
        %7453 = vmatpush1.msra.mxu0 0.0
        %7454 = vmatprep.subr.mxu0 0.0
        %7455 = vmatpush1.msra.mxu0 0.0
        %7456 = vmatprep.subr.mxu0 0.0
        %7457 = vmatpush1.msra.mxu0 0.0
        %7458 = vmatprep.subr.mxu0 0.0
        %7459 = vmatpush1.msra.mxu0 0.0
        %7460 = vmatprep.subr.mxu0 0.0
        %7461 = vmatpush1.msra.mxu0 0.0
        %7462 = vmatprep.subr.mxu0 0.0
        %7463 = vmatpush1.msra.mxu0 0.0
        %7464 = vmatprep.subr.mxu0 0.0
        %7465 = vmatpush1.msra.mxu0 0.0
        %7466 = vmatprep.subr.mxu0 0.0
        %7467 = vmatpush1.msra.mxu0 0.0
        %7468 = vmatprep.subr.mxu0 0.0
        %7469 = vmatpush1.msra.mxu0 0.0
        %7470 = vmatprep.subr.mxu0 0.0
        %7471 = vmatpush1.msra.mxu0 0.0
        %7472 = vmatprep.subr.mxu0 0.0
        %7473 = vmatpush1.msra.mxu0 0.0
        %7474 = vmatprep.subr.mxu0 0.0
        %7475 = vmatpush1.msra.mxu0 0.0
        %7476 = vmatprep.subr.mxu0 0.0
        %7477 = vmatpush1.msra.mxu0 0.0
        %7478 = vmatprep.mubr.f32.mxu0 0.0
        %7479 = vmatmul.mubr.f32.gmra.mrb[0].mxu0 %v7412
        %v7480 = vpop.f32.mrb[0].mxu0
        %v7481 = vadd.f32 %v7409, %v7480
        %v7482 = vpop.f32.mrb[0].mxu0
        %7483 = vdwg.mxu0
        %s7484 = scalar_lea.vmem %s71, 1
        %v7485 = vld [vmem:[%s7484] sm:$0x1]
        %s7486 = scalar_lea.vmem %s69, 1
        %v7487 = vld [vmem:[%s7486] sm:$0x1]
        %v7488 = vadd.f32 %v4980, %v7481
        %v7489 = vsel %vm4733, %v7488, 0.0
        %v7490 = vrot.slane %v7489, 4
        %v7491 = vadd.f32 %v7489, %v7490
        %v7492 = vrot.slane %v7491, 2
        %v7493 = vadd.f32 %v7491, %v7492
        %v7494 = vrot.slane %v7493, 1
        %v7495 = vadd.f32 %v7493, %v7494
        %v7496 = vmul.f32 %v7495, %v4741
        %v7497 = vsub.f32 %v7488, %v7496
        %v7498 = vmul.f32 %v7497, %v7497
        %v7499 = vsel %vm4733, %v7498, 0.0
        %v7500 = vrot.slane %v7499, 4
        %v7501 = vadd.f32 %v7499, %v7500
        %v7502 = vrot.slane %v7501, 2
        %v7503 = vadd.f32 %v7501, %v7502
        %v7504 = vrot.slane %v7503, 1
        %v7505 = vadd.f32 %v7503, %v7504
        %v7506 = vmul.f32 %v7505, %v4741
        %v7507 = vadd.f32 %v7506, 1e-05
        %v7508 = vrsqrt.pop %v7507
        %v7509 = vmul.f32 %v7497, %v7508
        %v7511 = vlaneseq
        %v7512 = vshrl.u32 %v7511, 7
        %v7513 = vsub.s32 0, %v7512
        %v7514 = vrot.slane %v7485, %v7513
        %v7516 = vmul.f32 %v7509, %v7514
        %v7518 = vlaneseq
        %v7519 = vshrl.u32 %v7518, 7
        %v7520 = vsub.s32 0, %v7519
        %v7521 = vrot.slane %v7487, %v7520
        %v7523 = vadd.f32 %v7516, %v7521
        %s7524 = scalar_lea.vmem %s61, 32
        %v7525 = vld [vmem:[%s7524] sm:$0xff]
        %v7526 = vld [vmem:[%s7524 + $0x8] sm:$0xff]
        %v7527 = vld [vmem:[%s7524 + $0x10] sm:$0xff]
        %v7528 = vld [vmem:[%s7524 + $0x18] sm:$0xff]
        %s7529 = scalar_lea.vmem %s65, 1
        %v7530 = vld [vmem:[%s7529] sm:$0x1]
        %v7532 = vlaneseq
        %v7533 = vshrl.u32 %v7532, 7
        %v7534 = vsub.s32 0, %v7533
        %v7535 = vrot.slane %v7530, %v7534
        %v7538 = vsel %vm2184, %v7523, 0
        %7540 = vmatprep.subr.mxu0 0.0
        %7541 = vmatpush1.msra.mxu0 %v7525
        %7542 = vmatprep.subr.mxu0 0.0
        %7543 = vmatpush1.msra.mxu0 %v7526
        %7544 = vmatprep.subr.mxu0 0.0
        %7545 = vmatpush1.msra.mxu0 %v7527
        %7546 = vmatprep.subr.mxu0 0.0
        %7547 = vmatpush1.msra.mxu0 %v7528
        %7548 = vmatprep.subr.mxu0 0.0
        %7549 = vmatpush1.msra.mxu0 0.0
        %7550 = vmatprep.subr.mxu0 0.0
        %7551 = vmatpush1.msra.mxu0 0.0
        %7552 = vmatprep.subr.mxu0 0.0
        %7553 = vmatpush1.msra.mxu0 0.0
        %7554 = vmatprep.subr.mxu0 0.0
        %7555 = vmatpush1.msra.mxu0 0.0
        %7556 = vmatprep.subr.mxu0 0.0
        %7557 = vmatpush1.msra.mxu0 0.0
        %7558 = vmatprep.subr.mxu0 0.0
        %7559 = vmatpush1.msra.mxu0 0.0
        %7560 = vmatprep.subr.mxu0 0.0
        %7561 = vmatpush1.msra.mxu0 0.0
        %7562 = vmatprep.subr.mxu0 0.0
        %7563 = vmatpush1.msra.mxu0 0.0
        %7564 = vmatprep.subr.mxu0 0.0
        %7565 = vmatpush1.msra.mxu0 0.0
        %7566 = vmatprep.subr.mxu0 0.0
        %7567 = vmatpush1.msra.mxu0 0.0
        %7568 = vmatprep.subr.mxu0 0.0
        %7569 = vmatpush1.msra.mxu0 0.0
        %7570 = vmatprep.subr.mxu0 0.0
        %7571 = vmatpush1.msra.mxu0 0.0
        %7572 = vmatprep.subr.mxu0 0.0
        %7573 = vmatpush1.msra.mxu0 0.0
        %7574 = vmatprep.subr.mxu0 0.0
        %7575 = vmatpush1.msra.mxu0 0.0
        %7576 = vmatprep.subr.mxu0 0.0
        %7577 = vmatpush1.msra.mxu0 0.0
        %7578 = vmatprep.subr.mxu0 0.0
        %7579 = vmatpush1.msra.mxu0 0.0
        %7580 = vmatprep.subr.mxu0 0.0
        %7581 = vmatpush1.msra.mxu0 0.0
        %7582 = vmatprep.subr.mxu0 0.0
        %7583 = vmatpush1.msra.mxu0 0.0
        %7584 = vmatprep.subr.mxu0 0.0
        %7585 = vmatpush1.msra.mxu0 0.0
        %7586 = vmatprep.subr.mxu0 0.0
        %7587 = vmatpush1.msra.mxu0 0.0
        %7588 = vmatprep.subr.mxu0 0.0
        %7589 = vmatpush1.msra.mxu0 0.0
        %7590 = vmatprep.subr.mxu0 0.0
        %7591 = vmatpush1.msra.mxu0 0.0
        %7592 = vmatprep.subr.mxu0 0.0
        %7593 = vmatpush1.msra.mxu0 0.0
        %7594 = vmatprep.subr.mxu0 0.0
        %7595 = vmatpush1.msra.mxu0 0.0
        %7596 = vmatprep.subr.mxu0 0.0
        %7597 = vmatpush1.msra.mxu0 0.0
        %7598 = vmatprep.subr.mxu0 0.0
        %7599 = vmatpush1.msra.mxu0 0.0
        %7600 = vmatprep.subr.mxu0 0.0
        %7601 = vmatpush1.msra.mxu0 0.0
        %7602 = vmatprep.subr.mxu0 0.0
        %7603 = vmatpush1.msra.mxu0 0.0
        %7604 = vmatprep.mubr.f32.mxu0 0.0
        %7605 = vmatmul.mubr.f32.gmra.mrb[0].mxu0 %v7538
        %v7606 = vpop.f32.mrb[0].mxu0
        %v7607 = vadd.f32 %v7535, %v7606
        %v7608 = vpop.f32.mrb[0].mxu0
        %7609 = vdwg.mxu0
        %v7610 = vmax.f32 %v7607, 0.0
        %s7611 = scalar_lea.vmem %s63, 64
        %v7612 = vld [vmem:[%s7611] sm:$0xff]
        %v7613 = vld [vmem:[%s7611 + $0x8] sm:$0xff]
        %v7614 = vld [vmem:[%s7611 + $0x10] sm:$0xff]
        %v7615 = vld [vmem:[%s7611 + $0x18] sm:$0xff]
        %v7616 = vld [vmem:[%s7611 + $0x20] sm:$0xff]
        %v7617 = vld [vmem:[%s7611 + $0x28] sm:$0xff]
        %v7618 = vld [vmem:[%s7611 + $0x30] sm:$0xff]
        %v7619 = vld [vmem:[%s7611 + $0x38] sm:$0xff]
        %s7620 = scalar_lea.vmem %s67, 1
        %v7621 = vld [vmem:[%s7620] sm:$0x1]
        %v7623 = vlaneseq
        %v7624 = vshrl.u32 %v7623, 7
        %v7625 = vsub.s32 0, %v7624
        %v7626 = vrot.slane %v7621, %v7625
        %v7629 = vsel %vm3332, %v7610, 0
        %7631 = vmatprep.subr.mxu0 0.0
        %7632 = vmatpush1.msra.mxu0 %v7612
        %7633 = vmatprep.subr.mxu0 0.0
        %7634 = vmatpush1.msra.mxu0 %v7613
        %7635 = vmatprep.subr.mxu0 0.0
        %7636 = vmatpush1.msra.mxu0 %v7614
        %7637 = vmatprep.subr.mxu0 0.0
        %7638 = vmatpush1.msra.mxu0 %v7615
        %7639 = vmatprep.subr.mxu0 0.0
        %7640 = vmatpush1.msra.mxu0 %v7616
        %7641 = vmatprep.subr.mxu0 0.0
        %7642 = vmatpush1.msra.mxu0 %v7617
        %7643 = vmatprep.subr.mxu0 0.0
        %7644 = vmatpush1.msra.mxu0 %v7618
        %7645 = vmatprep.subr.mxu0 0.0
        %7646 = vmatpush1.msra.mxu0 %v7619
        %7647 = vmatprep.subr.mxu0 0.0
        %7648 = vmatpush1.msra.mxu0 0.0
        %7649 = vmatprep.subr.mxu0 0.0
        %7650 = vmatpush1.msra.mxu0 0.0
        %7651 = vmatprep.subr.mxu0 0.0
        %7652 = vmatpush1.msra.mxu0 0.0
        %7653 = vmatprep.subr.mxu0 0.0
        %7654 = vmatpush1.msra.mxu0 0.0
        %7655 = vmatprep.subr.mxu0 0.0
        %7656 = vmatpush1.msra.mxu0 0.0
        %7657 = vmatprep.subr.mxu0 0.0
        %7658 = vmatpush1.msra.mxu0 0.0
        %7659 = vmatprep.subr.mxu0 0.0
        %7660 = vmatpush1.msra.mxu0 0.0
        %7661 = vmatprep.subr.mxu0 0.0
        %7662 = vmatpush1.msra.mxu0 0.0
        %7663 = vmatprep.subr.mxu0 0.0
        %7664 = vmatpush1.msra.mxu0 0.0
        %7665 = vmatprep.subr.mxu0 0.0
        %7666 = vmatpush1.msra.mxu0 0.0
        %7667 = vmatprep.subr.mxu0 0.0
        %7668 = vmatpush1.msra.mxu0 0.0
        %7669 = vmatprep.subr.mxu0 0.0
        %7670 = vmatpush1.msra.mxu0 0.0
        %7671 = vmatprep.subr.mxu0 0.0
        %7672 = vmatpush1.msra.mxu0 0.0
        %7673 = vmatprep.subr.mxu0 0.0
        %7674 = vmatpush1.msra.mxu0 0.0
        %7675 = vmatprep.subr.mxu0 0.0
        %7676 = vmatpush1.msra.mxu0 0.0
        %7677 = vmatprep.subr.mxu0 0.0
        %7678 = vmatpush1.msra.mxu0 0.0
        %7679 = vmatprep.subr.mxu0 0.0
        %7680 = vmatpush1.msra.mxu0 0.0
        %7681 = vmatprep.subr.mxu0 0.0
        %7682 = vmatpush1.msra.mxu0 0.0
        %7683 = vmatprep.subr.mxu0 0.0
        %7684 = vmatpush1.msra.mxu0 0.0
        %7685 = vmatprep.subr.mxu0 0.0
        %7686 = vmatpush1.msra.mxu0 0.0
        %7687 = vmatprep.subr.mxu0 0.0
        %7688 = vmatpush1.msra.mxu0 0.0
        %7689 = vmatprep.subr.mxu0 0.0
        %7690 = vmatpush1.msra.mxu0 0.0
        %7691 = vmatprep.subr.mxu0 0.0
        %7692 = vmatpush1.msra.mxu0 0.0
        %7693 = vmatprep.subr.mxu0 0.0
        %7694 = vmatpush1.msra.mxu0 0.0
        %7695 = vmatprep.mubr.f32.mxu0 0.0
        %7696 = vmatmul.mubr.f32.gmra.mrb[0].mxu0 %v7629
        %v7697 = vpop.f32.mrb[0].mxu0
        %v7698 = vadd.f32 %v7626, %v7697
        %v7699 = vpop.f32.mrb[0].mxu0
        %7700 = vdwg.mxu0
        %s7701 = scalar_lea.vmem %s75, 1
        %v7702 = vld [vmem:[%s7701] sm:$0x1]
        %s7703 = scalar_lea.vmem %s73, 1
        %v7704 = vld [vmem:[%s7703] sm:$0x1]
        %v7705 = vadd.f32 %v7523, %v7698
        %v7706 = vsel %vm4733, %v7705, 0.0
        %v7707 = vrot.slane %v7706, 4
        %v7708 = vadd.f32 %v7706, %v7707
        %v7709 = vrot.slane %v7708, 2
        %v7710 = vadd.f32 %v7708, %v7709
        %v7711 = vrot.slane %v7710, 1
        %v7712 = vadd.f32 %v7710, %v7711
        %v7713 = vmul.f32 %v7712, %v4741
        %v7714 = vsub.f32 %v7705, %v7713
        %v7715 = vmul.f32 %v7714, %v7714
        %v7716 = vsel %vm4733, %v7715, 0.0
        %v7717 = vrot.slane %v7716, 4
        %v7718 = vadd.f32 %v7716, %v7717
        %v7719 = vrot.slane %v7718, 2
        %v7720 = vadd.f32 %v7718, %v7719
        %v7721 = vrot.slane %v7720, 1
        %v7722 = vadd.f32 %v7720, %v7721
        %v7723 = vmul.f32 %v7722, %v4741
        %v7724 = vadd.f32 %v7723, 1e-05
        %v7725 = vrsqrt.pop %v7724
        %v7726 = vmul.f32 %v7714, %v7725
        %v7728 = vlaneseq
        %v7729 = vshrl.u32 %v7728, 7
        %v7730 = vsub.s32 0, %v7729
        %v7731 = vrot.slane %v7702, %v7730
        %v7733 = vmul.f32 %v7726, %v7731
        %v7735 = vlaneseq
        %v7736 = vshrl.u32 %v7735, 7
        %v7737 = vsub.s32 0, %v7736
        %v7738 = vrot.slane %v7704, %v7737
        %v7740 = vadd.f32 %v7733, %v7738
        %v7742 = vsel %vm2184, %v6224, 0
        %7744 = vmatprep.subr.mxu0 0.0
        %7745 = vmatpush1.msra.mxu0 %v1990
        %7746 = vmatprep.subr.mxu0 0.0
        %7747 = vmatpush1.msra.mxu0 %v1991
        %7748 = vmatprep.subr.mxu0 0.0
        %7749 = vmatpush1.msra.mxu0 %v1992
        %7750 = vmatprep.subr.mxu0 0.0
        %7751 = vmatpush1.msra.mxu0 %v1993
        %7752 = vmatprep.subr.mxu0 0.0
        %7753 = vmatpush1.msra.mxu0 0.0
        %7754 = vmatprep.subr.mxu0 0.0
        %7755 = vmatpush1.msra.mxu0 0.0
        %7756 = vmatprep.subr.mxu0 0.0
        %7757 = vmatpush1.msra.mxu0 0.0
        %7758 = vmatprep.subr.mxu0 0.0
        %7759 = vmatpush1.msra.mxu0 0.0
        %7760 = vmatprep.subr.mxu0 0.0
        %7761 = vmatpush1.msra.mxu0 0.0
        %7762 = vmatprep.subr.mxu0 0.0
        %7763 = vmatpush1.msra.mxu0 0.0
        %7764 = vmatprep.subr.mxu0 0.0
        %7765 = vmatpush1.msra.mxu0 0.0
        %7766 = vmatprep.subr.mxu0 0.0
        %7767 = vmatpush1.msra.mxu0 0.0
        %7768 = vmatprep.subr.mxu0 0.0
        %7769 = vmatpush1.msra.mxu0 0.0
        %7770 = vmatprep.subr.mxu0 0.0
        %7771 = vmatpush1.msra.mxu0 0.0
        %7772 = vmatprep.subr.mxu0 0.0
        %7773 = vmatpush1.msra.mxu0 0.0
        %7774 = vmatprep.subr.mxu0 0.0
        %7775 = vmatpush1.msra.mxu0 0.0
        %7776 = vmatprep.subr.mxu0 0.0
        %7777 = vmatpush1.msra.mxu0 0.0
        %7778 = vmatprep.subr.mxu0 0.0
        %7779 = vmatpush1.msra.mxu0 0.0
        %7780 = vmatprep.subr.mxu0 0.0
        %7781 = vmatpush1.msra.mxu0 0.0
        %7782 = vmatprep.subr.mxu0 0.0
        %7783 = vmatpush1.msra.mxu0 0.0
        %7784 = vmatprep.subr.mxu0 0.0
        %7785 = vmatpush1.msra.mxu0 0.0
        %7786 = vmatprep.subr.mxu0 0.0
        %7787 = vmatpush1.msra.mxu0 0.0
        %7788 = vmatprep.subr.mxu0 0.0
        %7789 = vmatpush1.msra.mxu0 0.0
        %7790 = vmatprep.subr.mxu0 0.0
        %7791 = vmatpush1.msra.mxu0 0.0
        %7792 = vmatprep.subr.mxu0 0.0
        %7793 = vmatpush1.msra.mxu0 0.0
        %7794 = vmatprep.subr.mxu0 0.0
        %7795 = vmatpush1.msra.mxu0 0.0
        %7796 = vmatprep.subr.mxu0 0.0
        %7797 = vmatpush1.msra.mxu0 0.0
        %7798 = vmatprep.subr.mxu0 0.0
        %7799 = vmatpush1.msra.mxu0 0.0
        %7800 = vmatprep.subr.mxu0 0.0
        %7801 = vmatpush1.msra.mxu0 0.0
        %7802 = vmatprep.subr.mxu0 0.0
        %7803 = vmatpush1.msra.mxu0 0.0
        %7804 = vmatprep.subr.mxu0 0.0
        %7805 = vmatpush1.msra.mxu0 0.0
        %7806 = vmatprep.subr.mxu0 0.0
        %7807 = vmatpush1.msra.mxu0 0.0
        %7808 = vmatprep.mubr.f32.mxu0 0.0
        %7809 = vmatmul.mubr.f32.gmra.mrb[0].mxu0 %v7742
        %v7810 = vpop.f32.mrb[0].mxu0
        %v7811 = vadd.f32 0.0, %v7810
        %v7812 = vpop.f32.mrb[0].mxu0
        %7813 = vdwg.mxu0
        %v7815 = vsel %vm2184, %v7740, 0
        %7817 = vmatprep.subr.mxu0 0.0
        %7818 = vmatpush1.msra.mxu0 %v1994
        %7819 = vmatprep.subr.mxu0 0.0
        %7820 = vmatpush1.msra.mxu0 %v1995
        %7821 = vmatprep.subr.mxu0 0.0
        %7822 = vmatpush1.msra.mxu0 %v1996
        %7823 = vmatprep.subr.mxu0 0.0
        %7824 = vmatpush1.msra.mxu0 %v1997
        %7825 = vmatprep.subr.mxu0 0.0
        %7826 = vmatpush1.msra.mxu0 0.0
        %7827 = vmatprep.subr.mxu0 0.0
        %7828 = vmatpush1.msra.mxu0 0.0
        %7829 = vmatprep.subr.mxu0 0.0
        %7830 = vmatpush1.msra.mxu0 0.0
        %7831 = vmatprep.subr.mxu0 0.0
        %7832 = vmatpush1.msra.mxu0 0.0
        %7833 = vmatprep.subr.mxu0 0.0
        %7834 = vmatpush1.msra.mxu0 0.0
        %7835 = vmatprep.subr.mxu0 0.0
        %7836 = vmatpush1.msra.mxu0 0.0
        %7837 = vmatprep.subr.mxu0 0.0
        %7838 = vmatpush1.msra.mxu0 0.0
        %7839 = vmatprep.subr.mxu0 0.0
        %7840 = vmatpush1.msra.mxu0 0.0
        %7841 = vmatprep.subr.mxu0 0.0
        %7842 = vmatpush1.msra.mxu0 0.0
        %7843 = vmatprep.subr.mxu0 0.0
        %7844 = vmatpush1.msra.mxu0 0.0
        %7845 = vmatprep.subr.mxu0 0.0
        %7846 = vmatpush1.msra.mxu0 0.0
        %7847 = vmatprep.subr.mxu0 0.0
        %7848 = vmatpush1.msra.mxu0 0.0
        %7849 = vmatprep.subr.mxu0 0.0
        %7850 = vmatpush1.msra.mxu0 0.0
        %7851 = vmatprep.subr.mxu0 0.0
        %7852 = vmatpush1.msra.mxu0 0.0
        %7853 = vmatprep.subr.mxu0 0.0
        %7854 = vmatpush1.msra.mxu0 0.0
        %7855 = vmatprep.subr.mxu0 0.0
        %7856 = vmatpush1.msra.mxu0 0.0
        %7857 = vmatprep.subr.mxu0 0.0
        %7858 = vmatpush1.msra.mxu0 0.0
        %7859 = vmatprep.subr.mxu0 0.0
        %7860 = vmatpush1.msra.mxu0 0.0
        %7861 = vmatprep.subr.mxu0 0.0
        %7862 = vmatpush1.msra.mxu0 0.0
        %7863 = vmatprep.subr.mxu0 0.0
        %7864 = vmatpush1.msra.mxu0 0.0
        %7865 = vmatprep.subr.mxu0 0.0
        %7866 = vmatpush1.msra.mxu0 0.0
        %7867 = vmatprep.subr.mxu0 0.0
        %7868 = vmatpush1.msra.mxu0 0.0
        %7869 = vmatprep.subr.mxu0 0.0
        %7870 = vmatpush1.msra.mxu0 0.0
        %7871 = vmatprep.subr.mxu0 0.0
        %7872 = vmatpush1.msra.mxu0 0.0
        %7873 = vmatprep.subr.mxu0 0.0
        %7874 = vmatpush1.msra.mxu0 0.0
        %7875 = vmatprep.subr.mxu0 0.0
        %7876 = vmatpush1.msra.mxu0 0.0
        %7877 = vmatprep.subr.mxu0 0.0
        %7878 = vmatpush1.msra.mxu0 0.0
        %7879 = vmatprep.subr.mxu0 0.0
        %7880 = vmatpush1.msra.mxu0 0.0
        %7881 = vmatprep.mubr.f32.mxu0 0.0
        %7882 = vmatmul.mubr.f32.gmra.mrb[0].mxu0 %v7815
        %v7883 = vpop.f32.mrb[0].mxu0
        %v7884 = vadd.f32 0.0, %v7883
        %v7885 = vpop.f32.mrb[0].mxu0
        %7886 = vdwg.mxu0
        %7887 = vxpose.xlu0.b32.start [1/16] %v7811, 128
        %7888 = vxpose.xlu0.b32.cont [2/16] 0.0, 128
        %7889 = vxpose.xlu0.b32.cont [3/16] 0.0, 128
        %7890 = vxpose.xlu0.b32.cont [4/16] 0.0, 128
        %7891 = vxpose.xlu0.b32.cont [5/16] 0.0, 128
        %7892 = vxpose.xlu0.b32.cont [6/16] 0.0, 128
        %7893 = vxpose.xlu0.b32.cont [7/16] 0.0, 128
        %7894 = vxpose.xlu0.b32.cont [8/16] 0.0, 128
        %7895 = vxpose.xlu0.b32.cont [9/16] 0.0, 128
        %7896 = vxpose.xlu0.b32.cont [10/16] 0.0, 128
        %7897 = vxpose.xlu0.b32.cont [11/16] 0.0, 128
        %7898 = vxpose.xlu0.b32.cont [12/16] 0.0, 128
        %7899 = vxpose.xlu0.b32.cont [13/16] 0.0, 128
        %7900 = vxpose.xlu0.b32.cont [14/16] 0.0, 128
        %7901 = vxpose.xlu0.b32.cont [15/16] 0.0, 128
        %7902 = vxpose.xlu0.b32.end [16/16] 0.0, 128
        %v7903 = vpop.trf.xlu0
        %v7904 = vpop.trf.xlu0
        %v7905 = vpop.trf.xlu0
        %v7906 = vpop.trf.xlu0
        %v7907 = vpop.trf.xlu0
        %v7908 = vpop.trf.xlu0
        %v7909 = vpop.trf.xlu0
        %v7910 = vpop.trf.xlu0
        %v7911 = vpop.trf.xlu0
        %v7912 = vpop.trf.xlu0
        %v7913 = vpop.trf.xlu0
        %v7914 = vpop.trf.xlu0
        %v7915 = vpop.trf.xlu0
        %v7916 = vpop.trf.xlu0
        %v7917 = vpop.trf.xlu0
        %v7918 = vpop.trf.xlu0
        %v7920 = vsel %vm3624, %v7903, 0
        %v7923 = vsel %vm3624, %v7904, 0
        %v7926 = vsel %vm3624, %v7905, 0
        %v7929 = vsel %vm3624, %v7906, 0
        %7931 = vmatprep.subr.mxu0 0.0
        %7932 = vmatpush1.msra.mxu0 %v1977
        %7933 = vmatprep.subr.mxu0 0.0
        %7934 = vmatpush1.msra.mxu0 0.0
        %7935 = vmatprep.subr.mxu0 0.0
        %7936 = vmatpush1.msra.mxu0 0.0
        %7937 = vmatprep.subr.mxu0 0.0
        %7938 = vmatpush1.msra.mxu0 0.0
        %7939 = vmatprep.subr.mxu0 0.0
        %7940 = vmatpush1.msra.mxu0 0.0
        %7941 = vmatprep.subr.mxu0 0.0
        %7942 = vmatpush1.msra.mxu0 0.0
        %7943 = vmatprep.subr.mxu0 0.0
        %7944 = vmatpush1.msra.mxu0 0.0
        %7945 = vmatprep.subr.mxu0 0.0
        %7946 = vmatpush1.msra.mxu0 0.0
        %7947 = vmatprep.subr.mxu0 0.0
        %7948 = vmatpush1.msra.mxu0 0.0
        %7949 = vmatprep.subr.mxu0 0.0
        %7950 = vmatpush1.msra.mxu0 0.0
        %7951 = vmatprep.subr.mxu0 0.0
        %7952 = vmatpush1.msra.mxu0 0.0
        %7953 = vmatprep.subr.mxu0 0.0
        %7954 = vmatpush1.msra.mxu0 0.0
        %7955 = vmatprep.subr.mxu0 0.0
        %7956 = vmatpush1.msra.mxu0 0.0
        %7957 = vmatprep.subr.mxu0 0.0
        %7958 = vmatpush1.msra.mxu0 0.0
        %7959 = vmatprep.subr.mxu0 0.0
        %7960 = vmatpush1.msra.mxu0 0.0
        %7961 = vmatprep.subr.mxu0 0.0
        %7962 = vmatpush1.msra.mxu0 0.0
        %7963 = vmatprep.subr.mxu0 0.0
        %7964 = vmatpush1.msra.mxu0 0.0
        %7965 = vmatprep.subr.mxu0 0.0
        %7966 = vmatpush1.msra.mxu0 0.0
        %7967 = vmatprep.subr.mxu0 0.0
        %7968 = vmatpush1.msra.mxu0 0.0
        %7969 = vmatprep.subr.mxu0 0.0
        %7970 = vmatpush1.msra.mxu0 0.0
        %7971 = vmatprep.subr.mxu0 0.0
        %7972 = vmatpush1.msra.mxu0 0.0
        %7973 = vmatprep.subr.mxu0 0.0
        %7974 = vmatpush1.msra.mxu0 0.0
        %7975 = vmatprep.subr.mxu0 0.0
        %7976 = vmatpush1.msra.mxu0 0.0
        %7977 = vmatprep.subr.mxu0 0.0
        %7978 = vmatpush1.msra.mxu0 0.0
        %7979 = vmatprep.subr.mxu0 0.0
        %7980 = vmatpush1.msra.mxu0 0.0
        %7981 = vmatprep.subr.mxu0 0.0
        %7982 = vmatpush1.msra.mxu0 0.0
        %7983 = vmatprep.subr.mxu0 0.0
        %7984 = vmatpush1.msra.mxu0 0.0
        %7985 = vmatprep.subr.mxu0 0.0
        %7986 = vmatpush1.msra.mxu0 0.0
        %7987 = vmatprep.subr.mxu0 0.0
        %7988 = vmatpush1.msra.mxu0 0.0
        %7989 = vmatprep.subr.mxu0 0.0
        %7990 = vmatpush1.msra.mxu0 0.0
        %7991 = vmatprep.subr.mxu0 0.0
        %7992 = vmatpush1.msra.mxu0 0.0
        %7993 = vmatprep.subr.mxu0 0.0
        %7994 = vmatpush1.msra.mxu0 0.0
        %7995 = vmatprep.mubr.f32.mxu0 0.0
        %7996 = vmatmul.mubr.f32.gmra.mrb[0].mxu0 %v7920
        %v7997 = vpop.f32.mrb[0].mxu0
        %v7998 = vadd.f32 0.0, %v7997
        %v7999 = vpop.f32.mrb[0].mxu0
        %8000 = vmatprep.mubr.f32.mxu0 0.0
        %8001 = vmatmul.mubr.f32.gmra.mrb[0].mxu0 %v7923
        %v8002 = vpop.f32.mrb[0].mxu0
        %v8003 = vadd.f32 0.0, %v8002
        %v8004 = vpop.f32.mrb[0].mxu0
        %8005 = vmatprep.mubr.f32.mxu0 0.0
        %8006 = vmatmul.mubr.f32.gmra.mrb[0].mxu0 %v7926
        %v8007 = vpop.f32.mrb[0].mxu0
        %v8008 = vadd.f32 0.0, %v8007
        %v8009 = vpop.f32.mrb[0].mxu0
        %8010 = vmatprep.mubr.f32.mxu0 0.0
        %8011 = vmatmul.mubr.f32.gmra.mrb[0].mxu0 %v7929
        %v8012 = vpop.f32.mrb[0].mxu0
        %v8013 = vadd.f32 0.0, %v8012
        %v8014 = vpop.f32.mrb[0].mxu0
        %8015 = vdwg.mxu0
        %v8016 = vmul.f32 %v7998, %v1973
        %v8017 = vmul.f32 %v8003, %v1974
        %v8018 = vmul.f32 %v8008, %v1975
        %v8019 = vmul.f32 %v8013, %v1976
        %v8021 = vsel %vm2184, %v7884, 0
        %8023 = vmatprep.subr.mxu0 0.0
        %8024 = vmatpush1.msra.mxu0 %v8016
        %8025 = vmatprep.subr.mxu0 0.0
        %8026 = vmatpush1.msra.mxu0 %v8017
        %8027 = vmatprep.subr.mxu0 0.0
        %8028 = vmatpush1.msra.mxu0 %v8018
        %8029 = vmatprep.subr.mxu0 0.0
        %8030 = vmatpush1.msra.mxu0 %v8019
        %8031 = vmatprep.subr.mxu0 0.0
        %8032 = vmatpush1.msra.mxu0 0.0
        %8033 = vmatprep.subr.mxu0 0.0
        %8034 = vmatpush1.msra.mxu0 0.0
        %8035 = vmatprep.subr.mxu0 0.0
        %8036 = vmatpush1.msra.mxu0 0.0
        %8037 = vmatprep.subr.mxu0 0.0
        %8038 = vmatpush1.msra.mxu0 0.0
        %8039 = vmatprep.subr.mxu0 0.0
        %8040 = vmatpush1.msra.mxu0 0.0
        %8041 = vmatprep.subr.mxu0 0.0
        %8042 = vmatpush1.msra.mxu0 0.0
        %8043 = vmatprep.subr.mxu0 0.0
        %8044 = vmatpush1.msra.mxu0 0.0
        %8045 = vmatprep.subr.mxu0 0.0
        %8046 = vmatpush1.msra.mxu0 0.0
        %8047 = vmatprep.subr.mxu0 0.0
        %8048 = vmatpush1.msra.mxu0 0.0
        %8049 = vmatprep.subr.mxu0 0.0
        %8050 = vmatpush1.msra.mxu0 0.0
        %8051 = vmatprep.subr.mxu0 0.0
        %8052 = vmatpush1.msra.mxu0 0.0
        %8053 = vmatprep.subr.mxu0 0.0
        %8054 = vmatpush1.msra.mxu0 0.0
        %8055 = vmatprep.subr.mxu0 0.0
        %8056 = vmatpush1.msra.mxu0 0.0
        %8057 = vmatprep.subr.mxu0 0.0
        %8058 = vmatpush1.msra.mxu0 0.0
        %8059 = vmatprep.subr.mxu0 0.0
        %8060 = vmatpush1.msra.mxu0 0.0
        %8061 = vmatprep.subr.mxu0 0.0
        %8062 = vmatpush1.msra.mxu0 0.0
        %8063 = vmatprep.subr.mxu0 0.0
        %8064 = vmatpush1.msra.mxu0 0.0
        %8065 = vmatprep.subr.mxu0 0.0
        %8066 = vmatpush1.msra.mxu0 0.0
        %8067 = vmatprep.subr.mxu0 0.0
        %8068 = vmatpush1.msra.mxu0 0.0
        %8069 = vmatprep.subr.mxu0 0.0
        %8070 = vmatpush1.msra.mxu0 0.0
        %8071 = vmatprep.subr.mxu0 0.0
        %8072 = vmatpush1.msra.mxu0 0.0
        %8073 = vmatprep.subr.mxu0 0.0
        %8074 = vmatpush1.msra.mxu0 0.0
        %8075 = vmatprep.subr.mxu0 0.0
        %8076 = vmatpush1.msra.mxu0 0.0
        %8077 = vmatprep.subr.mxu0 0.0
        %8078 = vmatpush1.msra.mxu0 0.0
        %8079 = vmatprep.subr.mxu0 0.0
        %8080 = vmatpush1.msra.mxu0 0.0
        %8081 = vmatprep.subr.mxu0 0.0
        %8082 = vmatpush1.msra.mxu0 0.0
        %8083 = vmatprep.subr.mxu0 0.0
        %8084 = vmatpush1.msra.mxu0 0.0
        %8085 = vmatprep.subr.mxu0 0.0
        %8086 = vmatpush1.msra.mxu0 0.0
        %8087 = vmatprep.mubr.f32.mxu0 0.0
        %8088 = vmatmul.mubr.f32.gmra.mrb[0].mxu0 %v8021
        %v8089 = vpop.f32.mrb[0].mxu0
        %v8090 = vadd.f32 0.0, %v8089
        %v8091 = vpop.f32.mrb[0].mxu0
        %8092 = vdwg.mxu0
        %v8093 = vsel %vm4350, %v8090, -inf
        %8094 = vmax.xlane.f32.xlu0 %v8093
        %v8095 = vpop.xlane.xlu0 %8094
        %v8096 = vmul.f32 %v8095, %v4357
        %v8097 = vadd.f32 %v8096, 0.0
        %v8098 = vsel %vm4360, %v8090, -inf
        %8099 = vmax.xlane.f32.xlu0 %v8098
        %v8100 = vpop.xlane.xlu0 %8099
        %v8101 = vmul.f32 %v8100, %v4367
        %v8102 = vadd.f32 %v8097, %v8101
        %v8103 = vsel %vm4370, %v8090, -inf
        %8104 = vmax.xlane.f32.xlu0 %v8103
        %v8105 = vpop.xlane.xlu0 %8104
        %v8106 = vmul.f32 %v8105, %v4377
        %v8107 = vadd.f32 %v8102, %v8106
        %v8108 = vsel %vm4380, %v8090, -inf
        %8109 = vmax.xlane.f32.xlu0 %v8108
        %v8110 = vpop.xlane.xlu0 %8109
        %v8111 = vmul.f32 %v8110, %v4387
        %v8112 = vadd.f32 %v8107, %v8111
        %v8113 = vsub.f32 %v8090, %v8112
        %v8114 = vmul.f32 %v8113, 1.442695
        %v8115 = vpow.pop %v8114
        %v8117 = vsel %vm2184, %v8115, 0
        %8119 = vmatprep.subr.mxu0 0.0
        %8120 = vmatpush1.msra.mxu0 %v1982
        %8121 = vmatprep.subr.mxu0 0.0
        %8122 = vmatpush1.msra.mxu0 %v1983
        %8123 = vmatprep.subr.mxu0 0.0
        %8124 = vmatpush1.msra.mxu0 %v1984
        %8125 = vmatprep.subr.mxu0 0.0
        %8126 = vmatpush1.msra.mxu0 %v1985
        %8127 = vmatprep.subr.mxu0 0.0
        %8128 = vmatpush1.msra.mxu0 0.0
        %8129 = vmatprep.subr.mxu0 0.0
        %8130 = vmatpush1.msra.mxu0 0.0
        %8131 = vmatprep.subr.mxu0 0.0
        %8132 = vmatpush1.msra.mxu0 0.0
        %8133 = vmatprep.subr.mxu0 0.0
        %8134 = vmatpush1.msra.mxu0 0.0
        %8135 = vmatprep.subr.mxu0 0.0
        %8136 = vmatpush1.msra.mxu0 0.0
        %8137 = vmatprep.subr.mxu0 0.0
        %8138 = vmatpush1.msra.mxu0 0.0
        %8139 = vmatprep.subr.mxu0 0.0
        %8140 = vmatpush1.msra.mxu0 0.0
        %8141 = vmatprep.subr.mxu0 0.0
        %8142 = vmatpush1.msra.mxu0 0.0
        %8143 = vmatprep.subr.mxu0 0.0
        %8144 = vmatpush1.msra.mxu0 0.0
        %8145 = vmatprep.subr.mxu0 0.0
        %8146 = vmatpush1.msra.mxu0 0.0
        %8147 = vmatprep.subr.mxu0 0.0
        %8148 = vmatpush1.msra.mxu0 0.0
        %8149 = vmatprep.subr.mxu0 0.0
        %8150 = vmatpush1.msra.mxu0 0.0
        %8151 = vmatprep.subr.mxu0 0.0
        %8152 = vmatpush1.msra.mxu0 0.0
        %8153 = vmatprep.subr.mxu0 0.0
        %8154 = vmatpush1.msra.mxu0 0.0
        %8155 = vmatprep.subr.mxu0 0.0
        %8156 = vmatpush1.msra.mxu0 0.0
        %8157 = vmatprep.subr.mxu0 0.0
        %8158 = vmatpush1.msra.mxu0 0.0
        %8159 = vmatprep.subr.mxu0 0.0
        %8160 = vmatpush1.msra.mxu0 0.0
        %8161 = vmatprep.subr.mxu0 0.0
        %8162 = vmatpush1.msra.mxu0 0.0
        %8163 = vmatprep.subr.mxu0 0.0
        %8164 = vmatpush1.msra.mxu0 0.0
        %8165 = vmatprep.subr.mxu0 0.0
        %8166 = vmatpush1.msra.mxu0 0.0
        %8167 = vmatprep.subr.mxu0 0.0
        %8168 = vmatpush1.msra.mxu0 0.0
        %8169 = vmatprep.subr.mxu0 0.0
        %8170 = vmatpush1.msra.mxu0 0.0
        %8171 = vmatprep.subr.mxu0 0.0
        %8172 = vmatpush1.msra.mxu0 0.0
        %8173 = vmatprep.subr.mxu0 0.0
        %8174 = vmatpush1.msra.mxu0 0.0
        %8175 = vmatprep.subr.mxu0 0.0
        %8176 = vmatpush1.msra.mxu0 0.0
        %8177 = vmatprep.subr.mxu0 0.0
        %8178 = vmatpush1.msra.mxu0 0.0
        %8179 = vmatprep.subr.mxu0 0.0
        %8180 = vmatpush1.msra.mxu0 0.0
        %8181 = vmatprep.subr.mxu0 0.0
        %8182 = vmatpush1.msra.mxu0 0.0
        %8183 = vmatprep.mubr.f32.mxu0 0.0
        %8184 = vmatmul.mubr.f32.gmra.mrb[0].mxu0 %v8117
        %v8185 = vpop.f32.mrb[0].mxu0
        %v8186 = vadd.f32 0.0, %v8185
        %v8187 = vpop.f32.mrb[0].mxu0
        %8188 = vdwg.mxu0
        %v8189 = vrcp.pop %v8186
        %v8190 = vmul.f32 %v8115, %v8189
        %8192 = vrot.lane.b32.xlu0 %v7811, 96
        %v8193 = vpop.permute.xlu0 %8192
        %8195 = vmatprep.subr.mxu0 0.0
        %8196 = vmatpush1.msra.mxu0 %v8193
        %8197 = vmatprep.subr.mxu0 0.0
        %8198 = vmatpush1.msra.mxu0 0.0
        %8199 = vmatprep.subr.mxu0 0.0
        %8200 = vmatpush1.msra.mxu0 0.0
        %8201 = vmatprep.subr.mxu0 0.0
        %8202 = vmatpush1.msra.mxu0 0.0
        %8203 = vmatprep.subr.mxu0 0.0
        %8204 = vmatpush1.msra.mxu0 0.0
        %8205 = vmatprep.subr.mxu0 0.0
        %8206 = vmatpush1.msra.mxu0 0.0
        %8207 = vmatprep.subr.mxu0 0.0
        %8208 = vmatpush1.msra.mxu0 0.0
        %8209 = vmatprep.subr.mxu0 0.0
        %8210 = vmatpush1.msra.mxu0 0.0
        %8211 = vmatprep.subr.mxu0 0.0
        %8212 = vmatpush1.msra.mxu0 0.0
        %8213 = vmatprep.subr.mxu0 0.0
        %8214 = vmatpush1.msra.mxu0 0.0
        %8215 = vmatprep.subr.mxu0 0.0
        %8216 = vmatpush1.msra.mxu0 0.0
        %8217 = vmatprep.subr.mxu0 0.0
        %8218 = vmatpush1.msra.mxu0 0.0
        %8219 = vmatprep.subr.mxu0 0.0
        %8220 = vmatpush1.msra.mxu0 0.0
        %8221 = vmatprep.subr.mxu0 0.0
        %8222 = vmatpush1.msra.mxu0 0.0
        %8223 = vmatprep.subr.mxu0 0.0
        %8224 = vmatpush1.msra.mxu0 0.0
        %8225 = vmatprep.subr.mxu0 0.0
        %8226 = vmatpush1.msra.mxu0 0.0
        %8227 = vmatprep.subr.mxu0 0.0
        %8228 = vmatpush1.msra.mxu0 0.0
        %8229 = vmatprep.subr.mxu0 0.0
        %8230 = vmatpush1.msra.mxu0 0.0
        %8231 = vmatprep.subr.mxu0 0.0
        %8232 = vmatpush1.msra.mxu0 0.0
        %8233 = vmatprep.subr.mxu0 0.0
        %8234 = vmatpush1.msra.mxu0 0.0
        %8235 = vmatprep.subr.mxu0 0.0
        %8236 = vmatpush1.msra.mxu0 0.0
        %8237 = vmatprep.subr.mxu0 0.0
        %8238 = vmatpush1.msra.mxu0 0.0
        %8239 = vmatprep.subr.mxu0 0.0
        %8240 = vmatpush1.msra.mxu0 0.0
        %8241 = vmatprep.subr.mxu0 0.0
        %8242 = vmatpush1.msra.mxu0 0.0
        %8243 = vmatprep.subr.mxu0 0.0
        %8244 = vmatpush1.msra.mxu0 0.0
        %8245 = vmatprep.subr.mxu0 0.0
        %8246 = vmatpush1.msra.mxu0 0.0
        %8247 = vmatprep.subr.mxu0 0.0
        %8248 = vmatpush1.msra.mxu0 0.0
        %8249 = vmatprep.subr.mxu0 0.0
        %8250 = vmatpush1.msra.mxu0 0.0
        %8251 = vmatprep.subr.mxu0 0.0
        %8252 = vmatpush1.msra.mxu0 0.0
        %8253 = vmatprep.subr.mxu0 0.0
        %8254 = vmatpush1.msra.mxu0 0.0
        %8255 = vmatprep.subr.mxu0 0.0
        %8256 = vmatpush1.msra.mxu0 0.0
        %8257 = vmatprep.subr.mxu0 0.0
        %8258 = vmatpush1.msra.mxu0 0.0
        %8259 = vmatprep.mubr.f32.mxu0 0.0
        %8260 = vmatmul.mubr.f32.gmra.mrb[0].mxu0 %v4473
        %v8261 = vpop.f32.mrb[0].mxu0
        %v8262 = vadd.f32 0.0, %v8261
        %v8263 = vpop.f32.mrb[0].mxu0
        %8264 = vmatprep.mubr.f32.mxu0 0.0
        %8265 = vmatmul.mubr.f32.gmra.mrb[0].mxu0 %v4476
        %v8266 = vpop.f32.mrb[0].mxu0
        %v8267 = vadd.f32 0.0, %v8266
        %v8268 = vpop.f32.mrb[0].mxu0
        %8269 = vmatprep.mubr.f32.mxu0 0.0
        %8270 = vmatmul.mubr.f32.gmra.mrb[0].mxu0 %v4479
        %v8271 = vpop.f32.mrb[0].mxu0
        %v8272 = vadd.f32 0.0, %v8271
        %v8273 = vpop.f32.mrb[0].mxu0
        %8274 = vmatprep.mubr.f32.mxu0 0.0
        %8275 = vmatmul.mubr.f32.gmra.mrb[0].mxu0 %v4482
        %v8276 = vpop.f32.mrb[0].mxu0
        %v8277 = vadd.f32 0.0, %v8276
        %v8278 = vpop.f32.mrb[0].mxu0
        %8279 = vdwg.mxu0
        %v8280 = vmul.f32 %v8262, %v1986
        %v8281 = vmul.f32 %v8267, %v1987
        %v8282 = vmul.f32 %v8272, %v1988
        %v8283 = vmul.f32 %v8277, %v1989
        %v8285 = vsel %vm2184, %v8190, 0
        %8287 = vmatprep.subr.mxu0 0.0
        %8288 = vmatpush1.msra.mxu0 %v8280
        %8289 = vmatprep.subr.mxu0 0.0
        %8290 = vmatpush1.msra.mxu0 %v8281
        %8291 = vmatprep.subr.mxu0 0.0
        %8292 = vmatpush1.msra.mxu0 %v8282
        %8293 = vmatprep.subr.mxu0 0.0
        %8294 = vmatpush1.msra.mxu0 %v8283
        %8295 = vmatprep.subr.mxu0 0.0
        %8296 = vmatpush1.msra.mxu0 0.0
        %8297 = vmatprep.subr.mxu0 0.0
        %8298 = vmatpush1.msra.mxu0 0.0
        %8299 = vmatprep.subr.mxu0 0.0
        %8300 = vmatpush1.msra.mxu0 0.0
        %8301 = vmatprep.subr.mxu0 0.0
        %8302 = vmatpush1.msra.mxu0 0.0
        %8303 = vmatprep.subr.mxu0 0.0
        %8304 = vmatpush1.msra.mxu0 0.0
        %8305 = vmatprep.subr.mxu0 0.0
        %8306 = vmatpush1.msra.mxu0 0.0
        %8307 = vmatprep.subr.mxu0 0.0
        %8308 = vmatpush1.msra.mxu0 0.0
        %8309 = vmatprep.subr.mxu0 0.0
        %8310 = vmatpush1.msra.mxu0 0.0
        %8311 = vmatprep.subr.mxu0 0.0
        %8312 = vmatpush1.msra.mxu0 0.0
        %8313 = vmatprep.subr.mxu0 0.0
        %8314 = vmatpush1.msra.mxu0 0.0
        %8315 = vmatprep.subr.mxu0 0.0
        %8316 = vmatpush1.msra.mxu0 0.0
        %8317 = vmatprep.subr.mxu0 0.0
        %8318 = vmatpush1.msra.mxu0 0.0
        %8319 = vmatprep.subr.mxu0 0.0
        %8320 = vmatpush1.msra.mxu0 0.0
        %8321 = vmatprep.subr.mxu0 0.0
        %8322 = vmatpush1.msra.mxu0 0.0
        %8323 = vmatprep.subr.mxu0 0.0
        %8324 = vmatpush1.msra.mxu0 0.0
        %8325 = vmatprep.subr.mxu0 0.0
        %8326 = vmatpush1.msra.mxu0 0.0
        %8327 = vmatprep.subr.mxu0 0.0
        %8328 = vmatpush1.msra.mxu0 0.0
        %8329 = vmatprep.subr.mxu0 0.0
        %8330 = vmatpush1.msra.mxu0 0.0
        %8331 = vmatprep.subr.mxu0 0.0
        %8332 = vmatpush1.msra.mxu0 0.0
        %8333 = vmatprep.subr.mxu0 0.0
        %8334 = vmatpush1.msra.mxu0 0.0
        %8335 = vmatprep.subr.mxu0 0.0
        %8336 = vmatpush1.msra.mxu0 0.0
        %8337 = vmatprep.subr.mxu0 0.0
        %8338 = vmatpush1.msra.mxu0 0.0
        %8339 = vmatprep.subr.mxu0 0.0
        %8340 = vmatpush1.msra.mxu0 0.0
        %8341 = vmatprep.subr.mxu0 0.0
        %8342 = vmatpush1.msra.mxu0 0.0
        %8343 = vmatprep.subr.mxu0 0.0
        %8344 = vmatpush1.msra.mxu0 0.0
        %8345 = vmatprep.subr.mxu0 0.0
        %8346 = vmatpush1.msra.mxu0 0.0
        %8347 = vmatprep.subr.mxu0 0.0
        %8348 = vmatpush1.msra.mxu0 0.0
        %8349 = vmatprep.subr.mxu0 0.0
        %8350 = vmatpush1.msra.mxu0 0.0
        %8351 = vmatprep.mubr.f32.mxu0 0.0
        %8352 = vmatmul.mubr.f32.gmra.mrb[0].mxu0 %v8285
        %v8353 = vpop.f32.mrb[0].mxu0
        %v8354 = vadd.f32 0.0, %v8353
        %v8355 = vpop.f32.mrb[0].mxu0
        %8356 = vdwg.mxu0
        %v8358 = vlaneseq
        %v8359 = vshrl.u32 %v8358, 7
        %v8360 = vsub.s32 0, %v8359
        %v8361 = vrot.slane %v2002, %v8360
        %v8364 = vsel %vm2184, %v8354, 0
        %8366 = vmatprep.subr.mxu0 0.0
        %8367 = vmatpush1.msra.mxu0 %v1998
        %8368 = vmatprep.subr.mxu0 0.0
        %8369 = vmatpush1.msra.mxu0 %v1999
        %8370 = vmatprep.subr.mxu0 0.0
        %8371 = vmatpush1.msra.mxu0 %v2000
        %8372 = vmatprep.subr.mxu0 0.0
        %8373 = vmatpush1.msra.mxu0 %v2001
        %8374 = vmatprep.subr.mxu0 0.0
        %8375 = vmatpush1.msra.mxu0 0.0
        %8376 = vmatprep.subr.mxu0 0.0
        %8377 = vmatpush1.msra.mxu0 0.0
        %8378 = vmatprep.subr.mxu0 0.0
        %8379 = vmatpush1.msra.mxu0 0.0
        %8380 = vmatprep.subr.mxu0 0.0
        %8381 = vmatpush1.msra.mxu0 0.0
        %8382 = vmatprep.subr.mxu0 0.0
        %8383 = vmatpush1.msra.mxu0 0.0
        %8384 = vmatprep.subr.mxu0 0.0
        %8385 = vmatpush1.msra.mxu0 0.0
        %8386 = vmatprep.subr.mxu0 0.0
        %8387 = vmatpush1.msra.mxu0 0.0
        %8388 = vmatprep.subr.mxu0 0.0
        %8389 = vmatpush1.msra.mxu0 0.0
        %8390 = vmatprep.subr.mxu0 0.0
        %8391 = vmatpush1.msra.mxu0 0.0
        %8392 = vmatprep.subr.mxu0 0.0
        %8393 = vmatpush1.msra.mxu0 0.0
        %8394 = vmatprep.subr.mxu0 0.0
        %8395 = vmatpush1.msra.mxu0 0.0
        %8396 = vmatprep.subr.mxu0 0.0
        %8397 = vmatpush1.msra.mxu0 0.0
        %8398 = vmatprep.subr.mxu0 0.0
        %8399 = vmatpush1.msra.mxu0 0.0
        %8400 = vmatprep.subr.mxu0 0.0
        %8401 = vmatpush1.msra.mxu0 0.0
        %8402 = vmatprep.subr.mxu0 0.0
        %8403 = vmatpush1.msra.mxu0 0.0
        %8404 = vmatprep.subr.mxu0 0.0
        %8405 = vmatpush1.msra.mxu0 0.0
        %8406 = vmatprep.subr.mxu0 0.0
        %8407 = vmatpush1.msra.mxu0 0.0
        %8408 = vmatprep.subr.mxu0 0.0
        %8409 = vmatpush1.msra.mxu0 0.0
        %8410 = vmatprep.subr.mxu0 0.0
        %8411 = vmatpush1.msra.mxu0 0.0
        %8412 = vmatprep.subr.mxu0 0.0
        %8413 = vmatpush1.msra.mxu0 0.0
        %8414 = vmatprep.subr.mxu0 0.0
        %8415 = vmatpush1.msra.mxu0 0.0
        %8416 = vmatprep.subr.mxu0 0.0
        %8417 = vmatpush1.msra.mxu0 0.0
        %8418 = vmatprep.subr.mxu0 0.0
        %8419 = vmatpush1.msra.mxu0 0.0
        %8420 = vmatprep.subr.mxu0 0.0
        %8421 = vmatpush1.msra.mxu0 0.0
        %8422 = vmatprep.subr.mxu0 0.0
        %8423 = vmatpush1.msra.mxu0 0.0
        %8424 = vmatprep.subr.mxu0 0.0
        %8425 = vmatpush1.msra.mxu0 0.0
        %8426 = vmatprep.subr.mxu0 0.0
        %8427 = vmatpush1.msra.mxu0 0.0
        %8428 = vmatprep.subr.mxu0 0.0
        %8429 = vmatpush1.msra.mxu0 0.0
        %8430 = vmatprep.mubr.f32.mxu0 0.0
        %8431 = vmatmul.mubr.f32.gmra.mrb[0].mxu0 %v8364
        %v8432 = vpop.f32.mrb[0].mxu0
        %v8433 = vadd.f32 %v8361, %v8432
        %v8434 = vpop.f32.mrb[0].mxu0
        %8435 = vdwg.mxu0
        %v8437 = vsel %vm2184, %v8433, 0
        %8439 = vmatprep.subr.mxu0 0.0
        %8440 = vmatpush1.xpose.msra.mxu0 %v7742
        %8441 = vmatprep.subr.mxu0 0.0
        %8442 = vmatpush1.xpose.msra.mxu0 0.0
        %8443 = vmatprep.subr.mxu0 0.0
        %8444 = vmatpush1.xpose.msra.mxu0 0.0
        %8445 = vmatprep.subr.mxu0 0.0
        %8446 = vmatpush1.xpose.msra.mxu0 0.0
        %8447 = vmatprep.subr.mxu0 0.0
        %8448 = vmatpush1.xpose.msra.mxu0 0.0
        %8449 = vmatprep.subr.mxu0 0.0
        %8450 = vmatpush1.xpose.msra.mxu0 0.0
        %8451 = vmatprep.subr.mxu0 0.0
        %8452 = vmatpush1.xpose.msra.mxu0 0.0
        %8453 = vmatprep.subr.mxu0 0.0
        %8454 = vmatpush1.xpose.msra.mxu0 0.0
        %8455 = vmatprep.subr.mxu0 0.0
        %8456 = vmatpush1.xpose.msra.mxu0 0.0
        %8457 = vmatprep.subr.mxu0 0.0
        %8458 = vmatpush1.xpose.msra.mxu0 0.0
        %8459 = vmatprep.subr.mxu0 0.0
        %8460 = vmatpush1.xpose.msra.mxu0 0.0
        %8461 = vmatprep.subr.mxu0 0.0
        %8462 = vmatpush1.xpose.msra.mxu0 0.0
        %8463 = vmatprep.subr.mxu0 0.0
        %8464 = vmatpush1.xpose.msra.mxu0 0.0
        %8465 = vmatprep.subr.mxu0 0.0
        %8466 = vmatpush1.xpose.msra.mxu0 0.0
        %8467 = vmatprep.subr.mxu0 0.0
        %8468 = vmatpush1.xpose.msra.mxu0 0.0
        %8469 = vmatprep.subr.mxu0 0.0
        %8470 = vmatpush1.xpose.msra.mxu0 0.0
        %8471 = vmatprep.subr.mxu0 0.0
        %8472 = vmatpush1.xpose.msra.mxu0 0.0
        %8473 = vmatprep.subr.mxu0 0.0
        %8474 = vmatpush1.xpose.msra.mxu0 0.0
        %8475 = vmatprep.subr.mxu0 0.0
        %8476 = vmatpush1.xpose.msra.mxu0 0.0
        %8477 = vmatprep.subr.mxu0 0.0
        %8478 = vmatpush1.xpose.msra.mxu0 0.0
        %8479 = vmatprep.subr.mxu0 0.0
        %8480 = vmatpush1.xpose.msra.mxu0 0.0
        %8481 = vmatprep.subr.mxu0 0.0
        %8482 = vmatpush1.xpose.msra.mxu0 0.0
        %8483 = vmatprep.subr.mxu0 0.0
        %8484 = vmatpush1.xpose.msra.mxu0 0.0
        %8485 = vmatprep.subr.mxu0 0.0
        %8486 = vmatpush1.xpose.msra.mxu0 0.0
        %8487 = vmatprep.subr.mxu0 0.0
        %8488 = vmatpush1.xpose.msra.mxu0 0.0
        %8489 = vmatprep.subr.mxu0 0.0
        %8490 = vmatpush1.xpose.msra.mxu0 0.0
        %8491 = vmatprep.subr.mxu0 0.0
        %8492 = vmatpush1.xpose.msra.mxu0 0.0
        %8493 = vmatprep.subr.mxu0 0.0
        %8494 = vmatpush1.xpose.msra.mxu0 0.0
        %8495 = vmatprep.subr.mxu0 0.0
        %8496 = vmatpush1.xpose.msra.mxu0 0.0
        %8497 = vmatprep.subr.mxu0 0.0
        %8498 = vmatpush1.xpose.msra.mxu0 0.0
        %8499 = vmatprep.subr.mxu0 0.0
        %8500 = vmatpush1.xpose.msra.mxu0 0.0
        %8501 = vmatprep.subr.mxu0 0.0
        %8502 = vmatpush1.xpose.msra.mxu0 0.0
        %8503 = vmatprep.mubr.f32.mxu0 0.0
        %8504 = vmatmul.mubr.f32.gmra.mrb[0].mxu0 %v8437
        %v8505 = vpop.f32.mrb[0].mxu0
        %v8506 = vadd.f32 0.0, %v8505
        %v8507 = vpop.f32.mrb[0].mxu0
        %8508 = vdwg.mxu0
        %v8509 = vmul.f32 %v8506, 0.17677669
        %v8510 = vtanh.pop %v8509
        %v8511 = vmul.f32 %v8510, 10.0
        %v8512 = vadd.f32 %v8511, %v2007
        %v8513 = vsel %vm4350, %v8512, -inf
        %8514 = vmax.xlane.f32.xlu0 %v8513
        %v8515 = vpop.xlane.xlu0 %8514
        %v8516 = vrot.slane %v8515, 4
        %v8517 = vmax.f32 %v8515, %v8516
        %v8518 = vrot.slane %v8517, 2
        %v8519 = vmax.f32 %v8517, %v8518
        %v8520 = vrot.slane %v8519, 1
        %v8521 = vmax.f32 %v8519, %v8520
        %s8522 = vtos %v8521
        %v8523 = vstv %s8522
        %v8524 = vsub.f32 %v8512, %v8523
        %v8525 = vmul.f32 %v8524, 1.442695
        %v8526 = vpow.pop %v8525
        %v8527 = vsel %vm4350, %v8526, 0.0
        %8528 = vadd.xlane.f32.xlu0 %v8527
        %v8529 = vpop.xlane.xlu0 %8528
        %v8530 = vrot.slane %v8529, 4
        %v8531 = vadd.f32 %v8529, %v8530
        %v8532 = vrot.slane %v8531, 2
        %v8533 = vadd.f32 %v8531, %v8532
        %v8534 = vrot.slane %v8533, 1
        %v8535 = vadd.f32 %v8533, %v8534
        %s8536 = vtos %v8535
        %v8537 = vstv %s8536
        %v8538 = vrcp.pop %v8537
        %v8539 = vmul.f32 %v8526, %v8538
        %8540 = vst.msk [vmem:[%s1959] sm:$0xf] %vm4350, %v8539
        %p8541 = scmp.lt.s32.totalorder %s136, 1
        %s8542 = scalar_select %p8541, %s136, 1
        %s8543 = smul.addr %s8542, 4
        %s8544 = scalar_lea.vmem %s119, %s8543
        // Predicated region
        $region301: #{cloud_matrix_model_forward.1} parent=255 // pred_check
          %p8545 = pneg %p1418
        $region302: #{cloud_matrix_model_forward.1} parent=255 // pred_check_branch
          %8547 = sbr.rel (%p8545) target = $region304
        $region303: #{cloud_matrix_model_forward.1} parent=255 // pred_region
          _
        $region304: #{cloud_matrix_model_forward.1} parent=255 // pred_fallthru
          _
      $region256: #{cloud_matrix_model_forward.1} parent=5 // pred_fallthru
        _
      %p8548 = scmp.le.s32.totalorder 2, %s131
      // Predicated region
      $region305: #{cloud_matrix_model_forward.1} parent=5 // pred_check
        %p8549 = pneg %p8548
      $region306: #{cloud_matrix_model_forward.1} parent=5 // pred_check_branch
        %8551 = sbr.rel (%p8549) target = $region308
      $region307: #{cloud_matrix_model_forward.1} parent=5 // pred_region
        %s8552 = ssub.s32 %s131, 2
        // Predicated region
        $region309: #{cloud_matrix_model_forward.1} parent=307 // pred_check
          %p8553 = pneg %p1424
        $region310: #{cloud_matrix_model_forward.1} parent=307 // pred_check_branch
          %8555 = sbr.rel (%p8553) target = $region312
        $region311: #{cloud_matrix_model_forward.1} parent=307 // pred_region
          %p8556 = scmp.lt.s32.totalorder %s137, 1
          %s8557 = scalar_select %p8556, %s137, 1
          %s8558 = smul.addr %s8557, 4
          %s8559 = scalar_lea.vmem %s119, %s8558
        $region312: #{cloud_matrix_model_forward.1} parent=307 // pred_fallthru
          _
      $region308: #{cloud_matrix_model_forward.1} parent=5 // pred_fallthru
        _
    $region6: #{cloud_matrix_model_forward.1} parent=1 // loop_footer
      %s135 = sadd.s32 1, %s131
    $region7: #{cloud_matrix_model_forward.1} parent=1 // loop_footer_branch
      %130 = sbr.rel target = $region3
    $region8: #{cloud_matrix_model_forward.1} parent=1 // loop_exit
      _
    %8560 = vsyncpa [#allocation3], 1
    %s8561 = scalar_lea.sflag [#allocation3], 1
    %8562 = vsyncpa %s8561, 1
    %8563 = vsyncpa [#allocation5], 1
    %8564 = vsyncpa [#allocation8], 1
    %8565 = vsyncpa [#allocation11], 1
    %8566 = vsyncpa [#allocation14], 1
    %8567 = vsyncpa [#allocation17], 1

</llo_original>
